<compile_context>
chip_gen: v7x
topology: tpu7x:2x2x1
jax: 0.10.0
libtpu: 0.0.40
codegen_flags: <defaults>
</compile_context>

<pallas_src>
import functools

import jax
import jax.numpy as jnp
from jax.experimental import pallas as pl
from jax.experimental.pallas import tpu as pltpu


def _posenc_kernel(x_ref, o_ref, *, num_levels):
    """x_ref: (row_tile, lane_tile). o_ref: (2L+1, row_tile, lane_tile)."""
    x = x_ref[...]                                    # fully dense vregs
    o_ref[0] = x.astype(o_ref.dtype)                  # identity plane
    for l in range(num_levels):                       # statically unrolled
        scaled = (2.0 ** l) * x                       # compile-time const freq
        o_ref[1 + 2 * l] = jnp.sin(scaled).astype(o_ref.dtype)
        o_ref[2 + 2 * l] = jnp.cos(scaled).astype(o_ref.dtype)


def positional_encode(x, num_levels, *, row_tile=128, lane_tile=1024,
                      out_dtype=None):
    """Pallas implementation of _Encoder(num_levels).forward(x).

    x: array of shape (..., D). Returns (..., D * (2*num_levels + 1)).
    row_tile / lane_tile: block shape of the lane-dense slab (rows x lanes);
    larger row_tile may require raising vmem_limit_bytes.
    out_dtype: optional output dtype (e.g. bfloat16 to halve store traffic on
    v5e/v6e); defaults to x.dtype.
    """
    assert lane_tile % 128 == 0 and row_tile % 8 == 0
    orig_shape = x.shape
    D = orig_shape[-1]
    K = 2 * num_levels + 1
    out_D = D * K
    out_dtype = x.dtype if out_dtype is None else out_dtype

    x_flat = x.reshape(-1)
    M = x_flat.shape[0]
    N = M // D

    # Lane-dense slab shape, padded so the grid tiles it exactly.
    R = max(pl.cdiv(M, lane_tile), 1)
    row_tile_eff = max(8, min(row_tile, pl.cdiv(R, 8) * 8))
    grid = pl.cdiv(R, row_tile_eff)
    R_pad = grid * row_tile_eff
    M_pad = R_pad * lane_tile
    if M_pad != M:
        x_flat = jnp.pad(x_flat, (0, M_pad - M))
    x_mat = x_flat.reshape(R_pad, lane_tile)

    kernel = functools.partial(_posenc_kernel, num_levels=num_levels)

    out_planes = pl.pallas_call(
        kernel,
        out_shape=jax.ShapeDtypeStruct((K, R_pad, lane_tile), out_dtype),
        grid_spec=pltpu.PrefetchScalarGridSpec(
            num_scalar_prefetch=0,
            grid=(grid,),
            in_specs=[pl.BlockSpec((row_tile_eff, lane_tile),
                                   lambda i: (i, 0))],
            out_specs=pl.BlockSpec((K, row_tile_eff, lane_tile),
                                   lambda i: (0, i, 0)),
        ),
        compiler_params=pltpu.CompilerParams(
            dimension_semantics=("parallel",)),
    )(x_mat)

    # Plain-JAX glue: drop padding and rearrange to the feature-last layout
    # [x, sin(2^0 x), cos(2^0 x), ...] along the last dim, matching torch.cat.
    out_flat = out_planes.reshape(K, M_pad)[:, :M]           # (K, N*D)
    out = jnp.moveaxis(out_flat.reshape(K, N, D), 0, 1)      # (N, K, D)
    return out.reshape(*orig_shape[:-1], out_D)


def positional_encode_ref(x, num_levels):
    parts = [x]
    for L in range(num_levels):
        parts.append(jnp.sin((2.0 ** L) * x))
        parts.append(jnp.cos((2.0 ** L) * x))
    return jnp.concatenate(parts, axis=-1)


if __name__ == "__main__":
    key = jax.random.PRNGKey(0)

    # Shapes consistent with NeRF usage: rays x samples x 3D points,
    # 4 frequency levels -> out feature dim = 3 * (2*4 + 1) = 27.
    batch, samples, coord_dim = 2, 64, 3
    num_levels = 4
    x = jax.random.uniform(key, (batch, samples, coord_dim), dtype=jnp.float32,
                           minval=-1.0, maxval=1.0)

    out = positional_encode(x, num_levels)
    out = jax.block_until_ready(out)
    ref = positional_encode_ref(x, num_levels)
    assert out.shape == (batch, samples, coord_dim * (2 * num_levels + 1)), out.shape
    assert jnp.allclose(out, ref, atol=1e-5, rtol=1e-5), "mismatch vs reference"

    # Second check: non-divisible element count + multi-step grid (exercises
    # padding and the tiled path with small block overrides).
    x2 = jax.random.uniform(jax.random.PRNGKey(1), (7, 100, 3),
                            dtype=jnp.float32, minval=-2.0, maxval=2.0)
    out2 = positional_encode(x2, 3, row_tile=8, lane_tile=128)
    out2 = jax.block_until_ready(out2)
    ref2 = positional_encode_ref(x2, 3)
    assert out2.shape == ref2.shape, out2.shape
    assert jnp.allclose(out2, ref2, atol=1e-5, rtol=1e-5), "mismatch vs reference (tail case)"

    print("KERNEL_OK")
</pallas_src>

<mosaic_0001>
module attributes {stable_mosaic.version = 11 : i64} {
  func.func @_posenc_kernel(%arg0: i32, %arg1: memref<8x1024xf32, #tpu.memory_space<vmem>>, %arg2: memref<9x8x1024xf32, #tpu.memory_space<vmem>>) attributes {dimension_semantics = [#tpu.dimension_semantics<parallel>], iteration_bounds = array<i64: 1>, scalar_prefetch = 0 : i64, scratch_operands = 0 : i64, tpu.core_type = #tpu.core_type<tc>, window_params = [{transform_indices = @transform_0, window_bounds = array<i64: 8, 1024>}, {transform_indices = @transform_1, window_bounds = array<i64: 9, 8, 1024>}]} {
    %c0 = arith.constant 0 : index
    %c0_0 = arith.constant 0 : index
    %0 = vector.load %arg1[%c0, %c0_0] : memref<8x1024xf32, #tpu.memory_space<vmem>>, vector<8x1024xf32>
    %c0_1 = arith.constant 0 : index
    %c0_2 = arith.constant 0 : index
    %c0_3 = arith.constant 0 : index
    %1 = vector.load %arg2[%c0_1, %c0_2, %c0_3] : memref<9x8x1024xf32, #tpu.memory_space<vmem>>, vector<1x8x1024xf32>
    %2 = vector.shape_cast %1 : vector<1x8x1024xf32> to vector<8x1024xf32>
    %3 = vector.shape_cast %0 : vector<8x1024xf32> to vector<1x8x1024xf32>
    tpu.vector_store %arg2[%c0_1, %c0_2, %c0_3], %3 {strides = array<i32>} : memref<9x8x1024xf32, #tpu.memory_space<vmem>>, vector<1x8x1024xf32>,
    %cst = arith.constant 1.000000e+00 : f32
    %4 = vector.broadcast %cst : f32 to vector<8x1024xf32>
    %5 = arith.mulf %4, %0 : vector<8x1024xf32>
    %6 = math.sin %5 : vector<8x1024xf32>
    %c1 = arith.constant 1 : index
    %c0_4 = arith.constant 0 : index
    %c0_5 = arith.constant 0 : index
    %7 = vector.load %arg2[%c1, %c0_4, %c0_5] : memref<9x8x1024xf32, #tpu.memory_space<vmem>>, vector<1x8x1024xf32>
    %8 = vector.shape_cast %7 : vector<1x8x1024xf32> to vector<8x1024xf32>
    %9 = vector.shape_cast %6 : vector<8x1024xf32> to vector<1x8x1024xf32>
    tpu.vector_store %arg2[%c1, %c0_4, %c0_5], %9 {strides = array<i32>} : memref<9x8x1024xf32, #tpu.memory_space<vmem>>, vector<1x8x1024xf32>,
    %10 = math.cos %5 : vector<8x1024xf32>
    %c2 = arith.constant 2 : index
    %c0_6 = arith.constant 0 : index
    %c0_7 = arith.constant 0 : index
    %11 = vector.load %arg2[%c2, %c0_6, %c0_7] : memref<9x8x1024xf32, #tpu.memory_space<vmem>>, vector<1x8x1024xf32>
    %12 = vector.shape_cast %11 : vector<1x8x1024xf32> to vector<8x1024xf32>
    %13 = vector.shape_cast %10 : vector<8x1024xf32> to vector<1x8x1024xf32>
    tpu.vector_store %arg2[%c2, %c0_6, %c0_7], %13 {strides = array<i32>} : memref<9x8x1024xf32, #tpu.memory_space<vmem>>, vector<1x8x1024xf32>,
    %cst_8 = arith.constant 2.000000e+00 : f32
    %14 = vector.broadcast %cst_8 : f32 to vector<8x1024xf32>
    %15 = arith.mulf %14, %0 : vector<8x1024xf32>
    %16 = math.sin %15 : vector<8x1024xf32>
    %c3 = arith.constant 3 : index
    %c0_9 = arith.constant 0 : index
    %c0_10 = arith.constant 0 : index
    %17 = vector.load %arg2[%c3, %c0_9, %c0_10] : memref<9x8x1024xf32, #tpu.memory_space<vmem>>, vector<1x8x1024xf32>
    %18 = vector.shape_cast %17 : vector<1x8x1024xf32> to vector<8x1024xf32>
    %19 = vector.shape_cast %16 : vector<8x1024xf32> to vector<1x8x1024xf32>
    tpu.vector_store %arg2[%c3, %c0_9, %c0_10], %19 {strides = array<i32>} : memref<9x8x1024xf32, #tpu.memory_space<vmem>>, vector<1x8x1024xf32>,
    %20 = math.cos %15 : vector<8x1024xf32>
    %c4 = arith.constant 4 : index
    %c0_11 = arith.constant 0 : index
    %c0_12 = arith.constant 0 : index
    %21 = vector.load %arg2[%c4, %c0_11, %c0_12] : memref<9x8x1024xf32, #tpu.memory_space<vmem>>, vector<1x8x1024xf32>
    %22 = vector.shape_cast %21 : vector<1x8x1024xf32> to vector<8x1024xf32>
    %23 = vector.shape_cast %20 : vector<8x1024xf32> to vector<1x8x1024xf32>
    tpu.vector_store %arg2[%c4, %c0_11, %c0_12], %23 {strides = array<i32>} : memref<9x8x1024xf32, #tpu.memory_space<vmem>>, vector<1x8x1024xf32>,
    %cst_13 = arith.constant 4.000000e+00 : f32
    %24 = vector.broadcast %cst_13 : f32 to vector<8x1024xf32>
    %25 = arith.mulf %24, %0 : vector<8x1024xf32>
    %26 = math.sin %25 : vector<8x1024xf32>
    %c5 = arith.constant 5 : index
    %c0_14 = arith.constant 0 : index
    %c0_15 = arith.constant 0 : index
    %27 = vector.load %arg2[%c5, %c0_14, %c0_15] : memref<9x8x1024xf32, #tpu.memory_space<vmem>>, vector<1x8x1024xf32>
    %28 = vector.shape_cast %27 : vector<1x8x1024xf32> to vector<8x1024xf32>
    %29 = vector.shape_cast %26 : vector<8x1024xf32> to vector<1x8x1024xf32>
    tpu.vector_store %arg2[%c5, %c0_14, %c0_15], %29 {strides = array<i32>} : memref<9x8x1024xf32, #tpu.memory_space<vmem>>, vector<1x8x1024xf32>,
    %30 = math.cos %25 : vector<8x1024xf32>
    %c6 = arith.constant 6 : index
    %c0_16 = arith.constant 0 : index
    %c0_17 = arith.constant 0 : index
    %31 = vector.load %arg2[%c6, %c0_16, %c0_17] : memref<9x8x1024xf32, #tpu.memory_space<vmem>>, vector<1x8x1024xf32>
    %32 = vector.shape_cast %31 : vector<1x8x1024xf32> to vector<8x1024xf32>
    %33 = vector.shape_cast %30 : vector<8x1024xf32> to vector<1x8x1024xf32>
    tpu.vector_store %arg2[%c6, %c0_16, %c0_17], %33 {strides = array<i32>} : memref<9x8x1024xf32, #tpu.memory_space<vmem>>, vector<1x8x1024xf32>,
    %cst_18 = arith.constant 8.000000e+00 : f32
    %34 = vector.broadcast %cst_18 : f32 to vector<8x1024xf32>
    %35 = arith.mulf %34, %0 : vector<8x1024xf32>
    %36 = math.sin %35 : vector<8x1024xf32>
    %c7 = arith.constant 7 : index
    %c0_19 = arith.constant 0 : index
    %c0_20 = arith.constant 0 : index
    %37 = vector.load %arg2[%c7, %c0_19, %c0_20] : memref<9x8x1024xf32, #tpu.memory_space<vmem>>, vector<1x8x1024xf32>
    %38 = vector.shape_cast %37 : vector<1x8x1024xf32> to vector<8x1024xf32>
    %39 = vector.shape_cast %36 : vector<8x1024xf32> to vector<1x8x1024xf32>
    tpu.vector_store %arg2[%c7, %c0_19, %c0_20], %39 {strides = array<i32>} : memref<9x8x1024xf32, #tpu.memory_space<vmem>>, vector<1x8x1024xf32>,
    %40 = math.cos %35 : vector<8x1024xf32>
    %c8 = arith.constant 8 : index
    %c0_21 = arith.constant 0 : index
    %c0_22 = arith.constant 0 : index
    %41 = vector.load %arg2[%c8, %c0_21, %c0_22] : memref<9x8x1024xf32, #tpu.memory_space<vmem>>, vector<1x8x1024xf32>
    %42 = vector.shape_cast %41 : vector<1x8x1024xf32> to vector<8x1024xf32>
    %43 = vector.shape_cast %40 : vector<8x1024xf32> to vector<1x8x1024xf32>
    tpu.vector_store %arg2[%c8, %c0_21, %c0_22], %43 {strides = array<i32>} : memref<9x8x1024xf32, #tpu.memory_space<vmem>>, vector<1x8x1024xf32>,
    return
  }
  func.func @transform_0(%arg0: i32) -> (i32, i32) {
    %c0_i32 = arith.constant 0 : i32
    %c0_i32_0 = arith.constant 0 : i32
    return %arg0, %c0_i32 : i32, i32
  }
  func.func @transform_1(%arg0: i32) -> (i32, i32, i32) {
    %c0_i32 = arith.constant 0 : i32
    %c0_i32_0 = arith.constant 0 : i32
    %c0_i32_1 = arith.constant 0 : i32
    return %c0_i32, %arg0, %c0_i32_0 : i32, i32, i32
  }
}

</mosaic_0001>

<llo_original>
// kernel: tpu_custom_call.1
$region0: #{tpu_custom_call.1}
  #allocation0 [shape = 'u32[]', space=smem, size = 0x4, offset = 0x4, fixed_abs, tag = 'smem constant byte address 0x4 - core index']
  #allocation1 [shape = 'u32[144,128]{1,0:T(1,128)}', space=vmem, size = 0x12000, scoped, tag = 'internal scratch']
  %s0 = inlined_call_operand.hbm [shape: f32[8,1024], index: 0, kind: input, shape index: {}]
  %s1 = inlined_call_operand.hbm [shape: f32[9,8,1024], index: 1, kind: output, shape index: {}]
  %s2 = sld [smem:[#allocation0]]
  $region18: #{tpu_custom_call.1} parent=0
    _
  %s4 = ssub.s32 1, %s2
  %s5 = scalar_select 0, %s4, %s2
  $region1: #{tpu_custom_call.1} parent=0
    #allocation2 [shape = 'u8[32768]{0}', space=vmem, size = 0x8000, scoped, tag = 'input window, operand 0, single buffered']
    #allocation3 [shape = 's32[1]{0}', space=sflag, size = 0x4, scoped, tag = 'scoped memory for tpu_custom_call.1']
    #allocation4 [shape = 's32[1]{0}', space=sflag, size = 0x4, scoped, tag = 'scoped memory for tpu_custom_call.1']
    #allocation5 [shape = 'u8[294912]{0}', space=vmem, size = 0x48000, scoped, tag = 'output window, operand 0, single buffered']
    %6 = vsyncpa [#allocation3], 0
    %7 = vsyncpa [#allocation4], 0
    // Predicated region
    $region2: #{tpu_custom_call.1} parent=1 // pred_check
      _
    $region3: #{tpu_custom_call.1} parent=1 // pred_check_branch
      %9 = sbr.rel (0) target = $region5
    $region4: #{tpu_custom_call.1} parent=1 // pred_region
      %s11 = ssub.s32 1024, 1024
      %12 = vsyncadd [#allocation3], %s11
      %s14 = sshll.u32 [#allocation2], 4
      %s15 = int_to_ptr.vmem [resolvable:$true] %s14
      %17 = dma.hbm_to_vmem [thread:$0]  %s0, 1024, %s15, [#allocation3]
    $region5: #{tpu_custom_call.1} parent=1 // pred_fallthru
      _
    // Predicated region
    $region6: #{tpu_custom_call.1} parent=1 // pred_check
      _
    $region7: #{tpu_custom_call.1} parent=1 // pred_check_branch
      %19 = sbr.rel (0) target = $region9
    $region8: #{tpu_custom_call.1} parent=1 // pred_region
      %20 = dma.done [#allocation3], 1024
    $region9: #{tpu_custom_call.1} parent=1 // pred_fallthru
      _
    %v21 = vld [vmem:[#allocation2] sm:$0xff]
    %v22 = vld [vmem:[#allocation2 + $0x8] sm:$0xff]
    %v23 = vld [vmem:[#allocation2 + $0x10] sm:$0xff]
    %v24 = vld [vmem:[#allocation2 + $0x18] sm:$0xff]
    %v25 = vld [vmem:[#allocation2 + $0x20] sm:$0xff]
    %v26 = vld [vmem:[#allocation2 + $0x28] sm:$0xff]
    %v27 = vld [vmem:[#allocation2 + $0x30] sm:$0xff]
    %v28 = vld [vmem:[#allocation2 + $0x38] sm:$0xff]
    %29 = vst [vmem:[#allocation5] sm:$0xff] %v21
    %30 = vst [vmem:[#allocation5 + $0x8] sm:$0xff] %v22
    %31 = vst [vmem:[#allocation5 + $0x10] sm:$0xff] %v23
    %32 = vst [vmem:[#allocation5 + $0x18] sm:$0xff] %v24
    %33 = vst [vmem:[#allocation5 + $0x20] sm:$0xff] %v25
    %34 = vst [vmem:[#allocation5 + $0x28] sm:$0xff] %v26
    %35 = vst [vmem:[#allocation5 + $0x30] sm:$0xff] %v27
    %36 = vst [vmem:[#allocation5 + $0x38] sm:$0xff] %v28
    %v37 = vand.u32 2147483647, %v21
    %vm38 = vcmp.le.f32.partialorder %v37, 0.7853982
    %vm39 = vcmp.lt.s32.totalorder %v21, 0
    %v40 = vand.u32 %v21, 2139095040
    %v41 = vshrl.u32 %v40, 23
    %v42 = vsub.s32 %v41, 127
    %v43 = vand.u32 2147483647, %v21
    %v44 = vand.u32 %v43, 8388607
    %v45 = vor.u32 %v44, 8388608
    %v46 = vsub.s32 0, %v45
    %v47 = vadd.s32 %v42, 1
    %vm48 = vcmp.gt.s32.totalorder %v47, 0
    %v49 = vsel %vm48, %v47, 0
    %v50 = vshrl.u32 %v49, 5
    %v51 = vand.u32 %v49, 31
    %v52 = vsub.s32 32, %v51
    %v53 = vshrl.u32 683565275, %v52
    %v54 = vshll.u32 683565275, %v51
    %v55 = vshrl.u32 2475754826, %v52
    %v56 = vor.u32 %v54, %v55
    %v57 = vshll.u32 2475754826, %v51
    %v58 = vshrl.u32 2131351028, %v52
    %v59 = vor.u32 %v57, %v58
    %v60 = vshll.u32 2131351028, %v51
    %v61 = vshrl.u32 2102212464, %v52
    %v62 = vor.u32 %v60, %v61
    %v63 = vshll.u32 2102212464, %v51
    %v64 = vshrl.u32 920167782, %v52
    %v65 = vor.u32 %v63, %v64
    %v66 = vshll.u32 920167782, %v51
    %v67 = vshrl.u32 1326507024, %v52
    %v68 = vor.u32 %v66, %v67
    %vm69 = vcmp.lt.s32.totalorder %v50, 1
    %vm70 = vcmp.lt.s32.totalorder %v50, 2
    %vm71 = vcmp.lt.s32.totalorder %v50, 3
    %vm72 = vcmp.lt.s32.totalorder %v50, 4
    %v73 = vsel %vm69, %v53, %v56
    %v74 = vsel %vm72, %v62, 2102212464
    %v75 = vsel %vm71, %v59, %v74
    %v76 = vsel %vm70, %v73, %v75
    %v77 = vsel %vm69, %v56, %v59
    %v78 = vsel %vm72, %v65, 920167782
    %v79 = vsel %vm71, %v62, %v78
    %v80 = vsel %vm70, %v77, %v79
    %v81 = vsel %vm69, %v59, %v62
    %v82 = vsel %vm72, %v68, 1326507024
    %v83 = vsel %vm71, %v65, %v82
    %v84 = vsel %vm70, %v81, %v83
    %v85 = vshll.u32 %v45, 8
    %v86 = vmul.u32.u64.compose %v85, %v84
    %v87 = vextract.low.u32 %v86
    %v88 = vextract.high.u32 %v86
    %v89 = vmul.u32.u64.compose %v85, %v80
    %v90 = vextract.low.u32 %v89
    %v91 = vextract.high.u32 %v89
    %v92 = vmul.u32 %v85, %v76
    %v93 = vadd.s32 %v88, %v90
    %vm94 = vc.u32 %v88, %v90
    %v95 = vadd.s32 %v91, 1
    %v96 = vsel %vm94, %v95, %v91
    %v97 = vadd.s32 %v92, %v96
    %v98 = vadd.s32 %v97, 536870912
    %v99 = vshrl.u32 %v98, 30
    %v100 = vshll.u32 %v99, 30
    %v101 = vsub.s32 %v97, %v100
    %vm102 = vcmp.lt.s32.totalorder %v101, 0
    %v103 = vsub.s32 0, %v101
    %v104 = vsel %vm102, %v103, %v101
    %v105 = vclz %v104
    %v106 = vsub.s32 %v105, 2
    %vm107 = vcmp.gt.s32.totalorder 0, %v106
    %v108 = vsel %vm107, 0, %v106
    %v109 = vsub.s32 32, %v108
    %v110 = vshll.u32 %v101, %v108
    %v111 = vshrl.u32 %v93, %v109
    %v112 = vor.u32 %v110, %v111
    %v113 = vsub.s32 4294967266, %v108
    %v114 = vadd.s32 %v113, 127
    %v115 = vshll.u32 %v114, 23
    %v116 = vor.u32 4788187, %v115
    %v117 = vand.u32 2147483647, %v116
    %v119 = vcvt.s32.f32 %v112
    %v120 = vmul.f32 %v119, %v117
    %v121 = vxor.u32 %v120, 2147483648
    %v122 = vsel %vm39, %v121, %v120
    %v123 = vsub.s32 4, %v99
    %v124 = vsel %vm39, %v123, %v99
    %v125 = vsel %vm38, %v21, %v122
    %v126 = vsel %vm38, 0, %v124
    %v127 = vcosq.f32.pop %v125
    %v128 = vsinq.f32.pop %v125
    %vm129 = vweird.f32 %v21
    %v130 = vadd.s32 %v126, 3
    %v131 = vand.u32 %v130, 3
    %vm132 = vcmp.lt.s32.totalorder %v131, 2
    %vm133 = vcmp.eq.s32.totalorder %v131, 0
    %v134 = vxor.u32 %v128, 2147483648
    %v135 = vsel %vm133, %v127, %v134
    %vm136 = vcmp.eq.s32.totalorder %v131, 2
    %v137 = vxor.u32 %v127, 2147483648
    %v138 = vsel %vm136, %v137, %v128
    %v139 = vsel %vm132, %v135, %v138
    %v140 = vsel %vm129, nan, %v139
    %v141 = vand.u32 2147483647, %v22
    %vm142 = vcmp.le.f32.partialorder %v141, 0.7853982
    %vm143 = vcmp.lt.s32.totalorder %v22, 0
    %v144 = vand.u32 %v22, 2139095040
    %v145 = vshrl.u32 %v144, 23
    %v146 = vsub.s32 %v145, 127
    %v147 = vand.u32 2147483647, %v22
    %v148 = vand.u32 %v147, 8388607
    %v149 = vor.u32 %v148, 8388608
    %v150 = vsub.s32 0, %v149
    %v151 = vadd.s32 %v146, 1
    %vm152 = vcmp.gt.s32.totalorder %v151, 0
    %v153 = vsel %vm152, %v151, 0
    %v154 = vshrl.u32 %v153, 5
    %v155 = vand.u32 %v153, 31
    %v156 = vsub.s32 32, %v155
    %v157 = vshrl.u32 683565275, %v156
    %v158 = vshll.u32 683565275, %v155
    %v159 = vshrl.u32 2475754826, %v156
    %v160 = vor.u32 %v158, %v159
    %v161 = vshll.u32 2475754826, %v155
    %v162 = vshrl.u32 2131351028, %v156
    %v163 = vor.u32 %v161, %v162
    %v164 = vshll.u32 2131351028, %v155
    %v165 = vshrl.u32 2102212464, %v156
    %v166 = vor.u32 %v164, %v165
    %v167 = vshll.u32 2102212464, %v155
    %v168 = vshrl.u32 920167782, %v156
    %v169 = vor.u32 %v167, %v168
    %v170 = vshll.u32 920167782, %v155
    %v171 = vshrl.u32 1326507024, %v156
    %v172 = vor.u32 %v170, %v171
    %vm173 = vcmp.lt.s32.totalorder %v154, 1
    %vm174 = vcmp.lt.s32.totalorder %v154, 2
    %vm175 = vcmp.lt.s32.totalorder %v154, 3
    %vm176 = vcmp.lt.s32.totalorder %v154, 4
    %v177 = vsel %vm173, %v157, %v160
    %v178 = vsel %vm176, %v166, 2102212464
    %v179 = vsel %vm175, %v163, %v178
    %v180 = vsel %vm174, %v177, %v179
    %v181 = vsel %vm173, %v160, %v163
    %v182 = vsel %vm176, %v169, 920167782
    %v183 = vsel %vm175, %v166, %v182
    %v184 = vsel %vm174, %v181, %v183
    %v185 = vsel %vm173, %v163, %v166
    %v186 = vsel %vm176, %v172, 1326507024
    %v187 = vsel %vm175, %v169, %v186
    %v188 = vsel %vm174, %v185, %v187
    %v189 = vshll.u32 %v149, 8
    %v190 = vmul.u32.u64.compose %v189, %v188
    %v191 = vextract.low.u32 %v190
    %v192 = vextract.high.u32 %v190
    %v193 = vmul.u32.u64.compose %v189, %v184
    %v194 = vextract.low.u32 %v193
    %v195 = vextract.high.u32 %v193
    %v196 = vmul.u32 %v189, %v180
    %v197 = vadd.s32 %v192, %v194
    %vm198 = vc.u32 %v192, %v194
    %v199 = vadd.s32 %v195, 1
    %v200 = vsel %vm198, %v199, %v195
    %v201 = vadd.s32 %v196, %v200
    %v202 = vadd.s32 %v201, 536870912
    %v203 = vshrl.u32 %v202, 30
    %v204 = vshll.u32 %v203, 30
    %v205 = vsub.s32 %v201, %v204
    %vm206 = vcmp.lt.s32.totalorder %v205, 0
    %v207 = vsub.s32 0, %v205
    %v208 = vsel %vm206, %v207, %v205
    %v209 = vclz %v208
    %v210 = vsub.s32 %v209, 2
    %vm211 = vcmp.gt.s32.totalorder 0, %v210
    %v212 = vsel %vm211, 0, %v210
    %v213 = vsub.s32 32, %v212
    %v214 = vshll.u32 %v205, %v212
    %v215 = vshrl.u32 %v197, %v213
    %v216 = vor.u32 %v214, %v215
    %v217 = vsub.s32 4294967266, %v212
    %v218 = vadd.s32 %v217, 127
    %v219 = vshll.u32 %v218, 23
    %v220 = vor.u32 4788187, %v219
    %v221 = vand.u32 2147483647, %v220
    %v223 = vcvt.s32.f32 %v216
    %v224 = vmul.f32 %v223, %v221
    %v225 = vxor.u32 %v224, 2147483648
    %v226 = vsel %vm143, %v225, %v224
    %v227 = vsub.s32 4, %v203
    %v228 = vsel %vm143, %v227, %v203
    %v229 = vsel %vm142, %v22, %v226
    %v230 = vsel %vm142, 0, %v228
    %v231 = vcosq.f32.pop %v229
    %v232 = vsinq.f32.pop %v229
    %vm233 = vweird.f32 %v22
    %v234 = vadd.s32 %v230, 3
    %v235 = vand.u32 %v234, 3
    %vm236 = vcmp.lt.s32.totalorder %v235, 2
    %vm237 = vcmp.eq.s32.totalorder %v235, 0
    %v238 = vxor.u32 %v232, 2147483648
    %v239 = vsel %vm237, %v231, %v238
    %vm240 = vcmp.eq.s32.totalorder %v235, 2
    %v241 = vxor.u32 %v231, 2147483648
    %v242 = vsel %vm240, %v241, %v232
    %v243 = vsel %vm236, %v239, %v242
    %v244 = vsel %vm233, nan, %v243
    %v245 = vand.u32 2147483647, %v23
    %vm246 = vcmp.le.f32.partialorder %v245, 0.7853982
    %vm247 = vcmp.lt.s32.totalorder %v23, 0
    %v248 = vand.u32 %v23, 2139095040
    %v249 = vshrl.u32 %v248, 23
    %v250 = vsub.s32 %v249, 127
    %v251 = vand.u32 2147483647, %v23
    %v252 = vand.u32 %v251, 8388607
    %v253 = vor.u32 %v252, 8388608
    %v254 = vsub.s32 0, %v253
    %v255 = vadd.s32 %v250, 1
    %vm256 = vcmp.gt.s32.totalorder %v255, 0
    %v257 = vsel %vm256, %v255, 0
    %v258 = vshrl.u32 %v257, 5
    %v259 = vand.u32 %v257, 31
    %v260 = vsub.s32 32, %v259
    %v261 = vshrl.u32 683565275, %v260
    %v262 = vshll.u32 683565275, %v259
    %v263 = vshrl.u32 2475754826, %v260
    %v264 = vor.u32 %v262, %v263
    %v265 = vshll.u32 2475754826, %v259
    %v266 = vshrl.u32 2131351028, %v260
    %v267 = vor.u32 %v265, %v266
    %v268 = vshll.u32 2131351028, %v259
    %v269 = vshrl.u32 2102212464, %v260
    %v270 = vor.u32 %v268, %v269
    %v271 = vshll.u32 2102212464, %v259
    %v272 = vshrl.u32 920167782, %v260
    %v273 = vor.u32 %v271, %v272
    %v274 = vshll.u32 920167782, %v259
    %v275 = vshrl.u32 1326507024, %v260
    %v276 = vor.u32 %v274, %v275
    %vm277 = vcmp.lt.s32.totalorder %v258, 1
    %vm278 = vcmp.lt.s32.totalorder %v258, 2
    %vm279 = vcmp.lt.s32.totalorder %v258, 3
    %vm280 = vcmp.lt.s32.totalorder %v258, 4
    %v281 = vsel %vm277, %v261, %v264
    %v282 = vsel %vm280, %v270, 2102212464
    %v283 = vsel %vm279, %v267, %v282
    %v284 = vsel %vm278, %v281, %v283
    %v285 = vsel %vm277, %v264, %v267
    %v286 = vsel %vm280, %v273, 920167782
    %v287 = vsel %vm279, %v270, %v286
    %v288 = vsel %vm278, %v285, %v287
    %v289 = vsel %vm277, %v267, %v270
    %v290 = vsel %vm280, %v276, 1326507024
    %v291 = vsel %vm279, %v273, %v290
    %v292 = vsel %vm278, %v289, %v291
    %v293 = vshll.u32 %v253, 8
    %v294 = vmul.u32.u64.compose %v293, %v292
    %v295 = vextract.low.u32 %v294
    %v296 = vextract.high.u32 %v294
    %v297 = vmul.u32.u64.compose %v293, %v288
    %v298 = vextract.low.u32 %v297
    %v299 = vextract.high.u32 %v297
    %v300 = vmul.u32 %v293, %v284
    %v301 = vadd.s32 %v296, %v298
    %vm302 = vc.u32 %v296, %v298
    %v303 = vadd.s32 %v299, 1
    %v304 = vsel %vm302, %v303, %v299
    %v305 = vadd.s32 %v300, %v304
    %v306 = vadd.s32 %v305, 536870912
    %v307 = vshrl.u32 %v306, 30
    %v308 = vshll.u32 %v307, 30
    %v309 = vsub.s32 %v305, %v308
    %vm310 = vcmp.lt.s32.totalorder %v309, 0
    %v311 = vsub.s32 0, %v309
    %v312 = vsel %vm310, %v311, %v309
    %v313 = vclz %v312
    %v314 = vsub.s32 %v313, 2
    %vm315 = vcmp.gt.s32.totalorder 0, %v314
    %v316 = vsel %vm315, 0, %v314
    %v317 = vsub.s32 32, %v316
    %v318 = vshll.u32 %v309, %v316
    %v319 = vshrl.u32 %v301, %v317
    %v320 = vor.u32 %v318, %v319
    %v321 = vsub.s32 4294967266, %v316
    %v322 = vadd.s32 %v321, 127
    %v323 = vshll.u32 %v322, 23
    %v324 = vor.u32 4788187, %v323
    %v325 = vand.u32 2147483647, %v324
    %v327 = vcvt.s32.f32 %v320
    %v328 = vmul.f32 %v327, %v325
    %v329 = vxor.u32 %v328, 2147483648
    %v330 = vsel %vm247, %v329, %v328
    %v331 = vsub.s32 4, %v307
    %v332 = vsel %vm247, %v331, %v307
    %v333 = vsel %vm246, %v23, %v330
    %v334 = vsel %vm246, 0, %v332
    %v335 = vcosq.f32.pop %v333
    %v336 = vsinq.f32.pop %v333
    %vm337 = vweird.f32 %v23
    %v338 = vadd.s32 %v334, 3
    %v339 = vand.u32 %v338, 3
    %vm340 = vcmp.lt.s32.totalorder %v339, 2
    %vm341 = vcmp.eq.s32.totalorder %v339, 0
    %v342 = vxor.u32 %v336, 2147483648
    %v343 = vsel %vm341, %v335, %v342
    %vm344 = vcmp.eq.s32.totalorder %v339, 2
    %v345 = vxor.u32 %v335, 2147483648
    %v346 = vsel %vm344, %v345, %v336
    %v347 = vsel %vm340, %v343, %v346
    %v348 = vsel %vm337, nan, %v347
    %v349 = vand.u32 2147483647, %v24
    %vm350 = vcmp.le.f32.partialorder %v349, 0.7853982
    %vm351 = vcmp.lt.s32.totalorder %v24, 0
    %v352 = vand.u32 %v24, 2139095040
    %v353 = vshrl.u32 %v352, 23
    %v354 = vsub.s32 %v353, 127
    %v355 = vand.u32 2147483647, %v24
    %v356 = vand.u32 %v355, 8388607
    %v357 = vor.u32 %v356, 8388608
    %v358 = vsub.s32 0, %v357
    %v359 = vadd.s32 %v354, 1
    %vm360 = vcmp.gt.s32.totalorder %v359, 0
    %v361 = vsel %vm360, %v359, 0
    %v362 = vshrl.u32 %v361, 5
    %v363 = vand.u32 %v361, 31
    %v364 = vsub.s32 32, %v363
    %v365 = vshrl.u32 683565275, %v364
    %v366 = vshll.u32 683565275, %v363
    %v367 = vshrl.u32 2475754826, %v364
    %v368 = vor.u32 %v366, %v367
    %v369 = vshll.u32 2475754826, %v363
    %v370 = vshrl.u32 2131351028, %v364
    %v371 = vor.u32 %v369, %v370
    %v372 = vshll.u32 2131351028, %v363
    %v373 = vshrl.u32 2102212464, %v364
    %v374 = vor.u32 %v372, %v373
    %v375 = vshll.u32 2102212464, %v363
    %v376 = vshrl.u32 920167782, %v364
    %v377 = vor.u32 %v375, %v376
    %v378 = vshll.u32 920167782, %v363
    %v379 = vshrl.u32 1326507024, %v364
    %v380 = vor.u32 %v378, %v379
    %vm381 = vcmp.lt.s32.totalorder %v362, 1
    %vm382 = vcmp.lt.s32.totalorder %v362, 2
    %vm383 = vcmp.lt.s32.totalorder %v362, 3
    %vm384 = vcmp.lt.s32.totalorder %v362, 4
    %v385 = vsel %vm381, %v365, %v368
    %v386 = vsel %vm384, %v374, 2102212464
    %v387 = vsel %vm383, %v371, %v386
    %v388 = vsel %vm382, %v385, %v387
    %v389 = vsel %vm381, %v368, %v371
    %v390 = vsel %vm384, %v377, 920167782
    %v391 = vsel %vm383, %v374, %v390
    %v392 = vsel %vm382, %v389, %v391
    %v393 = vsel %vm381, %v371, %v374
    %v394 = vsel %vm384, %v380, 1326507024
    %v395 = vsel %vm383, %v377, %v394
    %v396 = vsel %vm382, %v393, %v395
    %v397 = vshll.u32 %v357, 8
    %v398 = vmul.u32.u64.compose %v397, %v396
    %v399 = vextract.low.u32 %v398
    %v400 = vextract.high.u32 %v398
    %v401 = vmul.u32.u64.compose %v397, %v392
    %v402 = vextract.low.u32 %v401
    %v403 = vextract.high.u32 %v401
    %v404 = vmul.u32 %v397, %v388
    %v405 = vadd.s32 %v400, %v402
    %vm406 = vc.u32 %v400, %v402
    %v407 = vadd.s32 %v403, 1
    %v408 = vsel %vm406, %v407, %v403
    %v409 = vadd.s32 %v404, %v408
    %v410 = vadd.s32 %v409, 536870912
    %v411 = vshrl.u32 %v410, 30
    %v412 = vshll.u32 %v411, 30
    %v413 = vsub.s32 %v409, %v412
    %vm414 = vcmp.lt.s32.totalorder %v413, 0
    %v415 = vsub.s32 0, %v413
    %v416 = vsel %vm414, %v415, %v413
    %v417 = vclz %v416
    %v418 = vsub.s32 %v417, 2
    %vm419 = vcmp.gt.s32.totalorder 0, %v418
    %v420 = vsel %vm419, 0, %v418
    %v421 = vsub.s32 32, %v420
    %v422 = vshll.u32 %v413, %v420
    %v423 = vshrl.u32 %v405, %v421
    %v424 = vor.u32 %v422, %v423
    %v425 = vsub.s32 4294967266, %v420
    %v426 = vadd.s32 %v425, 127
    %v427 = vshll.u32 %v426, 23
    %v428 = vor.u32 4788187, %v427
    %v429 = vand.u32 2147483647, %v428
    %v431 = vcvt.s32.f32 %v424
    %v432 = vmul.f32 %v431, %v429
    %v433 = vxor.u32 %v432, 2147483648
    %v434 = vsel %vm351, %v433, %v432
    %v435 = vsub.s32 4, %v411
    %v436 = vsel %vm351, %v435, %v411
    %v437 = vsel %vm350, %v24, %v434
    %v438 = vsel %vm350, 0, %v436
    %v439 = vcosq.f32.pop %v437
    %v440 = vsinq.f32.pop %v437
    %vm441 = vweird.f32 %v24
    %v442 = vadd.s32 %v438, 3
    %v443 = vand.u32 %v442, 3
    %vm444 = vcmp.lt.s32.totalorder %v443, 2
    %vm445 = vcmp.eq.s32.totalorder %v443, 0
    %v446 = vxor.u32 %v440, 2147483648
    %v447 = vsel %vm445, %v439, %v446
    %vm448 = vcmp.eq.s32.totalorder %v443, 2
    %v449 = vxor.u32 %v439, 2147483648
    %v450 = vsel %vm448, %v449, %v440
    %v451 = vsel %vm444, %v447, %v450
    %v452 = vsel %vm441, nan, %v451
    %v453 = vand.u32 2147483647, %v25
    %vm454 = vcmp.le.f32.partialorder %v453, 0.7853982
    %vm455 = vcmp.lt.s32.totalorder %v25, 0
    %v456 = vand.u32 %v25, 2139095040
    %v457 = vshrl.u32 %v456, 23
    %v458 = vsub.s32 %v457, 127
    %v459 = vand.u32 2147483647, %v25
    %v460 = vand.u32 %v459, 8388607
    %v461 = vor.u32 %v460, 8388608
    %v462 = vsub.s32 0, %v461
    %v463 = vadd.s32 %v458, 1
    %vm464 = vcmp.gt.s32.totalorder %v463, 0
    %v465 = vsel %vm464, %v463, 0
    %v466 = vshrl.u32 %v465, 5
    %v467 = vand.u32 %v465, 31
    %v468 = vsub.s32 32, %v467
    %v469 = vshrl.u32 683565275, %v468
    %v470 = vshll.u32 683565275, %v467
    %v471 = vshrl.u32 2475754826, %v468
    %v472 = vor.u32 %v470, %v471
    %v473 = vshll.u32 2475754826, %v467
    %v474 = vshrl.u32 2131351028, %v468
    %v475 = vor.u32 %v473, %v474
    %v476 = vshll.u32 2131351028, %v467
    %v477 = vshrl.u32 2102212464, %v468
    %v478 = vor.u32 %v476, %v477
    %v479 = vshll.u32 2102212464, %v467
    %v480 = vshrl.u32 920167782, %v468
    %v481 = vor.u32 %v479, %v480
    %v482 = vshll.u32 920167782, %v467
    %v483 = vshrl.u32 1326507024, %v468
    %v484 = vor.u32 %v482, %v483
    %vm485 = vcmp.lt.s32.totalorder %v466, 1
    %vm486 = vcmp.lt.s32.totalorder %v466, 2
    %vm487 = vcmp.lt.s32.totalorder %v466, 3
    %vm488 = vcmp.lt.s32.totalorder %v466, 4
    %v489 = vsel %vm485, %v469, %v472
    %v490 = vsel %vm488, %v478, 2102212464
    %v491 = vsel %vm487, %v475, %v490
    %v492 = vsel %vm486, %v489, %v491
    %v493 = vsel %vm485, %v472, %v475
    %v494 = vsel %vm488, %v481, 920167782
    %v495 = vsel %vm487, %v478, %v494
    %v496 = vsel %vm486, %v493, %v495
    %v497 = vsel %vm485, %v475, %v478
    %v498 = vsel %vm488, %v484, 1326507024
    %v499 = vsel %vm487, %v481, %v498
    %v500 = vsel %vm486, %v497, %v499
    %v501 = vshll.u32 %v461, 8
    %v502 = vmul.u32.u64.compose %v501, %v500
    %v503 = vextract.low.u32 %v502
    %v504 = vextract.high.u32 %v502
    %v505 = vmul.u32.u64.compose %v501, %v496
    %v506 = vextract.low.u32 %v505
    %v507 = vextract.high.u32 %v505
    %v508 = vmul.u32 %v501, %v492
    %v509 = vadd.s32 %v504, %v506
    %vm510 = vc.u32 %v504, %v506
    %v511 = vadd.s32 %v507, 1
    %v512 = vsel %vm510, %v511, %v507
    %v513 = vadd.s32 %v508, %v512
    %v514 = vadd.s32 %v513, 536870912
    %v515 = vshrl.u32 %v514, 30
    %v516 = vshll.u32 %v515, 30
    %v517 = vsub.s32 %v513, %v516
    %vm518 = vcmp.lt.s32.totalorder %v517, 0
    %v519 = vsub.s32 0, %v517
    %v520 = vsel %vm518, %v519, %v517
    %v521 = vclz %v520
    %v522 = vsub.s32 %v521, 2
    %vm523 = vcmp.gt.s32.totalorder 0, %v522
    %v524 = vsel %vm523, 0, %v522
    %v525 = vsub.s32 32, %v524
    %v526 = vshll.u32 %v517, %v524
    %v527 = vshrl.u32 %v509, %v525
    %v528 = vor.u32 %v526, %v527
    %v529 = vsub.s32 4294967266, %v524
    %v530 = vadd.s32 %v529, 127
    %v531 = vshll.u32 %v530, 23
    %v532 = vor.u32 4788187, %v531
    %v533 = vand.u32 2147483647, %v532
    %v535 = vcvt.s32.f32 %v528
    %v536 = vmul.f32 %v535, %v533
    %v537 = vxor.u32 %v536, 2147483648
    %v538 = vsel %vm455, %v537, %v536
    %v539 = vsub.s32 4, %v515
    %v540 = vsel %vm455, %v539, %v515
    %v541 = vsel %vm454, %v25, %v538
    %v542 = vsel %vm454, 0, %v540
    %v543 = vcosq.f32.pop %v541
    %v544 = vsinq.f32.pop %v541
    %vm545 = vweird.f32 %v25
    %v546 = vadd.s32 %v542, 3
    %v547 = vand.u32 %v546, 3
    %vm548 = vcmp.lt.s32.totalorder %v547, 2
    %vm549 = vcmp.eq.s32.totalorder %v547, 0
    %v550 = vxor.u32 %v544, 2147483648
    %v551 = vsel %vm549, %v543, %v550
    %vm552 = vcmp.eq.s32.totalorder %v547, 2
    %v553 = vxor.u32 %v543, 2147483648
    %v554 = vsel %vm552, %v553, %v544
    %v555 = vsel %vm548, %v551, %v554
    %v556 = vsel %vm545, nan, %v555
    %v557 = vand.u32 2147483647, %v26
    %vm558 = vcmp.le.f32.partialorder %v557, 0.7853982
    %vm559 = vcmp.lt.s32.totalorder %v26, 0
    %v560 = vand.u32 %v26, 2139095040
    %v561 = vshrl.u32 %v560, 23
    %v562 = vsub.s32 %v561, 127
    %v563 = vand.u32 2147483647, %v26
    %v564 = vand.u32 %v563, 8388607
    %v565 = vor.u32 %v564, 8388608
    %v566 = vsub.s32 0, %v565
    %v567 = vadd.s32 %v562, 1
    %vm568 = vcmp.gt.s32.totalorder %v567, 0
    %v569 = vsel %vm568, %v567, 0
    %v570 = vshrl.u32 %v569, 5
    %v571 = vand.u32 %v569, 31
    %v572 = vsub.s32 32, %v571
    %v573 = vshrl.u32 683565275, %v572
    %v574 = vshll.u32 683565275, %v571
    %v575 = vshrl.u32 2475754826, %v572
    %v576 = vor.u32 %v574, %v575
    %v577 = vshll.u32 2475754826, %v571
    %v578 = vshrl.u32 2131351028, %v572
    %v579 = vor.u32 %v577, %v578
    %v580 = vshll.u32 2131351028, %v571
    %v581 = vshrl.u32 2102212464, %v572
    %v582 = vor.u32 %v580, %v581
    %v583 = vshll.u32 2102212464, %v571
    %v584 = vshrl.u32 920167782, %v572
    %v585 = vor.u32 %v583, %v584
    %v586 = vshll.u32 920167782, %v571
    %v587 = vshrl.u32 1326507024, %v572
    %v588 = vor.u32 %v586, %v587
    %vm589 = vcmp.lt.s32.totalorder %v570, 1
    %vm590 = vcmp.lt.s32.totalorder %v570, 2
    %vm591 = vcmp.lt.s32.totalorder %v570, 3
    %vm592 = vcmp.lt.s32.totalorder %v570, 4
    %v593 = vsel %vm589, %v573, %v576
    %v594 = vsel %vm592, %v582, 2102212464
    %v595 = vsel %vm591, %v579, %v594
    %v596 = vsel %vm590, %v593, %v595
    %v597 = vsel %vm589, %v576, %v579
    %v598 = vsel %vm592, %v585, 920167782
    %v599 = vsel %vm591, %v582, %v598
    %v600 = vsel %vm590, %v597, %v599
    %v601 = vsel %vm589, %v579, %v582
    %v602 = vsel %vm592, %v588, 1326507024
    %v603 = vsel %vm591, %v585, %v602
    %v604 = vsel %vm590, %v601, %v603
    %v605 = vshll.u32 %v565, 8
    %v606 = vmul.u32.u64.compose %v605, %v604
    %v607 = vextract.low.u32 %v606
    %v608 = vextract.high.u32 %v606
    %v609 = vmul.u32.u64.compose %v605, %v600
    %v610 = vextract.low.u32 %v609
    %v611 = vextract.high.u32 %v609
    %v612 = vmul.u32 %v605, %v596
    %v613 = vadd.s32 %v608, %v610
    %vm614 = vc.u32 %v608, %v610
    %v615 = vadd.s32 %v611, 1
    %v616 = vsel %vm614, %v615, %v611
    %v617 = vadd.s32 %v612, %v616
    %v618 = vadd.s32 %v617, 536870912
    %v619 = vshrl.u32 %v618, 30
    %v620 = vshll.u32 %v619, 30
    %v621 = vsub.s32 %v617, %v620
    %vm622 = vcmp.lt.s32.totalorder %v621, 0
    %v623 = vsub.s32 0, %v621
    %v624 = vsel %vm622, %v623, %v621
    %v625 = vclz %v624
    %v626 = vsub.s32 %v625, 2
    %vm627 = vcmp.gt.s32.totalorder 0, %v626
    %v628 = vsel %vm627, 0, %v626
    %v629 = vsub.s32 32, %v628
    %v630 = vshll.u32 %v621, %v628
    %v631 = vshrl.u32 %v613, %v629
    %v632 = vor.u32 %v630, %v631
    %v633 = vsub.s32 4294967266, %v628
    %v634 = vadd.s32 %v633, 127
    %v635 = vshll.u32 %v634, 23
    %v636 = vor.u32 4788187, %v635
    %v637 = vand.u32 2147483647, %v636
    %v639 = vcvt.s32.f32 %v632
    %v640 = vmul.f32 %v639, %v637
    %v641 = vxor.u32 %v640, 2147483648
    %v642 = vsel %vm559, %v641, %v640
    %v643 = vsub.s32 4, %v619
    %v644 = vsel %vm559, %v643, %v619
    %v645 = vsel %vm558, %v26, %v642
    %v646 = vsel %vm558, 0, %v644
    %v647 = vcosq.f32.pop %v645
    %v648 = vsinq.f32.pop %v645
    %vm649 = vweird.f32 %v26
    %v650 = vadd.s32 %v646, 3
    %v651 = vand.u32 %v650, 3
    %vm652 = vcmp.lt.s32.totalorder %v651, 2
    %vm653 = vcmp.eq.s32.totalorder %v651, 0
    %v654 = vxor.u32 %v648, 2147483648
    %v655 = vsel %vm653, %v647, %v654
    %vm656 = vcmp.eq.s32.totalorder %v651, 2
    %v657 = vxor.u32 %v647, 2147483648
    %v658 = vsel %vm656, %v657, %v648
    %v659 = vsel %vm652, %v655, %v658
    %v660 = vsel %vm649, nan, %v659
    %v661 = vand.u32 2147483647, %v27
    %vm662 = vcmp.le.f32.partialorder %v661, 0.7853982
    %vm663 = vcmp.lt.s32.totalorder %v27, 0
    %v664 = vand.u32 %v27, 2139095040
    %v665 = vshrl.u32 %v664, 23
    %v666 = vsub.s32 %v665, 127
    %v667 = vand.u32 2147483647, %v27
    %v668 = vand.u32 %v667, 8388607
    %v669 = vor.u32 %v668, 8388608
    %v670 = vsub.s32 0, %v669
    %v671 = vadd.s32 %v666, 1
    %vm672 = vcmp.gt.s32.totalorder %v671, 0
    %v673 = vsel %vm672, %v671, 0
    %v674 = vshrl.u32 %v673, 5
    %v675 = vand.u32 %v673, 31
    %v676 = vsub.s32 32, %v675
    %v677 = vshrl.u32 683565275, %v676
    %v678 = vshll.u32 683565275, %v675
    %v679 = vshrl.u32 2475754826, %v676
    %v680 = vor.u32 %v678, %v679
    %v681 = vshll.u32 2475754826, %v675
    %v682 = vshrl.u32 2131351028, %v676
    %v683 = vor.u32 %v681, %v682
    %v684 = vshll.u32 2131351028, %v675
    %v685 = vshrl.u32 2102212464, %v676
    %v686 = vor.u32 %v684, %v685
    %v687 = vshll.u32 2102212464, %v675
    %v688 = vshrl.u32 920167782, %v676
    %v689 = vor.u32 %v687, %v688
    %v690 = vshll.u32 920167782, %v675
    %v691 = vshrl.u32 1326507024, %v676
    %v692 = vor.u32 %v690, %v691
    %vm693 = vcmp.lt.s32.totalorder %v674, 1
    %vm694 = vcmp.lt.s32.totalorder %v674, 2
    %vm695 = vcmp.lt.s32.totalorder %v674, 3
    %vm696 = vcmp.lt.s32.totalorder %v674, 4
    %v697 = vsel %vm693, %v677, %v680
    %v698 = vsel %vm696, %v686, 2102212464
    %v699 = vsel %vm695, %v683, %v698
    %v700 = vsel %vm694, %v697, %v699
    %v701 = vsel %vm693, %v680, %v683
    %v702 = vsel %vm696, %v689, 920167782
    %v703 = vsel %vm695, %v686, %v702
    %v704 = vsel %vm694, %v701, %v703
    %v705 = vsel %vm693, %v683, %v686
    %v706 = vsel %vm696, %v692, 1326507024
    %v707 = vsel %vm695, %v689, %v706
    %v708 = vsel %vm694, %v705, %v707
    %v709 = vshll.u32 %v669, 8
    %v710 = vmul.u32.u64.compose %v709, %v708
    %v711 = vextract.low.u32 %v710
    %v712 = vextract.high.u32 %v710
    %v713 = vmul.u32.u64.compose %v709, %v704
    %v714 = vextract.low.u32 %v713
    %v715 = vextract.high.u32 %v713
    %v716 = vmul.u32 %v709, %v700
    %v717 = vadd.s32 %v712, %v714
    %vm718 = vc.u32 %v712, %v714
    %v719 = vadd.s32 %v715, 1
    %v720 = vsel %vm718, %v719, %v715
    %v721 = vadd.s32 %v716, %v720
    %v722 = vadd.s32 %v721, 536870912
    %v723 = vshrl.u32 %v722, 30
    %v724 = vshll.u32 %v723, 30
    %v725 = vsub.s32 %v721, %v724
    %vm726 = vcmp.lt.s32.totalorder %v725, 0
    %v727 = vsub.s32 0, %v725
    %v728 = vsel %vm726, %v727, %v725
    %v729 = vclz %v728
    %v730 = vsub.s32 %v729, 2
    %vm731 = vcmp.gt.s32.totalorder 0, %v730
    %v732 = vsel %vm731, 0, %v730
    %v733 = vsub.s32 32, %v732
    %v734 = vshll.u32 %v725, %v732
    %v735 = vshrl.u32 %v717, %v733
    %v736 = vor.u32 %v734, %v735
    %v737 = vsub.s32 4294967266, %v732
    %v738 = vadd.s32 %v737, 127
    %v739 = vshll.u32 %v738, 23
    %v740 = vor.u32 4788187, %v739
    %v741 = vand.u32 2147483647, %v740
    %v743 = vcvt.s32.f32 %v736
    %v744 = vmul.f32 %v743, %v741
    %v745 = vxor.u32 %v744, 2147483648
    %v746 = vsel %vm663, %v745, %v744
    %v747 = vsub.s32 4, %v723
    %v748 = vsel %vm663, %v747, %v723
    %v749 = vsel %vm662, %v27, %v746
    %v750 = vsel %vm662, 0, %v748
    %v751 = vcosq.f32.pop %v749
    %v752 = vsinq.f32.pop %v749
    %vm753 = vweird.f32 %v27
    %v754 = vadd.s32 %v750, 3
    %v755 = vand.u32 %v754, 3
    %vm756 = vcmp.lt.s32.totalorder %v755, 2
    %vm757 = vcmp.eq.s32.totalorder %v755, 0
    %v758 = vxor.u32 %v752, 2147483648
    %v759 = vsel %vm757, %v751, %v758
    %vm760 = vcmp.eq.s32.totalorder %v755, 2
    %v761 = vxor.u32 %v751, 2147483648
    %v762 = vsel %vm760, %v761, %v752
    %v763 = vsel %vm756, %v759, %v762
    %v764 = vsel %vm753, nan, %v763
    %v765 = vand.u32 2147483647, %v28
    %vm766 = vcmp.le.f32.partialorder %v765, 0.7853982
    %vm767 = vcmp.lt.s32.totalorder %v28, 0
    %v768 = vand.u32 %v28, 2139095040
    %v769 = vshrl.u32 %v768, 23
    %v770 = vsub.s32 %v769, 127
    %v771 = vand.u32 2147483647, %v28
    %v772 = vand.u32 %v771, 8388607
    %v773 = vor.u32 %v772, 8388608
    %v774 = vsub.s32 0, %v773
    %v775 = vadd.s32 %v770, 1
    %vm776 = vcmp.gt.s32.totalorder %v775, 0
    %v777 = vsel %vm776, %v775, 0
    %v778 = vshrl.u32 %v777, 5
    %v779 = vand.u32 %v777, 31
    %v780 = vsub.s32 32, %v779
    %v781 = vshrl.u32 683565275, %v780
    %v782 = vshll.u32 683565275, %v779
    %v783 = vshrl.u32 2475754826, %v780
    %v784 = vor.u32 %v782, %v783
    %v785 = vshll.u32 2475754826, %v779
    %v786 = vshrl.u32 2131351028, %v780
    %v787 = vor.u32 %v785, %v786
    %v788 = vshll.u32 2131351028, %v779
    %v789 = vshrl.u32 2102212464, %v780
    %v790 = vor.u32 %v788, %v789
    %v791 = vshll.u32 2102212464, %v779
    %v792 = vshrl.u32 920167782, %v780
    %v793 = vor.u32 %v791, %v792
    %v794 = vshll.u32 920167782, %v779
    %v795 = vshrl.u32 1326507024, %v780
    %v796 = vor.u32 %v794, %v795
    %vm797 = vcmp.lt.s32.totalorder %v778, 1
    %vm798 = vcmp.lt.s32.totalorder %v778, 2
    %vm799 = vcmp.lt.s32.totalorder %v778, 3
    %vm800 = vcmp.lt.s32.totalorder %v778, 4
    %v801 = vsel %vm797, %v781, %v784
    %v802 = vsel %vm800, %v790, 2102212464
    %v803 = vsel %vm799, %v787, %v802
    %v804 = vsel %vm798, %v801, %v803
    %v805 = vsel %vm797, %v784, %v787
    %v806 = vsel %vm800, %v793, 920167782
    %v807 = vsel %vm799, %v790, %v806
    %v808 = vsel %vm798, %v805, %v807
    %v809 = vsel %vm797, %v787, %v790
    %v810 = vsel %vm800, %v796, 1326507024
    %v811 = vsel %vm799, %v793, %v810
    %v812 = vsel %vm798, %v809, %v811
    %v813 = vshll.u32 %v773, 8
    %v814 = vmul.u32.u64.compose %v813, %v812
    %v815 = vextract.low.u32 %v814
    %v816 = vextract.high.u32 %v814
    %v817 = vmul.u32.u64.compose %v813, %v808
    %v818 = vextract.low.u32 %v817
    %v819 = vextract.high.u32 %v817
    %v820 = vmul.u32 %v813, %v804
    %v821 = vadd.s32 %v816, %v818
    %vm822 = vc.u32 %v816, %v818
    %v823 = vadd.s32 %v819, 1
    %v824 = vsel %vm822, %v823, %v819
    %v825 = vadd.s32 %v820, %v824
    %v826 = vadd.s32 %v825, 536870912
    %v827 = vshrl.u32 %v826, 30
    %v828 = vshll.u32 %v827, 30
    %v829 = vsub.s32 %v825, %v828
    %vm830 = vcmp.lt.s32.totalorder %v829, 0
    %v831 = vsub.s32 0, %v829
    %v832 = vsel %vm830, %v831, %v829
    %v833 = vclz %v832
    %v834 = vsub.s32 %v833, 2
    %vm835 = vcmp.gt.s32.totalorder 0, %v834
    %v836 = vsel %vm835, 0, %v834
    %v837 = vsub.s32 32, %v836
    %v838 = vshll.u32 %v829, %v836
    %v839 = vshrl.u32 %v821, %v837
    %v840 = vor.u32 %v838, %v839
    %v841 = vsub.s32 4294967266, %v836
    %v842 = vadd.s32 %v841, 127
    %v843 = vshll.u32 %v842, 23
    %v844 = vor.u32 4788187, %v843
    %v845 = vand.u32 2147483647, %v844
    %v847 = vcvt.s32.f32 %v840
    %v848 = vmul.f32 %v847, %v845
    %v849 = vxor.u32 %v848, 2147483648
    %v850 = vsel %vm767, %v849, %v848
    %v851 = vsub.s32 4, %v827
    %v852 = vsel %vm767, %v851, %v827
    %v853 = vsel %vm766, %v28, %v850
    %v854 = vsel %vm766, 0, %v852
    %v855 = vcosq.f32.pop %v853
    %v856 = vsinq.f32.pop %v853
    %vm857 = vweird.f32 %v28
    %v858 = vadd.s32 %v854, 3
    %v859 = vand.u32 %v858, 3
    %vm860 = vcmp.lt.s32.totalorder %v859, 2
    %vm861 = vcmp.eq.s32.totalorder %v859, 0
    %v862 = vxor.u32 %v856, 2147483648
    %v863 = vsel %vm861, %v855, %v862
    %vm864 = vcmp.eq.s32.totalorder %v859, 2
    %v865 = vxor.u32 %v855, 2147483648
    %v866 = vsel %vm864, %v865, %v856
    %v867 = vsel %vm860, %v863, %v866
    %v868 = vsel %vm857, nan, %v867
    %s869 = scalar_lea.vmem [#allocation5], 64
    %870 = vst [vmem:[%s869] sm:$0xff] %v140
    %871 = vst [vmem:[%s869 + $0x8] sm:$0xff] %v244
    %872 = vst [vmem:[%s869 + $0x10] sm:$0xff] %v348
    %873 = vst [vmem:[%s869 + $0x18] sm:$0xff] %v452
    %874 = vst [vmem:[%s869 + $0x20] sm:$0xff] %v556
    %875 = vst [vmem:[%s869 + $0x28] sm:$0xff] %v660
    %876 = vst [vmem:[%s869 + $0x30] sm:$0xff] %v764
    %877 = vst [vmem:[%s869 + $0x38] sm:$0xff] %v868
    %v878 = vand.u32 2147483647, %v21
    %vm879 = vcmp.le.f32.partialorder %v878, 0.7853982
    %vm880 = vcmp.lt.s32.totalorder %v21, 0
    %v881 = vand.u32 %v21, 2139095040
    %v882 = vshrl.u32 %v881, 23
    %v883 = vsub.s32 %v882, 127
    %v884 = vand.u32 2147483647, %v21
    %v885 = vand.u32 %v884, 8388607
    %v886 = vor.u32 %v885, 8388608
    %v887 = vsub.s32 0, %v886
    %v888 = vadd.s32 %v883, 1
    %vm889 = vcmp.gt.s32.totalorder %v888, 0
    %v890 = vsel %vm889, %v888, 0
    %v891 = vshrl.u32 %v890, 5
    %v892 = vand.u32 %v890, 31
    %v893 = vsub.s32 32, %v892
    %v894 = vshrl.u32 683565275, %v893
    %v895 = vshll.u32 683565275, %v892
    %v896 = vshrl.u32 2475754826, %v893
    %v897 = vor.u32 %v895, %v896
    %v898 = vshll.u32 2475754826, %v892
    %v899 = vshrl.u32 2131351028, %v893
    %v900 = vor.u32 %v898, %v899
    %v901 = vshll.u32 2131351028, %v892
    %v902 = vshrl.u32 2102212464, %v893
    %v903 = vor.u32 %v901, %v902
    %v904 = vshll.u32 2102212464, %v892
    %v905 = vshrl.u32 920167782, %v893
    %v906 = vor.u32 %v904, %v905
    %v907 = vshll.u32 920167782, %v892
    %v908 = vshrl.u32 1326507024, %v893
    %v909 = vor.u32 %v907, %v908
    %vm910 = vcmp.lt.s32.totalorder %v891, 1
    %vm911 = vcmp.lt.s32.totalorder %v891, 2
    %vm912 = vcmp.lt.s32.totalorder %v891, 3
    %vm913 = vcmp.lt.s32.totalorder %v891, 4
    %v914 = vsel %vm910, %v894, %v897
    %v915 = vsel %vm913, %v903, 2102212464
    %v916 = vsel %vm912, %v900, %v915
    %v917 = vsel %vm911, %v914, %v916
    %v918 = vsel %vm910, %v897, %v900
    %v919 = vsel %vm913, %v906, 920167782
    %v920 = vsel %vm912, %v903, %v919
    %v921 = vsel %vm911, %v918, %v920
    %v922 = vsel %vm910, %v900, %v903
    %v923 = vsel %vm913, %v909, 1326507024
    %v924 = vsel %vm912, %v906, %v923
    %v925 = vsel %vm911, %v922, %v924
    %v926 = vshll.u32 %v886, 8
    %v927 = vmul.u32.u64.compose %v926, %v925
    %v928 = vextract.low.u32 %v927
    %v929 = vextract.high.u32 %v927
    %v930 = vmul.u32.u64.compose %v926, %v921
    %v931 = vextract.low.u32 %v930
    %v932 = vextract.high.u32 %v930
    %v933 = vmul.u32 %v926, %v917
    %v934 = vadd.s32 %v929, %v931
    %vm935 = vc.u32 %v929, %v931
    %v936 = vadd.s32 %v932, 1
    %v937 = vsel %vm935, %v936, %v932
    %v938 = vadd.s32 %v933, %v937
    %v939 = vadd.s32 %v938, 536870912
    %v940 = vshrl.u32 %v939, 30
    %v941 = vshll.u32 %v940, 30
    %v942 = vsub.s32 %v938, %v941
    %vm943 = vcmp.lt.s32.totalorder %v942, 0
    %v944 = vsub.s32 0, %v942
    %v945 = vsel %vm943, %v944, %v942
    %v946 = vclz %v945
    %v947 = vsub.s32 %v946, 2
    %vm948 = vcmp.gt.s32.totalorder 0, %v947
    %v949 = vsel %vm948, 0, %v947
    %v950 = vsub.s32 32, %v949
    %v951 = vshll.u32 %v942, %v949
    %v952 = vshrl.u32 %v934, %v950
    %v953 = vor.u32 %v951, %v952
    %v954 = vsub.s32 4294967266, %v949
    %v955 = vadd.s32 %v954, 127
    %v956 = vshll.u32 %v955, 23
    %v957 = vor.u32 4788187, %v956
    %v958 = vand.u32 2147483647, %v957
    %v960 = vcvt.s32.f32 %v953
    %v961 = vmul.f32 %v960, %v958
    %v962 = vxor.u32 %v961, 2147483648
    %v963 = vsel %vm880, %v962, %v961
    %v964 = vsub.s32 4, %v940
    %v965 = vsel %vm880, %v964, %v940
    %v966 = vsel %vm879, %v21, %v963
    %v967 = vsel %vm879, 0, %v965
    %v968 = vcosq.f32.pop %v966
    %v969 = vsinq.f32.pop %v966
    %vm970 = vweird.f32 %v21
    %v971 = vand.u32 %v967, 3
    %vm972 = vcmp.lt.s32.totalorder %v971, 2
    %vm973 = vcmp.eq.s32.totalorder %v971, 0
    %v974 = vxor.u32 %v969, 2147483648
    %v975 = vsel %vm973, %v968, %v974
    %vm976 = vcmp.eq.s32.totalorder %v971, 2
    %v977 = vxor.u32 %v968, 2147483648
    %v978 = vsel %vm976, %v977, %v969
    %v979 = vsel %vm972, %v975, %v978
    %v980 = vsel %vm970, nan, %v979
    %v981 = vand.u32 2147483647, %v22
    %vm982 = vcmp.le.f32.partialorder %v981, 0.7853982
    %vm983 = vcmp.lt.s32.totalorder %v22, 0
    %v984 = vand.u32 %v22, 2139095040
    %v985 = vshrl.u32 %v984, 23
    %v986 = vsub.s32 %v985, 127
    %v987 = vand.u32 2147483647, %v22
    %v988 = vand.u32 %v987, 8388607
    %v989 = vor.u32 %v988, 8388608
    %v990 = vsub.s32 0, %v989
    %v991 = vadd.s32 %v986, 1
    %vm992 = vcmp.gt.s32.totalorder %v991, 0
    %v993 = vsel %vm992, %v991, 0
    %v994 = vshrl.u32 %v993, 5
    %v995 = vand.u32 %v993, 31
    %v996 = vsub.s32 32, %v995
    %v997 = vshrl.u32 683565275, %v996
    %v998 = vshll.u32 683565275, %v995
    %v999 = vshrl.u32 2475754826, %v996
    %v1000 = vor.u32 %v998, %v999
    %v1001 = vshll.u32 2475754826, %v995
    %v1002 = vshrl.u32 2131351028, %v996
    %v1003 = vor.u32 %v1001, %v1002
    %v1004 = vshll.u32 2131351028, %v995
    %v1005 = vshrl.u32 2102212464, %v996
    %v1006 = vor.u32 %v1004, %v1005
    %v1007 = vshll.u32 2102212464, %v995
    %v1008 = vshrl.u32 920167782, %v996
    %v1009 = vor.u32 %v1007, %v1008
    %v1010 = vshll.u32 920167782, %v995
    %v1011 = vshrl.u32 1326507024, %v996
    %v1012 = vor.u32 %v1010, %v1011
    %vm1013 = vcmp.lt.s32.totalorder %v994, 1
    %vm1014 = vcmp.lt.s32.totalorder %v994, 2
    %vm1015 = vcmp.lt.s32.totalorder %v994, 3
    %vm1016 = vcmp.lt.s32.totalorder %v994, 4
    %v1017 = vsel %vm1013, %v997, %v1000
    %v1018 = vsel %vm1016, %v1006, 2102212464
    %v1019 = vsel %vm1015, %v1003, %v1018
    %v1020 = vsel %vm1014, %v1017, %v1019
    %v1021 = vsel %vm1013, %v1000, %v1003
    %v1022 = vsel %vm1016, %v1009, 920167782
    %v1023 = vsel %vm1015, %v1006, %v1022
    %v1024 = vsel %vm1014, %v1021, %v1023
    %v1025 = vsel %vm1013, %v1003, %v1006
    %v1026 = vsel %vm1016, %v1012, 1326507024
    %v1027 = vsel %vm1015, %v1009, %v1026
    %v1028 = vsel %vm1014, %v1025, %v1027
    %v1029 = vshll.u32 %v989, 8
    %v1030 = vmul.u32.u64.compose %v1029, %v1028
    %v1031 = vextract.low.u32 %v1030
    %v1032 = vextract.high.u32 %v1030
    %v1033 = vmul.u32.u64.compose %v1029, %v1024
    %v1034 = vextract.low.u32 %v1033
    %v1035 = vextract.high.u32 %v1033
    %v1036 = vmul.u32 %v1029, %v1020
    %v1037 = vadd.s32 %v1032, %v1034
    %vm1038 = vc.u32 %v1032, %v1034
    %v1039 = vadd.s32 %v1035, 1
    %v1040 = vsel %vm1038, %v1039, %v1035
    %v1041 = vadd.s32 %v1036, %v1040
    %v1042 = vadd.s32 %v1041, 536870912
    %v1043 = vshrl.u32 %v1042, 30
    %v1044 = vshll.u32 %v1043, 30
    %v1045 = vsub.s32 %v1041, %v1044
    %vm1046 = vcmp.lt.s32.totalorder %v1045, 0
    %v1047 = vsub.s32 0, %v1045
    %v1048 = vsel %vm1046, %v1047, %v1045
    %v1049 = vclz %v1048
    %v1050 = vsub.s32 %v1049, 2
    %vm1051 = vcmp.gt.s32.totalorder 0, %v1050
    %v1052 = vsel %vm1051, 0, %v1050
    %v1053 = vsub.s32 32, %v1052
    %v1054 = vshll.u32 %v1045, %v1052
    %v1055 = vshrl.u32 %v1037, %v1053
    %v1056 = vor.u32 %v1054, %v1055
    %v1057 = vsub.s32 4294967266, %v1052
    %v1058 = vadd.s32 %v1057, 127
    %v1059 = vshll.u32 %v1058, 23
    %v1060 = vor.u32 4788187, %v1059
    %v1061 = vand.u32 2147483647, %v1060
    %v1063 = vcvt.s32.f32 %v1056
    %v1064 = vmul.f32 %v1063, %v1061
    %v1065 = vxor.u32 %v1064, 2147483648
    %v1066 = vsel %vm983, %v1065, %v1064
    %v1067 = vsub.s32 4, %v1043
    %v1068 = vsel %vm983, %v1067, %v1043
    %v1069 = vsel %vm982, %v22, %v1066
    %v1070 = vsel %vm982, 0, %v1068
    %v1071 = vcosq.f32.pop %v1069
    %v1072 = vsinq.f32.pop %v1069
    %vm1073 = vweird.f32 %v22
    %v1074 = vand.u32 %v1070, 3
    %vm1075 = vcmp.lt.s32.totalorder %v1074, 2
    %vm1076 = vcmp.eq.s32.totalorder %v1074, 0
    %v1077 = vxor.u32 %v1072, 2147483648
    %v1078 = vsel %vm1076, %v1071, %v1077
    %vm1079 = vcmp.eq.s32.totalorder %v1074, 2
    %v1080 = vxor.u32 %v1071, 2147483648
    %v1081 = vsel %vm1079, %v1080, %v1072
    %v1082 = vsel %vm1075, %v1078, %v1081
    %v1083 = vsel %vm1073, nan, %v1082
    %v1084 = vand.u32 2147483647, %v23
    %vm1085 = vcmp.le.f32.partialorder %v1084, 0.7853982
    %vm1086 = vcmp.lt.s32.totalorder %v23, 0
    %v1087 = vand.u32 %v23, 2139095040
    %v1088 = vshrl.u32 %v1087, 23
    %v1089 = vsub.s32 %v1088, 127
    %v1090 = vand.u32 2147483647, %v23
    %v1091 = vand.u32 %v1090, 8388607
    %v1092 = vor.u32 %v1091, 8388608
    %v1093 = vsub.s32 0, %v1092
    %v1094 = vadd.s32 %v1089, 1
    %vm1095 = vcmp.gt.s32.totalorder %v1094, 0
    %v1096 = vsel %vm1095, %v1094, 0
    %v1097 = vshrl.u32 %v1096, 5
    %v1098 = vand.u32 %v1096, 31
    %v1099 = vsub.s32 32, %v1098
    %v1100 = vshrl.u32 683565275, %v1099
    %v1101 = vshll.u32 683565275, %v1098
    %v1102 = vshrl.u32 2475754826, %v1099
    %v1103 = vor.u32 %v1101, %v1102
    %v1104 = vshll.u32 2475754826, %v1098
    %v1105 = vshrl.u32 2131351028, %v1099
    %v1106 = vor.u32 %v1104, %v1105
    %v1107 = vshll.u32 2131351028, %v1098
    %v1108 = vshrl.u32 2102212464, %v1099
    %v1109 = vor.u32 %v1107, %v1108
    %v1110 = vshll.u32 2102212464, %v1098
    %v1111 = vshrl.u32 920167782, %v1099
    %v1112 = vor.u32 %v1110, %v1111
    %v1113 = vshll.u32 920167782, %v1098
    %v1114 = vshrl.u32 1326507024, %v1099
    %v1115 = vor.u32 %v1113, %v1114
    %vm1116 = vcmp.lt.s32.totalorder %v1097, 1
    %vm1117 = vcmp.lt.s32.totalorder %v1097, 2
    %vm1118 = vcmp.lt.s32.totalorder %v1097, 3
    %vm1119 = vcmp.lt.s32.totalorder %v1097, 4
    %v1120 = vsel %vm1116, %v1100, %v1103
    %v1121 = vsel %vm1119, %v1109, 2102212464
    %v1122 = vsel %vm1118, %v1106, %v1121
    %v1123 = vsel %vm1117, %v1120, %v1122
    %v1124 = vsel %vm1116, %v1103, %v1106
    %v1125 = vsel %vm1119, %v1112, 920167782
    %v1126 = vsel %vm1118, %v1109, %v1125
    %v1127 = vsel %vm1117, %v1124, %v1126
    %v1128 = vsel %vm1116, %v1106, %v1109
    %v1129 = vsel %vm1119, %v1115, 1326507024
    %v1130 = vsel %vm1118, %v1112, %v1129
    %v1131 = vsel %vm1117, %v1128, %v1130
    %v1132 = vshll.u32 %v1092, 8
    %v1133 = vmul.u32.u64.compose %v1132, %v1131
    %v1134 = vextract.low.u32 %v1133
    %v1135 = vextract.high.u32 %v1133
    %v1136 = vmul.u32.u64.compose %v1132, %v1127
    %v1137 = vextract.low.u32 %v1136
    %v1138 = vextract.high.u32 %v1136
    %v1139 = vmul.u32 %v1132, %v1123
    %v1140 = vadd.s32 %v1135, %v1137
    %vm1141 = vc.u32 %v1135, %v1137
    %v1142 = vadd.s32 %v1138, 1
    %v1143 = vsel %vm1141, %v1142, %v1138
    %v1144 = vadd.s32 %v1139, %v1143
    %v1145 = vadd.s32 %v1144, 536870912
    %v1146 = vshrl.u32 %v1145, 30
    %v1147 = vshll.u32 %v1146, 30
    %v1148 = vsub.s32 %v1144, %v1147
    %vm1149 = vcmp.lt.s32.totalorder %v1148, 0
    %v1150 = vsub.s32 0, %v1148
    %v1151 = vsel %vm1149, %v1150, %v1148
    %v1152 = vclz %v1151
    %v1153 = vsub.s32 %v1152, 2
    %vm1154 = vcmp.gt.s32.totalorder 0, %v1153
    %v1155 = vsel %vm1154, 0, %v1153
    %v1156 = vsub.s32 32, %v1155
    %v1157 = vshll.u32 %v1148, %v1155
    %v1158 = vshrl.u32 %v1140, %v1156
    %v1159 = vor.u32 %v1157, %v1158
    %v1160 = vsub.s32 4294967266, %v1155
    %v1161 = vadd.s32 %v1160, 127
    %v1162 = vshll.u32 %v1161, 23
    %v1163 = vor.u32 4788187, %v1162
    %v1164 = vand.u32 2147483647, %v1163
    %v1166 = vcvt.s32.f32 %v1159
    %v1167 = vmul.f32 %v1166, %v1164
    %v1168 = vxor.u32 %v1167, 2147483648
    %v1169 = vsel %vm1086, %v1168, %v1167
    %v1170 = vsub.s32 4, %v1146
    %v1171 = vsel %vm1086, %v1170, %v1146
    %v1172 = vsel %vm1085, %v23, %v1169
    %v1173 = vsel %vm1085, 0, %v1171
    %v1174 = vcosq.f32.pop %v1172
    %v1175 = vsinq.f32.pop %v1172
    %vm1176 = vweird.f32 %v23
    %v1177 = vand.u32 %v1173, 3
    %vm1178 = vcmp.lt.s32.totalorder %v1177, 2
    %vm1179 = vcmp.eq.s32.totalorder %v1177, 0
    %v1180 = vxor.u32 %v1175, 2147483648
    %v1181 = vsel %vm1179, %v1174, %v1180
    %vm1182 = vcmp.eq.s32.totalorder %v1177, 2
    %v1183 = vxor.u32 %v1174, 2147483648
    %v1184 = vsel %vm1182, %v1183, %v1175
    %v1185 = vsel %vm1178, %v1181, %v1184
    %v1186 = vsel %vm1176, nan, %v1185
    %v1187 = vand.u32 2147483647, %v24
    %vm1188 = vcmp.le.f32.partialorder %v1187, 0.7853982
    %vm1189 = vcmp.lt.s32.totalorder %v24, 0
    %v1190 = vand.u32 %v24, 2139095040
    %v1191 = vshrl.u32 %v1190, 23
    %v1192 = vsub.s32 %v1191, 127
    %v1193 = vand.u32 2147483647, %v24
    %v1194 = vand.u32 %v1193, 8388607
    %v1195 = vor.u32 %v1194, 8388608
    %v1196 = vsub.s32 0, %v1195
    %v1197 = vadd.s32 %v1192, 1
    %vm1198 = vcmp.gt.s32.totalorder %v1197, 0
    %v1199 = vsel %vm1198, %v1197, 0
    %v1200 = vshrl.u32 %v1199, 5
    %v1201 = vand.u32 %v1199, 31
    %v1202 = vsub.s32 32, %v1201
    %v1203 = vshrl.u32 683565275, %v1202
    %v1204 = vshll.u32 683565275, %v1201
    %v1205 = vshrl.u32 2475754826, %v1202
    %v1206 = vor.u32 %v1204, %v1205
    %v1207 = vshll.u32 2475754826, %v1201
    %v1208 = vshrl.u32 2131351028, %v1202
    %v1209 = vor.u32 %v1207, %v1208
    %v1210 = vshll.u32 2131351028, %v1201
    %v1211 = vshrl.u32 2102212464, %v1202
    %v1212 = vor.u32 %v1210, %v1211
    %v1213 = vshll.u32 2102212464, %v1201
    %v1214 = vshrl.u32 920167782, %v1202
    %v1215 = vor.u32 %v1213, %v1214
    %v1216 = vshll.u32 920167782, %v1201
    %v1217 = vshrl.u32 1326507024, %v1202
    %v1218 = vor.u32 %v1216, %v1217
    %vm1219 = vcmp.lt.s32.totalorder %v1200, 1
    %vm1220 = vcmp.lt.s32.totalorder %v1200, 2
    %vm1221 = vcmp.lt.s32.totalorder %v1200, 3
    %vm1222 = vcmp.lt.s32.totalorder %v1200, 4
    %v1223 = vsel %vm1219, %v1203, %v1206
    %v1224 = vsel %vm1222, %v1212, 2102212464
    %v1225 = vsel %vm1221, %v1209, %v1224
    %v1226 = vsel %vm1220, %v1223, %v1225
    %v1227 = vsel %vm1219, %v1206, %v1209
    %v1228 = vsel %vm1222, %v1215, 920167782
    %v1229 = vsel %vm1221, %v1212, %v1228
    %v1230 = vsel %vm1220, %v1227, %v1229
    %v1231 = vsel %vm1219, %v1209, %v1212
    %v1232 = vsel %vm1222, %v1218, 1326507024
    %v1233 = vsel %vm1221, %v1215, %v1232
    %v1234 = vsel %vm1220, %v1231, %v1233
    %v1235 = vshll.u32 %v1195, 8
    %v1236 = vmul.u32.u64.compose %v1235, %v1234
    %v1237 = vextract.low.u32 %v1236
    %v1238 = vextract.high.u32 %v1236
    %v1239 = vmul.u32.u64.compose %v1235, %v1230
    %v1240 = vextract.low.u32 %v1239
    %v1241 = vextract.high.u32 %v1239
    %v1242 = vmul.u32 %v1235, %v1226
    %v1243 = vadd.s32 %v1238, %v1240
    %vm1244 = vc.u32 %v1238, %v1240
    %v1245 = vadd.s32 %v1241, 1
    %v1246 = vsel %vm1244, %v1245, %v1241
    %v1247 = vadd.s32 %v1242, %v1246
    %v1248 = vadd.s32 %v1247, 536870912
    %v1249 = vshrl.u32 %v1248, 30
    %v1250 = vshll.u32 %v1249, 30
    %v1251 = vsub.s32 %v1247, %v1250
    %vm1252 = vcmp.lt.s32.totalorder %v1251, 0
    %v1253 = vsub.s32 0, %v1251
    %v1254 = vsel %vm1252, %v1253, %v1251
    %v1255 = vclz %v1254
    %v1256 = vsub.s32 %v1255, 2
    %vm1257 = vcmp.gt.s32.totalorder 0, %v1256
    %v1258 = vsel %vm1257, 0, %v1256
    %v1259 = vsub.s32 32, %v1258
    %v1260 = vshll.u32 %v1251, %v1258
    %v1261 = vshrl.u32 %v1243, %v1259
    %v1262 = vor.u32 %v1260, %v1261
    %v1263 = vsub.s32 4294967266, %v1258
    %v1264 = vadd.s32 %v1263, 127
    %v1265 = vshll.u32 %v1264, 23
    %v1266 = vor.u32 4788187, %v1265
    %v1267 = vand.u32 2147483647, %v1266
    %v1269 = vcvt.s32.f32 %v1262
    %v1270 = vmul.f32 %v1269, %v1267
    %v1271 = vxor.u32 %v1270, 2147483648
    %v1272 = vsel %vm1189, %v1271, %v1270
    %v1273 = vsub.s32 4, %v1249
    %v1274 = vsel %vm1189, %v1273, %v1249
    %v1275 = vsel %vm1188, %v24, %v1272
    %v1276 = vsel %vm1188, 0, %v1274
    %v1277 = vcosq.f32.pop %v1275
    %v1278 = vsinq.f32.pop %v1275
    %vm1279 = vweird.f32 %v24
    %v1280 = vand.u32 %v1276, 3
    %vm1281 = vcmp.lt.s32.totalorder %v1280, 2
    %vm1282 = vcmp.eq.s32.totalorder %v1280, 0
    %v1283 = vxor.u32 %v1278, 2147483648
    %v1284 = vsel %vm1282, %v1277, %v1283
    %vm1285 = vcmp.eq.s32.totalorder %v1280, 2
    %v1286 = vxor.u32 %v1277, 2147483648
    %v1287 = vsel %vm1285, %v1286, %v1278
    %v1288 = vsel %vm1281, %v1284, %v1287
    %v1289 = vsel %vm1279, nan, %v1288
    %v1290 = vand.u32 2147483647, %v25
    %vm1291 = vcmp.le.f32.partialorder %v1290, 0.7853982
    %vm1292 = vcmp.lt.s32.totalorder %v25, 0
    %v1293 = vand.u32 %v25, 2139095040
    %v1294 = vshrl.u32 %v1293, 23
    %v1295 = vsub.s32 %v1294, 127
    %v1296 = vand.u32 2147483647, %v25
    %v1297 = vand.u32 %v1296, 8388607
    %v1298 = vor.u32 %v1297, 8388608
    %v1299 = vsub.s32 0, %v1298
    %v1300 = vadd.s32 %v1295, 1
    %vm1301 = vcmp.gt.s32.totalorder %v1300, 0
    %v1302 = vsel %vm1301, %v1300, 0
    %v1303 = vshrl.u32 %v1302, 5
    %v1304 = vand.u32 %v1302, 31
    %v1305 = vsub.s32 32, %v1304
    %v1306 = vshrl.u32 683565275, %v1305
    %v1307 = vshll.u32 683565275, %v1304
    %v1308 = vshrl.u32 2475754826, %v1305
    %v1309 = vor.u32 %v1307, %v1308
    %v1310 = vshll.u32 2475754826, %v1304
    %v1311 = vshrl.u32 2131351028, %v1305
    %v1312 = vor.u32 %v1310, %v1311
    %v1313 = vshll.u32 2131351028, %v1304
    %v1314 = vshrl.u32 2102212464, %v1305
    %v1315 = vor.u32 %v1313, %v1314
    %v1316 = vshll.u32 2102212464, %v1304
    %v1317 = vshrl.u32 920167782, %v1305
    %v1318 = vor.u32 %v1316, %v1317
    %v1319 = vshll.u32 920167782, %v1304
    %v1320 = vshrl.u32 1326507024, %v1305
    %v1321 = vor.u32 %v1319, %v1320
    %vm1322 = vcmp.lt.s32.totalorder %v1303, 1
    %vm1323 = vcmp.lt.s32.totalorder %v1303, 2
    %vm1324 = vcmp.lt.s32.totalorder %v1303, 3
    %vm1325 = vcmp.lt.s32.totalorder %v1303, 4
    %v1326 = vsel %vm1322, %v1306, %v1309
    %v1327 = vsel %vm1325, %v1315, 2102212464
    %v1328 = vsel %vm1324, %v1312, %v1327
    %v1329 = vsel %vm1323, %v1326, %v1328
    %v1330 = vsel %vm1322, %v1309, %v1312
    %v1331 = vsel %vm1325, %v1318, 920167782
    %v1332 = vsel %vm1324, %v1315, %v1331
    %v1333 = vsel %vm1323, %v1330, %v1332
    %v1334 = vsel %vm1322, %v1312, %v1315
    %v1335 = vsel %vm1325, %v1321, 1326507024
    %v1336 = vsel %vm1324, %v1318, %v1335
    %v1337 = vsel %vm1323, %v1334, %v1336
    %v1338 = vshll.u32 %v1298, 8
    %v1339 = vmul.u32.u64.compose %v1338, %v1337
    %v1340 = vextract.low.u32 %v1339
    %v1341 = vextract.high.u32 %v1339
    %v1342 = vmul.u32.u64.compose %v1338, %v1333
    %v1343 = vextract.low.u32 %v1342
    %v1344 = vextract.high.u32 %v1342
    %v1345 = vmul.u32 %v1338, %v1329
    %v1346 = vadd.s32 %v1341, %v1343
    %vm1347 = vc.u32 %v1341, %v1343
    %v1348 = vadd.s32 %v1344, 1
    %v1349 = vsel %vm1347, %v1348, %v1344
    %v1350 = vadd.s32 %v1345, %v1349
    %v1351 = vadd.s32 %v1350, 536870912
    %v1352 = vshrl.u32 %v1351, 30
    %v1353 = vshll.u32 %v1352, 30
    %v1354 = vsub.s32 %v1350, %v1353
    %vm1355 = vcmp.lt.s32.totalorder %v1354, 0
    %v1356 = vsub.s32 0, %v1354
    %v1357 = vsel %vm1355, %v1356, %v1354
    %v1358 = vclz %v1357
    %v1359 = vsub.s32 %v1358, 2
    %vm1360 = vcmp.gt.s32.totalorder 0, %v1359
    %v1361 = vsel %vm1360, 0, %v1359
    %v1362 = vsub.s32 32, %v1361
    %v1363 = vshll.u32 %v1354, %v1361
    %v1364 = vshrl.u32 %v1346, %v1362
    %v1365 = vor.u32 %v1363, %v1364
    %v1366 = vsub.s32 4294967266, %v1361
    %v1367 = vadd.s32 %v1366, 127
    %v1368 = vshll.u32 %v1367, 23
    %v1369 = vor.u32 4788187, %v1368
    %v1370 = vand.u32 2147483647, %v1369
    %v1372 = vcvt.s32.f32 %v1365
    %v1373 = vmul.f32 %v1372, %v1370
    %v1374 = vxor.u32 %v1373, 2147483648
    %v1375 = vsel %vm1292, %v1374, %v1373
    %v1376 = vsub.s32 4, %v1352
    %v1377 = vsel %vm1292, %v1376, %v1352
    %v1378 = vsel %vm1291, %v25, %v1375
    %v1379 = vsel %vm1291, 0, %v1377
    %v1380 = vcosq.f32.pop %v1378
    %v1381 = vsinq.f32.pop %v1378
    %vm1382 = vweird.f32 %v25
    %v1383 = vand.u32 %v1379, 3
    %vm1384 = vcmp.lt.s32.totalorder %v1383, 2
    %vm1385 = vcmp.eq.s32.totalorder %v1383, 0
    %v1386 = vxor.u32 %v1381, 2147483648
    %v1387 = vsel %vm1385, %v1380, %v1386
    %vm1388 = vcmp.eq.s32.totalorder %v1383, 2
    %v1389 = vxor.u32 %v1380, 2147483648
    %v1390 = vsel %vm1388, %v1389, %v1381
    %v1391 = vsel %vm1384, %v1387, %v1390
    %v1392 = vsel %vm1382, nan, %v1391
    %v1393 = vand.u32 2147483647, %v26
    %vm1394 = vcmp.le.f32.partialorder %v1393, 0.7853982
    %vm1395 = vcmp.lt.s32.totalorder %v26, 0
    %v1396 = vand.u32 %v26, 2139095040
    %v1397 = vshrl.u32 %v1396, 23
    %v1398 = vsub.s32 %v1397, 127
    %v1399 = vand.u32 2147483647, %v26
    %v1400 = vand.u32 %v1399, 8388607
    %v1401 = vor.u32 %v1400, 8388608
    %v1402 = vsub.s32 0, %v1401
    %v1403 = vadd.s32 %v1398, 1
    %vm1404 = vcmp.gt.s32.totalorder %v1403, 0
    %v1405 = vsel %vm1404, %v1403, 0
    %v1406 = vshrl.u32 %v1405, 5
    %v1407 = vand.u32 %v1405, 31
    %v1408 = vsub.s32 32, %v1407
    %v1409 = vshrl.u32 683565275, %v1408
    %v1410 = vshll.u32 683565275, %v1407
    %v1411 = vshrl.u32 2475754826, %v1408
    %v1412 = vor.u32 %v1410, %v1411
    %v1413 = vshll.u32 2475754826, %v1407
    %v1414 = vshrl.u32 2131351028, %v1408
    %v1415 = vor.u32 %v1413, %v1414
    %v1416 = vshll.u32 2131351028, %v1407
    %v1417 = vshrl.u32 2102212464, %v1408
    %v1418 = vor.u32 %v1416, %v1417
    %v1419 = vshll.u32 2102212464, %v1407
    %v1420 = vshrl.u32 920167782, %v1408
    %v1421 = vor.u32 %v1419, %v1420
    %v1422 = vshll.u32 920167782, %v1407
    %v1423 = vshrl.u32 1326507024, %v1408
    %v1424 = vor.u32 %v1422, %v1423
    %vm1425 = vcmp.lt.s32.totalorder %v1406, 1
    %vm1426 = vcmp.lt.s32.totalorder %v1406, 2
    %vm1427 = vcmp.lt.s32.totalorder %v1406, 3
    %vm1428 = vcmp.lt.s32.totalorder %v1406, 4
    %v1429 = vsel %vm1425, %v1409, %v1412
    %v1430 = vsel %vm1428, %v1418, 2102212464
    %v1431 = vsel %vm1427, %v1415, %v1430
    %v1432 = vsel %vm1426, %v1429, %v1431
    %v1433 = vsel %vm1425, %v1412, %v1415
    %v1434 = vsel %vm1428, %v1421, 920167782
    %v1435 = vsel %vm1427, %v1418, %v1434
    %v1436 = vsel %vm1426, %v1433, %v1435
    %v1437 = vsel %vm1425, %v1415, %v1418
    %v1438 = vsel %vm1428, %v1424, 1326507024
    %v1439 = vsel %vm1427, %v1421, %v1438
    %v1440 = vsel %vm1426, %v1437, %v1439
    %v1441 = vshll.u32 %v1401, 8
    %v1442 = vmul.u32.u64.compose %v1441, %v1440
    %v1443 = vextract.low.u32 %v1442
    %v1444 = vextract.high.u32 %v1442
    %v1445 = vmul.u32.u64.compose %v1441, %v1436
    %v1446 = vextract.low.u32 %v1445
    %v1447 = vextract.high.u32 %v1445
    %v1448 = vmul.u32 %v1441, %v1432
    %v1449 = vadd.s32 %v1444, %v1446
    %vm1450 = vc.u32 %v1444, %v1446
    %v1451 = vadd.s32 %v1447, 1
    %v1452 = vsel %vm1450, %v1451, %v1447
    %v1453 = vadd.s32 %v1448, %v1452
    %v1454 = vadd.s32 %v1453, 536870912
    %v1455 = vshrl.u32 %v1454, 30
    %v1456 = vshll.u32 %v1455, 30
    %v1457 = vsub.s32 %v1453, %v1456
    %vm1458 = vcmp.lt.s32.totalorder %v1457, 0
    %v1459 = vsub.s32 0, %v1457
    %v1460 = vsel %vm1458, %v1459, %v1457
    %v1461 = vclz %v1460
    %v1462 = vsub.s32 %v1461, 2
    %vm1463 = vcmp.gt.s32.totalorder 0, %v1462
    %v1464 = vsel %vm1463, 0, %v1462
    %v1465 = vsub.s32 32, %v1464
    %v1466 = vshll.u32 %v1457, %v1464
    %v1467 = vshrl.u32 %v1449, %v1465
    %v1468 = vor.u32 %v1466, %v1467
    %v1469 = vsub.s32 4294967266, %v1464
    %v1470 = vadd.s32 %v1469, 127
    %v1471 = vshll.u32 %v1470, 23
    %v1472 = vor.u32 4788187, %v1471
    %v1473 = vand.u32 2147483647, %v1472
    %v1475 = vcvt.s32.f32 %v1468
    %v1476 = vmul.f32 %v1475, %v1473
    %v1477 = vxor.u32 %v1476, 2147483648
    %v1478 = vsel %vm1395, %v1477, %v1476
    %v1479 = vsub.s32 4, %v1455
    %v1480 = vsel %vm1395, %v1479, %v1455
    %v1481 = vsel %vm1394, %v26, %v1478
    %v1482 = vsel %vm1394, 0, %v1480
    %v1483 = vcosq.f32.pop %v1481
    %v1484 = vsinq.f32.pop %v1481
    %vm1485 = vweird.f32 %v26
    %v1486 = vand.u32 %v1482, 3
    %vm1487 = vcmp.lt.s32.totalorder %v1486, 2
    %vm1488 = vcmp.eq.s32.totalorder %v1486, 0
    %v1489 = vxor.u32 %v1484, 2147483648
    %v1490 = vsel %vm1488, %v1483, %v1489
    %vm1491 = vcmp.eq.s32.totalorder %v1486, 2
    %v1492 = vxor.u32 %v1483, 2147483648
    %v1493 = vsel %vm1491, %v1492, %v1484
    %v1494 = vsel %vm1487, %v1490, %v1493
    %v1495 = vsel %vm1485, nan, %v1494
    %v1496 = vand.u32 2147483647, %v27
    %vm1497 = vcmp.le.f32.partialorder %v1496, 0.7853982
    %vm1498 = vcmp.lt.s32.totalorder %v27, 0
    %v1499 = vand.u32 %v27, 2139095040
    %v1500 = vshrl.u32 %v1499, 23
    %v1501 = vsub.s32 %v1500, 127
    %v1502 = vand.u32 2147483647, %v27
    %v1503 = vand.u32 %v1502, 8388607
    %v1504 = vor.u32 %v1503, 8388608
    %v1505 = vsub.s32 0, %v1504
    %v1506 = vadd.s32 %v1501, 1
    %vm1507 = vcmp.gt.s32.totalorder %v1506, 0
    %v1508 = vsel %vm1507, %v1506, 0
    %v1509 = vshrl.u32 %v1508, 5
    %v1510 = vand.u32 %v1508, 31
    %v1511 = vsub.s32 32, %v1510
    %v1512 = vshrl.u32 683565275, %v1511
    %v1513 = vshll.u32 683565275, %v1510
    %v1514 = vshrl.u32 2475754826, %v1511
    %v1515 = vor.u32 %v1513, %v1514
    %v1516 = vshll.u32 2475754826, %v1510
    %v1517 = vshrl.u32 2131351028, %v1511
    %v1518 = vor.u32 %v1516, %v1517
    %v1519 = vshll.u32 2131351028, %v1510
    %v1520 = vshrl.u32 2102212464, %v1511
    %v1521 = vor.u32 %v1519, %v1520
    %v1522 = vshll.u32 2102212464, %v1510
    %v1523 = vshrl.u32 920167782, %v1511
    %v1524 = vor.u32 %v1522, %v1523
    %v1525 = vshll.u32 920167782, %v1510
    %v1526 = vshrl.u32 1326507024, %v1511
    %v1527 = vor.u32 %v1525, %v1526
    %vm1528 = vcmp.lt.s32.totalorder %v1509, 1
    %vm1529 = vcmp.lt.s32.totalorder %v1509, 2
    %vm1530 = vcmp.lt.s32.totalorder %v1509, 3
    %vm1531 = vcmp.lt.s32.totalorder %v1509, 4
    %v1532 = vsel %vm1528, %v1512, %v1515
    %v1533 = vsel %vm1531, %v1521, 2102212464
    %v1534 = vsel %vm1530, %v1518, %v1533
    %v1535 = vsel %vm1529, %v1532, %v1534
    %v1536 = vsel %vm1528, %v1515, %v1518
    %v1537 = vsel %vm1531, %v1524, 920167782
    %v1538 = vsel %vm1530, %v1521, %v1537
    %v1539 = vsel %vm1529, %v1536, %v1538
    %v1540 = vsel %vm1528, %v1518, %v1521
    %v1541 = vsel %vm1531, %v1527, 1326507024
    %v1542 = vsel %vm1530, %v1524, %v1541
    %v1543 = vsel %vm1529, %v1540, %v1542
    %v1544 = vshll.u32 %v1504, 8
    %v1545 = vmul.u32.u64.compose %v1544, %v1543
    %v1546 = vextract.low.u32 %v1545
    %v1547 = vextract.high.u32 %v1545
    %v1548 = vmul.u32.u64.compose %v1544, %v1539
    %v1549 = vextract.low.u32 %v1548
    %v1550 = vextract.high.u32 %v1548
    %v1551 = vmul.u32 %v1544, %v1535
    %v1552 = vadd.s32 %v1547, %v1549
    %vm1553 = vc.u32 %v1547, %v1549
    %v1554 = vadd.s32 %v1550, 1
    %v1555 = vsel %vm1553, %v1554, %v1550
    %v1556 = vadd.s32 %v1551, %v1555
    %v1557 = vadd.s32 %v1556, 536870912
    %v1558 = vshrl.u32 %v1557, 30
    %v1559 = vshll.u32 %v1558, 30
    %v1560 = vsub.s32 %v1556, %v1559
    %vm1561 = vcmp.lt.s32.totalorder %v1560, 0
    %v1562 = vsub.s32 0, %v1560
    %v1563 = vsel %vm1561, %v1562, %v1560
    %v1564 = vclz %v1563
    %v1565 = vsub.s32 %v1564, 2
    %vm1566 = vcmp.gt.s32.totalorder 0, %v1565
    %v1567 = vsel %vm1566, 0, %v1565
    %v1568 = vsub.s32 32, %v1567
    %v1569 = vshll.u32 %v1560, %v1567
    %v1570 = vshrl.u32 %v1552, %v1568
    %v1571 = vor.u32 %v1569, %v1570
    %v1572 = vsub.s32 4294967266, %v1567
    %v1573 = vadd.s32 %v1572, 127
    %v1574 = vshll.u32 %v1573, 23
    %v1575 = vor.u32 4788187, %v1574
    %v1576 = vand.u32 2147483647, %v1575
    %v1578 = vcvt.s32.f32 %v1571
    %v1579 = vmul.f32 %v1578, %v1576
    %v1580 = vxor.u32 %v1579, 2147483648
    %v1581 = vsel %vm1498, %v1580, %v1579
    %v1582 = vsub.s32 4, %v1558
    %v1583 = vsel %vm1498, %v1582, %v1558
    %v1584 = vsel %vm1497, %v27, %v1581
    %v1585 = vsel %vm1497, 0, %v1583
    %v1586 = vcosq.f32.pop %v1584
    %v1587 = vsinq.f32.pop %v1584
    %vm1588 = vweird.f32 %v27
    %v1589 = vand.u32 %v1585, 3
    %vm1590 = vcmp.lt.s32.totalorder %v1589, 2
    %vm1591 = vcmp.eq.s32.totalorder %v1589, 0
    %v1592 = vxor.u32 %v1587, 2147483648
    %v1593 = vsel %vm1591, %v1586, %v1592
    %vm1594 = vcmp.eq.s32.totalorder %v1589, 2
    %v1595 = vxor.u32 %v1586, 2147483648
    %v1596 = vsel %vm1594, %v1595, %v1587
    %v1597 = vsel %vm1590, %v1593, %v1596
    %v1598 = vsel %vm1588, nan, %v1597
    %v1599 = vand.u32 2147483647, %v28
    %vm1600 = vcmp.le.f32.partialorder %v1599, 0.7853982
    %vm1601 = vcmp.lt.s32.totalorder %v28, 0
    %v1602 = vand.u32 %v28, 2139095040
    %v1603 = vshrl.u32 %v1602, 23
    %v1604 = vsub.s32 %v1603, 127
    %v1605 = vand.u32 2147483647, %v28
    %v1606 = vand.u32 %v1605, 8388607
    %v1607 = vor.u32 %v1606, 8388608
    %v1608 = vsub.s32 0, %v1607
    %v1609 = vadd.s32 %v1604, 1
    %vm1610 = vcmp.gt.s32.totalorder %v1609, 0
    %v1611 = vsel %vm1610, %v1609, 0
    %v1612 = vshrl.u32 %v1611, 5
    %v1613 = vand.u32 %v1611, 31
    %v1614 = vsub.s32 32, %v1613
    %v1615 = vshrl.u32 683565275, %v1614
    %v1616 = vshll.u32 683565275, %v1613
    %v1617 = vshrl.u32 2475754826, %v1614
    %v1618 = vor.u32 %v1616, %v1617
    %v1619 = vshll.u32 2475754826, %v1613
    %v1620 = vshrl.u32 2131351028, %v1614
    %v1621 = vor.u32 %v1619, %v1620
    %v1622 = vshll.u32 2131351028, %v1613
    %v1623 = vshrl.u32 2102212464, %v1614
    %v1624 = vor.u32 %v1622, %v1623
    %v1625 = vshll.u32 2102212464, %v1613
    %v1626 = vshrl.u32 920167782, %v1614
    %v1627 = vor.u32 %v1625, %v1626
    %v1628 = vshll.u32 920167782, %v1613
    %v1629 = vshrl.u32 1326507024, %v1614
    %v1630 = vor.u32 %v1628, %v1629
    %vm1631 = vcmp.lt.s32.totalorder %v1612, 1
    %vm1632 = vcmp.lt.s32.totalorder %v1612, 2
    %vm1633 = vcmp.lt.s32.totalorder %v1612, 3
    %vm1634 = vcmp.lt.s32.totalorder %v1612, 4
    %v1635 = vsel %vm1631, %v1615, %v1618
    %v1636 = vsel %vm1634, %v1624, 2102212464
    %v1637 = vsel %vm1633, %v1621, %v1636
    %v1638 = vsel %vm1632, %v1635, %v1637
    %v1639 = vsel %vm1631, %v1618, %v1621
    %v1640 = vsel %vm1634, %v1627, 920167782
    %v1641 = vsel %vm1633, %v1624, %v1640
    %v1642 = vsel %vm1632, %v1639, %v1641
    %v1643 = vsel %vm1631, %v1621, %v1624
    %v1644 = vsel %vm1634, %v1630, 1326507024
    %v1645 = vsel %vm1633, %v1627, %v1644
    %v1646 = vsel %vm1632, %v1643, %v1645
    %v1647 = vshll.u32 %v1607, 8
    %v1648 = vmul.u32.u64.compose %v1647, %v1646
    %v1649 = vextract.low.u32 %v1648
    %v1650 = vextract.high.u32 %v1648
    %v1651 = vmul.u32.u64.compose %v1647, %v1642
    %v1652 = vextract.low.u32 %v1651
    %v1653 = vextract.high.u32 %v1651
    %v1654 = vmul.u32 %v1647, %v1638
    %v1655 = vadd.s32 %v1650, %v1652
    %vm1656 = vc.u32 %v1650, %v1652
    %v1657 = vadd.s32 %v1653, 1
    %v1658 = vsel %vm1656, %v1657, %v1653
    %v1659 = vadd.s32 %v1654, %v1658
    %v1660 = vadd.s32 %v1659, 536870912
    %v1661 = vshrl.u32 %v1660, 30
    %v1662 = vshll.u32 %v1661, 30
    %v1663 = vsub.s32 %v1659, %v1662
    %vm1664 = vcmp.lt.s32.totalorder %v1663, 0
    %v1665 = vsub.s32 0, %v1663
    %v1666 = vsel %vm1664, %v1665, %v1663
    %v1667 = vclz %v1666
    %v1668 = vsub.s32 %v1667, 2
    %vm1669 = vcmp.gt.s32.totalorder 0, %v1668
    %v1670 = vsel %vm1669, 0, %v1668
    %v1671 = vsub.s32 32, %v1670
    %v1672 = vshll.u32 %v1663, %v1670
    %v1673 = vshrl.u32 %v1655, %v1671
    %v1674 = vor.u32 %v1672, %v1673
    %v1675 = vsub.s32 4294967266, %v1670
    %v1676 = vadd.s32 %v1675, 127
    %v1677 = vshll.u32 %v1676, 23
    %v1678 = vor.u32 4788187, %v1677
    %v1679 = vand.u32 2147483647, %v1678
    %v1681 = vcvt.s32.f32 %v1674
    %v1682 = vmul.f32 %v1681, %v1679
    %v1683 = vxor.u32 %v1682, 2147483648
    %v1684 = vsel %vm1601, %v1683, %v1682
    %v1685 = vsub.s32 4, %v1661
    %v1686 = vsel %vm1601, %v1685, %v1661
    %v1687 = vsel %vm1600, %v28, %v1684
    %v1688 = vsel %vm1600, 0, %v1686
    %v1689 = vcosq.f32.pop %v1687
    %v1690 = vsinq.f32.pop %v1687
    %vm1691 = vweird.f32 %v28
    %v1692 = vand.u32 %v1688, 3
    %vm1693 = vcmp.lt.s32.totalorder %v1692, 2
    %vm1694 = vcmp.eq.s32.totalorder %v1692, 0
    %v1695 = vxor.u32 %v1690, 2147483648
    %v1696 = vsel %vm1694, %v1689, %v1695
    %vm1697 = vcmp.eq.s32.totalorder %v1692, 2
    %v1698 = vxor.u32 %v1689, 2147483648
    %v1699 = vsel %vm1697, %v1698, %v1690
    %v1700 = vsel %vm1693, %v1696, %v1699
    %v1701 = vsel %vm1691, nan, %v1700
    %s1702 = scalar_lea.vmem [#allocation5], 128
    %1703 = vst [vmem:[%s1702] sm:$0xff] %v980
    %1704 = vst [vmem:[%s1702 + $0x8] sm:$0xff] %v1083
    %1705 = vst [vmem:[%s1702 + $0x10] sm:$0xff] %v1186
    %1706 = vst [vmem:[%s1702 + $0x18] sm:$0xff] %v1289
    %1707 = vst [vmem:[%s1702 + $0x20] sm:$0xff] %v1392
    %1708 = vst [vmem:[%s1702 + $0x28] sm:$0xff] %v1495
    %1709 = vst [vmem:[%s1702 + $0x30] sm:$0xff] %v1598
    %1710 = vst [vmem:[%s1702 + $0x38] sm:$0xff] %v1701
    %v1711 = vmul.f32 %v21, 2.0
    %v1712 = vmul.f32 %v22, 2.0
    %v1713 = vmul.f32 %v23, 2.0
    %v1714 = vmul.f32 %v24, 2.0
    %v1715 = vmul.f32 %v25, 2.0
    %v1716 = vmul.f32 %v26, 2.0
    %v1717 = vmul.f32 %v27, 2.0
    %v1718 = vmul.f32 %v28, 2.0
    %v1719 = vand.u32 2147483647, %v1711
    %vm1720 = vcmp.le.f32.partialorder %v1719, 0.7853982
    %vm1721 = vcmp.lt.s32.totalorder %v1711, 0
    %v1722 = vand.u32 %v1711, 2139095040
    %v1723 = vshrl.u32 %v1722, 23
    %v1724 = vsub.s32 %v1723, 127
    %v1725 = vand.u32 2147483647, %v1711
    %v1726 = vand.u32 %v1725, 8388607
    %v1727 = vor.u32 %v1726, 8388608
    %v1728 = vsub.s32 0, %v1727
    %v1729 = vadd.s32 %v1724, 1
    %vm1730 = vcmp.gt.s32.totalorder %v1729, 0
    %v1731 = vsel %vm1730, %v1729, 0
    %v1732 = vshrl.u32 %v1731, 5
    %v1733 = vand.u32 %v1731, 31
    %v1734 = vsub.s32 32, %v1733
    %v1735 = vshrl.u32 683565275, %v1734
    %v1736 = vshll.u32 683565275, %v1733
    %v1737 = vshrl.u32 2475754826, %v1734
    %v1738 = vor.u32 %v1736, %v1737
    %v1739 = vshll.u32 2475754826, %v1733
    %v1740 = vshrl.u32 2131351028, %v1734
    %v1741 = vor.u32 %v1739, %v1740
    %v1742 = vshll.u32 2131351028, %v1733
    %v1743 = vshrl.u32 2102212464, %v1734
    %v1744 = vor.u32 %v1742, %v1743
    %v1745 = vshll.u32 2102212464, %v1733
    %v1746 = vshrl.u32 920167782, %v1734
    %v1747 = vor.u32 %v1745, %v1746
    %v1748 = vshll.u32 920167782, %v1733
    %v1749 = vshrl.u32 1326507024, %v1734
    %v1750 = vor.u32 %v1748, %v1749
    %vm1751 = vcmp.lt.s32.totalorder %v1732, 1
    %vm1752 = vcmp.lt.s32.totalorder %v1732, 2
    %vm1753 = vcmp.lt.s32.totalorder %v1732, 3
    %vm1754 = vcmp.lt.s32.totalorder %v1732, 4
    %v1755 = vsel %vm1751, %v1735, %v1738
    %v1756 = vsel %vm1754, %v1744, 2102212464
    %v1757 = vsel %vm1753, %v1741, %v1756
    %v1758 = vsel %vm1752, %v1755, %v1757
    %v1759 = vsel %vm1751, %v1738, %v1741
    %v1760 = vsel %vm1754, %v1747, 920167782
    %v1761 = vsel %vm1753, %v1744, %v1760
    %v1762 = vsel %vm1752, %v1759, %v1761
    %v1763 = vsel %vm1751, %v1741, %v1744
    %v1764 = vsel %vm1754, %v1750, 1326507024
    %v1765 = vsel %vm1753, %v1747, %v1764
    %v1766 = vsel %vm1752, %v1763, %v1765
    %v1767 = vshll.u32 %v1727, 8
    %v1768 = vmul.u32.u64.compose %v1767, %v1766
    %v1769 = vextract.low.u32 %v1768
    %v1770 = vextract.high.u32 %v1768
    %v1771 = vmul.u32.u64.compose %v1767, %v1762
    %v1772 = vextract.low.u32 %v1771
    %v1773 = vextract.high.u32 %v1771
    %v1774 = vmul.u32 %v1767, %v1758
    %v1775 = vadd.s32 %v1770, %v1772
    %vm1776 = vc.u32 %v1770, %v1772
    %v1777 = vadd.s32 %v1773, 1
    %v1778 = vsel %vm1776, %v1777, %v1773
    %v1779 = vadd.s32 %v1774, %v1778
    %v1780 = vadd.s32 %v1779, 536870912
    %v1781 = vshrl.u32 %v1780, 30
    %v1782 = vshll.u32 %v1781, 30
    %v1783 = vsub.s32 %v1779, %v1782
    %vm1784 = vcmp.lt.s32.totalorder %v1783, 0
    %v1785 = vsub.s32 0, %v1783
    %v1786 = vsel %vm1784, %v1785, %v1783
    %v1787 = vclz %v1786
    %v1788 = vsub.s32 %v1787, 2
    %vm1789 = vcmp.gt.s32.totalorder 0, %v1788
    %v1790 = vsel %vm1789, 0, %v1788
    %v1791 = vsub.s32 32, %v1790
    %v1792 = vshll.u32 %v1783, %v1790
    %v1793 = vshrl.u32 %v1775, %v1791
    %v1794 = vor.u32 %v1792, %v1793
    %v1795 = vsub.s32 4294967266, %v1790
    %v1796 = vadd.s32 %v1795, 127
    %v1797 = vshll.u32 %v1796, 23
    %v1798 = vor.u32 4788187, %v1797
    %v1799 = vand.u32 2147483647, %v1798
    %v1801 = vcvt.s32.f32 %v1794
    %v1802 = vmul.f32 %v1801, %v1799
    %v1803 = vxor.u32 %v1802, 2147483648
    %v1804 = vsel %vm1721, %v1803, %v1802
    %v1805 = vsub.s32 4, %v1781
    %v1806 = vsel %vm1721, %v1805, %v1781
    %v1807 = vsel %vm1720, %v1711, %v1804
    %v1808 = vsel %vm1720, 0, %v1806
    %v1809 = vcosq.f32.pop %v1807
    %v1810 = vsinq.f32.pop %v1807
    %vm1811 = vweird.f32 %v1711
    %v1812 = vadd.s32 %v1808, 3
    %v1813 = vand.u32 %v1812, 3
    %vm1814 = vcmp.lt.s32.totalorder %v1813, 2
    %vm1815 = vcmp.eq.s32.totalorder %v1813, 0
    %v1816 = vxor.u32 %v1810, 2147483648
    %v1817 = vsel %vm1815, %v1809, %v1816
    %vm1818 = vcmp.eq.s32.totalorder %v1813, 2
    %v1819 = vxor.u32 %v1809, 2147483648
    %v1820 = vsel %vm1818, %v1819, %v1810
    %v1821 = vsel %vm1814, %v1817, %v1820
    %v1822 = vsel %vm1811, nan, %v1821
    %v1823 = vand.u32 2147483647, %v1712
    %vm1824 = vcmp.le.f32.partialorder %v1823, 0.7853982
    %vm1825 = vcmp.lt.s32.totalorder %v1712, 0
    %v1826 = vand.u32 %v1712, 2139095040
    %v1827 = vshrl.u32 %v1826, 23
    %v1828 = vsub.s32 %v1827, 127
    %v1829 = vand.u32 2147483647, %v1712
    %v1830 = vand.u32 %v1829, 8388607
    %v1831 = vor.u32 %v1830, 8388608
    %v1832 = vsub.s32 0, %v1831
    %v1833 = vadd.s32 %v1828, 1
    %vm1834 = vcmp.gt.s32.totalorder %v1833, 0
    %v1835 = vsel %vm1834, %v1833, 0
    %v1836 = vshrl.u32 %v1835, 5
    %v1837 = vand.u32 %v1835, 31
    %v1838 = vsub.s32 32, %v1837
    %v1839 = vshrl.u32 683565275, %v1838
    %v1840 = vshll.u32 683565275, %v1837
    %v1841 = vshrl.u32 2475754826, %v1838
    %v1842 = vor.u32 %v1840, %v1841
    %v1843 = vshll.u32 2475754826, %v1837
    %v1844 = vshrl.u32 2131351028, %v1838
    %v1845 = vor.u32 %v1843, %v1844
    %v1846 = vshll.u32 2131351028, %v1837
    %v1847 = vshrl.u32 2102212464, %v1838
    %v1848 = vor.u32 %v1846, %v1847
    %v1849 = vshll.u32 2102212464, %v1837
    %v1850 = vshrl.u32 920167782, %v1838
    %v1851 = vor.u32 %v1849, %v1850
    %v1852 = vshll.u32 920167782, %v1837
    %v1853 = vshrl.u32 1326507024, %v1838
    %v1854 = vor.u32 %v1852, %v1853
    %vm1855 = vcmp.lt.s32.totalorder %v1836, 1
    %vm1856 = vcmp.lt.s32.totalorder %v1836, 2
    %vm1857 = vcmp.lt.s32.totalorder %v1836, 3
    %vm1858 = vcmp.lt.s32.totalorder %v1836, 4
    %v1859 = vsel %vm1855, %v1839, %v1842
    %v1860 = vsel %vm1858, %v1848, 2102212464
    %v1861 = vsel %vm1857, %v1845, %v1860
    %v1862 = vsel %vm1856, %v1859, %v1861
    %v1863 = vsel %vm1855, %v1842, %v1845
    %v1864 = vsel %vm1858, %v1851, 920167782
    %v1865 = vsel %vm1857, %v1848, %v1864
    %v1866 = vsel %vm1856, %v1863, %v1865
    %v1867 = vsel %vm1855, %v1845, %v1848
    %v1868 = vsel %vm1858, %v1854, 1326507024
    %v1869 = vsel %vm1857, %v1851, %v1868
    %v1870 = vsel %vm1856, %v1867, %v1869
    %v1871 = vshll.u32 %v1831, 8
    %v1872 = vmul.u32.u64.compose %v1871, %v1870
    %v1873 = vextract.low.u32 %v1872
    %v1874 = vextract.high.u32 %v1872
    %v1875 = vmul.u32.u64.compose %v1871, %v1866
    %v1876 = vextract.low.u32 %v1875
    %v1877 = vextract.high.u32 %v1875
    %v1878 = vmul.u32 %v1871, %v1862
    %v1879 = vadd.s32 %v1874, %v1876
    %vm1880 = vc.u32 %v1874, %v1876
    %v1881 = vadd.s32 %v1877, 1
    %v1882 = vsel %vm1880, %v1881, %v1877
    %v1883 = vadd.s32 %v1878, %v1882
    %v1884 = vadd.s32 %v1883, 536870912
    %v1885 = vshrl.u32 %v1884, 30
    %v1886 = vshll.u32 %v1885, 30
    %v1887 = vsub.s32 %v1883, %v1886
    %vm1888 = vcmp.lt.s32.totalorder %v1887, 0
    %v1889 = vsub.s32 0, %v1887
    %v1890 = vsel %vm1888, %v1889, %v1887
    %v1891 = vclz %v1890
    %v1892 = vsub.s32 %v1891, 2
    %vm1893 = vcmp.gt.s32.totalorder 0, %v1892
    %v1894 = vsel %vm1893, 0, %v1892
    %v1895 = vsub.s32 32, %v1894
    %v1896 = vshll.u32 %v1887, %v1894
    %v1897 = vshrl.u32 %v1879, %v1895
    %v1898 = vor.u32 %v1896, %v1897
    %v1899 = vsub.s32 4294967266, %v1894
    %v1900 = vadd.s32 %v1899, 127
    %v1901 = vshll.u32 %v1900, 23
    %v1902 = vor.u32 4788187, %v1901
    %v1903 = vand.u32 2147483647, %v1902
    %v1905 = vcvt.s32.f32 %v1898
    %v1906 = vmul.f32 %v1905, %v1903
    %v1907 = vxor.u32 %v1906, 2147483648
    %v1908 = vsel %vm1825, %v1907, %v1906
    %v1909 = vsub.s32 4, %v1885
    %v1910 = vsel %vm1825, %v1909, %v1885
    %v1911 = vsel %vm1824, %v1712, %v1908
    %v1912 = vsel %vm1824, 0, %v1910
    %v1913 = vcosq.f32.pop %v1911
    %v1914 = vsinq.f32.pop %v1911
    %vm1915 = vweird.f32 %v1712
    %v1916 = vadd.s32 %v1912, 3
    %v1917 = vand.u32 %v1916, 3
    %vm1918 = vcmp.lt.s32.totalorder %v1917, 2
    %vm1919 = vcmp.eq.s32.totalorder %v1917, 0
    %v1920 = vxor.u32 %v1914, 2147483648
    %v1921 = vsel %vm1919, %v1913, %v1920
    %vm1922 = vcmp.eq.s32.totalorder %v1917, 2
    %v1923 = vxor.u32 %v1913, 2147483648
    %v1924 = vsel %vm1922, %v1923, %v1914
    %v1925 = vsel %vm1918, %v1921, %v1924
    %v1926 = vsel %vm1915, nan, %v1925
    %v1927 = vand.u32 2147483647, %v1713
    %vm1928 = vcmp.le.f32.partialorder %v1927, 0.7853982
    %vm1929 = vcmp.lt.s32.totalorder %v1713, 0
    %v1930 = vand.u32 %v1713, 2139095040
    %v1931 = vshrl.u32 %v1930, 23
    %v1932 = vsub.s32 %v1931, 127
    %v1933 = vand.u32 2147483647, %v1713
    %v1934 = vand.u32 %v1933, 8388607
    %v1935 = vor.u32 %v1934, 8388608
    %v1936 = vsub.s32 0, %v1935
    %v1937 = vadd.s32 %v1932, 1
    %vm1938 = vcmp.gt.s32.totalorder %v1937, 0
    %v1939 = vsel %vm1938, %v1937, 0
    %v1940 = vshrl.u32 %v1939, 5
    %v1941 = vand.u32 %v1939, 31
    %v1942 = vsub.s32 32, %v1941
    %v1943 = vshrl.u32 683565275, %v1942
    %v1944 = vshll.u32 683565275, %v1941
    %v1945 = vshrl.u32 2475754826, %v1942
    %v1946 = vor.u32 %v1944, %v1945
    %v1947 = vshll.u32 2475754826, %v1941
    %v1948 = vshrl.u32 2131351028, %v1942
    %v1949 = vor.u32 %v1947, %v1948
    %v1950 = vshll.u32 2131351028, %v1941
    %v1951 = vshrl.u32 2102212464, %v1942
    %v1952 = vor.u32 %v1950, %v1951
    %v1953 = vshll.u32 2102212464, %v1941
    %v1954 = vshrl.u32 920167782, %v1942
    %v1955 = vor.u32 %v1953, %v1954
    %v1956 = vshll.u32 920167782, %v1941
    %v1957 = vshrl.u32 1326507024, %v1942
    %v1958 = vor.u32 %v1956, %v1957
    %vm1959 = vcmp.lt.s32.totalorder %v1940, 1
    %vm1960 = vcmp.lt.s32.totalorder %v1940, 2
    %vm1961 = vcmp.lt.s32.totalorder %v1940, 3
    %vm1962 = vcmp.lt.s32.totalorder %v1940, 4
    %v1963 = vsel %vm1959, %v1943, %v1946
    %v1964 = vsel %vm1962, %v1952, 2102212464
    %v1965 = vsel %vm1961, %v1949, %v1964
    %v1966 = vsel %vm1960, %v1963, %v1965
    %v1967 = vsel %vm1959, %v1946, %v1949
    %v1968 = vsel %vm1962, %v1955, 920167782
    %v1969 = vsel %vm1961, %v1952, %v1968
    %v1970 = vsel %vm1960, %v1967, %v1969
    %v1971 = vsel %vm1959, %v1949, %v1952
    %v1972 = vsel %vm1962, %v1958, 1326507024
    %v1973 = vsel %vm1961, %v1955, %v1972
    %v1974 = vsel %vm1960, %v1971, %v1973
    %v1975 = vshll.u32 %v1935, 8
    %v1976 = vmul.u32.u64.compose %v1975, %v1974
    %v1977 = vextract.low.u32 %v1976
    %v1978 = vextract.high.u32 %v1976
    %v1979 = vmul.u32.u64.compose %v1975, %v1970
    %v1980 = vextract.low.u32 %v1979
    %v1981 = vextract.high.u32 %v1979
    %v1982 = vmul.u32 %v1975, %v1966
    %v1983 = vadd.s32 %v1978, %v1980
    %vm1984 = vc.u32 %v1978, %v1980
    %v1985 = vadd.s32 %v1981, 1
    %v1986 = vsel %vm1984, %v1985, %v1981
    %v1987 = vadd.s32 %v1982, %v1986
    %v1988 = vadd.s32 %v1987, 536870912
    %v1989 = vshrl.u32 %v1988, 30
    %v1990 = vshll.u32 %v1989, 30
    %v1991 = vsub.s32 %v1987, %v1990
    %vm1992 = vcmp.lt.s32.totalorder %v1991, 0
    %v1993 = vsub.s32 0, %v1991
    %v1994 = vsel %vm1992, %v1993, %v1991
    %v1995 = vclz %v1994
    %v1996 = vsub.s32 %v1995, 2
    %vm1997 = vcmp.gt.s32.totalorder 0, %v1996
    %v1998 = vsel %vm1997, 0, %v1996
    %v1999 = vsub.s32 32, %v1998
    %v2000 = vshll.u32 %v1991, %v1998
    %v2001 = vshrl.u32 %v1983, %v1999
    %v2002 = vor.u32 %v2000, %v2001
    %v2003 = vsub.s32 4294967266, %v1998
    %v2004 = vadd.s32 %v2003, 127
    %v2005 = vshll.u32 %v2004, 23
    %v2006 = vor.u32 4788187, %v2005
    %v2007 = vand.u32 2147483647, %v2006
    %v2009 = vcvt.s32.f32 %v2002
    %v2010 = vmul.f32 %v2009, %v2007
    %v2011 = vxor.u32 %v2010, 2147483648
    %v2012 = vsel %vm1929, %v2011, %v2010
    %v2013 = vsub.s32 4, %v1989
    %v2014 = vsel %vm1929, %v2013, %v1989
    %v2015 = vsel %vm1928, %v1713, %v2012
    %v2016 = vsel %vm1928, 0, %v2014
    %v2017 = vcosq.f32.pop %v2015
    %v2018 = vsinq.f32.pop %v2015
    %vm2019 = vweird.f32 %v1713
    %v2020 = vadd.s32 %v2016, 3
    %v2021 = vand.u32 %v2020, 3
    %vm2022 = vcmp.lt.s32.totalorder %v2021, 2
    %vm2023 = vcmp.eq.s32.totalorder %v2021, 0
    %v2024 = vxor.u32 %v2018, 2147483648
    %v2025 = vsel %vm2023, %v2017, %v2024
    %vm2026 = vcmp.eq.s32.totalorder %v2021, 2
    %v2027 = vxor.u32 %v2017, 2147483648
    %v2028 = vsel %vm2026, %v2027, %v2018
    %v2029 = vsel %vm2022, %v2025, %v2028
    %v2030 = vsel %vm2019, nan, %v2029
    %v2031 = vand.u32 2147483647, %v1714
    %vm2032 = vcmp.le.f32.partialorder %v2031, 0.7853982
    %vm2033 = vcmp.lt.s32.totalorder %v1714, 0
    %v2034 = vand.u32 %v1714, 2139095040
    %v2035 = vshrl.u32 %v2034, 23
    %v2036 = vsub.s32 %v2035, 127
    %v2037 = vand.u32 2147483647, %v1714
    %v2038 = vand.u32 %v2037, 8388607
    %v2039 = vor.u32 %v2038, 8388608
    %v2040 = vsub.s32 0, %v2039
    %v2041 = vadd.s32 %v2036, 1
    %vm2042 = vcmp.gt.s32.totalorder %v2041, 0
    %v2043 = vsel %vm2042, %v2041, 0
    %v2044 = vshrl.u32 %v2043, 5
    %v2045 = vand.u32 %v2043, 31
    %v2046 = vsub.s32 32, %v2045
    %v2047 = vshrl.u32 683565275, %v2046
    %v2048 = vshll.u32 683565275, %v2045
    %v2049 = vshrl.u32 2475754826, %v2046
    %v2050 = vor.u32 %v2048, %v2049
    %v2051 = vshll.u32 2475754826, %v2045
    %v2052 = vshrl.u32 2131351028, %v2046
    %v2053 = vor.u32 %v2051, %v2052
    %v2054 = vshll.u32 2131351028, %v2045
    %v2055 = vshrl.u32 2102212464, %v2046
    %v2056 = vor.u32 %v2054, %v2055
    %v2057 = vshll.u32 2102212464, %v2045
    %v2058 = vshrl.u32 920167782, %v2046
    %v2059 = vor.u32 %v2057, %v2058
    %v2060 = vshll.u32 920167782, %v2045
    %v2061 = vshrl.u32 1326507024, %v2046
    %v2062 = vor.u32 %v2060, %v2061
    %vm2063 = vcmp.lt.s32.totalorder %v2044, 1
    %vm2064 = vcmp.lt.s32.totalorder %v2044, 2
    %vm2065 = vcmp.lt.s32.totalorder %v2044, 3
    %vm2066 = vcmp.lt.s32.totalorder %v2044, 4
    %v2067 = vsel %vm2063, %v2047, %v2050
    %v2068 = vsel %vm2066, %v2056, 2102212464
    %v2069 = vsel %vm2065, %v2053, %v2068
    %v2070 = vsel %vm2064, %v2067, %v2069
    %v2071 = vsel %vm2063, %v2050, %v2053
    %v2072 = vsel %vm2066, %v2059, 920167782
    %v2073 = vsel %vm2065, %v2056, %v2072
    %v2074 = vsel %vm2064, %v2071, %v2073
    %v2075 = vsel %vm2063, %v2053, %v2056
    %v2076 = vsel %vm2066, %v2062, 1326507024
    %v2077 = vsel %vm2065, %v2059, %v2076
    %v2078 = vsel %vm2064, %v2075, %v2077
    %v2079 = vshll.u32 %v2039, 8
    %v2080 = vmul.u32.u64.compose %v2079, %v2078
    %v2081 = vextract.low.u32 %v2080
    %v2082 = vextract.high.u32 %v2080
    %v2083 = vmul.u32.u64.compose %v2079, %v2074
    %v2084 = vextract.low.u32 %v2083
    %v2085 = vextract.high.u32 %v2083
    %v2086 = vmul.u32 %v2079, %v2070
    %v2087 = vadd.s32 %v2082, %v2084
    %vm2088 = vc.u32 %v2082, %v2084
    %v2089 = vadd.s32 %v2085, 1
    %v2090 = vsel %vm2088, %v2089, %v2085
    %v2091 = vadd.s32 %v2086, %v2090
    %v2092 = vadd.s32 %v2091, 536870912
    %v2093 = vshrl.u32 %v2092, 30
    %v2094 = vshll.u32 %v2093, 30
    %v2095 = vsub.s32 %v2091, %v2094
    %vm2096 = vcmp.lt.s32.totalorder %v2095, 0
    %v2097 = vsub.s32 0, %v2095
    %v2098 = vsel %vm2096, %v2097, %v2095
    %v2099 = vclz %v2098
    %v2100 = vsub.s32 %v2099, 2
    %vm2101 = vcmp.gt.s32.totalorder 0, %v2100
    %v2102 = vsel %vm2101, 0, %v2100
    %v2103 = vsub.s32 32, %v2102
    %v2104 = vshll.u32 %v2095, %v2102
    %v2105 = vshrl.u32 %v2087, %v2103
    %v2106 = vor.u32 %v2104, %v2105
    %v2107 = vsub.s32 4294967266, %v2102
    %v2108 = vadd.s32 %v2107, 127
    %v2109 = vshll.u32 %v2108, 23
    %v2110 = vor.u32 4788187, %v2109
    %v2111 = vand.u32 2147483647, %v2110
    %v2113 = vcvt.s32.f32 %v2106
    %v2114 = vmul.f32 %v2113, %v2111
    %v2115 = vxor.u32 %v2114, 2147483648
    %v2116 = vsel %vm2033, %v2115, %v2114
    %v2117 = vsub.s32 4, %v2093
    %v2118 = vsel %vm2033, %v2117, %v2093
    %v2119 = vsel %vm2032, %v1714, %v2116
    %v2120 = vsel %vm2032, 0, %v2118
    %v2121 = vcosq.f32.pop %v2119
    %v2122 = vsinq.f32.pop %v2119
    %vm2123 = vweird.f32 %v1714
    %v2124 = vadd.s32 %v2120, 3
    %v2125 = vand.u32 %v2124, 3
    %vm2126 = vcmp.lt.s32.totalorder %v2125, 2
    %vm2127 = vcmp.eq.s32.totalorder %v2125, 0
    %v2128 = vxor.u32 %v2122, 2147483648
    %v2129 = vsel %vm2127, %v2121, %v2128
    %vm2130 = vcmp.eq.s32.totalorder %v2125, 2
    %v2131 = vxor.u32 %v2121, 2147483648
    %v2132 = vsel %vm2130, %v2131, %v2122
    %v2133 = vsel %vm2126, %v2129, %v2132
    %v2134 = vsel %vm2123, nan, %v2133
    %v2135 = vand.u32 2147483647, %v1715
    %vm2136 = vcmp.le.f32.partialorder %v2135, 0.7853982
    %vm2137 = vcmp.lt.s32.totalorder %v1715, 0
    %v2138 = vand.u32 %v1715, 2139095040
    %v2139 = vshrl.u32 %v2138, 23
    %v2140 = vsub.s32 %v2139, 127
    %v2141 = vand.u32 2147483647, %v1715
    %v2142 = vand.u32 %v2141, 8388607
    %v2143 = vor.u32 %v2142, 8388608
    %v2144 = vsub.s32 0, %v2143
    %v2145 = vadd.s32 %v2140, 1
    %vm2146 = vcmp.gt.s32.totalorder %v2145, 0
    %v2147 = vsel %vm2146, %v2145, 0
    %v2148 = vshrl.u32 %v2147, 5
    %v2149 = vand.u32 %v2147, 31
    %v2150 = vsub.s32 32, %v2149
    %v2151 = vshrl.u32 683565275, %v2150
    %v2152 = vshll.u32 683565275, %v2149
    %v2153 = vshrl.u32 2475754826, %v2150
    %v2154 = vor.u32 %v2152, %v2153
    %v2155 = vshll.u32 2475754826, %v2149
    %v2156 = vshrl.u32 2131351028, %v2150
    %v2157 = vor.u32 %v2155, %v2156
    %v2158 = vshll.u32 2131351028, %v2149
    %v2159 = vshrl.u32 2102212464, %v2150
    %v2160 = vor.u32 %v2158, %v2159
    %v2161 = vshll.u32 2102212464, %v2149
    %v2162 = vshrl.u32 920167782, %v2150
    %v2163 = vor.u32 %v2161, %v2162
    %v2164 = vshll.u32 920167782, %v2149
    %v2165 = vshrl.u32 1326507024, %v2150
    %v2166 = vor.u32 %v2164, %v2165
    %vm2167 = vcmp.lt.s32.totalorder %v2148, 1
    %vm2168 = vcmp.lt.s32.totalorder %v2148, 2
    %vm2169 = vcmp.lt.s32.totalorder %v2148, 3
    %vm2170 = vcmp.lt.s32.totalorder %v2148, 4
    %v2171 = vsel %vm2167, %v2151, %v2154
    %v2172 = vsel %vm2170, %v2160, 2102212464
    %v2173 = vsel %vm2169, %v2157, %v2172
    %v2174 = vsel %vm2168, %v2171, %v2173
    %v2175 = vsel %vm2167, %v2154, %v2157
    %v2176 = vsel %vm2170, %v2163, 920167782
    %v2177 = vsel %vm2169, %v2160, %v2176
    %v2178 = vsel %vm2168, %v2175, %v2177
    %v2179 = vsel %vm2167, %v2157, %v2160
    %v2180 = vsel %vm2170, %v2166, 1326507024
    %v2181 = vsel %vm2169, %v2163, %v2180
    %v2182 = vsel %vm2168, %v2179, %v2181
    %v2183 = vshll.u32 %v2143, 8
    %v2184 = vmul.u32.u64.compose %v2183, %v2182
    %v2185 = vextract.low.u32 %v2184
    %v2186 = vextract.high.u32 %v2184
    %v2187 = vmul.u32.u64.compose %v2183, %v2178
    %v2188 = vextract.low.u32 %v2187
    %v2189 = vextract.high.u32 %v2187
    %v2190 = vmul.u32 %v2183, %v2174
    %v2191 = vadd.s32 %v2186, %v2188
    %vm2192 = vc.u32 %v2186, %v2188
    %v2193 = vadd.s32 %v2189, 1
    %v2194 = vsel %vm2192, %v2193, %v2189
    %v2195 = vadd.s32 %v2190, %v2194
    %v2196 = vadd.s32 %v2195, 536870912
    %v2197 = vshrl.u32 %v2196, 30
    %v2198 = vshll.u32 %v2197, 30
    %v2199 = vsub.s32 %v2195, %v2198
    %vm2200 = vcmp.lt.s32.totalorder %v2199, 0
    %v2201 = vsub.s32 0, %v2199
    %v2202 = vsel %vm2200, %v2201, %v2199
    %v2203 = vclz %v2202
    %v2204 = vsub.s32 %v2203, 2
    %vm2205 = vcmp.gt.s32.totalorder 0, %v2204
    %v2206 = vsel %vm2205, 0, %v2204
    %v2207 = vsub.s32 32, %v2206
    %v2208 = vshll.u32 %v2199, %v2206
    %v2209 = vshrl.u32 %v2191, %v2207
    %v2210 = vor.u32 %v2208, %v2209
    %v2211 = vsub.s32 4294967266, %v2206
    %v2212 = vadd.s32 %v2211, 127
    %v2213 = vshll.u32 %v2212, 23
    %v2214 = vor.u32 4788187, %v2213
    %v2215 = vand.u32 2147483647, %v2214
    %v2217 = vcvt.s32.f32 %v2210
    %v2218 = vmul.f32 %v2217, %v2215
    %v2219 = vxor.u32 %v2218, 2147483648
    %v2220 = vsel %vm2137, %v2219, %v2218
    %v2221 = vsub.s32 4, %v2197
    %v2222 = vsel %vm2137, %v2221, %v2197
    %v2223 = vsel %vm2136, %v1715, %v2220
    %v2224 = vsel %vm2136, 0, %v2222
    %v2225 = vcosq.f32.pop %v2223
    %v2226 = vsinq.f32.pop %v2223
    %vm2227 = vweird.f32 %v1715
    %v2228 = vadd.s32 %v2224, 3
    %v2229 = vand.u32 %v2228, 3
    %vm2230 = vcmp.lt.s32.totalorder %v2229, 2
    %vm2231 = vcmp.eq.s32.totalorder %v2229, 0
    %v2232 = vxor.u32 %v2226, 2147483648
    %v2233 = vsel %vm2231, %v2225, %v2232
    %vm2234 = vcmp.eq.s32.totalorder %v2229, 2
    %v2235 = vxor.u32 %v2225, 2147483648
    %v2236 = vsel %vm2234, %v2235, %v2226
    %v2237 = vsel %vm2230, %v2233, %v2236
    %v2238 = vsel %vm2227, nan, %v2237
    %v2239 = vand.u32 2147483647, %v1716
    %vm2240 = vcmp.le.f32.partialorder %v2239, 0.7853982
    %vm2241 = vcmp.lt.s32.totalorder %v1716, 0
    %v2242 = vand.u32 %v1716, 2139095040
    %v2243 = vshrl.u32 %v2242, 23
    %v2244 = vsub.s32 %v2243, 127
    %v2245 = vand.u32 2147483647, %v1716
    %v2246 = vand.u32 %v2245, 8388607
    %v2247 = vor.u32 %v2246, 8388608
    %v2248 = vsub.s32 0, %v2247
    %v2249 = vadd.s32 %v2244, 1
    %vm2250 = vcmp.gt.s32.totalorder %v2249, 0
    %v2251 = vsel %vm2250, %v2249, 0
    %v2252 = vshrl.u32 %v2251, 5
    %v2253 = vand.u32 %v2251, 31
    %v2254 = vsub.s32 32, %v2253
    %v2255 = vshrl.u32 683565275, %v2254
    %v2256 = vshll.u32 683565275, %v2253
    %v2257 = vshrl.u32 2475754826, %v2254
    %v2258 = vor.u32 %v2256, %v2257
    %v2259 = vshll.u32 2475754826, %v2253
    %v2260 = vshrl.u32 2131351028, %v2254
    %v2261 = vor.u32 %v2259, %v2260
    %v2262 = vshll.u32 2131351028, %v2253
    %v2263 = vshrl.u32 2102212464, %v2254
    %v2264 = vor.u32 %v2262, %v2263
    %v2265 = vshll.u32 2102212464, %v2253
    %v2266 = vshrl.u32 920167782, %v2254
    %v2267 = vor.u32 %v2265, %v2266
    %v2268 = vshll.u32 920167782, %v2253
    %v2269 = vshrl.u32 1326507024, %v2254
    %v2270 = vor.u32 %v2268, %v2269
    %vm2271 = vcmp.lt.s32.totalorder %v2252, 1
    %vm2272 = vcmp.lt.s32.totalorder %v2252, 2
    %vm2273 = vcmp.lt.s32.totalorder %v2252, 3
    %vm2274 = vcmp.lt.s32.totalorder %v2252, 4
    %v2275 = vsel %vm2271, %v2255, %v2258
    %v2276 = vsel %vm2274, %v2264, 2102212464
    %v2277 = vsel %vm2273, %v2261, %v2276
    %v2278 = vsel %vm2272, %v2275, %v2277
    %v2279 = vsel %vm2271, %v2258, %v2261
    %v2280 = vsel %vm2274, %v2267, 920167782
    %v2281 = vsel %vm2273, %v2264, %v2280
    %v2282 = vsel %vm2272, %v2279, %v2281
    %v2283 = vsel %vm2271, %v2261, %v2264
    %v2284 = vsel %vm2274, %v2270, 1326507024
    %v2285 = vsel %vm2273, %v2267, %v2284
    %v2286 = vsel %vm2272, %v2283, %v2285
    %v2287 = vshll.u32 %v2247, 8
    %v2288 = vmul.u32.u64.compose %v2287, %v2286
    %v2289 = vextract.low.u32 %v2288
    %v2290 = vextract.high.u32 %v2288
    %v2291 = vmul.u32.u64.compose %v2287, %v2282
    %v2292 = vextract.low.u32 %v2291
    %v2293 = vextract.high.u32 %v2291
    %v2294 = vmul.u32 %v2287, %v2278
    %v2295 = vadd.s32 %v2290, %v2292
    %vm2296 = vc.u32 %v2290, %v2292
    %v2297 = vadd.s32 %v2293, 1
    %v2298 = vsel %vm2296, %v2297, %v2293
    %v2299 = vadd.s32 %v2294, %v2298
    %v2300 = vadd.s32 %v2299, 536870912
    %v2301 = vshrl.u32 %v2300, 30
    %v2302 = vshll.u32 %v2301, 30
    %v2303 = vsub.s32 %v2299, %v2302
    %vm2304 = vcmp.lt.s32.totalorder %v2303, 0
    %v2305 = vsub.s32 0, %v2303
    %v2306 = vsel %vm2304, %v2305, %v2303
    %v2307 = vclz %v2306
    %v2308 = vsub.s32 %v2307, 2
    %vm2309 = vcmp.gt.s32.totalorder 0, %v2308
    %v2310 = vsel %vm2309, 0, %v2308
    %v2311 = vsub.s32 32, %v2310
    %v2312 = vshll.u32 %v2303, %v2310
    %v2313 = vshrl.u32 %v2295, %v2311
    %v2314 = vor.u32 %v2312, %v2313
    %v2315 = vsub.s32 4294967266, %v2310
    %v2316 = vadd.s32 %v2315, 127
    %v2317 = vshll.u32 %v2316, 23
    %v2318 = vor.u32 4788187, %v2317
    %v2319 = vand.u32 2147483647, %v2318
    %v2321 = vcvt.s32.f32 %v2314
    %v2322 = vmul.f32 %v2321, %v2319
    %v2323 = vxor.u32 %v2322, 2147483648
    %v2324 = vsel %vm2241, %v2323, %v2322
    %v2325 = vsub.s32 4, %v2301
    %v2326 = vsel %vm2241, %v2325, %v2301
    %v2327 = vsel %vm2240, %v1716, %v2324
    %v2328 = vsel %vm2240, 0, %v2326
    %v2329 = vcosq.f32.pop %v2327
    %v2330 = vsinq.f32.pop %v2327
    %vm2331 = vweird.f32 %v1716
    %v2332 = vadd.s32 %v2328, 3
    %v2333 = vand.u32 %v2332, 3
    %vm2334 = vcmp.lt.s32.totalorder %v2333, 2
    %vm2335 = vcmp.eq.s32.totalorder %v2333, 0
    %v2336 = vxor.u32 %v2330, 2147483648
    %v2337 = vsel %vm2335, %v2329, %v2336
    %vm2338 = vcmp.eq.s32.totalorder %v2333, 2
    %v2339 = vxor.u32 %v2329, 2147483648
    %v2340 = vsel %vm2338, %v2339, %v2330
    %v2341 = vsel %vm2334, %v2337, %v2340
    %v2342 = vsel %vm2331, nan, %v2341
    %v2343 = vand.u32 2147483647, %v1717
    %vm2344 = vcmp.le.f32.partialorder %v2343, 0.7853982
    %vm2345 = vcmp.lt.s32.totalorder %v1717, 0
    %v2346 = vand.u32 %v1717, 2139095040
    %v2347 = vshrl.u32 %v2346, 23
    %v2348 = vsub.s32 %v2347, 127
    %v2349 = vand.u32 2147483647, %v1717
    %v2350 = vand.u32 %v2349, 8388607
    %v2351 = vor.u32 %v2350, 8388608
    %v2352 = vsub.s32 0, %v2351
    %v2353 = vadd.s32 %v2348, 1
    %vm2354 = vcmp.gt.s32.totalorder %v2353, 0
    %v2355 = vsel %vm2354, %v2353, 0
    %v2356 = vshrl.u32 %v2355, 5
    %v2357 = vand.u32 %v2355, 31
    %v2358 = vsub.s32 32, %v2357
    %v2359 = vshrl.u32 683565275, %v2358
    %v2360 = vshll.u32 683565275, %v2357
    %v2361 = vshrl.u32 2475754826, %v2358
    %v2362 = vor.u32 %v2360, %v2361
    %v2363 = vshll.u32 2475754826, %v2357
    %v2364 = vshrl.u32 2131351028, %v2358
    %v2365 = vor.u32 %v2363, %v2364
    %v2366 = vshll.u32 2131351028, %v2357
    %v2367 = vshrl.u32 2102212464, %v2358
    %v2368 = vor.u32 %v2366, %v2367
    %v2369 = vshll.u32 2102212464, %v2357
    %v2370 = vshrl.u32 920167782, %v2358
    %v2371 = vor.u32 %v2369, %v2370
    %v2372 = vshll.u32 920167782, %v2357
    %v2373 = vshrl.u32 1326507024, %v2358
    %v2374 = vor.u32 %v2372, %v2373
    %vm2375 = vcmp.lt.s32.totalorder %v2356, 1
    %vm2376 = vcmp.lt.s32.totalorder %v2356, 2
    %vm2377 = vcmp.lt.s32.totalorder %v2356, 3
    %vm2378 = vcmp.lt.s32.totalorder %v2356, 4
    %v2379 = vsel %vm2375, %v2359, %v2362
    %v2380 = vsel %vm2378, %v2368, 2102212464
    %v2381 = vsel %vm2377, %v2365, %v2380
    %v2382 = vsel %vm2376, %v2379, %v2381
    %v2383 = vsel %vm2375, %v2362, %v2365
    %v2384 = vsel %vm2378, %v2371, 920167782
    %v2385 = vsel %vm2377, %v2368, %v2384
    %v2386 = vsel %vm2376, %v2383, %v2385
    %v2387 = vsel %vm2375, %v2365, %v2368
    %v2388 = vsel %vm2378, %v2374, 1326507024
    %v2389 = vsel %vm2377, %v2371, %v2388
    %v2390 = vsel %vm2376, %v2387, %v2389
    %v2391 = vshll.u32 %v2351, 8
    %v2392 = vmul.u32.u64.compose %v2391, %v2390
    %v2393 = vextract.low.u32 %v2392
    %v2394 = vextract.high.u32 %v2392
    %v2395 = vmul.u32.u64.compose %v2391, %v2386
    %v2396 = vextract.low.u32 %v2395
    %v2397 = vextract.high.u32 %v2395
    %v2398 = vmul.u32 %v2391, %v2382
    %v2399 = vadd.s32 %v2394, %v2396
    %vm2400 = vc.u32 %v2394, %v2396
    %v2401 = vadd.s32 %v2397, 1
    %v2402 = vsel %vm2400, %v2401, %v2397
    %v2403 = vadd.s32 %v2398, %v2402
    %v2404 = vadd.s32 %v2403, 536870912
    %v2405 = vshrl.u32 %v2404, 30
    %v2406 = vshll.u32 %v2405, 30
    %v2407 = vsub.s32 %v2403, %v2406
    %vm2408 = vcmp.lt.s32.totalorder %v2407, 0
    %v2409 = vsub.s32 0, %v2407
    %v2410 = vsel %vm2408, %v2409, %v2407
    %v2411 = vclz %v2410
    %v2412 = vsub.s32 %v2411, 2
    %vm2413 = vcmp.gt.s32.totalorder 0, %v2412
    %v2414 = vsel %vm2413, 0, %v2412
    %v2415 = vsub.s32 32, %v2414
    %v2416 = vshll.u32 %v2407, %v2414
    %v2417 = vshrl.u32 %v2399, %v2415
    %v2418 = vor.u32 %v2416, %v2417
    %v2419 = vsub.s32 4294967266, %v2414
    %v2420 = vadd.s32 %v2419, 127
    %v2421 = vshll.u32 %v2420, 23
    %v2422 = vor.u32 4788187, %v2421
    %v2423 = vand.u32 2147483647, %v2422
    %v2425 = vcvt.s32.f32 %v2418
    %v2426 = vmul.f32 %v2425, %v2423
    %v2427 = vxor.u32 %v2426, 2147483648
    %v2428 = vsel %vm2345, %v2427, %v2426
    %v2429 = vsub.s32 4, %v2405
    %v2430 = vsel %vm2345, %v2429, %v2405
    %v2431 = vsel %vm2344, %v1717, %v2428
    %v2432 = vsel %vm2344, 0, %v2430
    %v2433 = vcosq.f32.pop %v2431
    %v2434 = vsinq.f32.pop %v2431
    %vm2435 = vweird.f32 %v1717
    %v2436 = vadd.s32 %v2432, 3
    %v2437 = vand.u32 %v2436, 3
    %vm2438 = vcmp.lt.s32.totalorder %v2437, 2
    %vm2439 = vcmp.eq.s32.totalorder %v2437, 0
    %v2440 = vxor.u32 %v2434, 2147483648
    %v2441 = vsel %vm2439, %v2433, %v2440
    %vm2442 = vcmp.eq.s32.totalorder %v2437, 2
    %v2443 = vxor.u32 %v2433, 2147483648
    %v2444 = vsel %vm2442, %v2443, %v2434
    %v2445 = vsel %vm2438, %v2441, %v2444
    %v2446 = vsel %vm2435, nan, %v2445
    %v2447 = vand.u32 2147483647, %v1718
    %vm2448 = vcmp.le.f32.partialorder %v2447, 0.7853982
    %vm2449 = vcmp.lt.s32.totalorder %v1718, 0
    %v2450 = vand.u32 %v1718, 2139095040
    %v2451 = vshrl.u32 %v2450, 23
    %v2452 = vsub.s32 %v2451, 127
    %v2453 = vand.u32 2147483647, %v1718
    %v2454 = vand.u32 %v2453, 8388607
    %v2455 = vor.u32 %v2454, 8388608
    %v2456 = vsub.s32 0, %v2455
    %v2457 = vadd.s32 %v2452, 1
    %vm2458 = vcmp.gt.s32.totalorder %v2457, 0
    %v2459 = vsel %vm2458, %v2457, 0
    %v2460 = vshrl.u32 %v2459, 5
    %v2461 = vand.u32 %v2459, 31
    %v2462 = vsub.s32 32, %v2461
    %v2463 = vshrl.u32 683565275, %v2462
    %v2464 = vshll.u32 683565275, %v2461
    %v2465 = vshrl.u32 2475754826, %v2462
    %v2466 = vor.u32 %v2464, %v2465
    %v2467 = vshll.u32 2475754826, %v2461
    %v2468 = vshrl.u32 2131351028, %v2462
    %v2469 = vor.u32 %v2467, %v2468
    %v2470 = vshll.u32 2131351028, %v2461
    %v2471 = vshrl.u32 2102212464, %v2462
    %v2472 = vor.u32 %v2470, %v2471
    %v2473 = vshll.u32 2102212464, %v2461
    %v2474 = vshrl.u32 920167782, %v2462
    %v2475 = vor.u32 %v2473, %v2474
    %v2476 = vshll.u32 920167782, %v2461
    %v2477 = vshrl.u32 1326507024, %v2462
    %v2478 = vor.u32 %v2476, %v2477
    %vm2479 = vcmp.lt.s32.totalorder %v2460, 1
    %vm2480 = vcmp.lt.s32.totalorder %v2460, 2
    %vm2481 = vcmp.lt.s32.totalorder %v2460, 3
    %vm2482 = vcmp.lt.s32.totalorder %v2460, 4
    %v2483 = vsel %vm2479, %v2463, %v2466
    %v2484 = vsel %vm2482, %v2472, 2102212464
    %v2485 = vsel %vm2481, %v2469, %v2484
    %v2486 = vsel %vm2480, %v2483, %v2485
    %v2487 = vsel %vm2479, %v2466, %v2469
    %v2488 = vsel %vm2482, %v2475, 920167782
    %v2489 = vsel %vm2481, %v2472, %v2488
    %v2490 = vsel %vm2480, %v2487, %v2489
    %v2491 = vsel %vm2479, %v2469, %v2472
    %v2492 = vsel %vm2482, %v2478, 1326507024
    %v2493 = vsel %vm2481, %v2475, %v2492
    %v2494 = vsel %vm2480, %v2491, %v2493
    %v2495 = vshll.u32 %v2455, 8
    %v2496 = vmul.u32.u64.compose %v2495, %v2494
    %v2497 = vextract.low.u32 %v2496
    %v2498 = vextract.high.u32 %v2496
    %v2499 = vmul.u32.u64.compose %v2495, %v2490
    %v2500 = vextract.low.u32 %v2499
    %v2501 = vextract.high.u32 %v2499
    %v2502 = vmul.u32 %v2495, %v2486
    %v2503 = vadd.s32 %v2498, %v2500
    %vm2504 = vc.u32 %v2498, %v2500
    %v2505 = vadd.s32 %v2501, 1
    %v2506 = vsel %vm2504, %v2505, %v2501
    %v2507 = vadd.s32 %v2502, %v2506
    %v2508 = vadd.s32 %v2507, 536870912
    %v2509 = vshrl.u32 %v2508, 30
    %v2510 = vshll.u32 %v2509, 30
    %v2511 = vsub.s32 %v2507, %v2510
    %vm2512 = vcmp.lt.s32.totalorder %v2511, 0
    %v2513 = vsub.s32 0, %v2511
    %v2514 = vsel %vm2512, %v2513, %v2511
    %v2515 = vclz %v2514
    %v2516 = vsub.s32 %v2515, 2
    %vm2517 = vcmp.gt.s32.totalorder 0, %v2516
    %v2518 = vsel %vm2517, 0, %v2516
    %v2519 = vsub.s32 32, %v2518
    %v2520 = vshll.u32 %v2511, %v2518
    %v2521 = vshrl.u32 %v2503, %v2519
    %v2522 = vor.u32 %v2520, %v2521
    %v2523 = vsub.s32 4294967266, %v2518
    %v2524 = vadd.s32 %v2523, 127
    %v2525 = vshll.u32 %v2524, 23
    %v2526 = vor.u32 4788187, %v2525
    %v2527 = vand.u32 2147483647, %v2526
    %v2529 = vcvt.s32.f32 %v2522
    %v2530 = vmul.f32 %v2529, %v2527
    %v2531 = vxor.u32 %v2530, 2147483648
    %v2532 = vsel %vm2449, %v2531, %v2530
    %v2533 = vsub.s32 4, %v2509
    %v2534 = vsel %vm2449, %v2533, %v2509
    %v2535 = vsel %vm2448, %v1718, %v2532
    %v2536 = vsel %vm2448, 0, %v2534
    %v2537 = vcosq.f32.pop %v2535
    %v2538 = vsinq.f32.pop %v2535
    %vm2539 = vweird.f32 %v1718
    %v2540 = vadd.s32 %v2536, 3
    %v2541 = vand.u32 %v2540, 3
    %vm2542 = vcmp.lt.s32.totalorder %v2541, 2
    %vm2543 = vcmp.eq.s32.totalorder %v2541, 0
    %v2544 = vxor.u32 %v2538, 2147483648
    %v2545 = vsel %vm2543, %v2537, %v2544
    %vm2546 = vcmp.eq.s32.totalorder %v2541, 2
    %v2547 = vxor.u32 %v2537, 2147483648
    %v2548 = vsel %vm2546, %v2547, %v2538
    %v2549 = vsel %vm2542, %v2545, %v2548
    %v2550 = vsel %vm2539, nan, %v2549
    %s2551 = scalar_lea.vmem [#allocation5], 192
    %2552 = vst [vmem:[%s2551] sm:$0xff] %v1822
    %2553 = vst [vmem:[%s2551 + $0x8] sm:$0xff] %v1926
    %2554 = vst [vmem:[%s2551 + $0x10] sm:$0xff] %v2030
    %2555 = vst [vmem:[%s2551 + $0x18] sm:$0xff] %v2134
    %2556 = vst [vmem:[%s2551 + $0x20] sm:$0xff] %v2238
    %2557 = vst [vmem:[%s2551 + $0x28] sm:$0xff] %v2342
    %2558 = vst [vmem:[%s2551 + $0x30] sm:$0xff] %v2446
    %2559 = vst [vmem:[%s2551 + $0x38] sm:$0xff] %v2550
    %v2560 = vand.u32 2147483647, %v1711
    %vm2561 = vcmp.le.f32.partialorder %v2560, 0.7853982
    %vm2562 = vcmp.lt.s32.totalorder %v1711, 0
    %v2563 = vand.u32 %v1711, 2139095040
    %v2564 = vshrl.u32 %v2563, 23
    %v2565 = vsub.s32 %v2564, 127
    %v2566 = vand.u32 2147483647, %v1711
    %v2567 = vand.u32 %v2566, 8388607
    %v2568 = vor.u32 %v2567, 8388608
    %v2569 = vsub.s32 0, %v2568
    %v2570 = vadd.s32 %v2565, 1
    %vm2571 = vcmp.gt.s32.totalorder %v2570, 0
    %v2572 = vsel %vm2571, %v2570, 0
    %v2573 = vshrl.u32 %v2572, 5
    %v2574 = vand.u32 %v2572, 31
    %v2575 = vsub.s32 32, %v2574
    %v2576 = vshrl.u32 683565275, %v2575
    %v2577 = vshll.u32 683565275, %v2574
    %v2578 = vshrl.u32 2475754826, %v2575
    %v2579 = vor.u32 %v2577, %v2578
    %v2580 = vshll.u32 2475754826, %v2574
    %v2581 = vshrl.u32 2131351028, %v2575
    %v2582 = vor.u32 %v2580, %v2581
    %v2583 = vshll.u32 2131351028, %v2574
    %v2584 = vshrl.u32 2102212464, %v2575
    %v2585 = vor.u32 %v2583, %v2584
    %v2586 = vshll.u32 2102212464, %v2574
    %v2587 = vshrl.u32 920167782, %v2575
    %v2588 = vor.u32 %v2586, %v2587
    %v2589 = vshll.u32 920167782, %v2574
    %v2590 = vshrl.u32 1326507024, %v2575
    %v2591 = vor.u32 %v2589, %v2590
    %vm2592 = vcmp.lt.s32.totalorder %v2573, 1
    %vm2593 = vcmp.lt.s32.totalorder %v2573, 2
    %vm2594 = vcmp.lt.s32.totalorder %v2573, 3
    %vm2595 = vcmp.lt.s32.totalorder %v2573, 4
    %v2596 = vsel %vm2592, %v2576, %v2579
    %v2597 = vsel %vm2595, %v2585, 2102212464
    %v2598 = vsel %vm2594, %v2582, %v2597
    %v2599 = vsel %vm2593, %v2596, %v2598
    %v2600 = vsel %vm2592, %v2579, %v2582
    %v2601 = vsel %vm2595, %v2588, 920167782
    %v2602 = vsel %vm2594, %v2585, %v2601
    %v2603 = vsel %vm2593, %v2600, %v2602
    %v2604 = vsel %vm2592, %v2582, %v2585
    %v2605 = vsel %vm2595, %v2591, 1326507024
    %v2606 = vsel %vm2594, %v2588, %v2605
    %v2607 = vsel %vm2593, %v2604, %v2606
    %v2608 = vshll.u32 %v2568, 8
    %v2609 = vmul.u32.u64.compose %v2608, %v2607
    %v2610 = vextract.low.u32 %v2609
    %v2611 = vextract.high.u32 %v2609
    %v2612 = vmul.u32.u64.compose %v2608, %v2603
    %v2613 = vextract.low.u32 %v2612
    %v2614 = vextract.high.u32 %v2612
    %v2615 = vmul.u32 %v2608, %v2599
    %v2616 = vadd.s32 %v2611, %v2613
    %vm2617 = vc.u32 %v2611, %v2613
    %v2618 = vadd.s32 %v2614, 1
    %v2619 = vsel %vm2617, %v2618, %v2614
    %v2620 = vadd.s32 %v2615, %v2619
    %v2621 = vadd.s32 %v2620, 536870912
    %v2622 = vshrl.u32 %v2621, 30
    %v2623 = vshll.u32 %v2622, 30
    %v2624 = vsub.s32 %v2620, %v2623
    %vm2625 = vcmp.lt.s32.totalorder %v2624, 0
    %v2626 = vsub.s32 0, %v2624
    %v2627 = vsel %vm2625, %v2626, %v2624
    %v2628 = vclz %v2627
    %v2629 = vsub.s32 %v2628, 2
    %vm2630 = vcmp.gt.s32.totalorder 0, %v2629
    %v2631 = vsel %vm2630, 0, %v2629
    %v2632 = vsub.s32 32, %v2631
    %v2633 = vshll.u32 %v2624, %v2631
    %v2634 = vshrl.u32 %v2616, %v2632
    %v2635 = vor.u32 %v2633, %v2634
    %v2636 = vsub.s32 4294967266, %v2631
    %v2637 = vadd.s32 %v2636, 127
    %v2638 = vshll.u32 %v2637, 23
    %v2639 = vor.u32 4788187, %v2638
    %v2640 = vand.u32 2147483647, %v2639
    %v2642 = vcvt.s32.f32 %v2635
    %v2643 = vmul.f32 %v2642, %v2640
    %v2644 = vxor.u32 %v2643, 2147483648
    %v2645 = vsel %vm2562, %v2644, %v2643
    %v2646 = vsub.s32 4, %v2622
    %v2647 = vsel %vm2562, %v2646, %v2622
    %v2648 = vsel %vm2561, %v1711, %v2645
    %v2649 = vsel %vm2561, 0, %v2647
    %v2650 = vcosq.f32.pop %v2648
    %v2651 = vsinq.f32.pop %v2648
    %vm2652 = vweird.f32 %v1711
    %v2653 = vand.u32 %v2649, 3
    %vm2654 = vcmp.lt.s32.totalorder %v2653, 2
    %vm2655 = vcmp.eq.s32.totalorder %v2653, 0
    %v2656 = vxor.u32 %v2651, 2147483648
    %v2657 = vsel %vm2655, %v2650, %v2656
    %vm2658 = vcmp.eq.s32.totalorder %v2653, 2
    %v2659 = vxor.u32 %v2650, 2147483648
    %v2660 = vsel %vm2658, %v2659, %v2651
    %v2661 = vsel %vm2654, %v2657, %v2660
    %v2662 = vsel %vm2652, nan, %v2661
    %v2663 = vand.u32 2147483647, %v1712
    %vm2664 = vcmp.le.f32.partialorder %v2663, 0.7853982
    %vm2665 = vcmp.lt.s32.totalorder %v1712, 0
    %v2666 = vand.u32 %v1712, 2139095040
    %v2667 = vshrl.u32 %v2666, 23
    %v2668 = vsub.s32 %v2667, 127
    %v2669 = vand.u32 2147483647, %v1712
    %v2670 = vand.u32 %v2669, 8388607
    %v2671 = vor.u32 %v2670, 8388608
    %v2672 = vsub.s32 0, %v2671
    %v2673 = vadd.s32 %v2668, 1
    %vm2674 = vcmp.gt.s32.totalorder %v2673, 0
    %v2675 = vsel %vm2674, %v2673, 0
    %v2676 = vshrl.u32 %v2675, 5
    %v2677 = vand.u32 %v2675, 31
    %v2678 = vsub.s32 32, %v2677
    %v2679 = vshrl.u32 683565275, %v2678
    %v2680 = vshll.u32 683565275, %v2677
    %v2681 = vshrl.u32 2475754826, %v2678
    %v2682 = vor.u32 %v2680, %v2681
    %v2683 = vshll.u32 2475754826, %v2677
    %v2684 = vshrl.u32 2131351028, %v2678
    %v2685 = vor.u32 %v2683, %v2684
    %v2686 = vshll.u32 2131351028, %v2677
    %v2687 = vshrl.u32 2102212464, %v2678
    %v2688 = vor.u32 %v2686, %v2687
    %v2689 = vshll.u32 2102212464, %v2677
    %v2690 = vshrl.u32 920167782, %v2678
    %v2691 = vor.u32 %v2689, %v2690
    %v2692 = vshll.u32 920167782, %v2677
    %v2693 = vshrl.u32 1326507024, %v2678
    %v2694 = vor.u32 %v2692, %v2693
    %vm2695 = vcmp.lt.s32.totalorder %v2676, 1
    %vm2696 = vcmp.lt.s32.totalorder %v2676, 2
    %vm2697 = vcmp.lt.s32.totalorder %v2676, 3
    %vm2698 = vcmp.lt.s32.totalorder %v2676, 4
    %v2699 = vsel %vm2695, %v2679, %v2682
    %v2700 = vsel %vm2698, %v2688, 2102212464
    %v2701 = vsel %vm2697, %v2685, %v2700
    %v2702 = vsel %vm2696, %v2699, %v2701
    %v2703 = vsel %vm2695, %v2682, %v2685
    %v2704 = vsel %vm2698, %v2691, 920167782
    %v2705 = vsel %vm2697, %v2688, %v2704
    %v2706 = vsel %vm2696, %v2703, %v2705
    %v2707 = vsel %vm2695, %v2685, %v2688
    %v2708 = vsel %vm2698, %v2694, 1326507024
    %v2709 = vsel %vm2697, %v2691, %v2708
    %v2710 = vsel %vm2696, %v2707, %v2709
    %v2711 = vshll.u32 %v2671, 8
    %v2712 = vmul.u32.u64.compose %v2711, %v2710
    %v2713 = vextract.low.u32 %v2712
    %v2714 = vextract.high.u32 %v2712
    %v2715 = vmul.u32.u64.compose %v2711, %v2706
    %v2716 = vextract.low.u32 %v2715
    %v2717 = vextract.high.u32 %v2715
    %v2718 = vmul.u32 %v2711, %v2702
    %v2719 = vadd.s32 %v2714, %v2716
    %vm2720 = vc.u32 %v2714, %v2716
    %v2721 = vadd.s32 %v2717, 1
    %v2722 = vsel %vm2720, %v2721, %v2717
    %v2723 = vadd.s32 %v2718, %v2722
    %v2724 = vadd.s32 %v2723, 536870912
    %v2725 = vshrl.u32 %v2724, 30
    %v2726 = vshll.u32 %v2725, 30
    %v2727 = vsub.s32 %v2723, %v2726
    %vm2728 = vcmp.lt.s32.totalorder %v2727, 0
    %v2729 = vsub.s32 0, %v2727
    %v2730 = vsel %vm2728, %v2729, %v2727
    %v2731 = vclz %v2730
    %v2732 = vsub.s32 %v2731, 2
    %vm2733 = vcmp.gt.s32.totalorder 0, %v2732
    %v2734 = vsel %vm2733, 0, %v2732
    %v2735 = vsub.s32 32, %v2734
    %v2736 = vshll.u32 %v2727, %v2734
    %v2737 = vshrl.u32 %v2719, %v2735
    %v2738 = vor.u32 %v2736, %v2737
    %v2739 = vsub.s32 4294967266, %v2734
    %v2740 = vadd.s32 %v2739, 127
    %v2741 = vshll.u32 %v2740, 23
    %v2742 = vor.u32 4788187, %v2741
    %v2743 = vand.u32 2147483647, %v2742
    %v2745 = vcvt.s32.f32 %v2738
    %v2746 = vmul.f32 %v2745, %v2743
    %v2747 = vxor.u32 %v2746, 2147483648
    %v2748 = vsel %vm2665, %v2747, %v2746
    %v2749 = vsub.s32 4, %v2725
    %v2750 = vsel %vm2665, %v2749, %v2725
    %v2751 = vsel %vm2664, %v1712, %v2748
    %v2752 = vsel %vm2664, 0, %v2750
    %v2753 = vcosq.f32.pop %v2751
    %v2754 = vsinq.f32.pop %v2751
    %vm2755 = vweird.f32 %v1712
    %v2756 = vand.u32 %v2752, 3
    %vm2757 = vcmp.lt.s32.totalorder %v2756, 2
    %vm2758 = vcmp.eq.s32.totalorder %v2756, 0
    %v2759 = vxor.u32 %v2754, 2147483648
    %v2760 = vsel %vm2758, %v2753, %v2759
    %vm2761 = vcmp.eq.s32.totalorder %v2756, 2
    %v2762 = vxor.u32 %v2753, 2147483648
    %v2763 = vsel %vm2761, %v2762, %v2754
    %v2764 = vsel %vm2757, %v2760, %v2763
    %v2765 = vsel %vm2755, nan, %v2764
    %v2766 = vand.u32 2147483647, %v1713
    %vm2767 = vcmp.le.f32.partialorder %v2766, 0.7853982
    %vm2768 = vcmp.lt.s32.totalorder %v1713, 0
    %v2769 = vand.u32 %v1713, 2139095040
    %v2770 = vshrl.u32 %v2769, 23
    %v2771 = vsub.s32 %v2770, 127
    %v2772 = vand.u32 2147483647, %v1713
    %v2773 = vand.u32 %v2772, 8388607
    %v2774 = vor.u32 %v2773, 8388608
    %v2775 = vsub.s32 0, %v2774
    %v2776 = vadd.s32 %v2771, 1
    %vm2777 = vcmp.gt.s32.totalorder %v2776, 0
    %v2778 = vsel %vm2777, %v2776, 0
    %v2779 = vshrl.u32 %v2778, 5
    %v2780 = vand.u32 %v2778, 31
    %v2781 = vsub.s32 32, %v2780
    %v2782 = vshrl.u32 683565275, %v2781
    %v2783 = vshll.u32 683565275, %v2780
    %v2784 = vshrl.u32 2475754826, %v2781
    %v2785 = vor.u32 %v2783, %v2784
    %v2786 = vshll.u32 2475754826, %v2780
    %v2787 = vshrl.u32 2131351028, %v2781
    %v2788 = vor.u32 %v2786, %v2787
    %v2789 = vshll.u32 2131351028, %v2780
    %v2790 = vshrl.u32 2102212464, %v2781
    %v2791 = vor.u32 %v2789, %v2790
    %v2792 = vshll.u32 2102212464, %v2780
    %v2793 = vshrl.u32 920167782, %v2781
    %v2794 = vor.u32 %v2792, %v2793
    %v2795 = vshll.u32 920167782, %v2780
    %v2796 = vshrl.u32 1326507024, %v2781
    %v2797 = vor.u32 %v2795, %v2796
    %vm2798 = vcmp.lt.s32.totalorder %v2779, 1
    %vm2799 = vcmp.lt.s32.totalorder %v2779, 2
    %vm2800 = vcmp.lt.s32.totalorder %v2779, 3
    %vm2801 = vcmp.lt.s32.totalorder %v2779, 4
    %v2802 = vsel %vm2798, %v2782, %v2785
    %v2803 = vsel %vm2801, %v2791, 2102212464
    %v2804 = vsel %vm2800, %v2788, %v2803
    %v2805 = vsel %vm2799, %v2802, %v2804
    %v2806 = vsel %vm2798, %v2785, %v2788
    %v2807 = vsel %vm2801, %v2794, 920167782
    %v2808 = vsel %vm2800, %v2791, %v2807
    %v2809 = vsel %vm2799, %v2806, %v2808
    %v2810 = vsel %vm2798, %v2788, %v2791
    %v2811 = vsel %vm2801, %v2797, 1326507024
    %v2812 = vsel %vm2800, %v2794, %v2811
    %v2813 = vsel %vm2799, %v2810, %v2812
    %v2814 = vshll.u32 %v2774, 8
    %v2815 = vmul.u32.u64.compose %v2814, %v2813
    %v2816 = vextract.low.u32 %v2815
    %v2817 = vextract.high.u32 %v2815
    %v2818 = vmul.u32.u64.compose %v2814, %v2809
    %v2819 = vextract.low.u32 %v2818
    %v2820 = vextract.high.u32 %v2818
    %v2821 = vmul.u32 %v2814, %v2805
    %v2822 = vadd.s32 %v2817, %v2819
    %vm2823 = vc.u32 %v2817, %v2819
    %v2824 = vadd.s32 %v2820, 1
    %v2825 = vsel %vm2823, %v2824, %v2820
    %v2826 = vadd.s32 %v2821, %v2825
    %v2827 = vadd.s32 %v2826, 536870912
    %v2828 = vshrl.u32 %v2827, 30
    %v2829 = vshll.u32 %v2828, 30
    %v2830 = vsub.s32 %v2826, %v2829
    %vm2831 = vcmp.lt.s32.totalorder %v2830, 0
    %v2832 = vsub.s32 0, %v2830
    %v2833 = vsel %vm2831, %v2832, %v2830
    %v2834 = vclz %v2833
    %v2835 = vsub.s32 %v2834, 2
    %vm2836 = vcmp.gt.s32.totalorder 0, %v2835
    %v2837 = vsel %vm2836, 0, %v2835
    %v2838 = vsub.s32 32, %v2837
    %v2839 = vshll.u32 %v2830, %v2837
    %v2840 = vshrl.u32 %v2822, %v2838
    %v2841 = vor.u32 %v2839, %v2840
    %v2842 = vsub.s32 4294967266, %v2837
    %v2843 = vadd.s32 %v2842, 127
    %v2844 = vshll.u32 %v2843, 23
    %v2845 = vor.u32 4788187, %v2844
    %v2846 = vand.u32 2147483647, %v2845
    %v2848 = vcvt.s32.f32 %v2841
    %v2849 = vmul.f32 %v2848, %v2846
    %v2850 = vxor.u32 %v2849, 2147483648
    %v2851 = vsel %vm2768, %v2850, %v2849
    %v2852 = vsub.s32 4, %v2828
    %v2853 = vsel %vm2768, %v2852, %v2828
    %v2854 = vsel %vm2767, %v1713, %v2851
    %v2855 = vsel %vm2767, 0, %v2853
    %v2856 = vcosq.f32.pop %v2854
    %v2857 = vsinq.f32.pop %v2854
    %vm2858 = vweird.f32 %v1713
    %v2859 = vand.u32 %v2855, 3
    %vm2860 = vcmp.lt.s32.totalorder %v2859, 2
    %vm2861 = vcmp.eq.s32.totalorder %v2859, 0
    %v2862 = vxor.u32 %v2857, 2147483648
    %v2863 = vsel %vm2861, %v2856, %v2862
    %vm2864 = vcmp.eq.s32.totalorder %v2859, 2
    %v2865 = vxor.u32 %v2856, 2147483648
    %v2866 = vsel %vm2864, %v2865, %v2857
    %v2867 = vsel %vm2860, %v2863, %v2866
    %v2868 = vsel %vm2858, nan, %v2867
    %v2869 = vand.u32 2147483647, %v1714
    %vm2870 = vcmp.le.f32.partialorder %v2869, 0.7853982
    %vm2871 = vcmp.lt.s32.totalorder %v1714, 0
    %v2872 = vand.u32 %v1714, 2139095040
    %v2873 = vshrl.u32 %v2872, 23
    %v2874 = vsub.s32 %v2873, 127
    %v2875 = vand.u32 2147483647, %v1714
    %v2876 = vand.u32 %v2875, 8388607
    %v2877 = vor.u32 %v2876, 8388608
    %v2878 = vsub.s32 0, %v2877
    %v2879 = vadd.s32 %v2874, 1
    %vm2880 = vcmp.gt.s32.totalorder %v2879, 0
    %v2881 = vsel %vm2880, %v2879, 0
    %v2882 = vshrl.u32 %v2881, 5
    %v2883 = vand.u32 %v2881, 31
    %v2884 = vsub.s32 32, %v2883
    %v2885 = vshrl.u32 683565275, %v2884
    %v2886 = vshll.u32 683565275, %v2883
    %v2887 = vshrl.u32 2475754826, %v2884
    %v2888 = vor.u32 %v2886, %v2887
    %v2889 = vshll.u32 2475754826, %v2883
    %v2890 = vshrl.u32 2131351028, %v2884
    %v2891 = vor.u32 %v2889, %v2890
    %v2892 = vshll.u32 2131351028, %v2883
    %v2893 = vshrl.u32 2102212464, %v2884
    %v2894 = vor.u32 %v2892, %v2893
    %v2895 = vshll.u32 2102212464, %v2883
    %v2896 = vshrl.u32 920167782, %v2884
    %v2897 = vor.u32 %v2895, %v2896
    %v2898 = vshll.u32 920167782, %v2883
    %v2899 = vshrl.u32 1326507024, %v2884
    %v2900 = vor.u32 %v2898, %v2899
    %vm2901 = vcmp.lt.s32.totalorder %v2882, 1
    %vm2902 = vcmp.lt.s32.totalorder %v2882, 2
    %vm2903 = vcmp.lt.s32.totalorder %v2882, 3
    %vm2904 = vcmp.lt.s32.totalorder %v2882, 4
    %v2905 = vsel %vm2901, %v2885, %v2888
    %v2906 = vsel %vm2904, %v2894, 2102212464
    %v2907 = vsel %vm2903, %v2891, %v2906
    %v2908 = vsel %vm2902, %v2905, %v2907
    %v2909 = vsel %vm2901, %v2888, %v2891
    %v2910 = vsel %vm2904, %v2897, 920167782
    %v2911 = vsel %vm2903, %v2894, %v2910
    %v2912 = vsel %vm2902, %v2909, %v2911
    %v2913 = vsel %vm2901, %v2891, %v2894
    %v2914 = vsel %vm2904, %v2900, 1326507024
    %v2915 = vsel %vm2903, %v2897, %v2914
    %v2916 = vsel %vm2902, %v2913, %v2915
    %v2917 = vshll.u32 %v2877, 8
    %v2918 = vmul.u32.u64.compose %v2917, %v2916
    %v2919 = vextract.low.u32 %v2918
    %v2920 = vextract.high.u32 %v2918
    %v2921 = vmul.u32.u64.compose %v2917, %v2912
    %v2922 = vextract.low.u32 %v2921
    %v2923 = vextract.high.u32 %v2921
    %v2924 = vmul.u32 %v2917, %v2908
    %v2925 = vadd.s32 %v2920, %v2922
    %vm2926 = vc.u32 %v2920, %v2922
    %v2927 = vadd.s32 %v2923, 1
    %v2928 = vsel %vm2926, %v2927, %v2923
    %v2929 = vadd.s32 %v2924, %v2928
    %v2930 = vadd.s32 %v2929, 536870912
    %v2931 = vshrl.u32 %v2930, 30
    %v2932 = vshll.u32 %v2931, 30
    %v2933 = vsub.s32 %v2929, %v2932
    %vm2934 = vcmp.lt.s32.totalorder %v2933, 0
    %v2935 = vsub.s32 0, %v2933
    %v2936 = vsel %vm2934, %v2935, %v2933
    %v2937 = vclz %v2936
    %v2938 = vsub.s32 %v2937, 2
    %vm2939 = vcmp.gt.s32.totalorder 0, %v2938
    %v2940 = vsel %vm2939, 0, %v2938
    %v2941 = vsub.s32 32, %v2940
    %v2942 = vshll.u32 %v2933, %v2940
    %v2943 = vshrl.u32 %v2925, %v2941
    %v2944 = vor.u32 %v2942, %v2943
    %v2945 = vsub.s32 4294967266, %v2940
    %v2946 = vadd.s32 %v2945, 127
    %v2947 = vshll.u32 %v2946, 23
    %v2948 = vor.u32 4788187, %v2947
    %v2949 = vand.u32 2147483647, %v2948
    %v2951 = vcvt.s32.f32 %v2944
    %v2952 = vmul.f32 %v2951, %v2949
    %v2953 = vxor.u32 %v2952, 2147483648
    %v2954 = vsel %vm2871, %v2953, %v2952
    %v2955 = vsub.s32 4, %v2931
    %v2956 = vsel %vm2871, %v2955, %v2931
    %v2957 = vsel %vm2870, %v1714, %v2954
    %v2958 = vsel %vm2870, 0, %v2956
    %v2959 = vcosq.f32.pop %v2957
    %v2960 = vsinq.f32.pop %v2957
    %vm2961 = vweird.f32 %v1714
    %v2962 = vand.u32 %v2958, 3
    %vm2963 = vcmp.lt.s32.totalorder %v2962, 2
    %vm2964 = vcmp.eq.s32.totalorder %v2962, 0
    %v2965 = vxor.u32 %v2960, 2147483648
    %v2966 = vsel %vm2964, %v2959, %v2965
    %vm2967 = vcmp.eq.s32.totalorder %v2962, 2
    %v2968 = vxor.u32 %v2959, 2147483648
    %v2969 = vsel %vm2967, %v2968, %v2960
    %v2970 = vsel %vm2963, %v2966, %v2969
    %v2971 = vsel %vm2961, nan, %v2970
    %v2972 = vand.u32 2147483647, %v1715
    %vm2973 = vcmp.le.f32.partialorder %v2972, 0.7853982
    %vm2974 = vcmp.lt.s32.totalorder %v1715, 0
    %v2975 = vand.u32 %v1715, 2139095040
    %v2976 = vshrl.u32 %v2975, 23
    %v2977 = vsub.s32 %v2976, 127
    %v2978 = vand.u32 2147483647, %v1715
    %v2979 = vand.u32 %v2978, 8388607
    %v2980 = vor.u32 %v2979, 8388608
    %v2981 = vsub.s32 0, %v2980
    %v2982 = vadd.s32 %v2977, 1
    %vm2983 = vcmp.gt.s32.totalorder %v2982, 0
    %v2984 = vsel %vm2983, %v2982, 0
    %v2985 = vshrl.u32 %v2984, 5
    %v2986 = vand.u32 %v2984, 31
    %v2987 = vsub.s32 32, %v2986
    %v2988 = vshrl.u32 683565275, %v2987
    %v2989 = vshll.u32 683565275, %v2986
    %v2990 = vshrl.u32 2475754826, %v2987
    %v2991 = vor.u32 %v2989, %v2990
    %v2992 = vshll.u32 2475754826, %v2986
    %v2993 = vshrl.u32 2131351028, %v2987
    %v2994 = vor.u32 %v2992, %v2993
    %v2995 = vshll.u32 2131351028, %v2986
    %v2996 = vshrl.u32 2102212464, %v2987
    %v2997 = vor.u32 %v2995, %v2996
    %v2998 = vshll.u32 2102212464, %v2986
    %v2999 = vshrl.u32 920167782, %v2987
    %v3000 = vor.u32 %v2998, %v2999
    %v3001 = vshll.u32 920167782, %v2986
    %v3002 = vshrl.u32 1326507024, %v2987
    %v3003 = vor.u32 %v3001, %v3002
    %vm3004 = vcmp.lt.s32.totalorder %v2985, 1
    %vm3005 = vcmp.lt.s32.totalorder %v2985, 2
    %vm3006 = vcmp.lt.s32.totalorder %v2985, 3
    %vm3007 = vcmp.lt.s32.totalorder %v2985, 4
    %v3008 = vsel %vm3004, %v2988, %v2991
    %v3009 = vsel %vm3007, %v2997, 2102212464
    %v3010 = vsel %vm3006, %v2994, %v3009
    %v3011 = vsel %vm3005, %v3008, %v3010
    %v3012 = vsel %vm3004, %v2991, %v2994
    %v3013 = vsel %vm3007, %v3000, 920167782
    %v3014 = vsel %vm3006, %v2997, %v3013
    %v3015 = vsel %vm3005, %v3012, %v3014
    %v3016 = vsel %vm3004, %v2994, %v2997
    %v3017 = vsel %vm3007, %v3003, 1326507024
    %v3018 = vsel %vm3006, %v3000, %v3017
    %v3019 = vsel %vm3005, %v3016, %v3018
    %v3020 = vshll.u32 %v2980, 8
    %v3021 = vmul.u32.u64.compose %v3020, %v3019
    %v3022 = vextract.low.u32 %v3021
    %v3023 = vextract.high.u32 %v3021
    %v3024 = vmul.u32.u64.compose %v3020, %v3015
    %v3025 = vextract.low.u32 %v3024
    %v3026 = vextract.high.u32 %v3024
    %v3027 = vmul.u32 %v3020, %v3011
    %v3028 = vadd.s32 %v3023, %v3025
    %vm3029 = vc.u32 %v3023, %v3025
    %v3030 = vadd.s32 %v3026, 1
    %v3031 = vsel %vm3029, %v3030, %v3026
    %v3032 = vadd.s32 %v3027, %v3031
    %v3033 = vadd.s32 %v3032, 536870912
    %v3034 = vshrl.u32 %v3033, 30
    %v3035 = vshll.u32 %v3034, 30
    %v3036 = vsub.s32 %v3032, %v3035
    %vm3037 = vcmp.lt.s32.totalorder %v3036, 0
    %v3038 = vsub.s32 0, %v3036
    %v3039 = vsel %vm3037, %v3038, %v3036
    %v3040 = vclz %v3039
    %v3041 = vsub.s32 %v3040, 2
    %vm3042 = vcmp.gt.s32.totalorder 0, %v3041
    %v3043 = vsel %vm3042, 0, %v3041
    %v3044 = vsub.s32 32, %v3043
    %v3045 = vshll.u32 %v3036, %v3043
    %v3046 = vshrl.u32 %v3028, %v3044
    %v3047 = vor.u32 %v3045, %v3046
    %v3048 = vsub.s32 4294967266, %v3043
    %v3049 = vadd.s32 %v3048, 127
    %v3050 = vshll.u32 %v3049, 23
    %v3051 = vor.u32 4788187, %v3050
    %v3052 = vand.u32 2147483647, %v3051
    %v3054 = vcvt.s32.f32 %v3047
    %v3055 = vmul.f32 %v3054, %v3052
    %v3056 = vxor.u32 %v3055, 2147483648
    %v3057 = vsel %vm2974, %v3056, %v3055
    %v3058 = vsub.s32 4, %v3034
    %v3059 = vsel %vm2974, %v3058, %v3034
    %v3060 = vsel %vm2973, %v1715, %v3057
    %v3061 = vsel %vm2973, 0, %v3059
    %v3062 = vcosq.f32.pop %v3060
    %v3063 = vsinq.f32.pop %v3060
    %vm3064 = vweird.f32 %v1715
    %v3065 = vand.u32 %v3061, 3
    %vm3066 = vcmp.lt.s32.totalorder %v3065, 2
    %vm3067 = vcmp.eq.s32.totalorder %v3065, 0
    %v3068 = vxor.u32 %v3063, 2147483648
    %v3069 = vsel %vm3067, %v3062, %v3068
    %vm3070 = vcmp.eq.s32.totalorder %v3065, 2
    %v3071 = vxor.u32 %v3062, 2147483648
    %v3072 = vsel %vm3070, %v3071, %v3063
    %v3073 = vsel %vm3066, %v3069, %v3072
    %v3074 = vsel %vm3064, nan, %v3073
    %v3075 = vand.u32 2147483647, %v1716
    %vm3076 = vcmp.le.f32.partialorder %v3075, 0.7853982
    %vm3077 = vcmp.lt.s32.totalorder %v1716, 0
    %v3078 = vand.u32 %v1716, 2139095040
    %v3079 = vshrl.u32 %v3078, 23
    %v3080 = vsub.s32 %v3079, 127
    %v3081 = vand.u32 2147483647, %v1716
    %v3082 = vand.u32 %v3081, 8388607
    %v3083 = vor.u32 %v3082, 8388608
    %v3084 = vsub.s32 0, %v3083
    %v3085 = vadd.s32 %v3080, 1
    %vm3086 = vcmp.gt.s32.totalorder %v3085, 0
    %v3087 = vsel %vm3086, %v3085, 0
    %v3088 = vshrl.u32 %v3087, 5
    %v3089 = vand.u32 %v3087, 31
    %v3090 = vsub.s32 32, %v3089
    %v3091 = vshrl.u32 683565275, %v3090
    %v3092 = vshll.u32 683565275, %v3089
    %v3093 = vshrl.u32 2475754826, %v3090
    %v3094 = vor.u32 %v3092, %v3093
    %v3095 = vshll.u32 2475754826, %v3089
    %v3096 = vshrl.u32 2131351028, %v3090
    %v3097 = vor.u32 %v3095, %v3096
    %v3098 = vshll.u32 2131351028, %v3089
    %v3099 = vshrl.u32 2102212464, %v3090
    %v3100 = vor.u32 %v3098, %v3099
    %v3101 = vshll.u32 2102212464, %v3089
    %v3102 = vshrl.u32 920167782, %v3090
    %v3103 = vor.u32 %v3101, %v3102
    %v3104 = vshll.u32 920167782, %v3089
    %v3105 = vshrl.u32 1326507024, %v3090
    %v3106 = vor.u32 %v3104, %v3105
    %vm3107 = vcmp.lt.s32.totalorder %v3088, 1
    %vm3108 = vcmp.lt.s32.totalorder %v3088, 2
    %vm3109 = vcmp.lt.s32.totalorder %v3088, 3
    %vm3110 = vcmp.lt.s32.totalorder %v3088, 4
    %v3111 = vsel %vm3107, %v3091, %v3094
    %v3112 = vsel %vm3110, %v3100, 2102212464
    %v3113 = vsel %vm3109, %v3097, %v3112
    %v3114 = vsel %vm3108, %v3111, %v3113
    %v3115 = vsel %vm3107, %v3094, %v3097
    %v3116 = vsel %vm3110, %v3103, 920167782
    %v3117 = vsel %vm3109, %v3100, %v3116
    %v3118 = vsel %vm3108, %v3115, %v3117
    %v3119 = vsel %vm3107, %v3097, %v3100
    %v3120 = vsel %vm3110, %v3106, 1326507024
    %v3121 = vsel %vm3109, %v3103, %v3120
    %v3122 = vsel %vm3108, %v3119, %v3121
    %v3123 = vshll.u32 %v3083, 8
    %v3124 = vmul.u32.u64.compose %v3123, %v3122
    %v3125 = vextract.low.u32 %v3124
    %v3126 = vextract.high.u32 %v3124
    %v3127 = vmul.u32.u64.compose %v3123, %v3118
    %v3128 = vextract.low.u32 %v3127
    %v3129 = vextract.high.u32 %v3127
    %v3130 = vmul.u32 %v3123, %v3114
    %v3131 = vadd.s32 %v3126, %v3128
    %vm3132 = vc.u32 %v3126, %v3128
    %v3133 = vadd.s32 %v3129, 1
    %v3134 = vsel %vm3132, %v3133, %v3129
    %v3135 = vadd.s32 %v3130, %v3134
    %v3136 = vadd.s32 %v3135, 536870912
    %v3137 = vshrl.u32 %v3136, 30
    %v3138 = vshll.u32 %v3137, 30
    %v3139 = vsub.s32 %v3135, %v3138
    %vm3140 = vcmp.lt.s32.totalorder %v3139, 0
    %v3141 = vsub.s32 0, %v3139
    %v3142 = vsel %vm3140, %v3141, %v3139
    %v3143 = vclz %v3142
    %v3144 = vsub.s32 %v3143, 2
    %vm3145 = vcmp.gt.s32.totalorder 0, %v3144
    %v3146 = vsel %vm3145, 0, %v3144
    %v3147 = vsub.s32 32, %v3146
    %v3148 = vshll.u32 %v3139, %v3146
    %v3149 = vshrl.u32 %v3131, %v3147
    %v3150 = vor.u32 %v3148, %v3149
    %v3151 = vsub.s32 4294967266, %v3146
    %v3152 = vadd.s32 %v3151, 127
    %v3153 = vshll.u32 %v3152, 23
    %v3154 = vor.u32 4788187, %v3153
    %v3155 = vand.u32 2147483647, %v3154
    %v3157 = vcvt.s32.f32 %v3150
    %v3158 = vmul.f32 %v3157, %v3155
    %v3159 = vxor.u32 %v3158, 2147483648
    %v3160 = vsel %vm3077, %v3159, %v3158
    %v3161 = vsub.s32 4, %v3137
    %v3162 = vsel %vm3077, %v3161, %v3137
    %v3163 = vsel %vm3076, %v1716, %v3160
    %v3164 = vsel %vm3076, 0, %v3162
    %v3165 = vcosq.f32.pop %v3163
    %v3166 = vsinq.f32.pop %v3163
    %vm3167 = vweird.f32 %v1716
    %v3168 = vand.u32 %v3164, 3
    %vm3169 = vcmp.lt.s32.totalorder %v3168, 2
    %vm3170 = vcmp.eq.s32.totalorder %v3168, 0
    %v3171 = vxor.u32 %v3166, 2147483648
    %v3172 = vsel %vm3170, %v3165, %v3171
    %vm3173 = vcmp.eq.s32.totalorder %v3168, 2
    %v3174 = vxor.u32 %v3165, 2147483648
    %v3175 = vsel %vm3173, %v3174, %v3166
    %v3176 = vsel %vm3169, %v3172, %v3175
    %v3177 = vsel %vm3167, nan, %v3176
    %v3178 = vand.u32 2147483647, %v1717
    %vm3179 = vcmp.le.f32.partialorder %v3178, 0.7853982
    %vm3180 = vcmp.lt.s32.totalorder %v1717, 0
    %v3181 = vand.u32 %v1717, 2139095040
    %v3182 = vshrl.u32 %v3181, 23
    %v3183 = vsub.s32 %v3182, 127
    %v3184 = vand.u32 2147483647, %v1717
    %v3185 = vand.u32 %v3184, 8388607
    %v3186 = vor.u32 %v3185, 8388608
    %v3187 = vsub.s32 0, %v3186
    %v3188 = vadd.s32 %v3183, 1
    %vm3189 = vcmp.gt.s32.totalorder %v3188, 0
    %v3190 = vsel %vm3189, %v3188, 0
    %v3191 = vshrl.u32 %v3190, 5
    %v3192 = vand.u32 %v3190, 31
    %v3193 = vsub.s32 32, %v3192
    %v3194 = vshrl.u32 683565275, %v3193
    %v3195 = vshll.u32 683565275, %v3192
    %v3196 = vshrl.u32 2475754826, %v3193
    %v3197 = vor.u32 %v3195, %v3196
    %v3198 = vshll.u32 2475754826, %v3192
    %v3199 = vshrl.u32 2131351028, %v3193
    %v3200 = vor.u32 %v3198, %v3199
    %v3201 = vshll.u32 2131351028, %v3192
    %v3202 = vshrl.u32 2102212464, %v3193
    %v3203 = vor.u32 %v3201, %v3202
    %v3204 = vshll.u32 2102212464, %v3192
    %v3205 = vshrl.u32 920167782, %v3193
    %v3206 = vor.u32 %v3204, %v3205
    %v3207 = vshll.u32 920167782, %v3192
    %v3208 = vshrl.u32 1326507024, %v3193
    %v3209 = vor.u32 %v3207, %v3208
    %vm3210 = vcmp.lt.s32.totalorder %v3191, 1
    %vm3211 = vcmp.lt.s32.totalorder %v3191, 2
    %vm3212 = vcmp.lt.s32.totalorder %v3191, 3
    %vm3213 = vcmp.lt.s32.totalorder %v3191, 4
    %v3214 = vsel %vm3210, %v3194, %v3197
    %v3215 = vsel %vm3213, %v3203, 2102212464
    %v3216 = vsel %vm3212, %v3200, %v3215
    %v3217 = vsel %vm3211, %v3214, %v3216
    %v3218 = vsel %vm3210, %v3197, %v3200
    %v3219 = vsel %vm3213, %v3206, 920167782
    %v3220 = vsel %vm3212, %v3203, %v3219
    %v3221 = vsel %vm3211, %v3218, %v3220
    %v3222 = vsel %vm3210, %v3200, %v3203
    %v3223 = vsel %vm3213, %v3209, 1326507024
    %v3224 = vsel %vm3212, %v3206, %v3223
    %v3225 = vsel %vm3211, %v3222, %v3224
    %v3226 = vshll.u32 %v3186, 8
    %v3227 = vmul.u32.u64.compose %v3226, %v3225
    %v3228 = vextract.low.u32 %v3227
    %v3229 = vextract.high.u32 %v3227
    %v3230 = vmul.u32.u64.compose %v3226, %v3221
    %v3231 = vextract.low.u32 %v3230
    %v3232 = vextract.high.u32 %v3230
    %v3233 = vmul.u32 %v3226, %v3217
    %v3234 = vadd.s32 %v3229, %v3231
    %vm3235 = vc.u32 %v3229, %v3231
    %v3236 = vadd.s32 %v3232, 1
    %v3237 = vsel %vm3235, %v3236, %v3232
    %v3238 = vadd.s32 %v3233, %v3237
    %v3239 = vadd.s32 %v3238, 536870912
    %v3240 = vshrl.u32 %v3239, 30
    %v3241 = vshll.u32 %v3240, 30
    %v3242 = vsub.s32 %v3238, %v3241
    %vm3243 = vcmp.lt.s32.totalorder %v3242, 0
    %v3244 = vsub.s32 0, %v3242
    %v3245 = vsel %vm3243, %v3244, %v3242
    %v3246 = vclz %v3245
    %v3247 = vsub.s32 %v3246, 2
    %vm3248 = vcmp.gt.s32.totalorder 0, %v3247
    %v3249 = vsel %vm3248, 0, %v3247
    %v3250 = vsub.s32 32, %v3249
    %v3251 = vshll.u32 %v3242, %v3249
    %v3252 = vshrl.u32 %v3234, %v3250
    %v3253 = vor.u32 %v3251, %v3252
    %v3254 = vsub.s32 4294967266, %v3249
    %v3255 = vadd.s32 %v3254, 127
    %v3256 = vshll.u32 %v3255, 23
    %v3257 = vor.u32 4788187, %v3256
    %v3258 = vand.u32 2147483647, %v3257
    %v3260 = vcvt.s32.f32 %v3253
    %v3261 = vmul.f32 %v3260, %v3258
    %v3262 = vxor.u32 %v3261, 2147483648
    %v3263 = vsel %vm3180, %v3262, %v3261
    %v3264 = vsub.s32 4, %v3240
    %v3265 = vsel %vm3180, %v3264, %v3240
    %v3266 = vsel %vm3179, %v1717, %v3263
    %v3267 = vsel %vm3179, 0, %v3265
    %v3268 = vcosq.f32.pop %v3266
    %v3269 = vsinq.f32.pop %v3266
    %vm3270 = vweird.f32 %v1717
    %v3271 = vand.u32 %v3267, 3
    %vm3272 = vcmp.lt.s32.totalorder %v3271, 2
    %vm3273 = vcmp.eq.s32.totalorder %v3271, 0
    %v3274 = vxor.u32 %v3269, 2147483648
    %v3275 = vsel %vm3273, %v3268, %v3274
    %vm3276 = vcmp.eq.s32.totalorder %v3271, 2
    %v3277 = vxor.u32 %v3268, 2147483648
    %v3278 = vsel %vm3276, %v3277, %v3269
    %v3279 = vsel %vm3272, %v3275, %v3278
    %v3280 = vsel %vm3270, nan, %v3279
    %v3281 = vand.u32 2147483647, %v1718
    %vm3282 = vcmp.le.f32.partialorder %v3281, 0.7853982
    %vm3283 = vcmp.lt.s32.totalorder %v1718, 0
    %v3284 = vand.u32 %v1718, 2139095040
    %v3285 = vshrl.u32 %v3284, 23
    %v3286 = vsub.s32 %v3285, 127
    %v3287 = vand.u32 2147483647, %v1718
    %v3288 = vand.u32 %v3287, 8388607
    %v3289 = vor.u32 %v3288, 8388608
    %v3290 = vsub.s32 0, %v3289
    %v3291 = vadd.s32 %v3286, 1
    %vm3292 = vcmp.gt.s32.totalorder %v3291, 0
    %v3293 = vsel %vm3292, %v3291, 0
    %v3294 = vshrl.u32 %v3293, 5
    %v3295 = vand.u32 %v3293, 31
    %v3296 = vsub.s32 32, %v3295
    %v3297 = vshrl.u32 683565275, %v3296
    %v3298 = vshll.u32 683565275, %v3295
    %v3299 = vshrl.u32 2475754826, %v3296
    %v3300 = vor.u32 %v3298, %v3299
    %v3301 = vshll.u32 2475754826, %v3295
    %v3302 = vshrl.u32 2131351028, %v3296
    %v3303 = vor.u32 %v3301, %v3302
    %v3304 = vshll.u32 2131351028, %v3295
    %v3305 = vshrl.u32 2102212464, %v3296
    %v3306 = vor.u32 %v3304, %v3305
    %v3307 = vshll.u32 2102212464, %v3295
    %v3308 = vshrl.u32 920167782, %v3296
    %v3309 = vor.u32 %v3307, %v3308
    %v3310 = vshll.u32 920167782, %v3295
    %v3311 = vshrl.u32 1326507024, %v3296
    %v3312 = vor.u32 %v3310, %v3311
    %vm3313 = vcmp.lt.s32.totalorder %v3294, 1
    %vm3314 = vcmp.lt.s32.totalorder %v3294, 2
    %vm3315 = vcmp.lt.s32.totalorder %v3294, 3
    %vm3316 = vcmp.lt.s32.totalorder %v3294, 4
    %v3317 = vsel %vm3313, %v3297, %v3300
    %v3318 = vsel %vm3316, %v3306, 2102212464
    %v3319 = vsel %vm3315, %v3303, %v3318
    %v3320 = vsel %vm3314, %v3317, %v3319
    %v3321 = vsel %vm3313, %v3300, %v3303
    %v3322 = vsel %vm3316, %v3309, 920167782
    %v3323 = vsel %vm3315, %v3306, %v3322
    %v3324 = vsel %vm3314, %v3321, %v3323
    %v3325 = vsel %vm3313, %v3303, %v3306
    %v3326 = vsel %vm3316, %v3312, 1326507024
    %v3327 = vsel %vm3315, %v3309, %v3326
    %v3328 = vsel %vm3314, %v3325, %v3327
    %v3329 = vshll.u32 %v3289, 8
    %v3330 = vmul.u32.u64.compose %v3329, %v3328
    %v3331 = vextract.low.u32 %v3330
    %v3332 = vextract.high.u32 %v3330
    %v3333 = vmul.u32.u64.compose %v3329, %v3324
    %v3334 = vextract.low.u32 %v3333
    %v3335 = vextract.high.u32 %v3333
    %v3336 = vmul.u32 %v3329, %v3320
    %v3337 = vadd.s32 %v3332, %v3334
    %vm3338 = vc.u32 %v3332, %v3334
    %v3339 = vadd.s32 %v3335, 1
    %v3340 = vsel %vm3338, %v3339, %v3335
    %v3341 = vadd.s32 %v3336, %v3340
    %v3342 = vadd.s32 %v3341, 536870912
    %v3343 = vshrl.u32 %v3342, 30
    %v3344 = vshll.u32 %v3343, 30
    %v3345 = vsub.s32 %v3341, %v3344
    %vm3346 = vcmp.lt.s32.totalorder %v3345, 0
    %v3347 = vsub.s32 0, %v3345
    %v3348 = vsel %vm3346, %v3347, %v3345
    %v3349 = vclz %v3348
    %v3350 = vsub.s32 %v3349, 2
    %vm3351 = vcmp.gt.s32.totalorder 0, %v3350
    %v3352 = vsel %vm3351, 0, %v3350
    %v3353 = vsub.s32 32, %v3352
    %v3354 = vshll.u32 %v3345, %v3352
    %v3355 = vshrl.u32 %v3337, %v3353
    %v3356 = vor.u32 %v3354, %v3355
    %v3357 = vsub.s32 4294967266, %v3352
    %v3358 = vadd.s32 %v3357, 127
    %v3359 = vshll.u32 %v3358, 23
    %v3360 = vor.u32 4788187, %v3359
    %v3361 = vand.u32 2147483647, %v3360
    %v3363 = vcvt.s32.f32 %v3356
    %v3364 = vmul.f32 %v3363, %v3361
    %v3365 = vxor.u32 %v3364, 2147483648
    %v3366 = vsel %vm3283, %v3365, %v3364
    %v3367 = vsub.s32 4, %v3343
    %v3368 = vsel %vm3283, %v3367, %v3343
    %v3369 = vsel %vm3282, %v1718, %v3366
    %v3370 = vsel %vm3282, 0, %v3368
    %v3371 = vcosq.f32.pop %v3369
    %v3372 = vsinq.f32.pop %v3369
    %vm3373 = vweird.f32 %v1718
    %v3374 = vand.u32 %v3370, 3
    %vm3375 = vcmp.lt.s32.totalorder %v3374, 2
    %vm3376 = vcmp.eq.s32.totalorder %v3374, 0
    %v3377 = vxor.u32 %v3372, 2147483648
    %v3378 = vsel %vm3376, %v3371, %v3377
    %vm3379 = vcmp.eq.s32.totalorder %v3374, 2
    %v3380 = vxor.u32 %v3371, 2147483648
    %v3381 = vsel %vm3379, %v3380, %v3372
    %v3382 = vsel %vm3375, %v3378, %v3381
    %v3383 = vsel %vm3373, nan, %v3382
    %s3384 = scalar_lea.vmem [#allocation5], 256
    %3385 = vst [vmem:[%s3384] sm:$0xff] %v2662
    %3386 = vst [vmem:[%s3384 + $0x8] sm:$0xff] %v2765
    %3387 = vst [vmem:[%s3384 + $0x10] sm:$0xff] %v2868
    %3388 = vst [vmem:[%s3384 + $0x18] sm:$0xff] %v2971
    %3389 = vst [vmem:[%s3384 + $0x20] sm:$0xff] %v3074
    %3390 = vst [vmem:[%s3384 + $0x28] sm:$0xff] %v3177
    %3391 = vst [vmem:[%s3384 + $0x30] sm:$0xff] %v3280
    %3392 = vst [vmem:[%s3384 + $0x38] sm:$0xff] %v3383
    %v3393 = vmul.f32 %v21, 4.0
    %v3394 = vmul.f32 %v22, 4.0
    %v3395 = vmul.f32 %v23, 4.0
    %v3396 = vmul.f32 %v24, 4.0
    %v3397 = vmul.f32 %v25, 4.0
    %v3398 = vmul.f32 %v26, 4.0
    %v3399 = vmul.f32 %v27, 4.0
    %v3400 = vmul.f32 %v28, 4.0
    %v3401 = vand.u32 2147483647, %v3393
    %vm3402 = vcmp.le.f32.partialorder %v3401, 0.7853982
    %vm3403 = vcmp.lt.s32.totalorder %v3393, 0
    %v3404 = vand.u32 %v3393, 2139095040
    %v3405 = vshrl.u32 %v3404, 23
    %v3406 = vsub.s32 %v3405, 127
    %v3407 = vand.u32 2147483647, %v3393
    %v3408 = vand.u32 %v3407, 8388607
    %v3409 = vor.u32 %v3408, 8388608
    %v3410 = vsub.s32 0, %v3409
    %v3411 = vadd.s32 %v3406, 1
    %vm3412 = vcmp.gt.s32.totalorder %v3411, 0
    %v3413 = vsel %vm3412, %v3411, 0
    %v3414 = vshrl.u32 %v3413, 5
    %v3415 = vand.u32 %v3413, 31
    %v3416 = vsub.s32 32, %v3415
    %v3417 = vshrl.u32 683565275, %v3416
    %v3418 = vshll.u32 683565275, %v3415
    %v3419 = vshrl.u32 2475754826, %v3416
    %v3420 = vor.u32 %v3418, %v3419
    %v3421 = vshll.u32 2475754826, %v3415
    %v3422 = vshrl.u32 2131351028, %v3416
    %v3423 = vor.u32 %v3421, %v3422
    %v3424 = vshll.u32 2131351028, %v3415
    %v3425 = vshrl.u32 2102212464, %v3416
    %v3426 = vor.u32 %v3424, %v3425
    %v3427 = vshll.u32 2102212464, %v3415
    %v3428 = vshrl.u32 920167782, %v3416
    %v3429 = vor.u32 %v3427, %v3428
    %v3430 = vshll.u32 920167782, %v3415
    %v3431 = vshrl.u32 1326507024, %v3416
    %v3432 = vor.u32 %v3430, %v3431
    %vm3433 = vcmp.lt.s32.totalorder %v3414, 1
    %vm3434 = vcmp.lt.s32.totalorder %v3414, 2
    %vm3435 = vcmp.lt.s32.totalorder %v3414, 3
    %vm3436 = vcmp.lt.s32.totalorder %v3414, 4
    %v3437 = vsel %vm3433, %v3417, %v3420
    %v3438 = vsel %vm3436, %v3426, 2102212464
    %v3439 = vsel %vm3435, %v3423, %v3438
    %v3440 = vsel %vm3434, %v3437, %v3439
    %v3441 = vsel %vm3433, %v3420, %v3423
    %v3442 = vsel %vm3436, %v3429, 920167782
    %v3443 = vsel %vm3435, %v3426, %v3442
    %v3444 = vsel %vm3434, %v3441, %v3443
    %v3445 = vsel %vm3433, %v3423, %v3426
    %v3446 = vsel %vm3436, %v3432, 1326507024
    %v3447 = vsel %vm3435, %v3429, %v3446
    %v3448 = vsel %vm3434, %v3445, %v3447
    %v3449 = vshll.u32 %v3409, 8
    %v3450 = vmul.u32.u64.compose %v3449, %v3448
    %v3451 = vextract.low.u32 %v3450
    %v3452 = vextract.high.u32 %v3450
    %v3453 = vmul.u32.u64.compose %v3449, %v3444
    %v3454 = vextract.low.u32 %v3453
    %v3455 = vextract.high.u32 %v3453
    %v3456 = vmul.u32 %v3449, %v3440
    %v3457 = vadd.s32 %v3452, %v3454
    %vm3458 = vc.u32 %v3452, %v3454
    %v3459 = vadd.s32 %v3455, 1
    %v3460 = vsel %vm3458, %v3459, %v3455
    %v3461 = vadd.s32 %v3456, %v3460
    %v3462 = vadd.s32 %v3461, 536870912
    %v3463 = vshrl.u32 %v3462, 30
    %v3464 = vshll.u32 %v3463, 30
    %v3465 = vsub.s32 %v3461, %v3464
    %vm3466 = vcmp.lt.s32.totalorder %v3465, 0
    %v3467 = vsub.s32 0, %v3465
    %v3468 = vsel %vm3466, %v3467, %v3465
    %v3469 = vclz %v3468
    %v3470 = vsub.s32 %v3469, 2
    %vm3471 = vcmp.gt.s32.totalorder 0, %v3470
    %v3472 = vsel %vm3471, 0, %v3470
    %v3473 = vsub.s32 32, %v3472
    %v3474 = vshll.u32 %v3465, %v3472
    %v3475 = vshrl.u32 %v3457, %v3473
    %v3476 = vor.u32 %v3474, %v3475
    %v3477 = vsub.s32 4294967266, %v3472
    %v3478 = vadd.s32 %v3477, 127
    %v3479 = vshll.u32 %v3478, 23
    %v3480 = vor.u32 4788187, %v3479
    %v3481 = vand.u32 2147483647, %v3480
    %v3483 = vcvt.s32.f32 %v3476
    %v3484 = vmul.f32 %v3483, %v3481
    %v3485 = vxor.u32 %v3484, 2147483648
    %v3486 = vsel %vm3403, %v3485, %v3484
    %v3487 = vsub.s32 4, %v3463
    %v3488 = vsel %vm3403, %v3487, %v3463
    %v3489 = vsel %vm3402, %v3393, %v3486
    %v3490 = vsel %vm3402, 0, %v3488
    %v3491 = vcosq.f32.pop %v3489
    %v3492 = vsinq.f32.pop %v3489
    %vm3493 = vweird.f32 %v3393
    %v3494 = vadd.s32 %v3490, 3
    %v3495 = vand.u32 %v3494, 3
    %vm3496 = vcmp.lt.s32.totalorder %v3495, 2
    %vm3497 = vcmp.eq.s32.totalorder %v3495, 0
    %v3498 = vxor.u32 %v3492, 2147483648
    %v3499 = vsel %vm3497, %v3491, %v3498
    %vm3500 = vcmp.eq.s32.totalorder %v3495, 2
    %v3501 = vxor.u32 %v3491, 2147483648
    %v3502 = vsel %vm3500, %v3501, %v3492
    %v3503 = vsel %vm3496, %v3499, %v3502
    %v3504 = vsel %vm3493, nan, %v3503
    %v3505 = vand.u32 2147483647, %v3394
    %vm3506 = vcmp.le.f32.partialorder %v3505, 0.7853982
    %vm3507 = vcmp.lt.s32.totalorder %v3394, 0
    %v3508 = vand.u32 %v3394, 2139095040
    %v3509 = vshrl.u32 %v3508, 23
    %v3510 = vsub.s32 %v3509, 127
    %v3511 = vand.u32 2147483647, %v3394
    %v3512 = vand.u32 %v3511, 8388607
    %v3513 = vor.u32 %v3512, 8388608
    %v3514 = vsub.s32 0, %v3513
    %v3515 = vadd.s32 %v3510, 1
    %vm3516 = vcmp.gt.s32.totalorder %v3515, 0
    %v3517 = vsel %vm3516, %v3515, 0
    %v3518 = vshrl.u32 %v3517, 5
    %v3519 = vand.u32 %v3517, 31
    %v3520 = vsub.s32 32, %v3519
    %v3521 = vshrl.u32 683565275, %v3520
    %v3522 = vshll.u32 683565275, %v3519
    %v3523 = vshrl.u32 2475754826, %v3520
    %v3524 = vor.u32 %v3522, %v3523
    %v3525 = vshll.u32 2475754826, %v3519
    %v3526 = vshrl.u32 2131351028, %v3520
    %v3527 = vor.u32 %v3525, %v3526
    %v3528 = vshll.u32 2131351028, %v3519
    %v3529 = vshrl.u32 2102212464, %v3520
    %v3530 = vor.u32 %v3528, %v3529
    %v3531 = vshll.u32 2102212464, %v3519
    %v3532 = vshrl.u32 920167782, %v3520
    %v3533 = vor.u32 %v3531, %v3532
    %v3534 = vshll.u32 920167782, %v3519
    %v3535 = vshrl.u32 1326507024, %v3520
    %v3536 = vor.u32 %v3534, %v3535
    %vm3537 = vcmp.lt.s32.totalorder %v3518, 1
    %vm3538 = vcmp.lt.s32.totalorder %v3518, 2
    %vm3539 = vcmp.lt.s32.totalorder %v3518, 3
    %vm3540 = vcmp.lt.s32.totalorder %v3518, 4
    %v3541 = vsel %vm3537, %v3521, %v3524
    %v3542 = vsel %vm3540, %v3530, 2102212464
    %v3543 = vsel %vm3539, %v3527, %v3542
    %v3544 = vsel %vm3538, %v3541, %v3543
    %v3545 = vsel %vm3537, %v3524, %v3527
    %v3546 = vsel %vm3540, %v3533, 920167782
    %v3547 = vsel %vm3539, %v3530, %v3546
    %v3548 = vsel %vm3538, %v3545, %v3547
    %v3549 = vsel %vm3537, %v3527, %v3530
    %v3550 = vsel %vm3540, %v3536, 1326507024
    %v3551 = vsel %vm3539, %v3533, %v3550
    %v3552 = vsel %vm3538, %v3549, %v3551
    %v3553 = vshll.u32 %v3513, 8
    %v3554 = vmul.u32.u64.compose %v3553, %v3552
    %v3555 = vextract.low.u32 %v3554
    %v3556 = vextract.high.u32 %v3554
    %v3557 = vmul.u32.u64.compose %v3553, %v3548
    %v3558 = vextract.low.u32 %v3557
    %v3559 = vextract.high.u32 %v3557
    %v3560 = vmul.u32 %v3553, %v3544
    %v3561 = vadd.s32 %v3556, %v3558
    %vm3562 = vc.u32 %v3556, %v3558
    %v3563 = vadd.s32 %v3559, 1
    %v3564 = vsel %vm3562, %v3563, %v3559
    %v3565 = vadd.s32 %v3560, %v3564
    %v3566 = vadd.s32 %v3565, 536870912
    %v3567 = vshrl.u32 %v3566, 30
    %v3568 = vshll.u32 %v3567, 30
    %v3569 = vsub.s32 %v3565, %v3568
    %vm3570 = vcmp.lt.s32.totalorder %v3569, 0
    %v3571 = vsub.s32 0, %v3569
    %v3572 = vsel %vm3570, %v3571, %v3569
    %v3573 = vclz %v3572
    %v3574 = vsub.s32 %v3573, 2
    %vm3575 = vcmp.gt.s32.totalorder 0, %v3574
    %v3576 = vsel %vm3575, 0, %v3574
    %v3577 = vsub.s32 32, %v3576
    %v3578 = vshll.u32 %v3569, %v3576
    %v3579 = vshrl.u32 %v3561, %v3577
    %v3580 = vor.u32 %v3578, %v3579
    %v3581 = vsub.s32 4294967266, %v3576
    %v3582 = vadd.s32 %v3581, 127
    %v3583 = vshll.u32 %v3582, 23
    %v3584 = vor.u32 4788187, %v3583
    %v3585 = vand.u32 2147483647, %v3584
    %v3587 = vcvt.s32.f32 %v3580
    %v3588 = vmul.f32 %v3587, %v3585
    %v3589 = vxor.u32 %v3588, 2147483648
    %v3590 = vsel %vm3507, %v3589, %v3588
    %v3591 = vsub.s32 4, %v3567
    %v3592 = vsel %vm3507, %v3591, %v3567
    %v3593 = vsel %vm3506, %v3394, %v3590
    %v3594 = vsel %vm3506, 0, %v3592
    %v3595 = vcosq.f32.pop %v3593
    %v3596 = vsinq.f32.pop %v3593
    %vm3597 = vweird.f32 %v3394
    %v3598 = vadd.s32 %v3594, 3
    %v3599 = vand.u32 %v3598, 3
    %vm3600 = vcmp.lt.s32.totalorder %v3599, 2
    %vm3601 = vcmp.eq.s32.totalorder %v3599, 0
    %v3602 = vxor.u32 %v3596, 2147483648
    %v3603 = vsel %vm3601, %v3595, %v3602
    %vm3604 = vcmp.eq.s32.totalorder %v3599, 2
    %v3605 = vxor.u32 %v3595, 2147483648
    %v3606 = vsel %vm3604, %v3605, %v3596
    %v3607 = vsel %vm3600, %v3603, %v3606
    %v3608 = vsel %vm3597, nan, %v3607
    %v3609 = vand.u32 2147483647, %v3395
    %vm3610 = vcmp.le.f32.partialorder %v3609, 0.7853982
    %vm3611 = vcmp.lt.s32.totalorder %v3395, 0
    %v3612 = vand.u32 %v3395, 2139095040
    %v3613 = vshrl.u32 %v3612, 23
    %v3614 = vsub.s32 %v3613, 127
    %v3615 = vand.u32 2147483647, %v3395
    %v3616 = vand.u32 %v3615, 8388607
    %v3617 = vor.u32 %v3616, 8388608
    %v3618 = vsub.s32 0, %v3617
    %v3619 = vadd.s32 %v3614, 1
    %vm3620 = vcmp.gt.s32.totalorder %v3619, 0
    %v3621 = vsel %vm3620, %v3619, 0
    %v3622 = vshrl.u32 %v3621, 5
    %v3623 = vand.u32 %v3621, 31
    %v3624 = vsub.s32 32, %v3623
    %v3625 = vshrl.u32 683565275, %v3624
    %v3626 = vshll.u32 683565275, %v3623
    %v3627 = vshrl.u32 2475754826, %v3624
    %v3628 = vor.u32 %v3626, %v3627
    %v3629 = vshll.u32 2475754826, %v3623
    %v3630 = vshrl.u32 2131351028, %v3624
    %v3631 = vor.u32 %v3629, %v3630
    %v3632 = vshll.u32 2131351028, %v3623
    %v3633 = vshrl.u32 2102212464, %v3624
    %v3634 = vor.u32 %v3632, %v3633
    %v3635 = vshll.u32 2102212464, %v3623
    %v3636 = vshrl.u32 920167782, %v3624
    %v3637 = vor.u32 %v3635, %v3636
    %v3638 = vshll.u32 920167782, %v3623
    %v3639 = vshrl.u32 1326507024, %v3624
    %v3640 = vor.u32 %v3638, %v3639
    %vm3641 = vcmp.lt.s32.totalorder %v3622, 1
    %vm3642 = vcmp.lt.s32.totalorder %v3622, 2
    %vm3643 = vcmp.lt.s32.totalorder %v3622, 3
    %vm3644 = vcmp.lt.s32.totalorder %v3622, 4
    %v3645 = vsel %vm3641, %v3625, %v3628
    %v3646 = vsel %vm3644, %v3634, 2102212464
    %v3647 = vsel %vm3643, %v3631, %v3646
    %v3648 = vsel %vm3642, %v3645, %v3647
    %v3649 = vsel %vm3641, %v3628, %v3631
    %v3650 = vsel %vm3644, %v3637, 920167782
    %v3651 = vsel %vm3643, %v3634, %v3650
    %v3652 = vsel %vm3642, %v3649, %v3651
    %v3653 = vsel %vm3641, %v3631, %v3634
    %v3654 = vsel %vm3644, %v3640, 1326507024
    %v3655 = vsel %vm3643, %v3637, %v3654
    %v3656 = vsel %vm3642, %v3653, %v3655
    %v3657 = vshll.u32 %v3617, 8
    %v3658 = vmul.u32.u64.compose %v3657, %v3656
    %v3659 = vextract.low.u32 %v3658
    %v3660 = vextract.high.u32 %v3658
    %v3661 = vmul.u32.u64.compose %v3657, %v3652
    %v3662 = vextract.low.u32 %v3661
    %v3663 = vextract.high.u32 %v3661
    %v3664 = vmul.u32 %v3657, %v3648
    %v3665 = vadd.s32 %v3660, %v3662
    %vm3666 = vc.u32 %v3660, %v3662
    %v3667 = vadd.s32 %v3663, 1
    %v3668 = vsel %vm3666, %v3667, %v3663
    %v3669 = vadd.s32 %v3664, %v3668
    %v3670 = vadd.s32 %v3669, 536870912
    %v3671 = vshrl.u32 %v3670, 30
    %v3672 = vshll.u32 %v3671, 30
    %v3673 = vsub.s32 %v3669, %v3672
    %vm3674 = vcmp.lt.s32.totalorder %v3673, 0
    %v3675 = vsub.s32 0, %v3673
    %v3676 = vsel %vm3674, %v3675, %v3673
    %v3677 = vclz %v3676
    %v3678 = vsub.s32 %v3677, 2
    %vm3679 = vcmp.gt.s32.totalorder 0, %v3678
    %v3680 = vsel %vm3679, 0, %v3678
    %v3681 = vsub.s32 32, %v3680
    %v3682 = vshll.u32 %v3673, %v3680
    %v3683 = vshrl.u32 %v3665, %v3681
    %v3684 = vor.u32 %v3682, %v3683
    %v3685 = vsub.s32 4294967266, %v3680
    %v3686 = vadd.s32 %v3685, 127
    %v3687 = vshll.u32 %v3686, 23
    %v3688 = vor.u32 4788187, %v3687
    %v3689 = vand.u32 2147483647, %v3688
    %v3691 = vcvt.s32.f32 %v3684
    %v3692 = vmul.f32 %v3691, %v3689
    %v3693 = vxor.u32 %v3692, 2147483648
    %v3694 = vsel %vm3611, %v3693, %v3692
    %v3695 = vsub.s32 4, %v3671
    %v3696 = vsel %vm3611, %v3695, %v3671
    %v3697 = vsel %vm3610, %v3395, %v3694
    %v3698 = vsel %vm3610, 0, %v3696
    %v3699 = vcosq.f32.pop %v3697
    %v3700 = vsinq.f32.pop %v3697
    %vm3701 = vweird.f32 %v3395
    %v3702 = vadd.s32 %v3698, 3
    %v3703 = vand.u32 %v3702, 3
    %vm3704 = vcmp.lt.s32.totalorder %v3703, 2
    %vm3705 = vcmp.eq.s32.totalorder %v3703, 0
    %v3706 = vxor.u32 %v3700, 2147483648
    %v3707 = vsel %vm3705, %v3699, %v3706
    %vm3708 = vcmp.eq.s32.totalorder %v3703, 2
    %v3709 = vxor.u32 %v3699, 2147483648
    %v3710 = vsel %vm3708, %v3709, %v3700
    %v3711 = vsel %vm3704, %v3707, %v3710
    %v3712 = vsel %vm3701, nan, %v3711
    %v3713 = vand.u32 2147483647, %v3396
    %vm3714 = vcmp.le.f32.partialorder %v3713, 0.7853982
    %vm3715 = vcmp.lt.s32.totalorder %v3396, 0
    %v3716 = vand.u32 %v3396, 2139095040
    %v3717 = vshrl.u32 %v3716, 23
    %v3718 = vsub.s32 %v3717, 127
    %v3719 = vand.u32 2147483647, %v3396
    %v3720 = vand.u32 %v3719, 8388607
    %v3721 = vor.u32 %v3720, 8388608
    %v3722 = vsub.s32 0, %v3721
    %v3723 = vadd.s32 %v3718, 1
    %vm3724 = vcmp.gt.s32.totalorder %v3723, 0
    %v3725 = vsel %vm3724, %v3723, 0
    %v3726 = vshrl.u32 %v3725, 5
    %v3727 = vand.u32 %v3725, 31
    %v3728 = vsub.s32 32, %v3727
    %v3729 = vshrl.u32 683565275, %v3728
    %v3730 = vshll.u32 683565275, %v3727
    %v3731 = vshrl.u32 2475754826, %v3728
    %v3732 = vor.u32 %v3730, %v3731
    %v3733 = vshll.u32 2475754826, %v3727
    %v3734 = vshrl.u32 2131351028, %v3728
    %v3735 = vor.u32 %v3733, %v3734
    %v3736 = vshll.u32 2131351028, %v3727
    %v3737 = vshrl.u32 2102212464, %v3728
    %v3738 = vor.u32 %v3736, %v3737
    %v3739 = vshll.u32 2102212464, %v3727
    %v3740 = vshrl.u32 920167782, %v3728
    %v3741 = vor.u32 %v3739, %v3740
    %v3742 = vshll.u32 920167782, %v3727
    %v3743 = vshrl.u32 1326507024, %v3728
    %v3744 = vor.u32 %v3742, %v3743
    %vm3745 = vcmp.lt.s32.totalorder %v3726, 1
    %vm3746 = vcmp.lt.s32.totalorder %v3726, 2
    %vm3747 = vcmp.lt.s32.totalorder %v3726, 3
    %vm3748 = vcmp.lt.s32.totalorder %v3726, 4
    %v3749 = vsel %vm3745, %v3729, %v3732
    %v3750 = vsel %vm3748, %v3738, 2102212464
    %v3751 = vsel %vm3747, %v3735, %v3750
    %v3752 = vsel %vm3746, %v3749, %v3751
    %v3753 = vsel %vm3745, %v3732, %v3735
    %v3754 = vsel %vm3748, %v3741, 920167782
    %v3755 = vsel %vm3747, %v3738, %v3754
    %v3756 = vsel %vm3746, %v3753, %v3755
    %v3757 = vsel %vm3745, %v3735, %v3738
    %v3758 = vsel %vm3748, %v3744, 1326507024
    %v3759 = vsel %vm3747, %v3741, %v3758
    %v3760 = vsel %vm3746, %v3757, %v3759
    %v3761 = vshll.u32 %v3721, 8
    %v3762 = vmul.u32.u64.compose %v3761, %v3760
    %v3763 = vextract.low.u32 %v3762
    %v3764 = vextract.high.u32 %v3762
    %v3765 = vmul.u32.u64.compose %v3761, %v3756
    %v3766 = vextract.low.u32 %v3765
    %v3767 = vextract.high.u32 %v3765
    %v3768 = vmul.u32 %v3761, %v3752
    %v3769 = vadd.s32 %v3764, %v3766
    %vm3770 = vc.u32 %v3764, %v3766
    %v3771 = vadd.s32 %v3767, 1
    %v3772 = vsel %vm3770, %v3771, %v3767
    %v3773 = vadd.s32 %v3768, %v3772
    %v3774 = vadd.s32 %v3773, 536870912
    %v3775 = vshrl.u32 %v3774, 30
    %v3776 = vshll.u32 %v3775, 30
    %v3777 = vsub.s32 %v3773, %v3776
    %vm3778 = vcmp.lt.s32.totalorder %v3777, 0
    %v3779 = vsub.s32 0, %v3777
    %v3780 = vsel %vm3778, %v3779, %v3777
    %v3781 = vclz %v3780
    %v3782 = vsub.s32 %v3781, 2
    %vm3783 = vcmp.gt.s32.totalorder 0, %v3782
    %v3784 = vsel %vm3783, 0, %v3782
    %v3785 = vsub.s32 32, %v3784
    %v3786 = vshll.u32 %v3777, %v3784
    %v3787 = vshrl.u32 %v3769, %v3785
    %v3788 = vor.u32 %v3786, %v3787
    %v3789 = vsub.s32 4294967266, %v3784
    %v3790 = vadd.s32 %v3789, 127
    %v3791 = vshll.u32 %v3790, 23
    %v3792 = vor.u32 4788187, %v3791
    %v3793 = vand.u32 2147483647, %v3792
    %v3795 = vcvt.s32.f32 %v3788
    %v3796 = vmul.f32 %v3795, %v3793
    %v3797 = vxor.u32 %v3796, 2147483648
    %v3798 = vsel %vm3715, %v3797, %v3796
    %v3799 = vsub.s32 4, %v3775
    %v3800 = vsel %vm3715, %v3799, %v3775
    %v3801 = vsel %vm3714, %v3396, %v3798
    %v3802 = vsel %vm3714, 0, %v3800
    %v3803 = vcosq.f32.pop %v3801
    %v3804 = vsinq.f32.pop %v3801
    %vm3805 = vweird.f32 %v3396
    %v3806 = vadd.s32 %v3802, 3
    %v3807 = vand.u32 %v3806, 3
    %vm3808 = vcmp.lt.s32.totalorder %v3807, 2
    %vm3809 = vcmp.eq.s32.totalorder %v3807, 0
    %v3810 = vxor.u32 %v3804, 2147483648
    %v3811 = vsel %vm3809, %v3803, %v3810
    %vm3812 = vcmp.eq.s32.totalorder %v3807, 2
    %v3813 = vxor.u32 %v3803, 2147483648
    %v3814 = vsel %vm3812, %v3813, %v3804
    %v3815 = vsel %vm3808, %v3811, %v3814
    %v3816 = vsel %vm3805, nan, %v3815
    %v3817 = vand.u32 2147483647, %v3397
    %vm3818 = vcmp.le.f32.partialorder %v3817, 0.7853982
    %vm3819 = vcmp.lt.s32.totalorder %v3397, 0
    %v3820 = vand.u32 %v3397, 2139095040
    %v3821 = vshrl.u32 %v3820, 23
    %v3822 = vsub.s32 %v3821, 127
    %v3823 = vand.u32 2147483647, %v3397
    %v3824 = vand.u32 %v3823, 8388607
    %v3825 = vor.u32 %v3824, 8388608
    %v3826 = vsub.s32 0, %v3825
    %v3827 = vadd.s32 %v3822, 1
    %vm3828 = vcmp.gt.s32.totalorder %v3827, 0
    %v3829 = vsel %vm3828, %v3827, 0
    %v3830 = vshrl.u32 %v3829, 5
    %v3831 = vand.u32 %v3829, 31
    %v3832 = vsub.s32 32, %v3831
    %v3833 = vshrl.u32 683565275, %v3832
    %v3834 = vshll.u32 683565275, %v3831
    %v3835 = vshrl.u32 2475754826, %v3832
    %v3836 = vor.u32 %v3834, %v3835
    %v3837 = vshll.u32 2475754826, %v3831
    %v3838 = vshrl.u32 2131351028, %v3832
    %v3839 = vor.u32 %v3837, %v3838
    %v3840 = vshll.u32 2131351028, %v3831
    %v3841 = vshrl.u32 2102212464, %v3832
    %v3842 = vor.u32 %v3840, %v3841
    %v3843 = vshll.u32 2102212464, %v3831
    %v3844 = vshrl.u32 920167782, %v3832
    %v3845 = vor.u32 %v3843, %v3844
    %v3846 = vshll.u32 920167782, %v3831
    %v3847 = vshrl.u32 1326507024, %v3832
    %v3848 = vor.u32 %v3846, %v3847
    %vm3849 = vcmp.lt.s32.totalorder %v3830, 1
    %vm3850 = vcmp.lt.s32.totalorder %v3830, 2
    %vm3851 = vcmp.lt.s32.totalorder %v3830, 3
    %vm3852 = vcmp.lt.s32.totalorder %v3830, 4
    %v3853 = vsel %vm3849, %v3833, %v3836
    %v3854 = vsel %vm3852, %v3842, 2102212464
    %v3855 = vsel %vm3851, %v3839, %v3854
    %v3856 = vsel %vm3850, %v3853, %v3855
    %v3857 = vsel %vm3849, %v3836, %v3839
    %v3858 = vsel %vm3852, %v3845, 920167782
    %v3859 = vsel %vm3851, %v3842, %v3858
    %v3860 = vsel %vm3850, %v3857, %v3859
    %v3861 = vsel %vm3849, %v3839, %v3842
    %v3862 = vsel %vm3852, %v3848, 1326507024
    %v3863 = vsel %vm3851, %v3845, %v3862
    %v3864 = vsel %vm3850, %v3861, %v3863
    %v3865 = vshll.u32 %v3825, 8
    %v3866 = vmul.u32.u64.compose %v3865, %v3864
    %v3867 = vextract.low.u32 %v3866
    %v3868 = vextract.high.u32 %v3866
    %v3869 = vmul.u32.u64.compose %v3865, %v3860
    %v3870 = vextract.low.u32 %v3869
    %v3871 = vextract.high.u32 %v3869
    %v3872 = vmul.u32 %v3865, %v3856
    %v3873 = vadd.s32 %v3868, %v3870
    %vm3874 = vc.u32 %v3868, %v3870
    %v3875 = vadd.s32 %v3871, 1
    %v3876 = vsel %vm3874, %v3875, %v3871
    %v3877 = vadd.s32 %v3872, %v3876
    %v3878 = vadd.s32 %v3877, 536870912
    %v3879 = vshrl.u32 %v3878, 30
    %v3880 = vshll.u32 %v3879, 30
    %v3881 = vsub.s32 %v3877, %v3880
    %vm3882 = vcmp.lt.s32.totalorder %v3881, 0
    %v3883 = vsub.s32 0, %v3881
    %v3884 = vsel %vm3882, %v3883, %v3881
    %v3885 = vclz %v3884
    %v3886 = vsub.s32 %v3885, 2
    %vm3887 = vcmp.gt.s32.totalorder 0, %v3886
    %v3888 = vsel %vm3887, 0, %v3886
    %v3889 = vsub.s32 32, %v3888
    %v3890 = vshll.u32 %v3881, %v3888
    %v3891 = vshrl.u32 %v3873, %v3889
    %v3892 = vor.u32 %v3890, %v3891
    %v3893 = vsub.s32 4294967266, %v3888
    %v3894 = vadd.s32 %v3893, 127
    %v3895 = vshll.u32 %v3894, 23
    %v3896 = vor.u32 4788187, %v3895
    %v3897 = vand.u32 2147483647, %v3896
    %v3899 = vcvt.s32.f32 %v3892
    %v3900 = vmul.f32 %v3899, %v3897
    %v3901 = vxor.u32 %v3900, 2147483648
    %v3902 = vsel %vm3819, %v3901, %v3900
    %v3903 = vsub.s32 4, %v3879
    %v3904 = vsel %vm3819, %v3903, %v3879
    %v3905 = vsel %vm3818, %v3397, %v3902
    %v3906 = vsel %vm3818, 0, %v3904
    %v3907 = vcosq.f32.pop %v3905
    %v3908 = vsinq.f32.pop %v3905
    %vm3909 = vweird.f32 %v3397
    %v3910 = vadd.s32 %v3906, 3
    %v3911 = vand.u32 %v3910, 3
    %vm3912 = vcmp.lt.s32.totalorder %v3911, 2
    %vm3913 = vcmp.eq.s32.totalorder %v3911, 0
    %v3914 = vxor.u32 %v3908, 2147483648
    %v3915 = vsel %vm3913, %v3907, %v3914
    %vm3916 = vcmp.eq.s32.totalorder %v3911, 2
    %v3917 = vxor.u32 %v3907, 2147483648
    %v3918 = vsel %vm3916, %v3917, %v3908
    %v3919 = vsel %vm3912, %v3915, %v3918
    %v3920 = vsel %vm3909, nan, %v3919
    %v3921 = vand.u32 2147483647, %v3398
    %vm3922 = vcmp.le.f32.partialorder %v3921, 0.7853982
    %vm3923 = vcmp.lt.s32.totalorder %v3398, 0
    %v3924 = vand.u32 %v3398, 2139095040
    %v3925 = vshrl.u32 %v3924, 23
    %v3926 = vsub.s32 %v3925, 127
    %v3927 = vand.u32 2147483647, %v3398
    %v3928 = vand.u32 %v3927, 8388607
    %v3929 = vor.u32 %v3928, 8388608
    %v3930 = vsub.s32 0, %v3929
    %v3931 = vadd.s32 %v3926, 1
    %vm3932 = vcmp.gt.s32.totalorder %v3931, 0
    %v3933 = vsel %vm3932, %v3931, 0
    %v3934 = vshrl.u32 %v3933, 5
    %v3935 = vand.u32 %v3933, 31
    %v3936 = vsub.s32 32, %v3935
    %v3937 = vshrl.u32 683565275, %v3936
    %v3938 = vshll.u32 683565275, %v3935
    %v3939 = vshrl.u32 2475754826, %v3936
    %v3940 = vor.u32 %v3938, %v3939
    %v3941 = vshll.u32 2475754826, %v3935
    %v3942 = vshrl.u32 2131351028, %v3936
    %v3943 = vor.u32 %v3941, %v3942
    %v3944 = vshll.u32 2131351028, %v3935
    %v3945 = vshrl.u32 2102212464, %v3936
    %v3946 = vor.u32 %v3944, %v3945
    %v3947 = vshll.u32 2102212464, %v3935
    %v3948 = vshrl.u32 920167782, %v3936
    %v3949 = vor.u32 %v3947, %v3948
    %v3950 = vshll.u32 920167782, %v3935
    %v3951 = vshrl.u32 1326507024, %v3936
    %v3952 = vor.u32 %v3950, %v3951
    %vm3953 = vcmp.lt.s32.totalorder %v3934, 1
    %vm3954 = vcmp.lt.s32.totalorder %v3934, 2
    %vm3955 = vcmp.lt.s32.totalorder %v3934, 3
    %vm3956 = vcmp.lt.s32.totalorder %v3934, 4
    %v3957 = vsel %vm3953, %v3937, %v3940
    %v3958 = vsel %vm3956, %v3946, 2102212464
    %v3959 = vsel %vm3955, %v3943, %v3958
    %v3960 = vsel %vm3954, %v3957, %v3959
    %v3961 = vsel %vm3953, %v3940, %v3943
    %v3962 = vsel %vm3956, %v3949, 920167782
    %v3963 = vsel %vm3955, %v3946, %v3962
    %v3964 = vsel %vm3954, %v3961, %v3963
    %v3965 = vsel %vm3953, %v3943, %v3946
    %v3966 = vsel %vm3956, %v3952, 1326507024
    %v3967 = vsel %vm3955, %v3949, %v3966
    %v3968 = vsel %vm3954, %v3965, %v3967
    %v3969 = vshll.u32 %v3929, 8
    %v3970 = vmul.u32.u64.compose %v3969, %v3968
    %v3971 = vextract.low.u32 %v3970
    %v3972 = vextract.high.u32 %v3970
    %v3973 = vmul.u32.u64.compose %v3969, %v3964
    %v3974 = vextract.low.u32 %v3973
    %v3975 = vextract.high.u32 %v3973
    %v3976 = vmul.u32 %v3969, %v3960
    %v3977 = vadd.s32 %v3972, %v3974
    %vm3978 = vc.u32 %v3972, %v3974
    %v3979 = vadd.s32 %v3975, 1
    %v3980 = vsel %vm3978, %v3979, %v3975
    %v3981 = vadd.s32 %v3976, %v3980
    %v3982 = vadd.s32 %v3981, 536870912
    %v3983 = vshrl.u32 %v3982, 30
    %v3984 = vshll.u32 %v3983, 30
    %v3985 = vsub.s32 %v3981, %v3984
    %vm3986 = vcmp.lt.s32.totalorder %v3985, 0
    %v3987 = vsub.s32 0, %v3985
    %v3988 = vsel %vm3986, %v3987, %v3985
    %v3989 = vclz %v3988
    %v3990 = vsub.s32 %v3989, 2
    %vm3991 = vcmp.gt.s32.totalorder 0, %v3990
    %v3992 = vsel %vm3991, 0, %v3990
    %v3993 = vsub.s32 32, %v3992
    %v3994 = vshll.u32 %v3985, %v3992
    %v3995 = vshrl.u32 %v3977, %v3993
    %v3996 = vor.u32 %v3994, %v3995
    %v3997 = vsub.s32 4294967266, %v3992
    %v3998 = vadd.s32 %v3997, 127
    %v3999 = vshll.u32 %v3998, 23
    %v4000 = vor.u32 4788187, %v3999
    %v4001 = vand.u32 2147483647, %v4000
    %v4003 = vcvt.s32.f32 %v3996
    %v4004 = vmul.f32 %v4003, %v4001
    %v4005 = vxor.u32 %v4004, 2147483648
    %v4006 = vsel %vm3923, %v4005, %v4004
    %v4007 = vsub.s32 4, %v3983
    %v4008 = vsel %vm3923, %v4007, %v3983
    %v4009 = vsel %vm3922, %v3398, %v4006
    %v4010 = vsel %vm3922, 0, %v4008
    %v4011 = vcosq.f32.pop %v4009
    %v4012 = vsinq.f32.pop %v4009
    %vm4013 = vweird.f32 %v3398
    %v4014 = vadd.s32 %v4010, 3
    %v4015 = vand.u32 %v4014, 3
    %vm4016 = vcmp.lt.s32.totalorder %v4015, 2
    %vm4017 = vcmp.eq.s32.totalorder %v4015, 0
    %v4018 = vxor.u32 %v4012, 2147483648
    %v4019 = vsel %vm4017, %v4011, %v4018
    %vm4020 = vcmp.eq.s32.totalorder %v4015, 2
    %v4021 = vxor.u32 %v4011, 2147483648
    %v4022 = vsel %vm4020, %v4021, %v4012
    %v4023 = vsel %vm4016, %v4019, %v4022
    %v4024 = vsel %vm4013, nan, %v4023
    %v4025 = vand.u32 2147483647, %v3399
    %vm4026 = vcmp.le.f32.partialorder %v4025, 0.7853982
    %vm4027 = vcmp.lt.s32.totalorder %v3399, 0
    %v4028 = vand.u32 %v3399, 2139095040
    %v4029 = vshrl.u32 %v4028, 23
    %v4030 = vsub.s32 %v4029, 127
    %v4031 = vand.u32 2147483647, %v3399
    %v4032 = vand.u32 %v4031, 8388607
    %v4033 = vor.u32 %v4032, 8388608
    %v4034 = vsub.s32 0, %v4033
    %v4035 = vadd.s32 %v4030, 1
    %vm4036 = vcmp.gt.s32.totalorder %v4035, 0
    %v4037 = vsel %vm4036, %v4035, 0
    %v4038 = vshrl.u32 %v4037, 5
    %v4039 = vand.u32 %v4037, 31
    %v4040 = vsub.s32 32, %v4039
    %v4041 = vshrl.u32 683565275, %v4040
    %v4042 = vshll.u32 683565275, %v4039
    %v4043 = vshrl.u32 2475754826, %v4040
    %v4044 = vor.u32 %v4042, %v4043
    %v4045 = vshll.u32 2475754826, %v4039
    %v4046 = vshrl.u32 2131351028, %v4040
    %v4047 = vor.u32 %v4045, %v4046
    %v4048 = vshll.u32 2131351028, %v4039
    %v4049 = vshrl.u32 2102212464, %v4040
    %v4050 = vor.u32 %v4048, %v4049
    %v4051 = vshll.u32 2102212464, %v4039
    %v4052 = vshrl.u32 920167782, %v4040
    %v4053 = vor.u32 %v4051, %v4052
    %v4054 = vshll.u32 920167782, %v4039
    %v4055 = vshrl.u32 1326507024, %v4040
    %v4056 = vor.u32 %v4054, %v4055
    %vm4057 = vcmp.lt.s32.totalorder %v4038, 1
    %vm4058 = vcmp.lt.s32.totalorder %v4038, 2
    %vm4059 = vcmp.lt.s32.totalorder %v4038, 3
    %vm4060 = vcmp.lt.s32.totalorder %v4038, 4
    %v4061 = vsel %vm4057, %v4041, %v4044
    %v4062 = vsel %vm4060, %v4050, 2102212464
    %v4063 = vsel %vm4059, %v4047, %v4062
    %v4064 = vsel %vm4058, %v4061, %v4063
    %v4065 = vsel %vm4057, %v4044, %v4047
    %v4066 = vsel %vm4060, %v4053, 920167782
    %v4067 = vsel %vm4059, %v4050, %v4066
    %v4068 = vsel %vm4058, %v4065, %v4067
    %v4069 = vsel %vm4057, %v4047, %v4050
    %v4070 = vsel %vm4060, %v4056, 1326507024
    %v4071 = vsel %vm4059, %v4053, %v4070
    %v4072 = vsel %vm4058, %v4069, %v4071
    %v4073 = vshll.u32 %v4033, 8
    %v4074 = vmul.u32.u64.compose %v4073, %v4072
    %v4075 = vextract.low.u32 %v4074
    %v4076 = vextract.high.u32 %v4074
    %v4077 = vmul.u32.u64.compose %v4073, %v4068
    %v4078 = vextract.low.u32 %v4077
    %v4079 = vextract.high.u32 %v4077
    %v4080 = vmul.u32 %v4073, %v4064
    %v4081 = vadd.s32 %v4076, %v4078
    %vm4082 = vc.u32 %v4076, %v4078
    %v4083 = vadd.s32 %v4079, 1
    %v4084 = vsel %vm4082, %v4083, %v4079
    %v4085 = vadd.s32 %v4080, %v4084
    %v4086 = vadd.s32 %v4085, 536870912
    %v4087 = vshrl.u32 %v4086, 30
    %v4088 = vshll.u32 %v4087, 30
    %v4089 = vsub.s32 %v4085, %v4088
    %vm4090 = vcmp.lt.s32.totalorder %v4089, 0
    %v4091 = vsub.s32 0, %v4089
    %v4092 = vsel %vm4090, %v4091, %v4089
    %v4093 = vclz %v4092
    %v4094 = vsub.s32 %v4093, 2
    %vm4095 = vcmp.gt.s32.totalorder 0, %v4094
    %v4096 = vsel %vm4095, 0, %v4094
    %v4097 = vsub.s32 32, %v4096
    %v4098 = vshll.u32 %v4089, %v4096
    %v4099 = vshrl.u32 %v4081, %v4097
    %v4100 = vor.u32 %v4098, %v4099
    %v4101 = vsub.s32 4294967266, %v4096
    %v4102 = vadd.s32 %v4101, 127
    %v4103 = vshll.u32 %v4102, 23
    %v4104 = vor.u32 4788187, %v4103
    %v4105 = vand.u32 2147483647, %v4104
    %v4107 = vcvt.s32.f32 %v4100
    %v4108 = vmul.f32 %v4107, %v4105
    %v4109 = vxor.u32 %v4108, 2147483648
    %v4110 = vsel %vm4027, %v4109, %v4108
    %v4111 = vsub.s32 4, %v4087
    %v4112 = vsel %vm4027, %v4111, %v4087
    %v4113 = vsel %vm4026, %v3399, %v4110
    %v4114 = vsel %vm4026, 0, %v4112
    %v4115 = vcosq.f32.pop %v4113
    %v4116 = vsinq.f32.pop %v4113
    %vm4117 = vweird.f32 %v3399
    %v4118 = vadd.s32 %v4114, 3
    %v4119 = vand.u32 %v4118, 3
    %vm4120 = vcmp.lt.s32.totalorder %v4119, 2
    %vm4121 = vcmp.eq.s32.totalorder %v4119, 0
    %v4122 = vxor.u32 %v4116, 2147483648
    %v4123 = vsel %vm4121, %v4115, %v4122
    %vm4124 = vcmp.eq.s32.totalorder %v4119, 2
    %v4125 = vxor.u32 %v4115, 2147483648
    %v4126 = vsel %vm4124, %v4125, %v4116
    %v4127 = vsel %vm4120, %v4123, %v4126
    %v4128 = vsel %vm4117, nan, %v4127
    %v4129 = vand.u32 2147483647, %v3400
    %vm4130 = vcmp.le.f32.partialorder %v4129, 0.7853982
    %vm4131 = vcmp.lt.s32.totalorder %v3400, 0
    %v4132 = vand.u32 %v3400, 2139095040
    %v4133 = vshrl.u32 %v4132, 23
    %v4134 = vsub.s32 %v4133, 127
    %v4135 = vand.u32 2147483647, %v3400
    %v4136 = vand.u32 %v4135, 8388607
    %v4137 = vor.u32 %v4136, 8388608
    %v4138 = vsub.s32 0, %v4137
    %v4139 = vadd.s32 %v4134, 1
    %vm4140 = vcmp.gt.s32.totalorder %v4139, 0
    %v4141 = vsel %vm4140, %v4139, 0
    %v4142 = vshrl.u32 %v4141, 5
    %v4143 = vand.u32 %v4141, 31
    %v4144 = vsub.s32 32, %v4143
    %v4145 = vshrl.u32 683565275, %v4144
    %v4146 = vshll.u32 683565275, %v4143
    %v4147 = vshrl.u32 2475754826, %v4144
    %v4148 = vor.u32 %v4146, %v4147
    %v4149 = vshll.u32 2475754826, %v4143
    %v4150 = vshrl.u32 2131351028, %v4144
    %v4151 = vor.u32 %v4149, %v4150
    %v4152 = vshll.u32 2131351028, %v4143
    %v4153 = vshrl.u32 2102212464, %v4144
    %v4154 = vor.u32 %v4152, %v4153
    %v4155 = vshll.u32 2102212464, %v4143
    %v4156 = vshrl.u32 920167782, %v4144
    %v4157 = vor.u32 %v4155, %v4156
    %v4158 = vshll.u32 920167782, %v4143
    %v4159 = vshrl.u32 1326507024, %v4144
    %v4160 = vor.u32 %v4158, %v4159
    %vm4161 = vcmp.lt.s32.totalorder %v4142, 1
    %vm4162 = vcmp.lt.s32.totalorder %v4142, 2
    %vm4163 = vcmp.lt.s32.totalorder %v4142, 3
    %vm4164 = vcmp.lt.s32.totalorder %v4142, 4
    %v4165 = vsel %vm4161, %v4145, %v4148
    %v4166 = vsel %vm4164, %v4154, 2102212464
    %v4167 = vsel %vm4163, %v4151, %v4166
    %v4168 = vsel %vm4162, %v4165, %v4167
    %v4169 = vsel %vm4161, %v4148, %v4151
    %v4170 = vsel %vm4164, %v4157, 920167782
    %v4171 = vsel %vm4163, %v4154, %v4170
    %v4172 = vsel %vm4162, %v4169, %v4171
    %v4173 = vsel %vm4161, %v4151, %v4154
    %v4174 = vsel %vm4164, %v4160, 1326507024
    %v4175 = vsel %vm4163, %v4157, %v4174
    %v4176 = vsel %vm4162, %v4173, %v4175
    %v4177 = vshll.u32 %v4137, 8
    %v4178 = vmul.u32.u64.compose %v4177, %v4176
    %v4179 = vextract.low.u32 %v4178
    %v4180 = vextract.high.u32 %v4178
    %v4181 = vmul.u32.u64.compose %v4177, %v4172
    %v4182 = vextract.low.u32 %v4181
    %v4183 = vextract.high.u32 %v4181
    %v4184 = vmul.u32 %v4177, %v4168
    %v4185 = vadd.s32 %v4180, %v4182
    %vm4186 = vc.u32 %v4180, %v4182
    %v4187 = vadd.s32 %v4183, 1
    %v4188 = vsel %vm4186, %v4187, %v4183
    %v4189 = vadd.s32 %v4184, %v4188
    %v4190 = vadd.s32 %v4189, 536870912
    %v4191 = vshrl.u32 %v4190, 30
    %v4192 = vshll.u32 %v4191, 30
    %v4193 = vsub.s32 %v4189, %v4192
    %vm4194 = vcmp.lt.s32.totalorder %v4193, 0
    %v4195 = vsub.s32 0, %v4193
    %v4196 = vsel %vm4194, %v4195, %v4193
    %v4197 = vclz %v4196
    %v4198 = vsub.s32 %v4197, 2
    %vm4199 = vcmp.gt.s32.totalorder 0, %v4198
    %v4200 = vsel %vm4199, 0, %v4198
    %v4201 = vsub.s32 32, %v4200
    %v4202 = vshll.u32 %v4193, %v4200
    %v4203 = vshrl.u32 %v4185, %v4201
    %v4204 = vor.u32 %v4202, %v4203
    %v4205 = vsub.s32 4294967266, %v4200
    %v4206 = vadd.s32 %v4205, 127
    %v4207 = vshll.u32 %v4206, 23
    %v4208 = vor.u32 4788187, %v4207
    %v4209 = vand.u32 2147483647, %v4208
    %v4211 = vcvt.s32.f32 %v4204
    %v4212 = vmul.f32 %v4211, %v4209
    %v4213 = vxor.u32 %v4212, 2147483648
    %v4214 = vsel %vm4131, %v4213, %v4212
    %v4215 = vsub.s32 4, %v4191
    %v4216 = vsel %vm4131, %v4215, %v4191
    %v4217 = vsel %vm4130, %v3400, %v4214
    %v4218 = vsel %vm4130, 0, %v4216
    %v4219 = vcosq.f32.pop %v4217
    %v4220 = vsinq.f32.pop %v4217
    %vm4221 = vweird.f32 %v3400
    %v4222 = vadd.s32 %v4218, 3
    %v4223 = vand.u32 %v4222, 3
    %vm4224 = vcmp.lt.s32.totalorder %v4223, 2
    %vm4225 = vcmp.eq.s32.totalorder %v4223, 0
    %v4226 = vxor.u32 %v4220, 2147483648
    %v4227 = vsel %vm4225, %v4219, %v4226
    %vm4228 = vcmp.eq.s32.totalorder %v4223, 2
    %v4229 = vxor.u32 %v4219, 2147483648
    %v4230 = vsel %vm4228, %v4229, %v4220
    %v4231 = vsel %vm4224, %v4227, %v4230
    %v4232 = vsel %vm4221, nan, %v4231
    %s4233 = scalar_lea.vmem [#allocation5], 320
    %4234 = vst [vmem:[%s4233] sm:$0xff] %v3504
    %4235 = vst [vmem:[%s4233 + $0x8] sm:$0xff] %v3608
    %4236 = vst [vmem:[%s4233 + $0x10] sm:$0xff] %v3712
    %4237 = vst [vmem:[%s4233 + $0x18] sm:$0xff] %v3816
    %4238 = vst [vmem:[%s4233 + $0x20] sm:$0xff] %v3920
    %4239 = vst [vmem:[%s4233 + $0x28] sm:$0xff] %v4024
    %4240 = vst [vmem:[%s4233 + $0x30] sm:$0xff] %v4128
    %4241 = vst [vmem:[%s4233 + $0x38] sm:$0xff] %v4232
    %v4242 = vand.u32 2147483647, %v3393
    %vm4243 = vcmp.le.f32.partialorder %v4242, 0.7853982
    %vm4244 = vcmp.lt.s32.totalorder %v3393, 0
    %v4245 = vand.u32 %v3393, 2139095040
    %v4246 = vshrl.u32 %v4245, 23
    %v4247 = vsub.s32 %v4246, 127
    %v4248 = vand.u32 2147483647, %v3393
    %v4249 = vand.u32 %v4248, 8388607
    %v4250 = vor.u32 %v4249, 8388608
    %v4251 = vsub.s32 0, %v4250
    %v4252 = vadd.s32 %v4247, 1
    %vm4253 = vcmp.gt.s32.totalorder %v4252, 0
    %v4254 = vsel %vm4253, %v4252, 0
    %v4255 = vshrl.u32 %v4254, 5
    %v4256 = vand.u32 %v4254, 31
    %v4257 = vsub.s32 32, %v4256
    %v4258 = vshrl.u32 683565275, %v4257
    %v4259 = vshll.u32 683565275, %v4256
    %v4260 = vshrl.u32 2475754826, %v4257
    %v4261 = vor.u32 %v4259, %v4260
    %v4262 = vshll.u32 2475754826, %v4256
    %v4263 = vshrl.u32 2131351028, %v4257
    %v4264 = vor.u32 %v4262, %v4263
    %v4265 = vshll.u32 2131351028, %v4256
    %v4266 = vshrl.u32 2102212464, %v4257
    %v4267 = vor.u32 %v4265, %v4266
    %v4268 = vshll.u32 2102212464, %v4256
    %v4269 = vshrl.u32 920167782, %v4257
    %v4270 = vor.u32 %v4268, %v4269
    %v4271 = vshll.u32 920167782, %v4256
    %v4272 = vshrl.u32 1326507024, %v4257
    %v4273 = vor.u32 %v4271, %v4272
    %vm4274 = vcmp.lt.s32.totalorder %v4255, 1
    %vm4275 = vcmp.lt.s32.totalorder %v4255, 2
    %vm4276 = vcmp.lt.s32.totalorder %v4255, 3
    %vm4277 = vcmp.lt.s32.totalorder %v4255, 4
    %v4278 = vsel %vm4274, %v4258, %v4261
    %v4279 = vsel %vm4277, %v4267, 2102212464
    %v4280 = vsel %vm4276, %v4264, %v4279
    %v4281 = vsel %vm4275, %v4278, %v4280
    %v4282 = vsel %vm4274, %v4261, %v4264
    %v4283 = vsel %vm4277, %v4270, 920167782
    %v4284 = vsel %vm4276, %v4267, %v4283
    %v4285 = vsel %vm4275, %v4282, %v4284
    %v4286 = vsel %vm4274, %v4264, %v4267
    %v4287 = vsel %vm4277, %v4273, 1326507024
    %v4288 = vsel %vm4276, %v4270, %v4287
    %v4289 = vsel %vm4275, %v4286, %v4288
    %v4290 = vshll.u32 %v4250, 8
    %v4291 = vmul.u32.u64.compose %v4290, %v4289
    %v4292 = vextract.low.u32 %v4291
    %v4293 = vextract.high.u32 %v4291
    %v4294 = vmul.u32.u64.compose %v4290, %v4285
    %v4295 = vextract.low.u32 %v4294
    %v4296 = vextract.high.u32 %v4294
    %v4297 = vmul.u32 %v4290, %v4281
    %v4298 = vadd.s32 %v4293, %v4295
    %vm4299 = vc.u32 %v4293, %v4295
    %v4300 = vadd.s32 %v4296, 1
    %v4301 = vsel %vm4299, %v4300, %v4296
    %v4302 = vadd.s32 %v4297, %v4301
    %v4303 = vadd.s32 %v4302, 536870912
    %v4304 = vshrl.u32 %v4303, 30
    %v4305 = vshll.u32 %v4304, 30
    %v4306 = vsub.s32 %v4302, %v4305
    %vm4307 = vcmp.lt.s32.totalorder %v4306, 0
    %v4308 = vsub.s32 0, %v4306
    %v4309 = vsel %vm4307, %v4308, %v4306
    %v4310 = vclz %v4309
    %v4311 = vsub.s32 %v4310, 2
    %vm4312 = vcmp.gt.s32.totalorder 0, %v4311
    %v4313 = vsel %vm4312, 0, %v4311
    %v4314 = vsub.s32 32, %v4313
    %v4315 = vshll.u32 %v4306, %v4313
    %v4316 = vshrl.u32 %v4298, %v4314
    %v4317 = vor.u32 %v4315, %v4316
    %v4318 = vsub.s32 4294967266, %v4313
    %v4319 = vadd.s32 %v4318, 127
    %v4320 = vshll.u32 %v4319, 23
    %v4321 = vor.u32 4788187, %v4320
    %v4322 = vand.u32 2147483647, %v4321
    %v4324 = vcvt.s32.f32 %v4317
    %v4325 = vmul.f32 %v4324, %v4322
    %v4326 = vxor.u32 %v4325, 2147483648
    %v4327 = vsel %vm4244, %v4326, %v4325
    %v4328 = vsub.s32 4, %v4304
    %v4329 = vsel %vm4244, %v4328, %v4304
    %v4330 = vsel %vm4243, %v3393, %v4327
    %v4331 = vsel %vm4243, 0, %v4329
    %v4332 = vcosq.f32.pop %v4330
    %v4333 = vsinq.f32.pop %v4330
    %vm4334 = vweird.f32 %v3393
    %v4335 = vand.u32 %v4331, 3
    %vm4336 = vcmp.lt.s32.totalorder %v4335, 2
    %vm4337 = vcmp.eq.s32.totalorder %v4335, 0
    %v4338 = vxor.u32 %v4333, 2147483648
    %v4339 = vsel %vm4337, %v4332, %v4338
    %vm4340 = vcmp.eq.s32.totalorder %v4335, 2
    %v4341 = vxor.u32 %v4332, 2147483648
    %v4342 = vsel %vm4340, %v4341, %v4333
    %v4343 = vsel %vm4336, %v4339, %v4342
    %v4344 = vsel %vm4334, nan, %v4343
    %v4345 = vand.u32 2147483647, %v3394
    %vm4346 = vcmp.le.f32.partialorder %v4345, 0.7853982
    %vm4347 = vcmp.lt.s32.totalorder %v3394, 0
    %v4348 = vand.u32 %v3394, 2139095040
    %v4349 = vshrl.u32 %v4348, 23
    %v4350 = vsub.s32 %v4349, 127
    %v4351 = vand.u32 2147483647, %v3394
    %v4352 = vand.u32 %v4351, 8388607
    %v4353 = vor.u32 %v4352, 8388608
    %v4354 = vsub.s32 0, %v4353
    %v4355 = vadd.s32 %v4350, 1
    %vm4356 = vcmp.gt.s32.totalorder %v4355, 0
    %v4357 = vsel %vm4356, %v4355, 0
    %v4358 = vshrl.u32 %v4357, 5
    %v4359 = vand.u32 %v4357, 31
    %v4360 = vsub.s32 32, %v4359
    %v4361 = vshrl.u32 683565275, %v4360
    %v4362 = vshll.u32 683565275, %v4359
    %v4363 = vshrl.u32 2475754826, %v4360
    %v4364 = vor.u32 %v4362, %v4363
    %v4365 = vshll.u32 2475754826, %v4359
    %v4366 = vshrl.u32 2131351028, %v4360
    %v4367 = vor.u32 %v4365, %v4366
    %v4368 = vshll.u32 2131351028, %v4359
    %v4369 = vshrl.u32 2102212464, %v4360
    %v4370 = vor.u32 %v4368, %v4369
    %v4371 = vshll.u32 2102212464, %v4359
    %v4372 = vshrl.u32 920167782, %v4360
    %v4373 = vor.u32 %v4371, %v4372
    %v4374 = vshll.u32 920167782, %v4359
    %v4375 = vshrl.u32 1326507024, %v4360
    %v4376 = vor.u32 %v4374, %v4375
    %vm4377 = vcmp.lt.s32.totalorder %v4358, 1
    %vm4378 = vcmp.lt.s32.totalorder %v4358, 2
    %vm4379 = vcmp.lt.s32.totalorder %v4358, 3
    %vm4380 = vcmp.lt.s32.totalorder %v4358, 4
    %v4381 = vsel %vm4377, %v4361, %v4364
    %v4382 = vsel %vm4380, %v4370, 2102212464
    %v4383 = vsel %vm4379, %v4367, %v4382
    %v4384 = vsel %vm4378, %v4381, %v4383
    %v4385 = vsel %vm4377, %v4364, %v4367
    %v4386 = vsel %vm4380, %v4373, 920167782
    %v4387 = vsel %vm4379, %v4370, %v4386
    %v4388 = vsel %vm4378, %v4385, %v4387
    %v4389 = vsel %vm4377, %v4367, %v4370
    %v4390 = vsel %vm4380, %v4376, 1326507024
    %v4391 = vsel %vm4379, %v4373, %v4390
    %v4392 = vsel %vm4378, %v4389, %v4391
    %v4393 = vshll.u32 %v4353, 8
    %v4394 = vmul.u32.u64.compose %v4393, %v4392
    %v4395 = vextract.low.u32 %v4394
    %v4396 = vextract.high.u32 %v4394
    %v4397 = vmul.u32.u64.compose %v4393, %v4388
    %v4398 = vextract.low.u32 %v4397
    %v4399 = vextract.high.u32 %v4397
    %v4400 = vmul.u32 %v4393, %v4384
    %v4401 = vadd.s32 %v4396, %v4398
    %vm4402 = vc.u32 %v4396, %v4398
    %v4403 = vadd.s32 %v4399, 1
    %v4404 = vsel %vm4402, %v4403, %v4399
    %v4405 = vadd.s32 %v4400, %v4404
    %v4406 = vadd.s32 %v4405, 536870912
    %v4407 = vshrl.u32 %v4406, 30
    %v4408 = vshll.u32 %v4407, 30
    %v4409 = vsub.s32 %v4405, %v4408
    %vm4410 = vcmp.lt.s32.totalorder %v4409, 0
    %v4411 = vsub.s32 0, %v4409
    %v4412 = vsel %vm4410, %v4411, %v4409
    %v4413 = vclz %v4412
    %v4414 = vsub.s32 %v4413, 2
    %vm4415 = vcmp.gt.s32.totalorder 0, %v4414
    %v4416 = vsel %vm4415, 0, %v4414
    %v4417 = vsub.s32 32, %v4416
    %v4418 = vshll.u32 %v4409, %v4416
    %v4419 = vshrl.u32 %v4401, %v4417
    %v4420 = vor.u32 %v4418, %v4419
    %v4421 = vsub.s32 4294967266, %v4416
    %v4422 = vadd.s32 %v4421, 127
    %v4423 = vshll.u32 %v4422, 23
    %v4424 = vor.u32 4788187, %v4423
    %v4425 = vand.u32 2147483647, %v4424
    %v4427 = vcvt.s32.f32 %v4420
    %v4428 = vmul.f32 %v4427, %v4425
    %v4429 = vxor.u32 %v4428, 2147483648
    %v4430 = vsel %vm4347, %v4429, %v4428
    %v4431 = vsub.s32 4, %v4407
    %v4432 = vsel %vm4347, %v4431, %v4407
    %v4433 = vsel %vm4346, %v3394, %v4430
    %v4434 = vsel %vm4346, 0, %v4432
    %v4435 = vcosq.f32.pop %v4433
    %v4436 = vsinq.f32.pop %v4433
    %vm4437 = vweird.f32 %v3394
    %v4438 = vand.u32 %v4434, 3
    %vm4439 = vcmp.lt.s32.totalorder %v4438, 2
    %vm4440 = vcmp.eq.s32.totalorder %v4438, 0
    %v4441 = vxor.u32 %v4436, 2147483648
    %v4442 = vsel %vm4440, %v4435, %v4441
    %vm4443 = vcmp.eq.s32.totalorder %v4438, 2
    %v4444 = vxor.u32 %v4435, 2147483648
    %v4445 = vsel %vm4443, %v4444, %v4436
    %v4446 = vsel %vm4439, %v4442, %v4445
    %v4447 = vsel %vm4437, nan, %v4446
    %v4448 = vand.u32 2147483647, %v3395
    %vm4449 = vcmp.le.f32.partialorder %v4448, 0.7853982
    %vm4450 = vcmp.lt.s32.totalorder %v3395, 0
    %v4451 = vand.u32 %v3395, 2139095040
    %v4452 = vshrl.u32 %v4451, 23
    %v4453 = vsub.s32 %v4452, 127
    %v4454 = vand.u32 2147483647, %v3395
    %v4455 = vand.u32 %v4454, 8388607
    %v4456 = vor.u32 %v4455, 8388608
    %v4457 = vsub.s32 0, %v4456
    %v4458 = vadd.s32 %v4453, 1
    %vm4459 = vcmp.gt.s32.totalorder %v4458, 0
    %v4460 = vsel %vm4459, %v4458, 0
    %v4461 = vshrl.u32 %v4460, 5
    %v4462 = vand.u32 %v4460, 31
    %v4463 = vsub.s32 32, %v4462
    %v4464 = vshrl.u32 683565275, %v4463
    %v4465 = vshll.u32 683565275, %v4462
    %v4466 = vshrl.u32 2475754826, %v4463
    %v4467 = vor.u32 %v4465, %v4466
    %v4468 = vshll.u32 2475754826, %v4462
    %v4469 = vshrl.u32 2131351028, %v4463
    %v4470 = vor.u32 %v4468, %v4469
    %v4471 = vshll.u32 2131351028, %v4462
    %v4472 = vshrl.u32 2102212464, %v4463
    %v4473 = vor.u32 %v4471, %v4472
    %v4474 = vshll.u32 2102212464, %v4462
    %v4475 = vshrl.u32 920167782, %v4463
    %v4476 = vor.u32 %v4474, %v4475
    %v4477 = vshll.u32 920167782, %v4462
    %v4478 = vshrl.u32 1326507024, %v4463
    %v4479 = vor.u32 %v4477, %v4478
    %vm4480 = vcmp.lt.s32.totalorder %v4461, 1
    %vm4481 = vcmp.lt.s32.totalorder %v4461, 2
    %vm4482 = vcmp.lt.s32.totalorder %v4461, 3
    %vm4483 = vcmp.lt.s32.totalorder %v4461, 4
    %v4484 = vsel %vm4480, %v4464, %v4467
    %v4485 = vsel %vm4483, %v4473, 2102212464
    %v4486 = vsel %vm4482, %v4470, %v4485
    %v4487 = vsel %vm4481, %v4484, %v4486
    %v4488 = vsel %vm4480, %v4467, %v4470
    %v4489 = vsel %vm4483, %v4476, 920167782
    %v4490 = vsel %vm4482, %v4473, %v4489
    %v4491 = vsel %vm4481, %v4488, %v4490
    %v4492 = vsel %vm4480, %v4470, %v4473
    %v4493 = vsel %vm4483, %v4479, 1326507024
    %v4494 = vsel %vm4482, %v4476, %v4493
    %v4495 = vsel %vm4481, %v4492, %v4494
    %v4496 = vshll.u32 %v4456, 8
    %v4497 = vmul.u32.u64.compose %v4496, %v4495
    %v4498 = vextract.low.u32 %v4497
    %v4499 = vextract.high.u32 %v4497
    %v4500 = vmul.u32.u64.compose %v4496, %v4491
    %v4501 = vextract.low.u32 %v4500
    %v4502 = vextract.high.u32 %v4500
    %v4503 = vmul.u32 %v4496, %v4487
    %v4504 = vadd.s32 %v4499, %v4501
    %vm4505 = vc.u32 %v4499, %v4501
    %v4506 = vadd.s32 %v4502, 1
    %v4507 = vsel %vm4505, %v4506, %v4502
    %v4508 = vadd.s32 %v4503, %v4507
    %v4509 = vadd.s32 %v4508, 536870912
    %v4510 = vshrl.u32 %v4509, 30
    %v4511 = vshll.u32 %v4510, 30
    %v4512 = vsub.s32 %v4508, %v4511
    %vm4513 = vcmp.lt.s32.totalorder %v4512, 0
    %v4514 = vsub.s32 0, %v4512
    %v4515 = vsel %vm4513, %v4514, %v4512
    %v4516 = vclz %v4515
    %v4517 = vsub.s32 %v4516, 2
    %vm4518 = vcmp.gt.s32.totalorder 0, %v4517
    %v4519 = vsel %vm4518, 0, %v4517
    %v4520 = vsub.s32 32, %v4519
    %v4521 = vshll.u32 %v4512, %v4519
    %v4522 = vshrl.u32 %v4504, %v4520
    %v4523 = vor.u32 %v4521, %v4522
    %v4524 = vsub.s32 4294967266, %v4519
    %v4525 = vadd.s32 %v4524, 127
    %v4526 = vshll.u32 %v4525, 23
    %v4527 = vor.u32 4788187, %v4526
    %v4528 = vand.u32 2147483647, %v4527
    %v4530 = vcvt.s32.f32 %v4523
    %v4531 = vmul.f32 %v4530, %v4528
    %v4532 = vxor.u32 %v4531, 2147483648
    %v4533 = vsel %vm4450, %v4532, %v4531
    %v4534 = vsub.s32 4, %v4510
    %v4535 = vsel %vm4450, %v4534, %v4510
    %v4536 = vsel %vm4449, %v3395, %v4533
    %v4537 = vsel %vm4449, 0, %v4535
    %v4538 = vcosq.f32.pop %v4536
    %v4539 = vsinq.f32.pop %v4536
    %vm4540 = vweird.f32 %v3395
    %v4541 = vand.u32 %v4537, 3
    %vm4542 = vcmp.lt.s32.totalorder %v4541, 2
    %vm4543 = vcmp.eq.s32.totalorder %v4541, 0
    %v4544 = vxor.u32 %v4539, 2147483648
    %v4545 = vsel %vm4543, %v4538, %v4544
    %vm4546 = vcmp.eq.s32.totalorder %v4541, 2
    %v4547 = vxor.u32 %v4538, 2147483648
    %v4548 = vsel %vm4546, %v4547, %v4539
    %v4549 = vsel %vm4542, %v4545, %v4548
    %v4550 = vsel %vm4540, nan, %v4549
    %v4551 = vand.u32 2147483647, %v3396
    %vm4552 = vcmp.le.f32.partialorder %v4551, 0.7853982
    %vm4553 = vcmp.lt.s32.totalorder %v3396, 0
    %v4554 = vand.u32 %v3396, 2139095040
    %v4555 = vshrl.u32 %v4554, 23
    %v4556 = vsub.s32 %v4555, 127
    %v4557 = vand.u32 2147483647, %v3396
    %v4558 = vand.u32 %v4557, 8388607
    %v4559 = vor.u32 %v4558, 8388608
    %v4560 = vsub.s32 0, %v4559
    %v4561 = vadd.s32 %v4556, 1
    %vm4562 = vcmp.gt.s32.totalorder %v4561, 0
    %v4563 = vsel %vm4562, %v4561, 0
    %v4564 = vshrl.u32 %v4563, 5
    %v4565 = vand.u32 %v4563, 31
    %v4566 = vsub.s32 32, %v4565
    %v4567 = vshrl.u32 683565275, %v4566
    %v4568 = vshll.u32 683565275, %v4565
    %v4569 = vshrl.u32 2475754826, %v4566
    %v4570 = vor.u32 %v4568, %v4569
    %v4571 = vshll.u32 2475754826, %v4565
    %v4572 = vshrl.u32 2131351028, %v4566
    %v4573 = vor.u32 %v4571, %v4572
    %v4574 = vshll.u32 2131351028, %v4565
    %v4575 = vshrl.u32 2102212464, %v4566
    %v4576 = vor.u32 %v4574, %v4575
    %v4577 = vshll.u32 2102212464, %v4565
    %v4578 = vshrl.u32 920167782, %v4566
    %v4579 = vor.u32 %v4577, %v4578
    %v4580 = vshll.u32 920167782, %v4565
    %v4581 = vshrl.u32 1326507024, %v4566
    %v4582 = vor.u32 %v4580, %v4581
    %vm4583 = vcmp.lt.s32.totalorder %v4564, 1
    %vm4584 = vcmp.lt.s32.totalorder %v4564, 2
    %vm4585 = vcmp.lt.s32.totalorder %v4564, 3
    %vm4586 = vcmp.lt.s32.totalorder %v4564, 4
    %v4587 = vsel %vm4583, %v4567, %v4570
    %v4588 = vsel %vm4586, %v4576, 2102212464
    %v4589 = vsel %vm4585, %v4573, %v4588
    %v4590 = vsel %vm4584, %v4587, %v4589
    %v4591 = vsel %vm4583, %v4570, %v4573
    %v4592 = vsel %vm4586, %v4579, 920167782
    %v4593 = vsel %vm4585, %v4576, %v4592
    %v4594 = vsel %vm4584, %v4591, %v4593
    %v4595 = vsel %vm4583, %v4573, %v4576
    %v4596 = vsel %vm4586, %v4582, 1326507024
    %v4597 = vsel %vm4585, %v4579, %v4596
    %v4598 = vsel %vm4584, %v4595, %v4597
    %v4599 = vshll.u32 %v4559, 8
    %v4600 = vmul.u32.u64.compose %v4599, %v4598
    %v4601 = vextract.low.u32 %v4600
    %v4602 = vextract.high.u32 %v4600
    %v4603 = vmul.u32.u64.compose %v4599, %v4594
    %v4604 = vextract.low.u32 %v4603
    %v4605 = vextract.high.u32 %v4603
    %v4606 = vmul.u32 %v4599, %v4590
    %v4607 = vadd.s32 %v4602, %v4604
    %vm4608 = vc.u32 %v4602, %v4604
    %v4609 = vadd.s32 %v4605, 1
    %v4610 = vsel %vm4608, %v4609, %v4605
    %v4611 = vadd.s32 %v4606, %v4610
    %v4612 = vadd.s32 %v4611, 536870912
    %v4613 = vshrl.u32 %v4612, 30
    %v4614 = vshll.u32 %v4613, 30
    %v4615 = vsub.s32 %v4611, %v4614
    %vm4616 = vcmp.lt.s32.totalorder %v4615, 0
    %v4617 = vsub.s32 0, %v4615
    %v4618 = vsel %vm4616, %v4617, %v4615
    %v4619 = vclz %v4618
    %v4620 = vsub.s32 %v4619, 2
    %vm4621 = vcmp.gt.s32.totalorder 0, %v4620
    %v4622 = vsel %vm4621, 0, %v4620
    %v4623 = vsub.s32 32, %v4622
    %v4624 = vshll.u32 %v4615, %v4622
    %v4625 = vshrl.u32 %v4607, %v4623
    %v4626 = vor.u32 %v4624, %v4625
    %v4627 = vsub.s32 4294967266, %v4622
    %v4628 = vadd.s32 %v4627, 127
    %v4629 = vshll.u32 %v4628, 23
    %v4630 = vor.u32 4788187, %v4629
    %v4631 = vand.u32 2147483647, %v4630
    %v4633 = vcvt.s32.f32 %v4626
    %v4634 = vmul.f32 %v4633, %v4631
    %v4635 = vxor.u32 %v4634, 2147483648
    %v4636 = vsel %vm4553, %v4635, %v4634
    %v4637 = vsub.s32 4, %v4613
    %v4638 = vsel %vm4553, %v4637, %v4613
    %v4639 = vsel %vm4552, %v3396, %v4636
    %v4640 = vsel %vm4552, 0, %v4638
    %v4641 = vcosq.f32.pop %v4639
    %v4642 = vsinq.f32.pop %v4639
    %vm4643 = vweird.f32 %v3396
    %v4644 = vand.u32 %v4640, 3
    %vm4645 = vcmp.lt.s32.totalorder %v4644, 2
    %vm4646 = vcmp.eq.s32.totalorder %v4644, 0
    %v4647 = vxor.u32 %v4642, 2147483648
    %v4648 = vsel %vm4646, %v4641, %v4647
    %vm4649 = vcmp.eq.s32.totalorder %v4644, 2
    %v4650 = vxor.u32 %v4641, 2147483648
    %v4651 = vsel %vm4649, %v4650, %v4642
    %v4652 = vsel %vm4645, %v4648, %v4651
    %v4653 = vsel %vm4643, nan, %v4652
    %v4654 = vand.u32 2147483647, %v3397
    %vm4655 = vcmp.le.f32.partialorder %v4654, 0.7853982
    %vm4656 = vcmp.lt.s32.totalorder %v3397, 0
    %v4657 = vand.u32 %v3397, 2139095040
    %v4658 = vshrl.u32 %v4657, 23
    %v4659 = vsub.s32 %v4658, 127
    %v4660 = vand.u32 2147483647, %v3397
    %v4661 = vand.u32 %v4660, 8388607
    %v4662 = vor.u32 %v4661, 8388608
    %v4663 = vsub.s32 0, %v4662
    %v4664 = vadd.s32 %v4659, 1
    %vm4665 = vcmp.gt.s32.totalorder %v4664, 0
    %v4666 = vsel %vm4665, %v4664, 0
    %v4667 = vshrl.u32 %v4666, 5
    %v4668 = vand.u32 %v4666, 31
    %v4669 = vsub.s32 32, %v4668
    %v4670 = vshrl.u32 683565275, %v4669
    %v4671 = vshll.u32 683565275, %v4668
    %v4672 = vshrl.u32 2475754826, %v4669
    %v4673 = vor.u32 %v4671, %v4672
    %v4674 = vshll.u32 2475754826, %v4668
    %v4675 = vshrl.u32 2131351028, %v4669
    %v4676 = vor.u32 %v4674, %v4675
    %v4677 = vshll.u32 2131351028, %v4668
    %v4678 = vshrl.u32 2102212464, %v4669
    %v4679 = vor.u32 %v4677, %v4678
    %v4680 = vshll.u32 2102212464, %v4668
    %v4681 = vshrl.u32 920167782, %v4669
    %v4682 = vor.u32 %v4680, %v4681
    %v4683 = vshll.u32 920167782, %v4668
    %v4684 = vshrl.u32 1326507024, %v4669
    %v4685 = vor.u32 %v4683, %v4684
    %vm4686 = vcmp.lt.s32.totalorder %v4667, 1
    %vm4687 = vcmp.lt.s32.totalorder %v4667, 2
    %vm4688 = vcmp.lt.s32.totalorder %v4667, 3
    %vm4689 = vcmp.lt.s32.totalorder %v4667, 4
    %v4690 = vsel %vm4686, %v4670, %v4673
    %v4691 = vsel %vm4689, %v4679, 2102212464
    %v4692 = vsel %vm4688, %v4676, %v4691
    %v4693 = vsel %vm4687, %v4690, %v4692
    %v4694 = vsel %vm4686, %v4673, %v4676
    %v4695 = vsel %vm4689, %v4682, 920167782
    %v4696 = vsel %vm4688, %v4679, %v4695
    %v4697 = vsel %vm4687, %v4694, %v4696
    %v4698 = vsel %vm4686, %v4676, %v4679
    %v4699 = vsel %vm4689, %v4685, 1326507024
    %v4700 = vsel %vm4688, %v4682, %v4699
    %v4701 = vsel %vm4687, %v4698, %v4700
    %v4702 = vshll.u32 %v4662, 8
    %v4703 = vmul.u32.u64.compose %v4702, %v4701
    %v4704 = vextract.low.u32 %v4703
    %v4705 = vextract.high.u32 %v4703
    %v4706 = vmul.u32.u64.compose %v4702, %v4697
    %v4707 = vextract.low.u32 %v4706
    %v4708 = vextract.high.u32 %v4706
    %v4709 = vmul.u32 %v4702, %v4693
    %v4710 = vadd.s32 %v4705, %v4707
    %vm4711 = vc.u32 %v4705, %v4707
    %v4712 = vadd.s32 %v4708, 1
    %v4713 = vsel %vm4711, %v4712, %v4708
    %v4714 = vadd.s32 %v4709, %v4713
    %v4715 = vadd.s32 %v4714, 536870912
    %v4716 = vshrl.u32 %v4715, 30
    %v4717 = vshll.u32 %v4716, 30
    %v4718 = vsub.s32 %v4714, %v4717
    %vm4719 = vcmp.lt.s32.totalorder %v4718, 0
    %v4720 = vsub.s32 0, %v4718
    %v4721 = vsel %vm4719, %v4720, %v4718
    %v4722 = vclz %v4721
    %v4723 = vsub.s32 %v4722, 2
    %vm4724 = vcmp.gt.s32.totalorder 0, %v4723
    %v4725 = vsel %vm4724, 0, %v4723
    %v4726 = vsub.s32 32, %v4725
    %v4727 = vshll.u32 %v4718, %v4725
    %v4728 = vshrl.u32 %v4710, %v4726
    %v4729 = vor.u32 %v4727, %v4728
    %v4730 = vsub.s32 4294967266, %v4725
    %v4731 = vadd.s32 %v4730, 127
    %v4732 = vshll.u32 %v4731, 23
    %v4733 = vor.u32 4788187, %v4732
    %v4734 = vand.u32 2147483647, %v4733
    %v4736 = vcvt.s32.f32 %v4729
    %v4737 = vmul.f32 %v4736, %v4734
    %v4738 = vxor.u32 %v4737, 2147483648
    %v4739 = vsel %vm4656, %v4738, %v4737
    %v4740 = vsub.s32 4, %v4716
    %v4741 = vsel %vm4656, %v4740, %v4716
    %v4742 = vsel %vm4655, %v3397, %v4739
    %v4743 = vsel %vm4655, 0, %v4741
    %v4744 = vcosq.f32.pop %v4742
    %v4745 = vsinq.f32.pop %v4742
    %vm4746 = vweird.f32 %v3397
    %v4747 = vand.u32 %v4743, 3
    %vm4748 = vcmp.lt.s32.totalorder %v4747, 2
    %vm4749 = vcmp.eq.s32.totalorder %v4747, 0
    %v4750 = vxor.u32 %v4745, 2147483648
    %v4751 = vsel %vm4749, %v4744, %v4750
    %vm4752 = vcmp.eq.s32.totalorder %v4747, 2
    %v4753 = vxor.u32 %v4744, 2147483648
    %v4754 = vsel %vm4752, %v4753, %v4745
    %v4755 = vsel %vm4748, %v4751, %v4754
    %v4756 = vsel %vm4746, nan, %v4755
    %v4757 = vand.u32 2147483647, %v3398
    %vm4758 = vcmp.le.f32.partialorder %v4757, 0.7853982
    %vm4759 = vcmp.lt.s32.totalorder %v3398, 0
    %v4760 = vand.u32 %v3398, 2139095040
    %v4761 = vshrl.u32 %v4760, 23
    %v4762 = vsub.s32 %v4761, 127
    %v4763 = vand.u32 2147483647, %v3398
    %v4764 = vand.u32 %v4763, 8388607
    %v4765 = vor.u32 %v4764, 8388608
    %v4766 = vsub.s32 0, %v4765
    %v4767 = vadd.s32 %v4762, 1
    %vm4768 = vcmp.gt.s32.totalorder %v4767, 0
    %v4769 = vsel %vm4768, %v4767, 0
    %v4770 = vshrl.u32 %v4769, 5
    %v4771 = vand.u32 %v4769, 31
    %v4772 = vsub.s32 32, %v4771
    %v4773 = vshrl.u32 683565275, %v4772
    %v4774 = vshll.u32 683565275, %v4771
    %v4775 = vshrl.u32 2475754826, %v4772
    %v4776 = vor.u32 %v4774, %v4775
    %v4777 = vshll.u32 2475754826, %v4771
    %v4778 = vshrl.u32 2131351028, %v4772
    %v4779 = vor.u32 %v4777, %v4778
    %v4780 = vshll.u32 2131351028, %v4771
    %v4781 = vshrl.u32 2102212464, %v4772
    %v4782 = vor.u32 %v4780, %v4781
    %v4783 = vshll.u32 2102212464, %v4771
    %v4784 = vshrl.u32 920167782, %v4772
    %v4785 = vor.u32 %v4783, %v4784
    %v4786 = vshll.u32 920167782, %v4771
    %v4787 = vshrl.u32 1326507024, %v4772
    %v4788 = vor.u32 %v4786, %v4787
    %vm4789 = vcmp.lt.s32.totalorder %v4770, 1
    %vm4790 = vcmp.lt.s32.totalorder %v4770, 2
    %vm4791 = vcmp.lt.s32.totalorder %v4770, 3
    %vm4792 = vcmp.lt.s32.totalorder %v4770, 4
    %v4793 = vsel %vm4789, %v4773, %v4776
    %v4794 = vsel %vm4792, %v4782, 2102212464
    %v4795 = vsel %vm4791, %v4779, %v4794
    %v4796 = vsel %vm4790, %v4793, %v4795
    %v4797 = vsel %vm4789, %v4776, %v4779
    %v4798 = vsel %vm4792, %v4785, 920167782
    %v4799 = vsel %vm4791, %v4782, %v4798
    %v4800 = vsel %vm4790, %v4797, %v4799
    %v4801 = vsel %vm4789, %v4779, %v4782
    %v4802 = vsel %vm4792, %v4788, 1326507024
    %v4803 = vsel %vm4791, %v4785, %v4802
    %v4804 = vsel %vm4790, %v4801, %v4803
    %v4805 = vshll.u32 %v4765, 8
    %v4806 = vmul.u32.u64.compose %v4805, %v4804
    %v4807 = vextract.low.u32 %v4806
    %v4808 = vextract.high.u32 %v4806
    %v4809 = vmul.u32.u64.compose %v4805, %v4800
    %v4810 = vextract.low.u32 %v4809
    %v4811 = vextract.high.u32 %v4809
    %v4812 = vmul.u32 %v4805, %v4796
    %v4813 = vadd.s32 %v4808, %v4810
    %vm4814 = vc.u32 %v4808, %v4810
    %v4815 = vadd.s32 %v4811, 1
    %v4816 = vsel %vm4814, %v4815, %v4811
    %v4817 = vadd.s32 %v4812, %v4816
    %v4818 = vadd.s32 %v4817, 536870912
    %v4819 = vshrl.u32 %v4818, 30
    %v4820 = vshll.u32 %v4819, 30
    %v4821 = vsub.s32 %v4817, %v4820
    %vm4822 = vcmp.lt.s32.totalorder %v4821, 0
    %v4823 = vsub.s32 0, %v4821
    %v4824 = vsel %vm4822, %v4823, %v4821
    %v4825 = vclz %v4824
    %v4826 = vsub.s32 %v4825, 2
    %vm4827 = vcmp.gt.s32.totalorder 0, %v4826
    %v4828 = vsel %vm4827, 0, %v4826
    %v4829 = vsub.s32 32, %v4828
    %v4830 = vshll.u32 %v4821, %v4828
    %v4831 = vshrl.u32 %v4813, %v4829
    %v4832 = vor.u32 %v4830, %v4831
    %v4833 = vsub.s32 4294967266, %v4828
    %v4834 = vadd.s32 %v4833, 127
    %v4835 = vshll.u32 %v4834, 23
    %v4836 = vor.u32 4788187, %v4835
    %v4837 = vand.u32 2147483647, %v4836
    %v4839 = vcvt.s32.f32 %v4832
    %v4840 = vmul.f32 %v4839, %v4837
    %v4841 = vxor.u32 %v4840, 2147483648
    %v4842 = vsel %vm4759, %v4841, %v4840
    %v4843 = vsub.s32 4, %v4819
    %v4844 = vsel %vm4759, %v4843, %v4819
    %v4845 = vsel %vm4758, %v3398, %v4842
    %v4846 = vsel %vm4758, 0, %v4844
    %v4847 = vcosq.f32.pop %v4845
    %v4848 = vsinq.f32.pop %v4845
    %vm4849 = vweird.f32 %v3398
    %v4850 = vand.u32 %v4846, 3
    %vm4851 = vcmp.lt.s32.totalorder %v4850, 2
    %vm4852 = vcmp.eq.s32.totalorder %v4850, 0
    %v4853 = vxor.u32 %v4848, 2147483648
    %v4854 = vsel %vm4852, %v4847, %v4853
    %vm4855 = vcmp.eq.s32.totalorder %v4850, 2
    %v4856 = vxor.u32 %v4847, 2147483648
    %v4857 = vsel %vm4855, %v4856, %v4848
    %v4858 = vsel %vm4851, %v4854, %v4857
    %v4859 = vsel %vm4849, nan, %v4858
    %v4860 = vand.u32 2147483647, %v3399
    %vm4861 = vcmp.le.f32.partialorder %v4860, 0.7853982
    %vm4862 = vcmp.lt.s32.totalorder %v3399, 0
    %v4863 = vand.u32 %v3399, 2139095040
    %v4864 = vshrl.u32 %v4863, 23
    %v4865 = vsub.s32 %v4864, 127
    %v4866 = vand.u32 2147483647, %v3399
    %v4867 = vand.u32 %v4866, 8388607
    %v4868 = vor.u32 %v4867, 8388608
    %v4869 = vsub.s32 0, %v4868
    %v4870 = vadd.s32 %v4865, 1
    %vm4871 = vcmp.gt.s32.totalorder %v4870, 0
    %v4872 = vsel %vm4871, %v4870, 0
    %v4873 = vshrl.u32 %v4872, 5
    %v4874 = vand.u32 %v4872, 31
    %v4875 = vsub.s32 32, %v4874
    %v4876 = vshrl.u32 683565275, %v4875
    %v4877 = vshll.u32 683565275, %v4874
    %v4878 = vshrl.u32 2475754826, %v4875
    %v4879 = vor.u32 %v4877, %v4878
    %v4880 = vshll.u32 2475754826, %v4874
    %v4881 = vshrl.u32 2131351028, %v4875
    %v4882 = vor.u32 %v4880, %v4881
    %v4883 = vshll.u32 2131351028, %v4874
    %v4884 = vshrl.u32 2102212464, %v4875
    %v4885 = vor.u32 %v4883, %v4884
    %v4886 = vshll.u32 2102212464, %v4874
    %v4887 = vshrl.u32 920167782, %v4875
    %v4888 = vor.u32 %v4886, %v4887
    %v4889 = vshll.u32 920167782, %v4874
    %v4890 = vshrl.u32 1326507024, %v4875
    %v4891 = vor.u32 %v4889, %v4890
    %vm4892 = vcmp.lt.s32.totalorder %v4873, 1
    %vm4893 = vcmp.lt.s32.totalorder %v4873, 2
    %vm4894 = vcmp.lt.s32.totalorder %v4873, 3
    %vm4895 = vcmp.lt.s32.totalorder %v4873, 4
    %v4896 = vsel %vm4892, %v4876, %v4879
    %v4897 = vsel %vm4895, %v4885, 2102212464
    %v4898 = vsel %vm4894, %v4882, %v4897
    %v4899 = vsel %vm4893, %v4896, %v4898
    %v4900 = vsel %vm4892, %v4879, %v4882
    %v4901 = vsel %vm4895, %v4888, 920167782
    %v4902 = vsel %vm4894, %v4885, %v4901
    %v4903 = vsel %vm4893, %v4900, %v4902
    %v4904 = vsel %vm4892, %v4882, %v4885
    %v4905 = vsel %vm4895, %v4891, 1326507024
    %v4906 = vsel %vm4894, %v4888, %v4905
    %v4907 = vsel %vm4893, %v4904, %v4906
    %v4908 = vshll.u32 %v4868, 8
    %v4909 = vmul.u32.u64.compose %v4908, %v4907
    %v4910 = vextract.low.u32 %v4909
    %v4911 = vextract.high.u32 %v4909
    %v4912 = vmul.u32.u64.compose %v4908, %v4903
    %v4913 = vextract.low.u32 %v4912
    %v4914 = vextract.high.u32 %v4912
    %v4915 = vmul.u32 %v4908, %v4899
    %v4916 = vadd.s32 %v4911, %v4913
    %vm4917 = vc.u32 %v4911, %v4913
    %v4918 = vadd.s32 %v4914, 1
    %v4919 = vsel %vm4917, %v4918, %v4914
    %v4920 = vadd.s32 %v4915, %v4919
    %v4921 = vadd.s32 %v4920, 536870912
    %v4922 = vshrl.u32 %v4921, 30
    %v4923 = vshll.u32 %v4922, 30
    %v4924 = vsub.s32 %v4920, %v4923
    %vm4925 = vcmp.lt.s32.totalorder %v4924, 0
    %v4926 = vsub.s32 0, %v4924
    %v4927 = vsel %vm4925, %v4926, %v4924
    %v4928 = vclz %v4927
    %v4929 = vsub.s32 %v4928, 2
    %vm4930 = vcmp.gt.s32.totalorder 0, %v4929
    %v4931 = vsel %vm4930, 0, %v4929
    %v4932 = vsub.s32 32, %v4931
    %v4933 = vshll.u32 %v4924, %v4931
    %v4934 = vshrl.u32 %v4916, %v4932
    %v4935 = vor.u32 %v4933, %v4934
    %v4936 = vsub.s32 4294967266, %v4931
    %v4937 = vadd.s32 %v4936, 127
    %v4938 = vshll.u32 %v4937, 23
    %v4939 = vor.u32 4788187, %v4938
    %v4940 = vand.u32 2147483647, %v4939
    %v4942 = vcvt.s32.f32 %v4935
    %v4943 = vmul.f32 %v4942, %v4940
    %v4944 = vxor.u32 %v4943, 2147483648
    %v4945 = vsel %vm4862, %v4944, %v4943
    %v4946 = vsub.s32 4, %v4922
    %v4947 = vsel %vm4862, %v4946, %v4922
    %v4948 = vsel %vm4861, %v3399, %v4945
    %v4949 = vsel %vm4861, 0, %v4947
    %v4950 = vcosq.f32.pop %v4948
    %v4951 = vsinq.f32.pop %v4948
    %vm4952 = vweird.f32 %v3399
    %v4953 = vand.u32 %v4949, 3
    %vm4954 = vcmp.lt.s32.totalorder %v4953, 2
    %vm4955 = vcmp.eq.s32.totalorder %v4953, 0
    %v4956 = vxor.u32 %v4951, 2147483648
    %v4957 = vsel %vm4955, %v4950, %v4956
    %vm4958 = vcmp.eq.s32.totalorder %v4953, 2
    %v4959 = vxor.u32 %v4950, 2147483648
    %v4960 = vsel %vm4958, %v4959, %v4951
    %v4961 = vsel %vm4954, %v4957, %v4960
    %v4962 = vsel %vm4952, nan, %v4961
    %v4963 = vand.u32 2147483647, %v3400
    %vm4964 = vcmp.le.f32.partialorder %v4963, 0.7853982
    %vm4965 = vcmp.lt.s32.totalorder %v3400, 0
    %v4966 = vand.u32 %v3400, 2139095040
    %v4967 = vshrl.u32 %v4966, 23
    %v4968 = vsub.s32 %v4967, 127
    %v4969 = vand.u32 2147483647, %v3400
    %v4970 = vand.u32 %v4969, 8388607
    %v4971 = vor.u32 %v4970, 8388608
    %v4972 = vsub.s32 0, %v4971
    %v4973 = vadd.s32 %v4968, 1
    %vm4974 = vcmp.gt.s32.totalorder %v4973, 0
    %v4975 = vsel %vm4974, %v4973, 0
    %v4976 = vshrl.u32 %v4975, 5
    %v4977 = vand.u32 %v4975, 31
    %v4978 = vsub.s32 32, %v4977
    %v4979 = vshrl.u32 683565275, %v4978
    %v4980 = vshll.u32 683565275, %v4977
    %v4981 = vshrl.u32 2475754826, %v4978
    %v4982 = vor.u32 %v4980, %v4981
    %v4983 = vshll.u32 2475754826, %v4977
    %v4984 = vshrl.u32 2131351028, %v4978
    %v4985 = vor.u32 %v4983, %v4984
    %v4986 = vshll.u32 2131351028, %v4977
    %v4987 = vshrl.u32 2102212464, %v4978
    %v4988 = vor.u32 %v4986, %v4987
    %v4989 = vshll.u32 2102212464, %v4977
    %v4990 = vshrl.u32 920167782, %v4978
    %v4991 = vor.u32 %v4989, %v4990
    %v4992 = vshll.u32 920167782, %v4977
    %v4993 = vshrl.u32 1326507024, %v4978
    %v4994 = vor.u32 %v4992, %v4993
    %vm4995 = vcmp.lt.s32.totalorder %v4976, 1
    %vm4996 = vcmp.lt.s32.totalorder %v4976, 2
    %vm4997 = vcmp.lt.s32.totalorder %v4976, 3
    %vm4998 = vcmp.lt.s32.totalorder %v4976, 4
    %v4999 = vsel %vm4995, %v4979, %v4982
    %v5000 = vsel %vm4998, %v4988, 2102212464
    %v5001 = vsel %vm4997, %v4985, %v5000
    %v5002 = vsel %vm4996, %v4999, %v5001
    %v5003 = vsel %vm4995, %v4982, %v4985
    %v5004 = vsel %vm4998, %v4991, 920167782
    %v5005 = vsel %vm4997, %v4988, %v5004
    %v5006 = vsel %vm4996, %v5003, %v5005
    %v5007 = vsel %vm4995, %v4985, %v4988
    %v5008 = vsel %vm4998, %v4994, 1326507024
    %v5009 = vsel %vm4997, %v4991, %v5008
    %v5010 = vsel %vm4996, %v5007, %v5009
    %v5011 = vshll.u32 %v4971, 8
    %v5012 = vmul.u32.u64.compose %v5011, %v5010
    %v5013 = vextract.low.u32 %v5012
    %v5014 = vextract.high.u32 %v5012
    %v5015 = vmul.u32.u64.compose %v5011, %v5006
    %v5016 = vextract.low.u32 %v5015
    %v5017 = vextract.high.u32 %v5015
    %v5018 = vmul.u32 %v5011, %v5002
    %v5019 = vadd.s32 %v5014, %v5016
    %vm5020 = vc.u32 %v5014, %v5016
    %v5021 = vadd.s32 %v5017, 1
    %v5022 = vsel %vm5020, %v5021, %v5017
    %v5023 = vadd.s32 %v5018, %v5022
    %v5024 = vadd.s32 %v5023, 536870912
    %v5025 = vshrl.u32 %v5024, 30
    %v5026 = vshll.u32 %v5025, 30
    %v5027 = vsub.s32 %v5023, %v5026
    %vm5028 = vcmp.lt.s32.totalorder %v5027, 0
    %v5029 = vsub.s32 0, %v5027
    %v5030 = vsel %vm5028, %v5029, %v5027
    %v5031 = vclz %v5030
    %v5032 = vsub.s32 %v5031, 2
    %vm5033 = vcmp.gt.s32.totalorder 0, %v5032
    %v5034 = vsel %vm5033, 0, %v5032
    %v5035 = vsub.s32 32, %v5034
    %v5036 = vshll.u32 %v5027, %v5034
    %v5037 = vshrl.u32 %v5019, %v5035
    %v5038 = vor.u32 %v5036, %v5037
    %v5039 = vsub.s32 4294967266, %v5034
    %v5040 = vadd.s32 %v5039, 127
    %v5041 = vshll.u32 %v5040, 23
    %v5042 = vor.u32 4788187, %v5041
    %v5043 = vand.u32 2147483647, %v5042
    %v5045 = vcvt.s32.f32 %v5038
    %v5046 = vmul.f32 %v5045, %v5043
    %v5047 = vxor.u32 %v5046, 2147483648
    %v5048 = vsel %vm4965, %v5047, %v5046
    %v5049 = vsub.s32 4, %v5025
    %v5050 = vsel %vm4965, %v5049, %v5025
    %v5051 = vsel %vm4964, %v3400, %v5048
    %v5052 = vsel %vm4964, 0, %v5050
    %v5053 = vcosq.f32.pop %v5051
    %v5054 = vsinq.f32.pop %v5051
    %vm5055 = vweird.f32 %v3400
    %v5056 = vand.u32 %v5052, 3
    %vm5057 = vcmp.lt.s32.totalorder %v5056, 2
    %vm5058 = vcmp.eq.s32.totalorder %v5056, 0
    %v5059 = vxor.u32 %v5054, 2147483648
    %v5060 = vsel %vm5058, %v5053, %v5059
    %vm5061 = vcmp.eq.s32.totalorder %v5056, 2
    %v5062 = vxor.u32 %v5053, 2147483648
    %v5063 = vsel %vm5061, %v5062, %v5054
    %v5064 = vsel %vm5057, %v5060, %v5063
    %v5065 = vsel %vm5055, nan, %v5064
    %s5066 = scalar_lea.vmem [#allocation5], 384
    %5067 = vst [vmem:[%s5066] sm:$0xff] %v4344
    %5068 = vst [vmem:[%s5066 + $0x8] sm:$0xff] %v4447
    %5069 = vst [vmem:[%s5066 + $0x10] sm:$0xff] %v4550
    %5070 = vst [vmem:[%s5066 + $0x18] sm:$0xff] %v4653
    %5071 = vst [vmem:[%s5066 + $0x20] sm:$0xff] %v4756
    %5072 = vst [vmem:[%s5066 + $0x28] sm:$0xff] %v4859
    %5073 = vst [vmem:[%s5066 + $0x30] sm:$0xff] %v4962
    %5074 = vst [vmem:[%s5066 + $0x38] sm:$0xff] %v5065
    %v5075 = vmul.f32 %v21, 8.0
    %v5076 = vmul.f32 %v22, 8.0
    %v5077 = vmul.f32 %v23, 8.0
    %v5078 = vmul.f32 %v24, 8.0
    %v5079 = vmul.f32 %v25, 8.0
    %v5080 = vmul.f32 %v26, 8.0
    %v5081 = vmul.f32 %v27, 8.0
    %v5082 = vmul.f32 %v28, 8.0
    %v5083 = vand.u32 2147483647, %v5075
    %vm5084 = vcmp.le.f32.partialorder %v5083, 0.7853982
    %vm5085 = vcmp.lt.s32.totalorder %v5075, 0
    %v5086 = vand.u32 %v5075, 2139095040
    %v5087 = vshrl.u32 %v5086, 23
    %v5088 = vsub.s32 %v5087, 127
    %v5089 = vand.u32 2147483647, %v5075
    %v5090 = vand.u32 %v5089, 8388607
    %v5091 = vor.u32 %v5090, 8388608
    %v5092 = vsub.s32 0, %v5091
    %v5093 = vadd.s32 %v5088, 1
    %vm5094 = vcmp.gt.s32.totalorder %v5093, 0
    %v5095 = vsel %vm5094, %v5093, 0
    %v5096 = vshrl.u32 %v5095, 5
    %v5097 = vand.u32 %v5095, 31
    %v5098 = vsub.s32 32, %v5097
    %v5099 = vshrl.u32 683565275, %v5098
    %v5100 = vshll.u32 683565275, %v5097
    %v5101 = vshrl.u32 2475754826, %v5098
    %v5102 = vor.u32 %v5100, %v5101
    %v5103 = vshll.u32 2475754826, %v5097
    %v5104 = vshrl.u32 2131351028, %v5098
    %v5105 = vor.u32 %v5103, %v5104
    %v5106 = vshll.u32 2131351028, %v5097
    %v5107 = vshrl.u32 2102212464, %v5098
    %v5108 = vor.u32 %v5106, %v5107
    %v5109 = vshll.u32 2102212464, %v5097
    %v5110 = vshrl.u32 920167782, %v5098
    %v5111 = vor.u32 %v5109, %v5110
    %v5112 = vshll.u32 920167782, %v5097
    %v5113 = vshrl.u32 1326507024, %v5098
    %v5114 = vor.u32 %v5112, %v5113
    %vm5115 = vcmp.lt.s32.totalorder %v5096, 1
    %vm5116 = vcmp.lt.s32.totalorder %v5096, 2
    %vm5117 = vcmp.lt.s32.totalorder %v5096, 3
    %vm5118 = vcmp.lt.s32.totalorder %v5096, 4
    %v5119 = vsel %vm5115, %v5099, %v5102
    %v5120 = vsel %vm5118, %v5108, 2102212464
    %v5121 = vsel %vm5117, %v5105, %v5120
    %v5122 = vsel %vm5116, %v5119, %v5121
    %v5123 = vsel %vm5115, %v5102, %v5105
    %v5124 = vsel %vm5118, %v5111, 920167782
    %v5125 = vsel %vm5117, %v5108, %v5124
    %v5126 = vsel %vm5116, %v5123, %v5125
    %v5127 = vsel %vm5115, %v5105, %v5108
    %v5128 = vsel %vm5118, %v5114, 1326507024
    %v5129 = vsel %vm5117, %v5111, %v5128
    %v5130 = vsel %vm5116, %v5127, %v5129
    %v5131 = vshll.u32 %v5091, 8
    %v5132 = vmul.u32.u64.compose %v5131, %v5130
    %v5133 = vextract.low.u32 %v5132
    %v5134 = vextract.high.u32 %v5132
    %v5135 = vmul.u32.u64.compose %v5131, %v5126
    %v5136 = vextract.low.u32 %v5135
    %v5137 = vextract.high.u32 %v5135
    %v5138 = vmul.u32 %v5131, %v5122
    %v5139 = vadd.s32 %v5134, %v5136
    %vm5140 = vc.u32 %v5134, %v5136
    %v5141 = vadd.s32 %v5137, 1
    %v5142 = vsel %vm5140, %v5141, %v5137
    %v5143 = vadd.s32 %v5138, %v5142
    %v5144 = vadd.s32 %v5143, 536870912
    %v5145 = vshrl.u32 %v5144, 30
    %v5146 = vshll.u32 %v5145, 30
    %v5147 = vsub.s32 %v5143, %v5146
    %vm5148 = vcmp.lt.s32.totalorder %v5147, 0
    %v5149 = vsub.s32 0, %v5147
    %v5150 = vsel %vm5148, %v5149, %v5147
    %v5151 = vclz %v5150
    %v5152 = vsub.s32 %v5151, 2
    %vm5153 = vcmp.gt.s32.totalorder 0, %v5152
    %v5154 = vsel %vm5153, 0, %v5152
    %v5155 = vsub.s32 32, %v5154
    %v5156 = vshll.u32 %v5147, %v5154
    %v5157 = vshrl.u32 %v5139, %v5155
    %v5158 = vor.u32 %v5156, %v5157
    %v5159 = vsub.s32 4294967266, %v5154
    %v5160 = vadd.s32 %v5159, 127
    %v5161 = vshll.u32 %v5160, 23
    %v5162 = vor.u32 4788187, %v5161
    %v5163 = vand.u32 2147483647, %v5162
    %v5165 = vcvt.s32.f32 %v5158
    %v5166 = vmul.f32 %v5165, %v5163
    %v5167 = vxor.u32 %v5166, 2147483648
    %v5168 = vsel %vm5085, %v5167, %v5166
    %v5169 = vsub.s32 4, %v5145
    %v5170 = vsel %vm5085, %v5169, %v5145
    %v5171 = vsel %vm5084, %v5075, %v5168
    %v5172 = vsel %vm5084, 0, %v5170
    %v5173 = vcosq.f32.pop %v5171
    %v5174 = vsinq.f32.pop %v5171
    %vm5175 = vweird.f32 %v5075
    %v5176 = vadd.s32 %v5172, 3
    %v5177 = vand.u32 %v5176, 3
    %vm5178 = vcmp.lt.s32.totalorder %v5177, 2
    %vm5179 = vcmp.eq.s32.totalorder %v5177, 0
    %v5180 = vxor.u32 %v5174, 2147483648
    %v5181 = vsel %vm5179, %v5173, %v5180
    %vm5182 = vcmp.eq.s32.totalorder %v5177, 2
    %v5183 = vxor.u32 %v5173, 2147483648
    %v5184 = vsel %vm5182, %v5183, %v5174
    %v5185 = vsel %vm5178, %v5181, %v5184
    %v5186 = vsel %vm5175, nan, %v5185
    %v5187 = vand.u32 2147483647, %v5076
    %vm5188 = vcmp.le.f32.partialorder %v5187, 0.7853982
    %vm5189 = vcmp.lt.s32.totalorder %v5076, 0
    %v5190 = vand.u32 %v5076, 2139095040
    %v5191 = vshrl.u32 %v5190, 23
    %v5192 = vsub.s32 %v5191, 127
    %v5193 = vand.u32 2147483647, %v5076
    %v5194 = vand.u32 %v5193, 8388607
    %v5195 = vor.u32 %v5194, 8388608
    %v5196 = vsub.s32 0, %v5195
    %v5197 = vadd.s32 %v5192, 1
    %vm5198 = vcmp.gt.s32.totalorder %v5197, 0
    %v5199 = vsel %vm5198, %v5197, 0
    %v5200 = vshrl.u32 %v5199, 5
    %v5201 = vand.u32 %v5199, 31
    %v5202 = vsub.s32 32, %v5201
    %v5203 = vshrl.u32 683565275, %v5202
    %v5204 = vshll.u32 683565275, %v5201
    %v5205 = vshrl.u32 2475754826, %v5202
    %v5206 = vor.u32 %v5204, %v5205
    %v5207 = vshll.u32 2475754826, %v5201
    %v5208 = vshrl.u32 2131351028, %v5202
    %v5209 = vor.u32 %v5207, %v5208
    %v5210 = vshll.u32 2131351028, %v5201
    %v5211 = vshrl.u32 2102212464, %v5202
    %v5212 = vor.u32 %v5210, %v5211
    %v5213 = vshll.u32 2102212464, %v5201
    %v5214 = vshrl.u32 920167782, %v5202
    %v5215 = vor.u32 %v5213, %v5214
    %v5216 = vshll.u32 920167782, %v5201
    %v5217 = vshrl.u32 1326507024, %v5202
    %v5218 = vor.u32 %v5216, %v5217
    %vm5219 = vcmp.lt.s32.totalorder %v5200, 1
    %vm5220 = vcmp.lt.s32.totalorder %v5200, 2
    %vm5221 = vcmp.lt.s32.totalorder %v5200, 3
    %vm5222 = vcmp.lt.s32.totalorder %v5200, 4
    %v5223 = vsel %vm5219, %v5203, %v5206
    %v5224 = vsel %vm5222, %v5212, 2102212464
    %v5225 = vsel %vm5221, %v5209, %v5224
    %v5226 = vsel %vm5220, %v5223, %v5225
    %v5227 = vsel %vm5219, %v5206, %v5209
    %v5228 = vsel %vm5222, %v5215, 920167782
    %v5229 = vsel %vm5221, %v5212, %v5228
    %v5230 = vsel %vm5220, %v5227, %v5229
    %v5231 = vsel %vm5219, %v5209, %v5212
    %v5232 = vsel %vm5222, %v5218, 1326507024
    %v5233 = vsel %vm5221, %v5215, %v5232
    %v5234 = vsel %vm5220, %v5231, %v5233
    %v5235 = vshll.u32 %v5195, 8
    %v5236 = vmul.u32.u64.compose %v5235, %v5234
    %v5237 = vextract.low.u32 %v5236
    %v5238 = vextract.high.u32 %v5236
    %v5239 = vmul.u32.u64.compose %v5235, %v5230
    %v5240 = vextract.low.u32 %v5239
    %v5241 = vextract.high.u32 %v5239
    %v5242 = vmul.u32 %v5235, %v5226
    %v5243 = vadd.s32 %v5238, %v5240
    %vm5244 = vc.u32 %v5238, %v5240
    %v5245 = vadd.s32 %v5241, 1
    %v5246 = vsel %vm5244, %v5245, %v5241
    %v5247 = vadd.s32 %v5242, %v5246
    %v5248 = vadd.s32 %v5247, 536870912
    %v5249 = vshrl.u32 %v5248, 30
    %v5250 = vshll.u32 %v5249, 30
    %v5251 = vsub.s32 %v5247, %v5250
    %vm5252 = vcmp.lt.s32.totalorder %v5251, 0
    %v5253 = vsub.s32 0, %v5251
    %v5254 = vsel %vm5252, %v5253, %v5251
    %v5255 = vclz %v5254
    %v5256 = vsub.s32 %v5255, 2
    %vm5257 = vcmp.gt.s32.totalorder 0, %v5256
    %v5258 = vsel %vm5257, 0, %v5256
    %v5259 = vsub.s32 32, %v5258
    %v5260 = vshll.u32 %v5251, %v5258
    %v5261 = vshrl.u32 %v5243, %v5259
    %v5262 = vor.u32 %v5260, %v5261
    %v5263 = vsub.s32 4294967266, %v5258
    %v5264 = vadd.s32 %v5263, 127
    %v5265 = vshll.u32 %v5264, 23
    %v5266 = vor.u32 4788187, %v5265
    %v5267 = vand.u32 2147483647, %v5266
    %v5269 = vcvt.s32.f32 %v5262
    %v5270 = vmul.f32 %v5269, %v5267
    %v5271 = vxor.u32 %v5270, 2147483648
    %v5272 = vsel %vm5189, %v5271, %v5270
    %v5273 = vsub.s32 4, %v5249
    %v5274 = vsel %vm5189, %v5273, %v5249
    %v5275 = vsel %vm5188, %v5076, %v5272
    %v5276 = vsel %vm5188, 0, %v5274
    %v5277 = vcosq.f32.pop %v5275
    %v5278 = vsinq.f32.pop %v5275
    %vm5279 = vweird.f32 %v5076
    %v5280 = vadd.s32 %v5276, 3
    %v5281 = vand.u32 %v5280, 3
    %vm5282 = vcmp.lt.s32.totalorder %v5281, 2
    %vm5283 = vcmp.eq.s32.totalorder %v5281, 0
    %v5284 = vxor.u32 %v5278, 2147483648
    %v5285 = vsel %vm5283, %v5277, %v5284
    %vm5286 = vcmp.eq.s32.totalorder %v5281, 2
    %v5287 = vxor.u32 %v5277, 2147483648
    %v5288 = vsel %vm5286, %v5287, %v5278
    %v5289 = vsel %vm5282, %v5285, %v5288
    %v5290 = vsel %vm5279, nan, %v5289
    %v5291 = vand.u32 2147483647, %v5077
    %vm5292 = vcmp.le.f32.partialorder %v5291, 0.7853982
    %vm5293 = vcmp.lt.s32.totalorder %v5077, 0
    %v5294 = vand.u32 %v5077, 2139095040
    %v5295 = vshrl.u32 %v5294, 23
    %v5296 = vsub.s32 %v5295, 127
    %v5297 = vand.u32 2147483647, %v5077
    %v5298 = vand.u32 %v5297, 8388607
    %v5299 = vor.u32 %v5298, 8388608
    %v5300 = vsub.s32 0, %v5299
    %v5301 = vadd.s32 %v5296, 1
    %vm5302 = vcmp.gt.s32.totalorder %v5301, 0
    %v5303 = vsel %vm5302, %v5301, 0
    %v5304 = vshrl.u32 %v5303, 5
    %v5305 = vand.u32 %v5303, 31
    %v5306 = vsub.s32 32, %v5305
    %v5307 = vshrl.u32 683565275, %v5306
    %v5308 = vshll.u32 683565275, %v5305
    %v5309 = vshrl.u32 2475754826, %v5306
    %v5310 = vor.u32 %v5308, %v5309
    %v5311 = vshll.u32 2475754826, %v5305
    %v5312 = vshrl.u32 2131351028, %v5306
    %v5313 = vor.u32 %v5311, %v5312
    %v5314 = vshll.u32 2131351028, %v5305
    %v5315 = vshrl.u32 2102212464, %v5306
    %v5316 = vor.u32 %v5314, %v5315
    %v5317 = vshll.u32 2102212464, %v5305
    %v5318 = vshrl.u32 920167782, %v5306
    %v5319 = vor.u32 %v5317, %v5318
    %v5320 = vshll.u32 920167782, %v5305
    %v5321 = vshrl.u32 1326507024, %v5306
    %v5322 = vor.u32 %v5320, %v5321
    %vm5323 = vcmp.lt.s32.totalorder %v5304, 1
    %vm5324 = vcmp.lt.s32.totalorder %v5304, 2
    %vm5325 = vcmp.lt.s32.totalorder %v5304, 3
    %vm5326 = vcmp.lt.s32.totalorder %v5304, 4
    %v5327 = vsel %vm5323, %v5307, %v5310
    %v5328 = vsel %vm5326, %v5316, 2102212464
    %v5329 = vsel %vm5325, %v5313, %v5328
    %v5330 = vsel %vm5324, %v5327, %v5329
    %v5331 = vsel %vm5323, %v5310, %v5313
    %v5332 = vsel %vm5326, %v5319, 920167782
    %v5333 = vsel %vm5325, %v5316, %v5332
    %v5334 = vsel %vm5324, %v5331, %v5333
    %v5335 = vsel %vm5323, %v5313, %v5316
    %v5336 = vsel %vm5326, %v5322, 1326507024
    %v5337 = vsel %vm5325, %v5319, %v5336
    %v5338 = vsel %vm5324, %v5335, %v5337
    %v5339 = vshll.u32 %v5299, 8
    %v5340 = vmul.u32.u64.compose %v5339, %v5338
    %v5341 = vextract.low.u32 %v5340
    %v5342 = vextract.high.u32 %v5340
    %v5343 = vmul.u32.u64.compose %v5339, %v5334
    %v5344 = vextract.low.u32 %v5343
    %v5345 = vextract.high.u32 %v5343
    %v5346 = vmul.u32 %v5339, %v5330
    %v5347 = vadd.s32 %v5342, %v5344
    %vm5348 = vc.u32 %v5342, %v5344
    %v5349 = vadd.s32 %v5345, 1
    %v5350 = vsel %vm5348, %v5349, %v5345
    %v5351 = vadd.s32 %v5346, %v5350
    %v5352 = vadd.s32 %v5351, 536870912
    %v5353 = vshrl.u32 %v5352, 30
    %v5354 = vshll.u32 %v5353, 30
    %v5355 = vsub.s32 %v5351, %v5354
    %vm5356 = vcmp.lt.s32.totalorder %v5355, 0
    %v5357 = vsub.s32 0, %v5355
    %v5358 = vsel %vm5356, %v5357, %v5355
    %v5359 = vclz %v5358
    %v5360 = vsub.s32 %v5359, 2
    %vm5361 = vcmp.gt.s32.totalorder 0, %v5360
    %v5362 = vsel %vm5361, 0, %v5360
    %v5363 = vsub.s32 32, %v5362
    %v5364 = vshll.u32 %v5355, %v5362
    %v5365 = vshrl.u32 %v5347, %v5363
    %v5366 = vor.u32 %v5364, %v5365
    %v5367 = vsub.s32 4294967266, %v5362
    %v5368 = vadd.s32 %v5367, 127
    %v5369 = vshll.u32 %v5368, 23
    %v5370 = vor.u32 4788187, %v5369
    %v5371 = vand.u32 2147483647, %v5370
    %v5373 = vcvt.s32.f32 %v5366
    %v5374 = vmul.f32 %v5373, %v5371
    %v5375 = vxor.u32 %v5374, 2147483648
    %v5376 = vsel %vm5293, %v5375, %v5374
    %v5377 = vsub.s32 4, %v5353
    %v5378 = vsel %vm5293, %v5377, %v5353
    %v5379 = vsel %vm5292, %v5077, %v5376
    %v5380 = vsel %vm5292, 0, %v5378
    %v5381 = vcosq.f32.pop %v5379
    %v5382 = vsinq.f32.pop %v5379
    %vm5383 = vweird.f32 %v5077
    %v5384 = vadd.s32 %v5380, 3
    %v5385 = vand.u32 %v5384, 3
    %vm5386 = vcmp.lt.s32.totalorder %v5385, 2
    %vm5387 = vcmp.eq.s32.totalorder %v5385, 0
    %v5388 = vxor.u32 %v5382, 2147483648
    %v5389 = vsel %vm5387, %v5381, %v5388
    %vm5390 = vcmp.eq.s32.totalorder %v5385, 2
    %v5391 = vxor.u32 %v5381, 2147483648
    %v5392 = vsel %vm5390, %v5391, %v5382
    %v5393 = vsel %vm5386, %v5389, %v5392
    %v5394 = vsel %vm5383, nan, %v5393
    %v5395 = vand.u32 2147483647, %v5078
    %vm5396 = vcmp.le.f32.partialorder %v5395, 0.7853982
    %vm5397 = vcmp.lt.s32.totalorder %v5078, 0
    %v5398 = vand.u32 %v5078, 2139095040
    %v5399 = vshrl.u32 %v5398, 23
    %v5400 = vsub.s32 %v5399, 127
    %v5401 = vand.u32 2147483647, %v5078
    %v5402 = vand.u32 %v5401, 8388607
    %v5403 = vor.u32 %v5402, 8388608
    %v5404 = vsub.s32 0, %v5403
    %v5405 = vadd.s32 %v5400, 1
    %vm5406 = vcmp.gt.s32.totalorder %v5405, 0
    %v5407 = vsel %vm5406, %v5405, 0
    %v5408 = vshrl.u32 %v5407, 5
    %v5409 = vand.u32 %v5407, 31
    %v5410 = vsub.s32 32, %v5409
    %v5411 = vshrl.u32 683565275, %v5410
    %v5412 = vshll.u32 683565275, %v5409
    %v5413 = vshrl.u32 2475754826, %v5410
    %v5414 = vor.u32 %v5412, %v5413
    %v5415 = vshll.u32 2475754826, %v5409
    %v5416 = vshrl.u32 2131351028, %v5410
    %v5417 = vor.u32 %v5415, %v5416
    %v5418 = vshll.u32 2131351028, %v5409
    %v5419 = vshrl.u32 2102212464, %v5410
    %v5420 = vor.u32 %v5418, %v5419
    %v5421 = vshll.u32 2102212464, %v5409
    %v5422 = vshrl.u32 920167782, %v5410
    %v5423 = vor.u32 %v5421, %v5422
    %v5424 = vshll.u32 920167782, %v5409
    %v5425 = vshrl.u32 1326507024, %v5410
    %v5426 = vor.u32 %v5424, %v5425
    %vm5427 = vcmp.lt.s32.totalorder %v5408, 1
    %vm5428 = vcmp.lt.s32.totalorder %v5408, 2
    %vm5429 = vcmp.lt.s32.totalorder %v5408, 3
    %vm5430 = vcmp.lt.s32.totalorder %v5408, 4
    %v5431 = vsel %vm5427, %v5411, %v5414
    %v5432 = vsel %vm5430, %v5420, 2102212464
    %v5433 = vsel %vm5429, %v5417, %v5432
    %v5434 = vsel %vm5428, %v5431, %v5433
    %v5435 = vsel %vm5427, %v5414, %v5417
    %v5436 = vsel %vm5430, %v5423, 920167782
    %v5437 = vsel %vm5429, %v5420, %v5436
    %v5438 = vsel %vm5428, %v5435, %v5437
    %v5439 = vsel %vm5427, %v5417, %v5420
    %v5440 = vsel %vm5430, %v5426, 1326507024
    %v5441 = vsel %vm5429, %v5423, %v5440
    %v5442 = vsel %vm5428, %v5439, %v5441
    %v5443 = vshll.u32 %v5403, 8
    %v5444 = vmul.u32.u64.compose %v5443, %v5442
    %v5445 = vextract.low.u32 %v5444
    %v5446 = vextract.high.u32 %v5444
    %v5447 = vmul.u32.u64.compose %v5443, %v5438
    %v5448 = vextract.low.u32 %v5447
    %v5449 = vextract.high.u32 %v5447
    %v5450 = vmul.u32 %v5443, %v5434
    %v5451 = vadd.s32 %v5446, %v5448
    %vm5452 = vc.u32 %v5446, %v5448
    %v5453 = vadd.s32 %v5449, 1
    %v5454 = vsel %vm5452, %v5453, %v5449
    %v5455 = vadd.s32 %v5450, %v5454
    %v5456 = vadd.s32 %v5455, 536870912
    %v5457 = vshrl.u32 %v5456, 30
    %v5458 = vshll.u32 %v5457, 30
    %v5459 = vsub.s32 %v5455, %v5458
    %vm5460 = vcmp.lt.s32.totalorder %v5459, 0
    %v5461 = vsub.s32 0, %v5459
    %v5462 = vsel %vm5460, %v5461, %v5459
    %v5463 = vclz %v5462
    %v5464 = vsub.s32 %v5463, 2
    %vm5465 = vcmp.gt.s32.totalorder 0, %v5464
    %v5466 = vsel %vm5465, 0, %v5464
    %v5467 = vsub.s32 32, %v5466
    %v5468 = vshll.u32 %v5459, %v5466
    %v5469 = vshrl.u32 %v5451, %v5467
    %v5470 = vor.u32 %v5468, %v5469
    %v5471 = vsub.s32 4294967266, %v5466
    %v5472 = vadd.s32 %v5471, 127
    %v5473 = vshll.u32 %v5472, 23
    %v5474 = vor.u32 4788187, %v5473
    %v5475 = vand.u32 2147483647, %v5474
    %v5477 = vcvt.s32.f32 %v5470
    %v5478 = vmul.f32 %v5477, %v5475
    %v5479 = vxor.u32 %v5478, 2147483648
    %v5480 = vsel %vm5397, %v5479, %v5478
    %v5481 = vsub.s32 4, %v5457
    %v5482 = vsel %vm5397, %v5481, %v5457
    %v5483 = vsel %vm5396, %v5078, %v5480
    %v5484 = vsel %vm5396, 0, %v5482
    %v5485 = vcosq.f32.pop %v5483
    %v5486 = vsinq.f32.pop %v5483
    %vm5487 = vweird.f32 %v5078
    %v5488 = vadd.s32 %v5484, 3
    %v5489 = vand.u32 %v5488, 3
    %vm5490 = vcmp.lt.s32.totalorder %v5489, 2
    %vm5491 = vcmp.eq.s32.totalorder %v5489, 0
    %v5492 = vxor.u32 %v5486, 2147483648
    %v5493 = vsel %vm5491, %v5485, %v5492
    %vm5494 = vcmp.eq.s32.totalorder %v5489, 2
    %v5495 = vxor.u32 %v5485, 2147483648
    %v5496 = vsel %vm5494, %v5495, %v5486
    %v5497 = vsel %vm5490, %v5493, %v5496
    %v5498 = vsel %vm5487, nan, %v5497
    %v5499 = vand.u32 2147483647, %v5079
    %vm5500 = vcmp.le.f32.partialorder %v5499, 0.7853982
    %vm5501 = vcmp.lt.s32.totalorder %v5079, 0
    %v5502 = vand.u32 %v5079, 2139095040
    %v5503 = vshrl.u32 %v5502, 23
    %v5504 = vsub.s32 %v5503, 127
    %v5505 = vand.u32 2147483647, %v5079
    %v5506 = vand.u32 %v5505, 8388607
    %v5507 = vor.u32 %v5506, 8388608
    %v5508 = vsub.s32 0, %v5507
    %v5509 = vadd.s32 %v5504, 1
    %vm5510 = vcmp.gt.s32.totalorder %v5509, 0
    %v5511 = vsel %vm5510, %v5509, 0
    %v5512 = vshrl.u32 %v5511, 5
    %v5513 = vand.u32 %v5511, 31
    %v5514 = vsub.s32 32, %v5513
    %v5515 = vshrl.u32 683565275, %v5514
    %v5516 = vshll.u32 683565275, %v5513
    %v5517 = vshrl.u32 2475754826, %v5514
    %v5518 = vor.u32 %v5516, %v5517
    %v5519 = vshll.u32 2475754826, %v5513
    %v5520 = vshrl.u32 2131351028, %v5514
    %v5521 = vor.u32 %v5519, %v5520
    %v5522 = vshll.u32 2131351028, %v5513
    %v5523 = vshrl.u32 2102212464, %v5514
    %v5524 = vor.u32 %v5522, %v5523
    %v5525 = vshll.u32 2102212464, %v5513
    %v5526 = vshrl.u32 920167782, %v5514
    %v5527 = vor.u32 %v5525, %v5526
    %v5528 = vshll.u32 920167782, %v5513
    %v5529 = vshrl.u32 1326507024, %v5514
    %v5530 = vor.u32 %v5528, %v5529
    %vm5531 = vcmp.lt.s32.totalorder %v5512, 1
    %vm5532 = vcmp.lt.s32.totalorder %v5512, 2
    %vm5533 = vcmp.lt.s32.totalorder %v5512, 3
    %vm5534 = vcmp.lt.s32.totalorder %v5512, 4
    %v5535 = vsel %vm5531, %v5515, %v5518
    %v5536 = vsel %vm5534, %v5524, 2102212464
    %v5537 = vsel %vm5533, %v5521, %v5536
    %v5538 = vsel %vm5532, %v5535, %v5537
    %v5539 = vsel %vm5531, %v5518, %v5521
    %v5540 = vsel %vm5534, %v5527, 920167782
    %v5541 = vsel %vm5533, %v5524, %v5540
    %v5542 = vsel %vm5532, %v5539, %v5541
    %v5543 = vsel %vm5531, %v5521, %v5524
    %v5544 = vsel %vm5534, %v5530, 1326507024
    %v5545 = vsel %vm5533, %v5527, %v5544
    %v5546 = vsel %vm5532, %v5543, %v5545
    %v5547 = vshll.u32 %v5507, 8
    %v5548 = vmul.u32.u64.compose %v5547, %v5546
    %v5549 = vextract.low.u32 %v5548
    %v5550 = vextract.high.u32 %v5548
    %v5551 = vmul.u32.u64.compose %v5547, %v5542
    %v5552 = vextract.low.u32 %v5551
    %v5553 = vextract.high.u32 %v5551
    %v5554 = vmul.u32 %v5547, %v5538
    %v5555 = vadd.s32 %v5550, %v5552
    %vm5556 = vc.u32 %v5550, %v5552
    %v5557 = vadd.s32 %v5553, 1
    %v5558 = vsel %vm5556, %v5557, %v5553
    %v5559 = vadd.s32 %v5554, %v5558
    %v5560 = vadd.s32 %v5559, 536870912
    %v5561 = vshrl.u32 %v5560, 30
    %v5562 = vshll.u32 %v5561, 30
    %v5563 = vsub.s32 %v5559, %v5562
    %vm5564 = vcmp.lt.s32.totalorder %v5563, 0
    %v5565 = vsub.s32 0, %v5563
    %v5566 = vsel %vm5564, %v5565, %v5563
    %v5567 = vclz %v5566
    %v5568 = vsub.s32 %v5567, 2
    %vm5569 = vcmp.gt.s32.totalorder 0, %v5568
    %v5570 = vsel %vm5569, 0, %v5568
    %v5571 = vsub.s32 32, %v5570
    %v5572 = vshll.u32 %v5563, %v5570
    %v5573 = vshrl.u32 %v5555, %v5571
    %v5574 = vor.u32 %v5572, %v5573
    %v5575 = vsub.s32 4294967266, %v5570
    %v5576 = vadd.s32 %v5575, 127
    %v5577 = vshll.u32 %v5576, 23
    %v5578 = vor.u32 4788187, %v5577
    %v5579 = vand.u32 2147483647, %v5578
    %v5581 = vcvt.s32.f32 %v5574
    %v5582 = vmul.f32 %v5581, %v5579
    %v5583 = vxor.u32 %v5582, 2147483648
    %v5584 = vsel %vm5501, %v5583, %v5582
    %v5585 = vsub.s32 4, %v5561
    %v5586 = vsel %vm5501, %v5585, %v5561
    %v5587 = vsel %vm5500, %v5079, %v5584
    %v5588 = vsel %vm5500, 0, %v5586
    %v5589 = vcosq.f32.pop %v5587
    %v5590 = vsinq.f32.pop %v5587
    %vm5591 = vweird.f32 %v5079
    %v5592 = vadd.s32 %v5588, 3
    %v5593 = vand.u32 %v5592, 3
    %vm5594 = vcmp.lt.s32.totalorder %v5593, 2
    %vm5595 = vcmp.eq.s32.totalorder %v5593, 0
    %v5596 = vxor.u32 %v5590, 2147483648
    %v5597 = vsel %vm5595, %v5589, %v5596
    %vm5598 = vcmp.eq.s32.totalorder %v5593, 2
    %v5599 = vxor.u32 %v5589, 2147483648
    %v5600 = vsel %vm5598, %v5599, %v5590
    %v5601 = vsel %vm5594, %v5597, %v5600
    %v5602 = vsel %vm5591, nan, %v5601
    %v5603 = vand.u32 2147483647, %v5080
    %vm5604 = vcmp.le.f32.partialorder %v5603, 0.7853982
    %vm5605 = vcmp.lt.s32.totalorder %v5080, 0
    %v5606 = vand.u32 %v5080, 2139095040
    %v5607 = vshrl.u32 %v5606, 23
    %v5608 = vsub.s32 %v5607, 127
    %v5609 = vand.u32 2147483647, %v5080
    %v5610 = vand.u32 %v5609, 8388607
    %v5611 = vor.u32 %v5610, 8388608
    %v5612 = vsub.s32 0, %v5611
    %v5613 = vadd.s32 %v5608, 1
    %vm5614 = vcmp.gt.s32.totalorder %v5613, 0
    %v5615 = vsel %vm5614, %v5613, 0
    %v5616 = vshrl.u32 %v5615, 5
    %v5617 = vand.u32 %v5615, 31
    %v5618 = vsub.s32 32, %v5617
    %v5619 = vshrl.u32 683565275, %v5618
    %v5620 = vshll.u32 683565275, %v5617
    %v5621 = vshrl.u32 2475754826, %v5618
    %v5622 = vor.u32 %v5620, %v5621
    %v5623 = vshll.u32 2475754826, %v5617
    %v5624 = vshrl.u32 2131351028, %v5618
    %v5625 = vor.u32 %v5623, %v5624
    %v5626 = vshll.u32 2131351028, %v5617
    %v5627 = vshrl.u32 2102212464, %v5618
    %v5628 = vor.u32 %v5626, %v5627
    %v5629 = vshll.u32 2102212464, %v5617
    %v5630 = vshrl.u32 920167782, %v5618
    %v5631 = vor.u32 %v5629, %v5630
    %v5632 = vshll.u32 920167782, %v5617
    %v5633 = vshrl.u32 1326507024, %v5618
    %v5634 = vor.u32 %v5632, %v5633
    %vm5635 = vcmp.lt.s32.totalorder %v5616, 1
    %vm5636 = vcmp.lt.s32.totalorder %v5616, 2
    %vm5637 = vcmp.lt.s32.totalorder %v5616, 3
    %vm5638 = vcmp.lt.s32.totalorder %v5616, 4
    %v5639 = vsel %vm5635, %v5619, %v5622
    %v5640 = vsel %vm5638, %v5628, 2102212464
    %v5641 = vsel %vm5637, %v5625, %v5640
    %v5642 = vsel %vm5636, %v5639, %v5641
    %v5643 = vsel %vm5635, %v5622, %v5625
    %v5644 = vsel %vm5638, %v5631, 920167782
    %v5645 = vsel %vm5637, %v5628, %v5644
    %v5646 = vsel %vm5636, %v5643, %v5645
    %v5647 = vsel %vm5635, %v5625, %v5628
    %v5648 = vsel %vm5638, %v5634, 1326507024
    %v5649 = vsel %vm5637, %v5631, %v5648
    %v5650 = vsel %vm5636, %v5647, %v5649
    %v5651 = vshll.u32 %v5611, 8
    %v5652 = vmul.u32.u64.compose %v5651, %v5650
    %v5653 = vextract.low.u32 %v5652
    %v5654 = vextract.high.u32 %v5652
    %v5655 = vmul.u32.u64.compose %v5651, %v5646
    %v5656 = vextract.low.u32 %v5655
    %v5657 = vextract.high.u32 %v5655
    %v5658 = vmul.u32 %v5651, %v5642
    %v5659 = vadd.s32 %v5654, %v5656
    %vm5660 = vc.u32 %v5654, %v5656
    %v5661 = vadd.s32 %v5657, 1
    %v5662 = vsel %vm5660, %v5661, %v5657
    %v5663 = vadd.s32 %v5658, %v5662
    %v5664 = vadd.s32 %v5663, 536870912
    %v5665 = vshrl.u32 %v5664, 30
    %v5666 = vshll.u32 %v5665, 30
    %v5667 = vsub.s32 %v5663, %v5666
    %vm5668 = vcmp.lt.s32.totalorder %v5667, 0
    %v5669 = vsub.s32 0, %v5667
    %v5670 = vsel %vm5668, %v5669, %v5667
    %v5671 = vclz %v5670
    %v5672 = vsub.s32 %v5671, 2
    %vm5673 = vcmp.gt.s32.totalorder 0, %v5672
    %v5674 = vsel %vm5673, 0, %v5672
    %v5675 = vsub.s32 32, %v5674
    %v5676 = vshll.u32 %v5667, %v5674
    %v5677 = vshrl.u32 %v5659, %v5675
    %v5678 = vor.u32 %v5676, %v5677
    %v5679 = vsub.s32 4294967266, %v5674
    %v5680 = vadd.s32 %v5679, 127
    %v5681 = vshll.u32 %v5680, 23
    %v5682 = vor.u32 4788187, %v5681
    %v5683 = vand.u32 2147483647, %v5682
    %v5685 = vcvt.s32.f32 %v5678
    %v5686 = vmul.f32 %v5685, %v5683
    %v5687 = vxor.u32 %v5686, 2147483648
    %v5688 = vsel %vm5605, %v5687, %v5686
    %v5689 = vsub.s32 4, %v5665
    %v5690 = vsel %vm5605, %v5689, %v5665
    %v5691 = vsel %vm5604, %v5080, %v5688
    %v5692 = vsel %vm5604, 0, %v5690
    %v5693 = vcosq.f32.pop %v5691
    %v5694 = vsinq.f32.pop %v5691
    %vm5695 = vweird.f32 %v5080
    %v5696 = vadd.s32 %v5692, 3
    %v5697 = vand.u32 %v5696, 3
    %vm5698 = vcmp.lt.s32.totalorder %v5697, 2
    %vm5699 = vcmp.eq.s32.totalorder %v5697, 0
    %v5700 = vxor.u32 %v5694, 2147483648
    %v5701 = vsel %vm5699, %v5693, %v5700
    %vm5702 = vcmp.eq.s32.totalorder %v5697, 2
    %v5703 = vxor.u32 %v5693, 2147483648
    %v5704 = vsel %vm5702, %v5703, %v5694
    %v5705 = vsel %vm5698, %v5701, %v5704
    %v5706 = vsel %vm5695, nan, %v5705
    %v5707 = vand.u32 2147483647, %v5081
    %vm5708 = vcmp.le.f32.partialorder %v5707, 0.7853982
    %vm5709 = vcmp.lt.s32.totalorder %v5081, 0
    %v5710 = vand.u32 %v5081, 2139095040
    %v5711 = vshrl.u32 %v5710, 23
    %v5712 = vsub.s32 %v5711, 127
    %v5713 = vand.u32 2147483647, %v5081
    %v5714 = vand.u32 %v5713, 8388607
    %v5715 = vor.u32 %v5714, 8388608
    %v5716 = vsub.s32 0, %v5715
    %v5717 = vadd.s32 %v5712, 1
    %vm5718 = vcmp.gt.s32.totalorder %v5717, 0
    %v5719 = vsel %vm5718, %v5717, 0
    %v5720 = vshrl.u32 %v5719, 5
    %v5721 = vand.u32 %v5719, 31
    %v5722 = vsub.s32 32, %v5721
    %v5723 = vshrl.u32 683565275, %v5722
    %v5724 = vshll.u32 683565275, %v5721
    %v5725 = vshrl.u32 2475754826, %v5722
    %v5726 = vor.u32 %v5724, %v5725
    %v5727 = vshll.u32 2475754826, %v5721
    %v5728 = vshrl.u32 2131351028, %v5722
    %v5729 = vor.u32 %v5727, %v5728
    %v5730 = vshll.u32 2131351028, %v5721
    %v5731 = vshrl.u32 2102212464, %v5722
    %v5732 = vor.u32 %v5730, %v5731
    %v5733 = vshll.u32 2102212464, %v5721
    %v5734 = vshrl.u32 920167782, %v5722
    %v5735 = vor.u32 %v5733, %v5734
    %v5736 = vshll.u32 920167782, %v5721
    %v5737 = vshrl.u32 1326507024, %v5722
    %v5738 = vor.u32 %v5736, %v5737
    %vm5739 = vcmp.lt.s32.totalorder %v5720, 1
    %vm5740 = vcmp.lt.s32.totalorder %v5720, 2
    %vm5741 = vcmp.lt.s32.totalorder %v5720, 3
    %vm5742 = vcmp.lt.s32.totalorder %v5720, 4
    %v5743 = vsel %vm5739, %v5723, %v5726
    %v5744 = vsel %vm5742, %v5732, 2102212464
    %v5745 = vsel %vm5741, %v5729, %v5744
    %v5746 = vsel %vm5740, %v5743, %v5745
    %v5747 = vsel %vm5739, %v5726, %v5729
    %v5748 = vsel %vm5742, %v5735, 920167782
    %v5749 = vsel %vm5741, %v5732, %v5748
    %v5750 = vsel %vm5740, %v5747, %v5749
    %v5751 = vsel %vm5739, %v5729, %v5732
    %v5752 = vsel %vm5742, %v5738, 1326507024
    %v5753 = vsel %vm5741, %v5735, %v5752
    %v5754 = vsel %vm5740, %v5751, %v5753
    %v5755 = vshll.u32 %v5715, 8
    %v5756 = vmul.u32.u64.compose %v5755, %v5754
    %v5757 = vextract.low.u32 %v5756
    %v5758 = vextract.high.u32 %v5756
    %v5759 = vmul.u32.u64.compose %v5755, %v5750
    %v5760 = vextract.low.u32 %v5759
    %v5761 = vextract.high.u32 %v5759
    %v5762 = vmul.u32 %v5755, %v5746
    %v5763 = vadd.s32 %v5758, %v5760
    %vm5764 = vc.u32 %v5758, %v5760
    %v5765 = vadd.s32 %v5761, 1
    %v5766 = vsel %vm5764, %v5765, %v5761
    %v5767 = vadd.s32 %v5762, %v5766
    %v5768 = vadd.s32 %v5767, 536870912
    %v5769 = vshrl.u32 %v5768, 30
    %v5770 = vshll.u32 %v5769, 30
    %v5771 = vsub.s32 %v5767, %v5770
    %vm5772 = vcmp.lt.s32.totalorder %v5771, 0
    %v5773 = vsub.s32 0, %v5771
    %v5774 = vsel %vm5772, %v5773, %v5771
    %v5775 = vclz %v5774
    %v5776 = vsub.s32 %v5775, 2
    %vm5777 = vcmp.gt.s32.totalorder 0, %v5776
    %v5778 = vsel %vm5777, 0, %v5776
    %v5779 = vsub.s32 32, %v5778
    %v5780 = vshll.u32 %v5771, %v5778
    %v5781 = vshrl.u32 %v5763, %v5779
    %v5782 = vor.u32 %v5780, %v5781
    %v5783 = vsub.s32 4294967266, %v5778
    %v5784 = vadd.s32 %v5783, 127
    %v5785 = vshll.u32 %v5784, 23
    %v5786 = vor.u32 4788187, %v5785
    %v5787 = vand.u32 2147483647, %v5786
    %v5789 = vcvt.s32.f32 %v5782
    %v5790 = vmul.f32 %v5789, %v5787
    %v5791 = vxor.u32 %v5790, 2147483648
    %v5792 = vsel %vm5709, %v5791, %v5790
    %v5793 = vsub.s32 4, %v5769
    %v5794 = vsel %vm5709, %v5793, %v5769
    %v5795 = vsel %vm5708, %v5081, %v5792
    %v5796 = vsel %vm5708, 0, %v5794
    %v5797 = vcosq.f32.pop %v5795
    %v5798 = vsinq.f32.pop %v5795
    %vm5799 = vweird.f32 %v5081
    %v5800 = vadd.s32 %v5796, 3
    %v5801 = vand.u32 %v5800, 3
    %vm5802 = vcmp.lt.s32.totalorder %v5801, 2
    %vm5803 = vcmp.eq.s32.totalorder %v5801, 0
    %v5804 = vxor.u32 %v5798, 2147483648
    %v5805 = vsel %vm5803, %v5797, %v5804
    %vm5806 = vcmp.eq.s32.totalorder %v5801, 2
    %v5807 = vxor.u32 %v5797, 2147483648
    %v5808 = vsel %vm5806, %v5807, %v5798
    %v5809 = vsel %vm5802, %v5805, %v5808
    %v5810 = vsel %vm5799, nan, %v5809
    %v5811 = vand.u32 2147483647, %v5082
    %vm5812 = vcmp.le.f32.partialorder %v5811, 0.7853982
    %vm5813 = vcmp.lt.s32.totalorder %v5082, 0
    %v5814 = vand.u32 %v5082, 2139095040
    %v5815 = vshrl.u32 %v5814, 23
    %v5816 = vsub.s32 %v5815, 127
    %v5817 = vand.u32 2147483647, %v5082
    %v5818 = vand.u32 %v5817, 8388607
    %v5819 = vor.u32 %v5818, 8388608
    %v5820 = vsub.s32 0, %v5819
    %v5821 = vadd.s32 %v5816, 1
    %vm5822 = vcmp.gt.s32.totalorder %v5821, 0
    %v5823 = vsel %vm5822, %v5821, 0
    %v5824 = vshrl.u32 %v5823, 5
    %v5825 = vand.u32 %v5823, 31
    %v5826 = vsub.s32 32, %v5825
    %v5827 = vshrl.u32 683565275, %v5826
    %v5828 = vshll.u32 683565275, %v5825
    %v5829 = vshrl.u32 2475754826, %v5826
    %v5830 = vor.u32 %v5828, %v5829
    %v5831 = vshll.u32 2475754826, %v5825
    %v5832 = vshrl.u32 2131351028, %v5826
    %v5833 = vor.u32 %v5831, %v5832
    %v5834 = vshll.u32 2131351028, %v5825
    %v5835 = vshrl.u32 2102212464, %v5826
    %v5836 = vor.u32 %v5834, %v5835
    %v5837 = vshll.u32 2102212464, %v5825
    %v5838 = vshrl.u32 920167782, %v5826
    %v5839 = vor.u32 %v5837, %v5838
    %v5840 = vshll.u32 920167782, %v5825
    %v5841 = vshrl.u32 1326507024, %v5826
    %v5842 = vor.u32 %v5840, %v5841
    %vm5843 = vcmp.lt.s32.totalorder %v5824, 1
    %vm5844 = vcmp.lt.s32.totalorder %v5824, 2
    %vm5845 = vcmp.lt.s32.totalorder %v5824, 3
    %vm5846 = vcmp.lt.s32.totalorder %v5824, 4
    %v5847 = vsel %vm5843, %v5827, %v5830
    %v5848 = vsel %vm5846, %v5836, 2102212464
    %v5849 = vsel %vm5845, %v5833, %v5848
    %v5850 = vsel %vm5844, %v5847, %v5849
    %v5851 = vsel %vm5843, %v5830, %v5833
    %v5852 = vsel %vm5846, %v5839, 920167782
    %v5853 = vsel %vm5845, %v5836, %v5852
    %v5854 = vsel %vm5844, %v5851, %v5853
    %v5855 = vsel %vm5843, %v5833, %v5836
    %v5856 = vsel %vm5846, %v5842, 1326507024
    %v5857 = vsel %vm5845, %v5839, %v5856
    %v5858 = vsel %vm5844, %v5855, %v5857
    %v5859 = vshll.u32 %v5819, 8
    %v5860 = vmul.u32.u64.compose %v5859, %v5858
    %v5861 = vextract.low.u32 %v5860
    %v5862 = vextract.high.u32 %v5860
    %v5863 = vmul.u32.u64.compose %v5859, %v5854
    %v5864 = vextract.low.u32 %v5863
    %v5865 = vextract.high.u32 %v5863
    %v5866 = vmul.u32 %v5859, %v5850
    %v5867 = vadd.s32 %v5862, %v5864
    %vm5868 = vc.u32 %v5862, %v5864
    %v5869 = vadd.s32 %v5865, 1
    %v5870 = vsel %vm5868, %v5869, %v5865
    %v5871 = vadd.s32 %v5866, %v5870
    %v5872 = vadd.s32 %v5871, 536870912
    %v5873 = vshrl.u32 %v5872, 30
    %v5874 = vshll.u32 %v5873, 30
    %v5875 = vsub.s32 %v5871, %v5874
    %vm5876 = vcmp.lt.s32.totalorder %v5875, 0
    %v5877 = vsub.s32 0, %v5875
    %v5878 = vsel %vm5876, %v5877, %v5875
    %v5879 = vclz %v5878
    %v5880 = vsub.s32 %v5879, 2
    %vm5881 = vcmp.gt.s32.totalorder 0, %v5880
    %v5882 = vsel %vm5881, 0, %v5880
    %v5883 = vsub.s32 32, %v5882
    %v5884 = vshll.u32 %v5875, %v5882
    %v5885 = vshrl.u32 %v5867, %v5883
    %v5886 = vor.u32 %v5884, %v5885
    %v5887 = vsub.s32 4294967266, %v5882
    %v5888 = vadd.s32 %v5887, 127
    %v5889 = vshll.u32 %v5888, 23
    %v5890 = vor.u32 4788187, %v5889
    %v5891 = vand.u32 2147483647, %v5890
    %v5893 = vcvt.s32.f32 %v5886
    %v5894 = vmul.f32 %v5893, %v5891
    %v5895 = vxor.u32 %v5894, 2147483648
    %v5896 = vsel %vm5813, %v5895, %v5894
    %v5897 = vsub.s32 4, %v5873
    %v5898 = vsel %vm5813, %v5897, %v5873
    %v5899 = vsel %vm5812, %v5082, %v5896
    %v5900 = vsel %vm5812, 0, %v5898
    %v5901 = vcosq.f32.pop %v5899
    %v5902 = vsinq.f32.pop %v5899
    %vm5903 = vweird.f32 %v5082
    %v5904 = vadd.s32 %v5900, 3
    %v5905 = vand.u32 %v5904, 3
    %vm5906 = vcmp.lt.s32.totalorder %v5905, 2
    %vm5907 = vcmp.eq.s32.totalorder %v5905, 0
    %v5908 = vxor.u32 %v5902, 2147483648
    %v5909 = vsel %vm5907, %v5901, %v5908
    %vm5910 = vcmp.eq.s32.totalorder %v5905, 2
    %v5911 = vxor.u32 %v5901, 2147483648
    %v5912 = vsel %vm5910, %v5911, %v5902
    %v5913 = vsel %vm5906, %v5909, %v5912
    %v5914 = vsel %vm5903, nan, %v5913
    %s5915 = scalar_lea.vmem [#allocation5], 448
    %5916 = vst [vmem:[%s5915] sm:$0xff] %v5186
    %5917 = vst [vmem:[%s5915 + $0x8] sm:$0xff] %v5290
    %5918 = vst [vmem:[%s5915 + $0x10] sm:$0xff] %v5394
    %5919 = vst [vmem:[%s5915 + $0x18] sm:$0xff] %v5498
    %5920 = vst [vmem:[%s5915 + $0x20] sm:$0xff] %v5602
    %5921 = vst [vmem:[%s5915 + $0x28] sm:$0xff] %v5706
    %5922 = vst [vmem:[%s5915 + $0x30] sm:$0xff] %v5810
    %5923 = vst [vmem:[%s5915 + $0x38] sm:$0xff] %v5914
    %v5924 = vand.u32 2147483647, %v5075
    %vm5925 = vcmp.le.f32.partialorder %v5924, 0.7853982
    %vm5926 = vcmp.lt.s32.totalorder %v5075, 0
    %v5927 = vand.u32 %v5075, 2139095040
    %v5928 = vshrl.u32 %v5927, 23
    %v5929 = vsub.s32 %v5928, 127
    %v5930 = vand.u32 2147483647, %v5075
    %v5931 = vand.u32 %v5930, 8388607
    %v5932 = vor.u32 %v5931, 8388608
    %v5933 = vsub.s32 0, %v5932
    %v5934 = vadd.s32 %v5929, 1
    %vm5935 = vcmp.gt.s32.totalorder %v5934, 0
    %v5936 = vsel %vm5935, %v5934, 0
    %v5937 = vshrl.u32 %v5936, 5
    %v5938 = vand.u32 %v5936, 31
    %v5939 = vsub.s32 32, %v5938
    %v5940 = vshrl.u32 683565275, %v5939
    %v5941 = vshll.u32 683565275, %v5938
    %v5942 = vshrl.u32 2475754826, %v5939
    %v5943 = vor.u32 %v5941, %v5942
    %v5944 = vshll.u32 2475754826, %v5938
    %v5945 = vshrl.u32 2131351028, %v5939
    %v5946 = vor.u32 %v5944, %v5945
    %v5947 = vshll.u32 2131351028, %v5938
    %v5948 = vshrl.u32 2102212464, %v5939
    %v5949 = vor.u32 %v5947, %v5948
    %v5950 = vshll.u32 2102212464, %v5938
    %v5951 = vshrl.u32 920167782, %v5939
    %v5952 = vor.u32 %v5950, %v5951
    %v5953 = vshll.u32 920167782, %v5938
    %v5954 = vshrl.u32 1326507024, %v5939
    %v5955 = vor.u32 %v5953, %v5954
    %vm5956 = vcmp.lt.s32.totalorder %v5937, 1
    %vm5957 = vcmp.lt.s32.totalorder %v5937, 2
    %vm5958 = vcmp.lt.s32.totalorder %v5937, 3
    %vm5959 = vcmp.lt.s32.totalorder %v5937, 4
    %v5960 = vsel %vm5956, %v5940, %v5943
    %v5961 = vsel %vm5959, %v5949, 2102212464
    %v5962 = vsel %vm5958, %v5946, %v5961
    %v5963 = vsel %vm5957, %v5960, %v5962
    %v5964 = vsel %vm5956, %v5943, %v5946
    %v5965 = vsel %vm5959, %v5952, 920167782
    %v5966 = vsel %vm5958, %v5949, %v5965
    %v5967 = vsel %vm5957, %v5964, %v5966
    %v5968 = vsel %vm5956, %v5946, %v5949
    %v5969 = vsel %vm5959, %v5955, 1326507024
    %v5970 = vsel %vm5958, %v5952, %v5969
    %v5971 = vsel %vm5957, %v5968, %v5970
    %v5972 = vshll.u32 %v5932, 8
    %v5973 = vmul.u32.u64.compose %v5972, %v5971
    %v5974 = vextract.low.u32 %v5973
    %v5975 = vextract.high.u32 %v5973
    %v5976 = vmul.u32.u64.compose %v5972, %v5967
    %v5977 = vextract.low.u32 %v5976
    %v5978 = vextract.high.u32 %v5976
    %v5979 = vmul.u32 %v5972, %v5963
    %v5980 = vadd.s32 %v5975, %v5977
    %vm5981 = vc.u32 %v5975, %v5977
    %v5982 = vadd.s32 %v5978, 1
    %v5983 = vsel %vm5981, %v5982, %v5978
    %v5984 = vadd.s32 %v5979, %v5983
    %v5985 = vadd.s32 %v5984, 536870912
    %v5986 = vshrl.u32 %v5985, 30
    %v5987 = vshll.u32 %v5986, 30
    %v5988 = vsub.s32 %v5984, %v5987
    %vm5989 = vcmp.lt.s32.totalorder %v5988, 0
    %v5990 = vsub.s32 0, %v5988
    %v5991 = vsel %vm5989, %v5990, %v5988
    %v5992 = vclz %v5991
    %v5993 = vsub.s32 %v5992, 2
    %vm5994 = vcmp.gt.s32.totalorder 0, %v5993
    %v5995 = vsel %vm5994, 0, %v5993
    %v5996 = vsub.s32 32, %v5995
    %v5997 = vshll.u32 %v5988, %v5995
    %v5998 = vshrl.u32 %v5980, %v5996
    %v5999 = vor.u32 %v5997, %v5998
    %v6000 = vsub.s32 4294967266, %v5995
    %v6001 = vadd.s32 %v6000, 127
    %v6002 = vshll.u32 %v6001, 23
    %v6003 = vor.u32 4788187, %v6002
    %v6004 = vand.u32 2147483647, %v6003
    %v6006 = vcvt.s32.f32 %v5999
    %v6007 = vmul.f32 %v6006, %v6004
    %v6008 = vxor.u32 %v6007, 2147483648
    %v6009 = vsel %vm5926, %v6008, %v6007
    %v6010 = vsub.s32 4, %v5986
    %v6011 = vsel %vm5926, %v6010, %v5986
    %v6012 = vsel %vm5925, %v5075, %v6009
    %v6013 = vsel %vm5925, 0, %v6011
    %v6014 = vcosq.f32.pop %v6012
    %v6015 = vsinq.f32.pop %v6012
    %vm6016 = vweird.f32 %v5075
    %v6017 = vand.u32 %v6013, 3
    %vm6018 = vcmp.lt.s32.totalorder %v6017, 2
    %vm6019 = vcmp.eq.s32.totalorder %v6017, 0
    %v6020 = vxor.u32 %v6015, 2147483648
    %v6021 = vsel %vm6019, %v6014, %v6020
    %vm6022 = vcmp.eq.s32.totalorder %v6017, 2
    %v6023 = vxor.u32 %v6014, 2147483648
    %v6024 = vsel %vm6022, %v6023, %v6015
    %v6025 = vsel %vm6018, %v6021, %v6024
    %v6026 = vsel %vm6016, nan, %v6025
    %v6027 = vand.u32 2147483647, %v5076
    %vm6028 = vcmp.le.f32.partialorder %v6027, 0.7853982
    %vm6029 = vcmp.lt.s32.totalorder %v5076, 0
    %v6030 = vand.u32 %v5076, 2139095040
    %v6031 = vshrl.u32 %v6030, 23
    %v6032 = vsub.s32 %v6031, 127
    %v6033 = vand.u32 2147483647, %v5076
    %v6034 = vand.u32 %v6033, 8388607
    %v6035 = vor.u32 %v6034, 8388608
    %v6036 = vsub.s32 0, %v6035
    %v6037 = vadd.s32 %v6032, 1
    %vm6038 = vcmp.gt.s32.totalorder %v6037, 0
    %v6039 = vsel %vm6038, %v6037, 0
    %v6040 = vshrl.u32 %v6039, 5
    %v6041 = vand.u32 %v6039, 31
    %v6042 = vsub.s32 32, %v6041
    %v6043 = vshrl.u32 683565275, %v6042
    %v6044 = vshll.u32 683565275, %v6041
    %v6045 = vshrl.u32 2475754826, %v6042
    %v6046 = vor.u32 %v6044, %v6045
    %v6047 = vshll.u32 2475754826, %v6041
    %v6048 = vshrl.u32 2131351028, %v6042
    %v6049 = vor.u32 %v6047, %v6048
    %v6050 = vshll.u32 2131351028, %v6041
    %v6051 = vshrl.u32 2102212464, %v6042
    %v6052 = vor.u32 %v6050, %v6051
    %v6053 = vshll.u32 2102212464, %v6041
    %v6054 = vshrl.u32 920167782, %v6042
    %v6055 = vor.u32 %v6053, %v6054
    %v6056 = vshll.u32 920167782, %v6041
    %v6057 = vshrl.u32 1326507024, %v6042
    %v6058 = vor.u32 %v6056, %v6057
    %vm6059 = vcmp.lt.s32.totalorder %v6040, 1
    %vm6060 = vcmp.lt.s32.totalorder %v6040, 2
    %vm6061 = vcmp.lt.s32.totalorder %v6040, 3
    %vm6062 = vcmp.lt.s32.totalorder %v6040, 4
    %v6063 = vsel %vm6059, %v6043, %v6046
    %v6064 = vsel %vm6062, %v6052, 2102212464
    %v6065 = vsel %vm6061, %v6049, %v6064
    %v6066 = vsel %vm6060, %v6063, %v6065
    %v6067 = vsel %vm6059, %v6046, %v6049
    %v6068 = vsel %vm6062, %v6055, 920167782
    %v6069 = vsel %vm6061, %v6052, %v6068
    %v6070 = vsel %vm6060, %v6067, %v6069
    %v6071 = vsel %vm6059, %v6049, %v6052
    %v6072 = vsel %vm6062, %v6058, 1326507024
    %v6073 = vsel %vm6061, %v6055, %v6072
    %v6074 = vsel %vm6060, %v6071, %v6073
    %v6075 = vshll.u32 %v6035, 8
    %v6076 = vmul.u32.u64.compose %v6075, %v6074
    %v6077 = vextract.low.u32 %v6076
    %v6078 = vextract.high.u32 %v6076
    %v6079 = vmul.u32.u64.compose %v6075, %v6070
    %v6080 = vextract.low.u32 %v6079
    %v6081 = vextract.high.u32 %v6079
    %v6082 = vmul.u32 %v6075, %v6066
    %v6083 = vadd.s32 %v6078, %v6080
    %vm6084 = vc.u32 %v6078, %v6080
    %v6085 = vadd.s32 %v6081, 1
    %v6086 = vsel %vm6084, %v6085, %v6081
    %v6087 = vadd.s32 %v6082, %v6086
    %v6088 = vadd.s32 %v6087, 536870912
    %v6089 = vshrl.u32 %v6088, 30
    %v6090 = vshll.u32 %v6089, 30
    %v6091 = vsub.s32 %v6087, %v6090
    %vm6092 = vcmp.lt.s32.totalorder %v6091, 0
    %v6093 = vsub.s32 0, %v6091
    %v6094 = vsel %vm6092, %v6093, %v6091
    %v6095 = vclz %v6094
    %v6096 = vsub.s32 %v6095, 2
    %vm6097 = vcmp.gt.s32.totalorder 0, %v6096
    %v6098 = vsel %vm6097, 0, %v6096
    %v6099 = vsub.s32 32, %v6098
    %v6100 = vshll.u32 %v6091, %v6098
    %v6101 = vshrl.u32 %v6083, %v6099
    %v6102 = vor.u32 %v6100, %v6101
    %v6103 = vsub.s32 4294967266, %v6098
    %v6104 = vadd.s32 %v6103, 127
    %v6105 = vshll.u32 %v6104, 23
    %v6106 = vor.u32 4788187, %v6105
    %v6107 = vand.u32 2147483647, %v6106
    %v6109 = vcvt.s32.f32 %v6102
    %v6110 = vmul.f32 %v6109, %v6107
    %v6111 = vxor.u32 %v6110, 2147483648
    %v6112 = vsel %vm6029, %v6111, %v6110
    %v6113 = vsub.s32 4, %v6089
    %v6114 = vsel %vm6029, %v6113, %v6089
    %v6115 = vsel %vm6028, %v5076, %v6112
    %v6116 = vsel %vm6028, 0, %v6114
    %v6117 = vcosq.f32.pop %v6115
    %v6118 = vsinq.f32.pop %v6115
    %vm6119 = vweird.f32 %v5076
    %v6120 = vand.u32 %v6116, 3
    %vm6121 = vcmp.lt.s32.totalorder %v6120, 2
    %vm6122 = vcmp.eq.s32.totalorder %v6120, 0
    %v6123 = vxor.u32 %v6118, 2147483648
    %v6124 = vsel %vm6122, %v6117, %v6123
    %vm6125 = vcmp.eq.s32.totalorder %v6120, 2
    %v6126 = vxor.u32 %v6117, 2147483648
    %v6127 = vsel %vm6125, %v6126, %v6118
    %v6128 = vsel %vm6121, %v6124, %v6127
    %v6129 = vsel %vm6119, nan, %v6128
    %v6130 = vand.u32 2147483647, %v5077
    %vm6131 = vcmp.le.f32.partialorder %v6130, 0.7853982
    %vm6132 = vcmp.lt.s32.totalorder %v5077, 0
    %v6133 = vand.u32 %v5077, 2139095040
    %v6134 = vshrl.u32 %v6133, 23
    %v6135 = vsub.s32 %v6134, 127
    %v6136 = vand.u32 2147483647, %v5077
    %v6137 = vand.u32 %v6136, 8388607
    %v6138 = vor.u32 %v6137, 8388608
    %v6139 = vsub.s32 0, %v6138
    %v6140 = vadd.s32 %v6135, 1
    %vm6141 = vcmp.gt.s32.totalorder %v6140, 0
    %v6142 = vsel %vm6141, %v6140, 0
    %v6143 = vshrl.u32 %v6142, 5
    %v6144 = vand.u32 %v6142, 31
    %v6145 = vsub.s32 32, %v6144
    %v6146 = vshrl.u32 683565275, %v6145
    %v6147 = vshll.u32 683565275, %v6144
    %v6148 = vshrl.u32 2475754826, %v6145
    %v6149 = vor.u32 %v6147, %v6148
    %v6150 = vshll.u32 2475754826, %v6144
    %v6151 = vshrl.u32 2131351028, %v6145
    %v6152 = vor.u32 %v6150, %v6151
    %v6153 = vshll.u32 2131351028, %v6144
    %v6154 = vshrl.u32 2102212464, %v6145
    %v6155 = vor.u32 %v6153, %v6154
    %v6156 = vshll.u32 2102212464, %v6144
    %v6157 = vshrl.u32 920167782, %v6145
    %v6158 = vor.u32 %v6156, %v6157
    %v6159 = vshll.u32 920167782, %v6144
    %v6160 = vshrl.u32 1326507024, %v6145
    %v6161 = vor.u32 %v6159, %v6160
    %vm6162 = vcmp.lt.s32.totalorder %v6143, 1
    %vm6163 = vcmp.lt.s32.totalorder %v6143, 2
    %vm6164 = vcmp.lt.s32.totalorder %v6143, 3
    %vm6165 = vcmp.lt.s32.totalorder %v6143, 4
    %v6166 = vsel %vm6162, %v6146, %v6149
    %v6167 = vsel %vm6165, %v6155, 2102212464
    %v6168 = vsel %vm6164, %v6152, %v6167
    %v6169 = vsel %vm6163, %v6166, %v6168
    %v6170 = vsel %vm6162, %v6149, %v6152
    %v6171 = vsel %vm6165, %v6158, 920167782
    %v6172 = vsel %vm6164, %v6155, %v6171
    %v6173 = vsel %vm6163, %v6170, %v6172
    %v6174 = vsel %vm6162, %v6152, %v6155
    %v6175 = vsel %vm6165, %v6161, 1326507024
    %v6176 = vsel %vm6164, %v6158, %v6175
    %v6177 = vsel %vm6163, %v6174, %v6176
    %v6178 = vshll.u32 %v6138, 8
    %v6179 = vmul.u32.u64.compose %v6178, %v6177
    %v6180 = vextract.low.u32 %v6179
    %v6181 = vextract.high.u32 %v6179
    %v6182 = vmul.u32.u64.compose %v6178, %v6173
    %v6183 = vextract.low.u32 %v6182
    %v6184 = vextract.high.u32 %v6182
    %v6185 = vmul.u32 %v6178, %v6169
    %v6186 = vadd.s32 %v6181, %v6183
    %vm6187 = vc.u32 %v6181, %v6183
    %v6188 = vadd.s32 %v6184, 1
    %v6189 = vsel %vm6187, %v6188, %v6184
    %v6190 = vadd.s32 %v6185, %v6189
    %v6191 = vadd.s32 %v6190, 536870912
    %v6192 = vshrl.u32 %v6191, 30
    %v6193 = vshll.u32 %v6192, 30
    %v6194 = vsub.s32 %v6190, %v6193
    %vm6195 = vcmp.lt.s32.totalorder %v6194, 0
    %v6196 = vsub.s32 0, %v6194
    %v6197 = vsel %vm6195, %v6196, %v6194
    %v6198 = vclz %v6197
    %v6199 = vsub.s32 %v6198, 2
    %vm6200 = vcmp.gt.s32.totalorder 0, %v6199
    %v6201 = vsel %vm6200, 0, %v6199
    %v6202 = vsub.s32 32, %v6201
    %v6203 = vshll.u32 %v6194, %v6201
    %v6204 = vshrl.u32 %v6186, %v6202
    %v6205 = vor.u32 %v6203, %v6204
    %v6206 = vsub.s32 4294967266, %v6201
    %v6207 = vadd.s32 %v6206, 127
    %v6208 = vshll.u32 %v6207, 23
    %v6209 = vor.u32 4788187, %v6208
    %v6210 = vand.u32 2147483647, %v6209
    %v6212 = vcvt.s32.f32 %v6205
    %v6213 = vmul.f32 %v6212, %v6210
    %v6214 = vxor.u32 %v6213, 2147483648
    %v6215 = vsel %vm6132, %v6214, %v6213
    %v6216 = vsub.s32 4, %v6192
    %v6217 = vsel %vm6132, %v6216, %v6192
    %v6218 = vsel %vm6131, %v5077, %v6215
    %v6219 = vsel %vm6131, 0, %v6217
    %v6220 = vcosq.f32.pop %v6218
    %v6221 = vsinq.f32.pop %v6218
    %vm6222 = vweird.f32 %v5077
    %v6223 = vand.u32 %v6219, 3
    %vm6224 = vcmp.lt.s32.totalorder %v6223, 2
    %vm6225 = vcmp.eq.s32.totalorder %v6223, 0
    %v6226 = vxor.u32 %v6221, 2147483648
    %v6227 = vsel %vm6225, %v6220, %v6226
    %vm6228 = vcmp.eq.s32.totalorder %v6223, 2
    %v6229 = vxor.u32 %v6220, 2147483648
    %v6230 = vsel %vm6228, %v6229, %v6221
    %v6231 = vsel %vm6224, %v6227, %v6230
    %v6232 = vsel %vm6222, nan, %v6231
    %v6233 = vand.u32 2147483647, %v5078
    %vm6234 = vcmp.le.f32.partialorder %v6233, 0.7853982
    %vm6235 = vcmp.lt.s32.totalorder %v5078, 0
    %v6236 = vand.u32 %v5078, 2139095040
    %v6237 = vshrl.u32 %v6236, 23
    %v6238 = vsub.s32 %v6237, 127
    %v6239 = vand.u32 2147483647, %v5078
    %v6240 = vand.u32 %v6239, 8388607
    %v6241 = vor.u32 %v6240, 8388608
    %v6242 = vsub.s32 0, %v6241
    %v6243 = vadd.s32 %v6238, 1
    %vm6244 = vcmp.gt.s32.totalorder %v6243, 0
    %v6245 = vsel %vm6244, %v6243, 0
    %v6246 = vshrl.u32 %v6245, 5
    %v6247 = vand.u32 %v6245, 31
    %v6248 = vsub.s32 32, %v6247
    %v6249 = vshrl.u32 683565275, %v6248
    %v6250 = vshll.u32 683565275, %v6247
    %v6251 = vshrl.u32 2475754826, %v6248
    %v6252 = vor.u32 %v6250, %v6251
    %v6253 = vshll.u32 2475754826, %v6247
    %v6254 = vshrl.u32 2131351028, %v6248
    %v6255 = vor.u32 %v6253, %v6254
    %v6256 = vshll.u32 2131351028, %v6247
    %v6257 = vshrl.u32 2102212464, %v6248
    %v6258 = vor.u32 %v6256, %v6257
    %v6259 = vshll.u32 2102212464, %v6247
    %v6260 = vshrl.u32 920167782, %v6248
    %v6261 = vor.u32 %v6259, %v6260
    %v6262 = vshll.u32 920167782, %v6247
    %v6263 = vshrl.u32 1326507024, %v6248
    %v6264 = vor.u32 %v6262, %v6263
    %vm6265 = vcmp.lt.s32.totalorder %v6246, 1
    %vm6266 = vcmp.lt.s32.totalorder %v6246, 2
    %vm6267 = vcmp.lt.s32.totalorder %v6246, 3
    %vm6268 = vcmp.lt.s32.totalorder %v6246, 4
    %v6269 = vsel %vm6265, %v6249, %v6252
    %v6270 = vsel %vm6268, %v6258, 2102212464
    %v6271 = vsel %vm6267, %v6255, %v6270
    %v6272 = vsel %vm6266, %v6269, %v6271
    %v6273 = vsel %vm6265, %v6252, %v6255
    %v6274 = vsel %vm6268, %v6261, 920167782
    %v6275 = vsel %vm6267, %v6258, %v6274
    %v6276 = vsel %vm6266, %v6273, %v6275
    %v6277 = vsel %vm6265, %v6255, %v6258
    %v6278 = vsel %vm6268, %v6264, 1326507024
    %v6279 = vsel %vm6267, %v6261, %v6278
    %v6280 = vsel %vm6266, %v6277, %v6279
    %v6281 = vshll.u32 %v6241, 8
    %v6282 = vmul.u32.u64.compose %v6281, %v6280
    %v6283 = vextract.low.u32 %v6282
    %v6284 = vextract.high.u32 %v6282
    %v6285 = vmul.u32.u64.compose %v6281, %v6276
    %v6286 = vextract.low.u32 %v6285
    %v6287 = vextract.high.u32 %v6285
    %v6288 = vmul.u32 %v6281, %v6272
    %v6289 = vadd.s32 %v6284, %v6286
    %vm6290 = vc.u32 %v6284, %v6286
    %v6291 = vadd.s32 %v6287, 1
    %v6292 = vsel %vm6290, %v6291, %v6287
    %v6293 = vadd.s32 %v6288, %v6292
    %v6294 = vadd.s32 %v6293, 536870912
    %v6295 = vshrl.u32 %v6294, 30
    %v6296 = vshll.u32 %v6295, 30
    %v6297 = vsub.s32 %v6293, %v6296
    %vm6298 = vcmp.lt.s32.totalorder %v6297, 0
    %v6299 = vsub.s32 0, %v6297
    %v6300 = vsel %vm6298, %v6299, %v6297
    %v6301 = vclz %v6300
    %v6302 = vsub.s32 %v6301, 2
    %vm6303 = vcmp.gt.s32.totalorder 0, %v6302
    %v6304 = vsel %vm6303, 0, %v6302
    %v6305 = vsub.s32 32, %v6304
    %v6306 = vshll.u32 %v6297, %v6304
    %v6307 = vshrl.u32 %v6289, %v6305
    %v6308 = vor.u32 %v6306, %v6307
    %v6309 = vsub.s32 4294967266, %v6304
    %v6310 = vadd.s32 %v6309, 127
    %v6311 = vshll.u32 %v6310, 23
    %v6312 = vor.u32 4788187, %v6311
    %v6313 = vand.u32 2147483647, %v6312
    %v6315 = vcvt.s32.f32 %v6308
    %v6316 = vmul.f32 %v6315, %v6313
    %v6317 = vxor.u32 %v6316, 2147483648
    %v6318 = vsel %vm6235, %v6317, %v6316
    %v6319 = vsub.s32 4, %v6295
    %v6320 = vsel %vm6235, %v6319, %v6295
    %v6321 = vsel %vm6234, %v5078, %v6318
    %v6322 = vsel %vm6234, 0, %v6320
    %v6323 = vcosq.f32.pop %v6321
    %v6324 = vsinq.f32.pop %v6321
    %vm6325 = vweird.f32 %v5078
    %v6326 = vand.u32 %v6322, 3
    %vm6327 = vcmp.lt.s32.totalorder %v6326, 2
    %vm6328 = vcmp.eq.s32.totalorder %v6326, 0
    %v6329 = vxor.u32 %v6324, 2147483648
    %v6330 = vsel %vm6328, %v6323, %v6329
    %vm6331 = vcmp.eq.s32.totalorder %v6326, 2
    %v6332 = vxor.u32 %v6323, 2147483648
    %v6333 = vsel %vm6331, %v6332, %v6324
    %v6334 = vsel %vm6327, %v6330, %v6333
    %v6335 = vsel %vm6325, nan, %v6334
    %v6336 = vand.u32 2147483647, %v5079
    %vm6337 = vcmp.le.f32.partialorder %v6336, 0.7853982
    %vm6338 = vcmp.lt.s32.totalorder %v5079, 0
    %v6339 = vand.u32 %v5079, 2139095040
    %v6340 = vshrl.u32 %v6339, 23
    %v6341 = vsub.s32 %v6340, 127
    %v6342 = vand.u32 2147483647, %v5079
    %v6343 = vand.u32 %v6342, 8388607
    %v6344 = vor.u32 %v6343, 8388608
    %v6345 = vsub.s32 0, %v6344
    %v6346 = vadd.s32 %v6341, 1
    %vm6347 = vcmp.gt.s32.totalorder %v6346, 0
    %v6348 = vsel %vm6347, %v6346, 0
    %v6349 = vshrl.u32 %v6348, 5
    %v6350 = vand.u32 %v6348, 31
    %v6351 = vsub.s32 32, %v6350
    %v6352 = vshrl.u32 683565275, %v6351
    %v6353 = vshll.u32 683565275, %v6350
    %v6354 = vshrl.u32 2475754826, %v6351
    %v6355 = vor.u32 %v6353, %v6354
    %v6356 = vshll.u32 2475754826, %v6350
    %v6357 = vshrl.u32 2131351028, %v6351
    %v6358 = vor.u32 %v6356, %v6357
    %v6359 = vshll.u32 2131351028, %v6350
    %v6360 = vshrl.u32 2102212464, %v6351
    %v6361 = vor.u32 %v6359, %v6360
    %v6362 = vshll.u32 2102212464, %v6350
    %v6363 = vshrl.u32 920167782, %v6351
    %v6364 = vor.u32 %v6362, %v6363
    %v6365 = vshll.u32 920167782, %v6350
    %v6366 = vshrl.u32 1326507024, %v6351
    %v6367 = vor.u32 %v6365, %v6366
    %vm6368 = vcmp.lt.s32.totalorder %v6349, 1
    %vm6369 = vcmp.lt.s32.totalorder %v6349, 2
    %vm6370 = vcmp.lt.s32.totalorder %v6349, 3
    %vm6371 = vcmp.lt.s32.totalorder %v6349, 4
    %v6372 = vsel %vm6368, %v6352, %v6355
    %v6373 = vsel %vm6371, %v6361, 2102212464
    %v6374 = vsel %vm6370, %v6358, %v6373
    %v6375 = vsel %vm6369, %v6372, %v6374
    %v6376 = vsel %vm6368, %v6355, %v6358
    %v6377 = vsel %vm6371, %v6364, 920167782
    %v6378 = vsel %vm6370, %v6361, %v6377
    %v6379 = vsel %vm6369, %v6376, %v6378
    %v6380 = vsel %vm6368, %v6358, %v6361
    %v6381 = vsel %vm6371, %v6367, 1326507024
    %v6382 = vsel %vm6370, %v6364, %v6381
    %v6383 = vsel %vm6369, %v6380, %v6382
    %v6384 = vshll.u32 %v6344, 8
    %v6385 = vmul.u32.u64.compose %v6384, %v6383
    %v6386 = vextract.low.u32 %v6385
    %v6387 = vextract.high.u32 %v6385
    %v6388 = vmul.u32.u64.compose %v6384, %v6379
    %v6389 = vextract.low.u32 %v6388
    %v6390 = vextract.high.u32 %v6388
    %v6391 = vmul.u32 %v6384, %v6375
    %v6392 = vadd.s32 %v6387, %v6389
    %vm6393 = vc.u32 %v6387, %v6389
    %v6394 = vadd.s32 %v6390, 1
    %v6395 = vsel %vm6393, %v6394, %v6390
    %v6396 = vadd.s32 %v6391, %v6395
    %v6397 = vadd.s32 %v6396, 536870912
    %v6398 = vshrl.u32 %v6397, 30
    %v6399 = vshll.u32 %v6398, 30
    %v6400 = vsub.s32 %v6396, %v6399
    %vm6401 = vcmp.lt.s32.totalorder %v6400, 0
    %v6402 = vsub.s32 0, %v6400
    %v6403 = vsel %vm6401, %v6402, %v6400
    %v6404 = vclz %v6403
    %v6405 = vsub.s32 %v6404, 2
    %vm6406 = vcmp.gt.s32.totalorder 0, %v6405
    %v6407 = vsel %vm6406, 0, %v6405
    %v6408 = vsub.s32 32, %v6407
    %v6409 = vshll.u32 %v6400, %v6407
    %v6410 = vshrl.u32 %v6392, %v6408
    %v6411 = vor.u32 %v6409, %v6410
    %v6412 = vsub.s32 4294967266, %v6407
    %v6413 = vadd.s32 %v6412, 127
    %v6414 = vshll.u32 %v6413, 23
    %v6415 = vor.u32 4788187, %v6414
    %v6416 = vand.u32 2147483647, %v6415
    %v6418 = vcvt.s32.f32 %v6411
    %v6419 = vmul.f32 %v6418, %v6416
    %v6420 = vxor.u32 %v6419, 2147483648
    %v6421 = vsel %vm6338, %v6420, %v6419
    %v6422 = vsub.s32 4, %v6398
    %v6423 = vsel %vm6338, %v6422, %v6398
    %v6424 = vsel %vm6337, %v5079, %v6421
    %v6425 = vsel %vm6337, 0, %v6423
    %v6426 = vcosq.f32.pop %v6424
    %v6427 = vsinq.f32.pop %v6424
    %vm6428 = vweird.f32 %v5079
    %v6429 = vand.u32 %v6425, 3
    %vm6430 = vcmp.lt.s32.totalorder %v6429, 2
    %vm6431 = vcmp.eq.s32.totalorder %v6429, 0
    %v6432 = vxor.u32 %v6427, 2147483648
    %v6433 = vsel %vm6431, %v6426, %v6432
    %vm6434 = vcmp.eq.s32.totalorder %v6429, 2
    %v6435 = vxor.u32 %v6426, 2147483648
    %v6436 = vsel %vm6434, %v6435, %v6427
    %v6437 = vsel %vm6430, %v6433, %v6436
    %v6438 = vsel %vm6428, nan, %v6437
    %v6439 = vand.u32 2147483647, %v5080
    %vm6440 = vcmp.le.f32.partialorder %v6439, 0.7853982
    %vm6441 = vcmp.lt.s32.totalorder %v5080, 0
    %v6442 = vand.u32 %v5080, 2139095040
    %v6443 = vshrl.u32 %v6442, 23
    %v6444 = vsub.s32 %v6443, 127
    %v6445 = vand.u32 2147483647, %v5080
    %v6446 = vand.u32 %v6445, 8388607
    %v6447 = vor.u32 %v6446, 8388608
    %v6448 = vsub.s32 0, %v6447
    %v6449 = vadd.s32 %v6444, 1
    %vm6450 = vcmp.gt.s32.totalorder %v6449, 0
    %v6451 = vsel %vm6450, %v6449, 0
    %v6452 = vshrl.u32 %v6451, 5
    %v6453 = vand.u32 %v6451, 31
    %v6454 = vsub.s32 32, %v6453
    %v6455 = vshrl.u32 683565275, %v6454
    %v6456 = vshll.u32 683565275, %v6453
    %v6457 = vshrl.u32 2475754826, %v6454
    %v6458 = vor.u32 %v6456, %v6457
    %v6459 = vshll.u32 2475754826, %v6453
    %v6460 = vshrl.u32 2131351028, %v6454
    %v6461 = vor.u32 %v6459, %v6460
    %v6462 = vshll.u32 2131351028, %v6453
    %v6463 = vshrl.u32 2102212464, %v6454
    %v6464 = vor.u32 %v6462, %v6463
    %v6465 = vshll.u32 2102212464, %v6453
    %v6466 = vshrl.u32 920167782, %v6454
    %v6467 = vor.u32 %v6465, %v6466
    %v6468 = vshll.u32 920167782, %v6453
    %v6469 = vshrl.u32 1326507024, %v6454
    %v6470 = vor.u32 %v6468, %v6469
    %vm6471 = vcmp.lt.s32.totalorder %v6452, 1
    %vm6472 = vcmp.lt.s32.totalorder %v6452, 2
    %vm6473 = vcmp.lt.s32.totalorder %v6452, 3
    %vm6474 = vcmp.lt.s32.totalorder %v6452, 4
    %v6475 = vsel %vm6471, %v6455, %v6458
    %v6476 = vsel %vm6474, %v6464, 2102212464
    %v6477 = vsel %vm6473, %v6461, %v6476
    %v6478 = vsel %vm6472, %v6475, %v6477
    %v6479 = vsel %vm6471, %v6458, %v6461
    %v6480 = vsel %vm6474, %v6467, 920167782
    %v6481 = vsel %vm6473, %v6464, %v6480
    %v6482 = vsel %vm6472, %v6479, %v6481
    %v6483 = vsel %vm6471, %v6461, %v6464
    %v6484 = vsel %vm6474, %v6470, 1326507024
    %v6485 = vsel %vm6473, %v6467, %v6484
    %v6486 = vsel %vm6472, %v6483, %v6485
    %v6487 = vshll.u32 %v6447, 8
    %v6488 = vmul.u32.u64.compose %v6487, %v6486
    %v6489 = vextract.low.u32 %v6488
    %v6490 = vextract.high.u32 %v6488
    %v6491 = vmul.u32.u64.compose %v6487, %v6482
    %v6492 = vextract.low.u32 %v6491
    %v6493 = vextract.high.u32 %v6491
    %v6494 = vmul.u32 %v6487, %v6478
    %v6495 = vadd.s32 %v6490, %v6492
    %vm6496 = vc.u32 %v6490, %v6492
    %v6497 = vadd.s32 %v6493, 1
    %v6498 = vsel %vm6496, %v6497, %v6493
    %v6499 = vadd.s32 %v6494, %v6498
    %v6500 = vadd.s32 %v6499, 536870912
    %v6501 = vshrl.u32 %v6500, 30
    %v6502 = vshll.u32 %v6501, 30
    %v6503 = vsub.s32 %v6499, %v6502
    %vm6504 = vcmp.lt.s32.totalorder %v6503, 0
    %v6505 = vsub.s32 0, %v6503
    %v6506 = vsel %vm6504, %v6505, %v6503
    %v6507 = vclz %v6506
    %v6508 = vsub.s32 %v6507, 2
    %vm6509 = vcmp.gt.s32.totalorder 0, %v6508
    %v6510 = vsel %vm6509, 0, %v6508
    %v6511 = vsub.s32 32, %v6510
    %v6512 = vshll.u32 %v6503, %v6510
    %v6513 = vshrl.u32 %v6495, %v6511
    %v6514 = vor.u32 %v6512, %v6513
    %v6515 = vsub.s32 4294967266, %v6510
    %v6516 = vadd.s32 %v6515, 127
    %v6517 = vshll.u32 %v6516, 23
    %v6518 = vor.u32 4788187, %v6517
    %v6519 = vand.u32 2147483647, %v6518
    %v6521 = vcvt.s32.f32 %v6514
    %v6522 = vmul.f32 %v6521, %v6519
    %v6523 = vxor.u32 %v6522, 2147483648
    %v6524 = vsel %vm6441, %v6523, %v6522
    %v6525 = vsub.s32 4, %v6501
    %v6526 = vsel %vm6441, %v6525, %v6501
    %v6527 = vsel %vm6440, %v5080, %v6524
    %v6528 = vsel %vm6440, 0, %v6526
    %v6529 = vcosq.f32.pop %v6527
    %v6530 = vsinq.f32.pop %v6527
    %vm6531 = vweird.f32 %v5080
    %v6532 = vand.u32 %v6528, 3
    %vm6533 = vcmp.lt.s32.totalorder %v6532, 2
    %vm6534 = vcmp.eq.s32.totalorder %v6532, 0
    %v6535 = vxor.u32 %v6530, 2147483648
    %v6536 = vsel %vm6534, %v6529, %v6535
    %vm6537 = vcmp.eq.s32.totalorder %v6532, 2
    %v6538 = vxor.u32 %v6529, 2147483648
    %v6539 = vsel %vm6537, %v6538, %v6530
    %v6540 = vsel %vm6533, %v6536, %v6539
    %v6541 = vsel %vm6531, nan, %v6540
    %v6542 = vand.u32 2147483647, %v5081
    %vm6543 = vcmp.le.f32.partialorder %v6542, 0.7853982
    %vm6544 = vcmp.lt.s32.totalorder %v5081, 0
    %v6545 = vand.u32 %v5081, 2139095040
    %v6546 = vshrl.u32 %v6545, 23
    %v6547 = vsub.s32 %v6546, 127
    %v6548 = vand.u32 2147483647, %v5081
    %v6549 = vand.u32 %v6548, 8388607
    %v6550 = vor.u32 %v6549, 8388608
    %v6551 = vsub.s32 0, %v6550
    %v6552 = vadd.s32 %v6547, 1
    %vm6553 = vcmp.gt.s32.totalorder %v6552, 0
    %v6554 = vsel %vm6553, %v6552, 0
    %v6555 = vshrl.u32 %v6554, 5
    %v6556 = vand.u32 %v6554, 31
    %v6557 = vsub.s32 32, %v6556
    %v6558 = vshrl.u32 683565275, %v6557
    %v6559 = vshll.u32 683565275, %v6556
    %v6560 = vshrl.u32 2475754826, %v6557
    %v6561 = vor.u32 %v6559, %v6560
    %v6562 = vshll.u32 2475754826, %v6556
    %v6563 = vshrl.u32 2131351028, %v6557
    %v6564 = vor.u32 %v6562, %v6563
    %v6565 = vshll.u32 2131351028, %v6556
    %v6566 = vshrl.u32 2102212464, %v6557
    %v6567 = vor.u32 %v6565, %v6566
    %v6568 = vshll.u32 2102212464, %v6556
    %v6569 = vshrl.u32 920167782, %v6557
    %v6570 = vor.u32 %v6568, %v6569
    %v6571 = vshll.u32 920167782, %v6556
    %v6572 = vshrl.u32 1326507024, %v6557
    %v6573 = vor.u32 %v6571, %v6572
    %vm6574 = vcmp.lt.s32.totalorder %v6555, 1
    %vm6575 = vcmp.lt.s32.totalorder %v6555, 2
    %vm6576 = vcmp.lt.s32.totalorder %v6555, 3
    %vm6577 = vcmp.lt.s32.totalorder %v6555, 4
    %v6578 = vsel %vm6574, %v6558, %v6561
    %v6579 = vsel %vm6577, %v6567, 2102212464
    %v6580 = vsel %vm6576, %v6564, %v6579
    %v6581 = vsel %vm6575, %v6578, %v6580
    %v6582 = vsel %vm6574, %v6561, %v6564
    %v6583 = vsel %vm6577, %v6570, 920167782
    %v6584 = vsel %vm6576, %v6567, %v6583
    %v6585 = vsel %vm6575, %v6582, %v6584
    %v6586 = vsel %vm6574, %v6564, %v6567
    %v6587 = vsel %vm6577, %v6573, 1326507024
    %v6588 = vsel %vm6576, %v6570, %v6587
    %v6589 = vsel %vm6575, %v6586, %v6588
    %v6590 = vshll.u32 %v6550, 8
    %v6591 = vmul.u32.u64.compose %v6590, %v6589
    %v6592 = vextract.low.u32 %v6591
    %v6593 = vextract.high.u32 %v6591
    %v6594 = vmul.u32.u64.compose %v6590, %v6585
    %v6595 = vextract.low.u32 %v6594
    %v6596 = vextract.high.u32 %v6594
    %v6597 = vmul.u32 %v6590, %v6581
    %v6598 = vadd.s32 %v6593, %v6595
    %vm6599 = vc.u32 %v6593, %v6595
    %v6600 = vadd.s32 %v6596, 1
    %v6601 = vsel %vm6599, %v6600, %v6596
    %v6602 = vadd.s32 %v6597, %v6601
    %v6603 = vadd.s32 %v6602, 536870912
    %v6604 = vshrl.u32 %v6603, 30
    %v6605 = vshll.u32 %v6604, 30
    %v6606 = vsub.s32 %v6602, %v6605
    %vm6607 = vcmp.lt.s32.totalorder %v6606, 0
    %v6608 = vsub.s32 0, %v6606
    %v6609 = vsel %vm6607, %v6608, %v6606
    %v6610 = vclz %v6609
    %v6611 = vsub.s32 %v6610, 2
    %vm6612 = vcmp.gt.s32.totalorder 0, %v6611
    %v6613 = vsel %vm6612, 0, %v6611
    %v6614 = vsub.s32 32, %v6613
    %v6615 = vshll.u32 %v6606, %v6613
    %v6616 = vshrl.u32 %v6598, %v6614
    %v6617 = vor.u32 %v6615, %v6616
    %v6618 = vsub.s32 4294967266, %v6613
    %v6619 = vadd.s32 %v6618, 127
    %v6620 = vshll.u32 %v6619, 23
    %v6621 = vor.u32 4788187, %v6620
    %v6622 = vand.u32 2147483647, %v6621
    %v6624 = vcvt.s32.f32 %v6617
    %v6625 = vmul.f32 %v6624, %v6622
    %v6626 = vxor.u32 %v6625, 2147483648
    %v6627 = vsel %vm6544, %v6626, %v6625
    %v6628 = vsub.s32 4, %v6604
    %v6629 = vsel %vm6544, %v6628, %v6604
    %v6630 = vsel %vm6543, %v5081, %v6627
    %v6631 = vsel %vm6543, 0, %v6629
    %v6632 = vcosq.f32.pop %v6630
    %v6633 = vsinq.f32.pop %v6630
    %vm6634 = vweird.f32 %v5081
    %v6635 = vand.u32 %v6631, 3
    %vm6636 = vcmp.lt.s32.totalorder %v6635, 2
    %vm6637 = vcmp.eq.s32.totalorder %v6635, 0
    %v6638 = vxor.u32 %v6633, 2147483648
    %v6639 = vsel %vm6637, %v6632, %v6638
    %vm6640 = vcmp.eq.s32.totalorder %v6635, 2
    %v6641 = vxor.u32 %v6632, 2147483648
    %v6642 = vsel %vm6640, %v6641, %v6633
    %v6643 = vsel %vm6636, %v6639, %v6642
    %v6644 = vsel %vm6634, nan, %v6643
    %v6645 = vand.u32 2147483647, %v5082
    %vm6646 = vcmp.le.f32.partialorder %v6645, 0.7853982
    %vm6647 = vcmp.lt.s32.totalorder %v5082, 0
    %v6648 = vand.u32 %v5082, 2139095040
    %v6649 = vshrl.u32 %v6648, 23
    %v6650 = vsub.s32 %v6649, 127
    %v6651 = vand.u32 2147483647, %v5082
    %v6652 = vand.u32 %v6651, 8388607
    %v6653 = vor.u32 %v6652, 8388608
    %v6654 = vsub.s32 0, %v6653
    %v6655 = vadd.s32 %v6650, 1
    %vm6656 = vcmp.gt.s32.totalorder %v6655, 0
    %v6657 = vsel %vm6656, %v6655, 0
    %v6658 = vshrl.u32 %v6657, 5
    %v6659 = vand.u32 %v6657, 31
    %v6660 = vsub.s32 32, %v6659
    %v6661 = vshrl.u32 683565275, %v6660
    %v6662 = vshll.u32 683565275, %v6659
    %v6663 = vshrl.u32 2475754826, %v6660
    %v6664 = vor.u32 %v6662, %v6663
    %v6665 = vshll.u32 2475754826, %v6659
    %v6666 = vshrl.u32 2131351028, %v6660
    %v6667 = vor.u32 %v6665, %v6666
    %v6668 = vshll.u32 2131351028, %v6659
    %v6669 = vshrl.u32 2102212464, %v6660
    %v6670 = vor.u32 %v6668, %v6669
    %v6671 = vshll.u32 2102212464, %v6659
    %v6672 = vshrl.u32 920167782, %v6660
    %v6673 = vor.u32 %v6671, %v6672
    %v6674 = vshll.u32 920167782, %v6659
    %v6675 = vshrl.u32 1326507024, %v6660
    %v6676 = vor.u32 %v6674, %v6675
    %vm6677 = vcmp.lt.s32.totalorder %v6658, 1
    %vm6678 = vcmp.lt.s32.totalorder %v6658, 2
    %vm6679 = vcmp.lt.s32.totalorder %v6658, 3
    %vm6680 = vcmp.lt.s32.totalorder %v6658, 4
    %v6681 = vsel %vm6677, %v6661, %v6664
    %v6682 = vsel %vm6680, %v6670, 2102212464
    %v6683 = vsel %vm6679, %v6667, %v6682
    %v6684 = vsel %vm6678, %v6681, %v6683
    %v6685 = vsel %vm6677, %v6664, %v6667
    %v6686 = vsel %vm6680, %v6673, 920167782
    %v6687 = vsel %vm6679, %v6670, %v6686
    %v6688 = vsel %vm6678, %v6685, %v6687
    %v6689 = vsel %vm6677, %v6667, %v6670
    %v6690 = vsel %vm6680, %v6676, 1326507024
    %v6691 = vsel %vm6679, %v6673, %v6690
    %v6692 = vsel %vm6678, %v6689, %v6691
    %v6693 = vshll.u32 %v6653, 8
    %v6694 = vmul.u32.u64.compose %v6693, %v6692
    %v6695 = vextract.low.u32 %v6694
    %v6696 = vextract.high.u32 %v6694
    %v6697 = vmul.u32.u64.compose %v6693, %v6688
    %v6698 = vextract.low.u32 %v6697
    %v6699 = vextract.high.u32 %v6697
    %v6700 = vmul.u32 %v6693, %v6684
    %v6701 = vadd.s32 %v6696, %v6698
    %vm6702 = vc.u32 %v6696, %v6698
    %v6703 = vadd.s32 %v6699, 1
    %v6704 = vsel %vm6702, %v6703, %v6699
    %v6705 = vadd.s32 %v6700, %v6704
    %v6706 = vadd.s32 %v6705, 536870912
    %v6707 = vshrl.u32 %v6706, 30
    %v6708 = vshll.u32 %v6707, 30
    %v6709 = vsub.s32 %v6705, %v6708
    %vm6710 = vcmp.lt.s32.totalorder %v6709, 0
    %v6711 = vsub.s32 0, %v6709
    %v6712 = vsel %vm6710, %v6711, %v6709
    %v6713 = vclz %v6712
    %v6714 = vsub.s32 %v6713, 2
    %vm6715 = vcmp.gt.s32.totalorder 0, %v6714
    %v6716 = vsel %vm6715, 0, %v6714
    %v6717 = vsub.s32 32, %v6716
    %v6718 = vshll.u32 %v6709, %v6716
    %v6719 = vshrl.u32 %v6701, %v6717
    %v6720 = vor.u32 %v6718, %v6719
    %v6721 = vsub.s32 4294967266, %v6716
    %v6722 = vadd.s32 %v6721, 127
    %v6723 = vshll.u32 %v6722, 23
    %v6724 = vor.u32 4788187, %v6723
    %v6725 = vand.u32 2147483647, %v6724
    %v6727 = vcvt.s32.f32 %v6720
    %v6728 = vmul.f32 %v6727, %v6725
    %v6729 = vxor.u32 %v6728, 2147483648
    %v6730 = vsel %vm6647, %v6729, %v6728
    %v6731 = vsub.s32 4, %v6707
    %v6732 = vsel %vm6647, %v6731, %v6707
    %v6733 = vsel %vm6646, %v5082, %v6730
    %v6734 = vsel %vm6646, 0, %v6732
    %v6735 = vcosq.f32.pop %v6733
    %v6736 = vsinq.f32.pop %v6733
    %vm6737 = vweird.f32 %v5082
    %v6738 = vand.u32 %v6734, 3
    %vm6739 = vcmp.lt.s32.totalorder %v6738, 2
    %vm6740 = vcmp.eq.s32.totalorder %v6738, 0
    %v6741 = vxor.u32 %v6736, 2147483648
    %v6742 = vsel %vm6740, %v6735, %v6741
    %vm6743 = vcmp.eq.s32.totalorder %v6738, 2
    %v6744 = vxor.u32 %v6735, 2147483648
    %v6745 = vsel %vm6743, %v6744, %v6736
    %v6746 = vsel %vm6739, %v6742, %v6745
    %v6747 = vsel %vm6737, nan, %v6746
    %s6748 = scalar_lea.vmem [#allocation5], 512
    %6749 = vst [vmem:[%s6748] sm:$0xff] %v6026
    %6750 = vst [vmem:[%s6748 + $0x8] sm:$0xff] %v6129
    %6751 = vst [vmem:[%s6748 + $0x10] sm:$0xff] %v6232
    %6752 = vst [vmem:[%s6748 + $0x18] sm:$0xff] %v6335
    %6753 = vst [vmem:[%s6748 + $0x20] sm:$0xff] %v6438
    %6754 = vst [vmem:[%s6748 + $0x28] sm:$0xff] %v6541
    %6755 = vst [vmem:[%s6748 + $0x30] sm:$0xff] %v6644
    %6756 = vst [vmem:[%s6748 + $0x38] sm:$0xff] %v6747
    // Predicated region
    $region10: #{tpu_custom_call.1} parent=1 // pred_check
      _
    $region11: #{tpu_custom_call.1} parent=1 // pred_check_branch
      %6758 = sbr.rel (0) target = $region13
    $region12: #{tpu_custom_call.1} parent=1 // pred_region
      %s6760 = ssub.s32 9216, 9216
      %6761 = vsyncadd [#allocation4], %s6760
      %s6762 = sshll.u32 [#allocation5], 4
      %s6763 = int_to_ptr.vmem [resolvable:$true] %s6762
      %6768 = dma.vmem_to_hbm [thread:$0]  %s6763, 9216, %s1, [#allocation4], 1024, 1024, 64
    $region13: #{tpu_custom_call.1} parent=1 // pred_fallthru
      _
    // Predicated region
    $region14: #{tpu_custom_call.1} parent=1 // pred_check
      _
    $region15: #{tpu_custom_call.1} parent=1 // pred_check_branch
      %6770 = sbr.rel (0) target = $region17
    $region16: #{tpu_custom_call.1} parent=1 // pred_region
      %6771 = dma.done [#allocation4], 9216
    $region17: #{tpu_custom_call.1} parent=1 // pred_fallthru
      _
    %6772 = vsyncpa [#allocation3], 1
    %6773 = vsyncpa [#allocation4], 1

</llo_original>
